<compile_context>
chip_gen: v6e
topology: v6e:2x2x1
jax: 0.10.0
libtpu: 0.0.40
codegen_flags: <defaults>
</compile_context>

<pallas_src>
import jax
import jax.numpy as jnp
from jax.experimental import pallas as pl
from jax.experimental.pallas import tpu as pltpu

CP = 128          # channel padding = one full TPU lane width
NEG_SLOPE = 0.2   # LeakyReLU negative slope


# -----------------------------------------------------------------------------
# Fused DiscriminatorBlock kernel
# -----------------------------------------------------------------------------
def _make_kernel(H, W, Ho, Wo, Wpad, cp, downsample):
    HW = H * W

    def leaky(v):
        return jnp.maximum(v, NEG_SLOPE * v)

    def conv3x3(a_ref, w_ref, b_ref, band_rows):
        """One 3x3 conv as a single K=3*cp MXU matmul.

        `band_rows(ky)` returns the list of leading-dim row slices that make up
        the ky-shifted band (a single contiguous slice for stride 1, Ho
        single-row slices for the stride-2 downsample)."""
        bands = []
        nrows = None
        for ky in range(3):
            pieces = [a_ref[rs] for rs in band_rows(ky)]        # aligned reads
            band = pieces[0] if len(pieces) == 1 else jnp.concatenate(pieces, 0)
            nrows = band.shape[0]
            # (nrows, Wpad, cp) f32 -> (nrows*Wpad, cp) bf16 (Wpad % 8 == 0, so
            # the flatten keeps the sublane layout; no misaligned shuffles).
            bands.append(band.reshape(nrows * Wpad, cp).astype(jnp.bfloat16))
        lhs = jnp.concatenate(bands, axis=-1)                   # (rows, 3cp) bf16
        r = jnp.dot(lhs, w_ref[...], preferred_element_type=jnp.float32)
        r3 = r.reshape(nrows, Wpad, 3 * cp)
        # combine the three kx taps:  out[y, x] = sum_kx p_kx[y, x + kx]
        out = (r3[:, 0:W, 0:cp]
               + r3[:, 1:W + 1, cp:2 * cp]
               + r3[:, 2:W + 2, 2 * cp:3 * cp])
        return out + b_ref[...]                                 # (nrows, W, cp) f32

    def stride1_rows(ky):
        return [slice(ky, ky + H)]

    def stride2_rows(ky):                                       # rows ky, ky+2, ...
        return [slice(ky + 2 * yo, ky + 2 * yo + 1) for yo in range(Ho)]

    def kernel(x_ref, w1_ref, b1_ref, w2_ref, b2_ref, wres_ref, bres_ref, *rest):
        if downsample:
            wd_ref, bd_ref, o_ref, apad_ref = rest
        else:
            o_ref, apad_ref = rest

        # Rebuild the spatially zero-padded activation buffer for this image.
        # Zeroing every step (only ~50 vregs of stores) keeps the zero-border
        # invariant correct even when the batch axis is split across cores;
        # within a step only the interior [1:H+1, 1:W+1, :] is ever written.
        apad_ref[...] = jnp.zeros_like(apad_ref)
        apad_ref[1:H + 1, 1:W + 1, :] = x_ref[...].astype(jnp.float32)

        # main path: conv3x3 -> leaky -> conv3x3 -> leaky
        h = leaky(conv3x3(apad_ref, w1_ref, b1_ref, stride1_rows))
        apad_ref[1:H + 1, 1:W + 1, :] = h
        h = leaky(conv3x3(apad_ref, w2_ref, b2_ref, stride1_rows))

        # residual 1x1 conv, computed late so it is not live across the convs;
        # its LHS is the (H*W, cp) bf16 input block itself (no padded slice).
        res = jnp.dot(x_ref[...].reshape(HW, cp), wres_ref[...],
                      preferred_element_type=jnp.float32)
        s = h + res.reshape(H, W, cp) + bres_ref[...]

        if downsample:
            apad_ref[1:H + 1, 1:W + 1, :] = s
            # stride-2 conv: stride-2 row bands directly (Ho rows instead of H),
            # then a static stride-2 column pick of the combined result.
            wide = conv3x3(apad_ref, wd_ref, bd_ref, stride2_rows)  # (Ho, W, cp)
            cols = [wide[:, 2 * xo:2 * xo + 1, :] for xo in range(Wo)]
            o_ref[...] = jnp.concatenate(cols, axis=1).astype(o_ref.dtype)
        else:
            o_ref[...] = s.astype(o_ref.dtype)

    return kernel


def discriminator_block_forward(x_nchw, pp, *, filters, downsample=True, cp=CP):
    """Pallas forward of DiscriminatorBlock.  x_nchw: (B, Cin, H, W)."""
    B, Cin, H, W = x_nchw.shape
    assert Cin <= cp and filters <= cp
    Hp = H + 2
    Wpad = ((W + 2 + 7) // 8) * 8        # padded width rounded up to 8 sublanes
    Ho, Wo = ((H - 1) // 2 + 1, (W - 1) // 2 + 1) if downsample else (H, W)

    # Small layout plumbing: NCHW -> NHWC, channel-pad to 128 lanes, cast bf16.
    # (Spatial padding lives inside the kernel's VMEM scratch.)
    x = jnp.transpose(x_nchw, (0, 2, 3, 1)).astype(jnp.bfloat16)
    x = jnp.pad(x, ((0, 0), (0, 0), (0, 0), (0, cp - Cin)))

    w3_spec = pl.BlockSpec((3 * cp, 3 * cp), lambda b: (0, 0))
    w1_spec = pl.BlockSpec((cp, cp), lambda b: (0, 0))
    b_spec = pl.BlockSpec((1, cp), lambda b: (0, 0))

    in_specs = [pl.BlockSpec((None, H, W, cp), lambda b: (b, 0, 0, 0)),
                w3_spec, b_spec, w3_spec, b_spec, w1_spec, b_spec]
    inputs = [x, pp["w1"], pp["b1"], pp["w2"], pp["b2"], pp["w_res"], pp["b_res"]]
    if downsample:
        in_specs += [w3_spec, b_spec]
        inputs += [pp["wd"], pp["bd"]]

    out = pl.pallas_call(
        _make_kernel(H, W, Ho, Wo, Wpad, cp, downsample),
        out_shape=jax.ShapeDtypeStruct((B, Ho, Wo, cp), jnp.float32),
        grid=(B,),
        in_specs=in_specs,
        out_specs=pl.BlockSpec((None, Ho, Wo, cp), lambda b: (b, 0, 0, 0)),
        scratch_shapes=[pltpu.VMEM((Hp, Wpad, cp), jnp.float32)],
        compiler_params=pltpu.CompilerParams(
            dimension_semantics=("parallel",),   # v7x: batch split across both TCs
            vmem_limit_bytes=32 * 1024 * 1024),
    )(*inputs)

    # Slice padded channels / return to NCHW only for the test; when chaining
    # blocks, the padded NHWC-128 tensor would be passed on directly.
    return jnp.transpose(out[..., :filters], (0, 3, 1, 2))


# -----------------------------------------------------------------------------
# Parameters (generated in-script), host-side packing, pure-JAX reference
# -----------------------------------------------------------------------------
def init_params(key, cin, f):
    ks = jax.random.split(key, 8)

    def w(k, shape, fan_in):
        return jax.random.normal(k, shape, jnp.float32) * jnp.sqrt(2.0 / fan_in)

    def b(k):
        return 0.1 * jax.random.normal(k, (f,), jnp.float32)

    return dict(
        w_res=w(ks[0], (cin, f), cin),        b_res=b(ks[1]),
        w1=w(ks[2], (9, cin, f), 9 * cin),    b1=b(ks[3]),
        w2=w(ks[4], (9, f, f), 9 * f),        b2=b(ks[5]),
        wd=w(ks[6], (9, f, f), 9 * f),        bd=b(ks[7]),
    )


def pack_params(p, cp=CP):
    """One-time host packing: 3x3 taps -> (3*cp, 3*cp) bf16 block matrix so a
    whole conv is one K=3*cp MXU matmul; 1x1 -> (cp, cp) bf16; biases (1,cp) f32."""
    def pack3x3(w):                      # (9, ci, co), tap index = ky*3 + kx
        ci, co = w.shape[1], w.shape[2]
        out = jnp.zeros((3 * cp, 3 * cp), jnp.float32)
        for ky in range(3):
            for kx in range(3):
                out = out.at[ky * cp:ky * cp + ci,
                             kx * cp:kx * cp + co].set(w[ky * 3 + kx])
        return out.astype(jnp.bfloat16)

    def pack1x1(w):                      # (ci, co)
        ci, co = w.shape
        return (jnp.zeros((cp, cp), jnp.float32).at[:ci, :co].set(w)
                .astype(jnp.bfloat16))

    def packb(b):
        return jnp.pad(b, (0, cp - b.shape[0])).reshape(1, cp).astype(jnp.float32)

    return dict(
        w_res=pack1x1(p["w_res"]), b_res=packb(p["b_res"]),
        w1=pack3x3(p["w1"]),       b1=packb(p["b1"]),
        w2=pack3x3(p["w2"]),       b2=packb(p["b2"]),
        wd=pack3x3(p["wd"]),       bd=packb(p["bd"]),
    )


def _conv_ref(x_nhwc, w, b, stride=1):
    if w.ndim == 3:                                   # (9, ci, co) -> 3x3, pad 1
        wf = w.reshape(3, 3, w.shape[1], w.shape[2])
        pad = ((1, 1), (1, 1))
    else:                                             # (ci, co) -> 1x1, pad 0
        wf = w.reshape(1, 1, w.shape[0], w.shape[1])
        pad = ((0, 0), (0, 0))
    y = jax.lax.conv_general_dilated(
        x_nhwc, wf, window_strides=(stride, stride), padding=pad,
        dimension_numbers=("NHWC", "HWIO", "NHWC"),
        precision=jax.lax.Precision.HIGHEST)
    return y + b


def discriminator_block_ref(x_nchw, p, downsample=True):
    x = jnp.transpose(x_nchw, (0, 2, 3, 1))
    res = _conv_ref(x, p["w_res"], p["b_res"], 1)
    h = _conv_ref(x, p["w1"], p["b1"], 1)
    h = jnp.where(h >= 0, h, NEG_SLOPE * h)
    h = _conv_ref(h, p["w2"], p["b2"], 1)
    h = jnp.where(h >= 0, h, NEG_SLOPE * h)
    h = h + res
    if downsample:
        h = _conv_ref(h, p["wd"], p["bd"], 2)
    return jnp.transpose(h, (0, 3, 1, 2))


def _check(y, y_ref):
    # bf16 MXU operands -> compare against the f32 reference with a bf16-level
    # tolerance (activations here are O(1)-O(3)).
    max_abs = float(jnp.max(jnp.abs(y - y_ref)))
    rel = float(jnp.sqrt(jnp.sum((y - y_ref) ** 2) / jnp.sum(y_ref ** 2)))
    assert max_abs < 2.5e-1 and rel < 2.5e-2, (max_abs, rel)


# -----------------------------------------------------------------------------
if __name__ == "__main__":
    key = jax.random.PRNGKey(0)
    kx, kp = jax.random.split(key)

    B, CIN, H, W, FILTERS = 2, 4, 16, 16, 8
    x = jax.random.normal(kx, (B, CIN, H, W), jnp.float32)

    raw = init_params(kp, CIN, FILTERS)
    packed = pack_params(raw)

    # --- downsample=True (module default) ---
    y = discriminator_block_forward(x, packed, filters=FILTERS, downsample=True)
    jax.block_until_ready(y)
    y_ref = discriminator_block_ref(x, raw, downsample=True)
    assert y.shape == (B, FILTERS, H // 2, W // 2), y.shape
    _check(y, y_ref)

    # --- downsample=False variant ---
    y2 = discriminator_block_forward(x, packed, filters=FILTERS, downsample=False)
    jax.block_until_ready(y2)
    y2_ref = discriminator_block_ref(x, raw, downsample=False)
    assert y2.shape == (B, FILTERS, H, W), y2.shape
    _check(y2, y2_ref)

    print("KERNEL_OK")
</pallas_src>

<mosaic_0001>
module attributes {stable_mosaic.version = 11 : i64} {
  func.func @kernel(%arg0: i32, %arg1: memref<1x16x16x128xbf16, #tpu.memory_space<vmem>>, %arg2: memref<384x384xbf16, #tpu.memory_space<vmem>>, %arg3: memref<1x128xf32, #tpu.memory_space<vmem>>, %arg4: memref<384x384xbf16, #tpu.memory_space<vmem>>, %arg5: memref<1x128xf32, #tpu.memory_space<vmem>>, %arg6: memref<128x128xbf16, #tpu.memory_space<vmem>>, %arg7: memref<1x128xf32, #tpu.memory_space<vmem>>, %arg8: memref<384x384xbf16, #tpu.memory_space<vmem>>, %arg9: memref<1x128xf32, #tpu.memory_space<vmem>>, %arg10: memref<1x8x8x128xf32, #tpu.memory_space<vmem>>, %arg11: memref<18x24x128xf32, #tpu.memory_space<vmem>>) attributes {dimension_semantics = [#tpu.dimension_semantics<parallel>], iteration_bounds = array<i64: 2>, scalar_prefetch = 0 : i64, scratch_operands = 1 : i64, tpu.core_type = #tpu.core_type<tc>, window_params = [{transform_indices = @transform_0, window_bounds = array<i64: 1, 16, 16, 128>}, {pipeline_mode = #tpu.pipeline_mode<synchronous>, transform_indices = @transform_1, window_bounds = array<i64: 384, 384>}, {pipeline_mode = #tpu.pipeline_mode<synchronous>, transform_indices = @transform_2, window_bounds = array<i64: 1, 128>}, {pipeline_mode = #tpu.pipeline_mode<synchronous>, transform_indices = @transform_3, window_bounds = array<i64: 384, 384>}, {pipeline_mode = #tpu.pipeline_mode<synchronous>, transform_indices = @transform_4, window_bounds = array<i64: 1, 128>}, {pipeline_mode = #tpu.pipeline_mode<synchronous>, transform_indices = @transform_5, window_bounds = array<i64: 128, 128>}, {pipeline_mode = #tpu.pipeline_mode<synchronous>, transform_indices = @transform_6, window_bounds = array<i64: 1, 128>}, {pipeline_mode = #tpu.pipeline_mode<synchronous>, transform_indices = @transform_7, window_bounds = array<i64: 384, 384>}, {pipeline_mode = #tpu.pipeline_mode<synchronous>, transform_indices = @transform_8, window_bounds = array<i64: 1, 128>}, {transform_indices = @transform_9, window_bounds = array<i64: 1, 8, 8, 128>}]} {
    %cst = arith.constant 0.000000e+00 : f32
    %0 = vector.broadcast %cst : f32 to vector<18x24x128xf32>
    %c0 = arith.constant 0 : index
    %c0_0 = arith.constant 0 : index
    %c0_1 = arith.constant 0 : index
    %1 = vector.load %arg11[%c0, %c0_0, %c0_1] : memref<18x24x128xf32, #tpu.memory_space<vmem>>, vector<18x24x128xf32>
    tpu.vector_store %arg11[%c0, %c0_0, %c0_1], %0 {strides = array<i32>} : memref<18x24x128xf32, #tpu.memory_space<vmem>>, vector<18x24x128xf32>,
    %c0_2 = arith.constant 0 : index
    %c0_3 = arith.constant 0 : index
    %c0_4 = arith.constant 0 : index
    %c0_5 = arith.constant 0 : index
    %2 = vector.load %arg1[%c0_2, %c0_3, %c0_4, %c0_5] : memref<1x16x16x128xbf16, #tpu.memory_space<vmem>>, vector<1x16x16x128xbf16>
    %3 = vector.shape_cast %2 : vector<1x16x16x128xbf16> to vector<16x16x128xbf16>
    %4 = arith.extf %3 : vector<16x16x128xbf16> to vector<16x16x128xf32>
    %c1 = arith.constant 1 : index
    %c1_6 = arith.constant 1 : index
    %c0_7 = arith.constant 0 : index
    %5 = vector.load %arg11[%c1, %c1_6, %c0_7] : memref<18x24x128xf32, #tpu.memory_space<vmem>>, vector<16x16x128xf32>
    tpu.vector_store %arg11[%c1, %c1_6, %c0_7], %4 {strides = array<i32>} : memref<18x24x128xf32, #tpu.memory_space<vmem>>, vector<16x16x128xf32>,
    %c0_8 = arith.constant 0 : index
    %c0_9 = arith.constant 0 : index
    %c0_10 = arith.constant 0 : index
    %6 = vector.load %arg11[%c0_8, %c0_9, %c0_10] : memref<18x24x128xf32, #tpu.memory_space<vmem>>, vector<16x24x128xf32>
    %7 = vector.shape_cast %6 : vector<16x24x128xf32> to vector<384x128xf32>
    %8 = arith.truncf %7 : vector<384x128xf32> to vector<384x128xbf16>
    %c1_11 = arith.constant 1 : index
    %c0_12 = arith.constant 0 : index
    %c0_13 = arith.constant 0 : index
    %9 = vector.load %arg11[%c1_11, %c0_12, %c0_13] : memref<18x24x128xf32, #tpu.memory_space<vmem>>, vector<16x24x128xf32>
    %10 = vector.shape_cast %9 : vector<16x24x128xf32> to vector<384x128xf32>
    %11 = arith.truncf %10 : vector<384x128xf32> to vector<384x128xbf16>
    %c2 = arith.constant 2 : index
    %c0_14 = arith.constant 0 : index
    %c0_15 = arith.constant 0 : index
    %12 = vector.load %arg11[%c2, %c0_14, %c0_15] : memref<18x24x128xf32, #tpu.memory_space<vmem>>, vector<16x24x128xf32>
    %13 = vector.shape_cast %12 : vector<16x24x128xf32> to vector<384x128xf32>
    %14 = arith.truncf %13 : vector<384x128xf32> to vector<384x128xbf16>
    %15 = tpu.concatenate %8, %11, %14 in 1 : vector<384x128xbf16>, vector<384x128xbf16>, vector<384x128xbf16> -> vector<384x384xbf16>
    %c0_16 = arith.constant 0 : index
    %c0_17 = arith.constant 0 : index
    %16 = vector.load %arg2[%c0_16, %c0_17] : memref<384x384xbf16, #tpu.memory_space<vmem>>, vector<384x384xbf16>
    %cst_18 = arith.constant dense<0.000000e+00> : vector<384x384xf32>
    %17 = tpu.matmul %15, %16, %cst_18 {dimension_numbers = #tpu.dot_dimension_numbers<[1], [0], [0], [1], [0, 0, 1, 1], [], []>} : vector<384x384xbf16>, vector<384x384xbf16>, vector<384x384xf32> -> vector<384x384xf32>
    %18 = vector.shape_cast %17 : vector<384x384xf32> to vector<16x24x384xf32>
    %19 = vector.extract_strided_slice %18 {offsets = [0, 0, 0], sizes = [16, 16, 128], strides = [1, 1, 1]} : vector<16x24x384xf32> to vector<16x16x128xf32>
    %20 = vector.extract_strided_slice %18 {offsets = [0, 1, 128], sizes = [16, 16, 128], strides = [1, 1, 1]} : vector<16x24x384xf32> to vector<16x16x128xf32>
    %21 = arith.addf %19, %20 : vector<16x16x128xf32>
    %22 = vector.extract_strided_slice %18 {offsets = [0, 2, 256], sizes = [16, 16, 128], strides = [1, 1, 1]} : vector<16x24x384xf32> to vector<16x16x128xf32>
    %23 = arith.addf %21, %22 : vector<16x16x128xf32>
    %c0_19 = arith.constant 0 : index
    %c0_20 = arith.constant 0 : index
    %24 = vector.load %arg3[%c0_19, %c0_20] : memref<1x128xf32, #tpu.memory_space<vmem>>, vector<1x128xf32>
    %25 = vector.shape_cast %24 : vector<1x128xf32> to vector<1x1x128xf32>
    %26 = vector.broadcast %25 : vector<1x1x128xf32> to vector<16x16x128xf32>
    %27 = arith.addf %23, %26 : vector<16x16x128xf32>
    %cst_21 = arith.constant 2.000000e-01 : f32
    %28 = vector.broadcast %cst_21 : f32 to vector<16x16x128xf32>
    %29 = arith.mulf %28, %27 : vector<16x16x128xf32>
    %30 = arith.maximumf %27, %29 : vector<16x16x128xf32>
    %c1_22 = arith.constant 1 : index
    %c1_23 = arith.constant 1 : index
    %c0_24 = arith.constant 0 : index
    %31 = vector.load %arg11[%c1_22, %c1_23, %c0_24] : memref<18x24x128xf32, #tpu.memory_space<vmem>>, vector<16x16x128xf32>
    tpu.vector_store %arg11[%c1_22, %c1_23, %c0_24], %30 {strides = array<i32>} : memref<18x24x128xf32, #tpu.memory_space<vmem>>, vector<16x16x128xf32>,
    %c0_25 = arith.constant 0 : index
    %c0_26 = arith.constant 0 : index
    %c0_27 = arith.constant 0 : index
    %32 = vector.load %arg11[%c0_25, %c0_26, %c0_27] : memref<18x24x128xf32, #tpu.memory_space<vmem>>, vector<16x24x128xf32>
    %33 = vector.shape_cast %32 : vector<16x24x128xf32> to vector<384x128xf32>
    %34 = arith.truncf %33 : vector<384x128xf32> to vector<384x128xbf16>
    %c1_28 = arith.constant 1 : index
    %c0_29 = arith.constant 0 : index
    %c0_30 = arith.constant 0 : index
    %35 = vector.load %arg11[%c1_28, %c0_29, %c0_30] : memref<18x24x128xf32, #tpu.memory_space<vmem>>, vector<16x24x128xf32>
    %36 = vector.shape_cast %35 : vector<16x24x128xf32> to vector<384x128xf32>
    %37 = arith.truncf %36 : vector<384x128xf32> to vector<384x128xbf16>
    %c2_31 = arith.constant 2 : index
    %c0_32 = arith.constant 0 : index
    %c0_33 = arith.constant 0 : index
    %38 = vector.load %arg11[%c2_31, %c0_32, %c0_33] : memref<18x24x128xf32, #tpu.memory_space<vmem>>, vector<16x24x128xf32>
    %39 = vector.shape_cast %38 : vector<16x24x128xf32> to vector<384x128xf32>
    %40 = arith.truncf %39 : vector<384x128xf32> to vector<384x128xbf16>
    %41 = tpu.concatenate %34, %37, %40 in 1 : vector<384x128xbf16>, vector<384x128xbf16>, vector<384x128xbf16> -> vector<384x384xbf16>
    %c0_34 = arith.constant 0 : index
    %c0_35 = arith.constant 0 : index
    %42 = vector.load %arg4[%c0_34, %c0_35] : memref<384x384xbf16, #tpu.memory_space<vmem>>, vector<384x384xbf16>
    %cst_36 = arith.constant dense<0.000000e+00> : vector<384x384xf32>
    %43 = tpu.matmul %41, %42, %cst_36 {dimension_numbers = #tpu.dot_dimension_numbers<[1], [0], [0], [1], [0, 0, 1, 1], [], []>} : vector<384x384xbf16>, vector<384x384xbf16>, vector<384x384xf32> -> vector<384x384xf32>
    %44 = vector.shape_cast %43 : vector<384x384xf32> to vector<16x24x384xf32>
    %45 = vector.extract_strided_slice %44 {offsets = [0, 0, 0], sizes = [16, 16, 128], strides = [1, 1, 1]} : vector<16x24x384xf32> to vector<16x16x128xf32>
    %46 = vector.extract_strided_slice %44 {offsets = [0, 1, 128], sizes = [16, 16, 128], strides = [1, 1, 1]} : vector<16x24x384xf32> to vector<16x16x128xf32>
    %47 = arith.addf %45, %46 : vector<16x16x128xf32>
    %48 = vector.extract_strided_slice %44 {offsets = [0, 2, 256], sizes = [16, 16, 128], strides = [1, 1, 1]} : vector<16x24x384xf32> to vector<16x16x128xf32>
    %49 = arith.addf %47, %48 : vector<16x16x128xf32>
    %c0_37 = arith.constant 0 : index
    %c0_38 = arith.constant 0 : index
    %50 = vector.load %arg5[%c0_37, %c0_38] : memref<1x128xf32, #tpu.memory_space<vmem>>, vector<1x128xf32>
    %51 = vector.shape_cast %50 : vector<1x128xf32> to vector<1x1x128xf32>
    %52 = vector.broadcast %51 : vector<1x1x128xf32> to vector<16x16x128xf32>
    %53 = arith.addf %49, %52 : vector<16x16x128xf32>
    %cst_39 = arith.constant 2.000000e-01 : f32
    %54 = vector.broadcast %cst_39 : f32 to vector<16x16x128xf32>
    %55 = arith.mulf %54, %53 : vector<16x16x128xf32>
    %56 = arith.maximumf %53, %55 : vector<16x16x128xf32>
    %c0_40 = arith.constant 0 : index
    %c0_41 = arith.constant 0 : index
    %c0_42 = arith.constant 0 : index
    %c0_43 = arith.constant 0 : index
    %57 = vector.load %arg1[%c0_40, %c0_41, %c0_42, %c0_43] : memref<1x16x16x128xbf16, #tpu.memory_space<vmem>>, vector<1x16x16x128xbf16>
    %58 = vector.shape_cast %57 : vector<1x16x16x128xbf16> to vector<16x16x128xbf16>
    %59 = vector.shape_cast %58 : vector<16x16x128xbf16> to vector<256x128xbf16>
    %c0_44 = arith.constant 0 : index
    %c0_45 = arith.constant 0 : index
    %60 = vector.load %arg6[%c0_44, %c0_45] : memref<128x128xbf16, #tpu.memory_space<vmem>>, vector<128x128xbf16>
    %cst_46 = arith.constant dense<0.000000e+00> : vector<256x128xf32>
    %61 = tpu.matmul %59, %60, %cst_46 {dimension_numbers = #tpu.dot_dimension_numbers<[1], [0], [0], [1], [0, 0, 1, 1], [], []>} : vector<256x128xbf16>, vector<128x128xbf16>, vector<256x128xf32> -> vector<256x128xf32>
    %62 = vector.shape_cast %61 : vector<256x128xf32> to vector<16x16x128xf32>
    %63 = arith.addf %56, %62 : vector<16x16x128xf32>
    %c0_47 = arith.constant 0 : index
    %c0_48 = arith.constant 0 : index
    %64 = vector.load %arg7[%c0_47, %c0_48] : memref<1x128xf32, #tpu.memory_space<vmem>>, vector<1x128xf32>
    %65 = vector.shape_cast %64 : vector<1x128xf32> to vector<1x1x128xf32>
    %66 = vector.broadcast %65 : vector<1x1x128xf32> to vector<16x16x128xf32>
    %67 = arith.addf %63, %66 : vector<16x16x128xf32>
    %c1_49 = arith.constant 1 : index
    %c1_50 = arith.constant 1 : index
    %c0_51 = arith.constant 0 : index
    %68 = vector.load %arg11[%c1_49, %c1_50, %c0_51] : memref<18x24x128xf32, #tpu.memory_space<vmem>>, vector<16x16x128xf32>
    tpu.vector_store %arg11[%c1_49, %c1_50, %c0_51], %67 {strides = array<i32>} : memref<18x24x128xf32, #tpu.memory_space<vmem>>, vector<16x16x128xf32>,
    %c0_52 = arith.constant 0 : index
    %c0_53 = arith.constant 0 : index
    %c0_54 = arith.constant 0 : index
    %69 = vector.load %arg11[%c0_52, %c0_53, %c0_54] : memref<18x24x128xf32, #tpu.memory_space<vmem>>, vector<1x24x128xf32>
    %c2_55 = arith.constant 2 : index
    %c0_56 = arith.constant 0 : index
    %c0_57 = arith.constant 0 : index
    %70 = vector.load %arg11[%c2_55, %c0_56, %c0_57] : memref<18x24x128xf32, #tpu.memory_space<vmem>>, vector<1x24x128xf32>
    %c4 = arith.constant 4 : index
    %c0_58 = arith.constant 0 : index
    %c0_59 = arith.constant 0 : index
    %71 = vector.load %arg11[%c4, %c0_58, %c0_59] : memref<18x24x128xf32, #tpu.memory_space<vmem>>, vector<1x24x128xf32>
    %c6 = arith.constant 6 : index
    %c0_60 = arith.constant 0 : index
    %c0_61 = arith.constant 0 : index
    %72 = vector.load %arg11[%c6, %c0_60, %c0_61] : memref<18x24x128xf32, #tpu.memory_space<vmem>>, vector<1x24x128xf32>
    %c8 = arith.constant 8 : index
    %c0_62 = arith.constant 0 : index
    %c0_63 = arith.constant 0 : index
    %73 = vector.load %arg11[%c8, %c0_62, %c0_63] : memref<18x24x128xf32, #tpu.memory_space<vmem>>, vector<1x24x128xf32>
    %c10 = arith.constant 10 : index
    %c0_64 = arith.constant 0 : index
    %c0_65 = arith.constant 0 : index
    %74 = vector.load %arg11[%c10, %c0_64, %c0_65] : memref<18x24x128xf32, #tpu.memory_space<vmem>>, vector<1x24x128xf32>
    %c12 = arith.constant 12 : index
    %c0_66 = arith.constant 0 : index
    %c0_67 = arith.constant 0 : index
    %75 = vector.load %arg11[%c12, %c0_66, %c0_67] : memref<18x24x128xf32, #tpu.memory_space<vmem>>, vector<1x24x128xf32>
    %c14 = arith.constant 14 : index
    %c0_68 = arith.constant 0 : index
    %c0_69 = arith.constant 0 : index
    %76 = vector.load %arg11[%c14, %c0_68, %c0_69] : memref<18x24x128xf32, #tpu.memory_space<vmem>>, vector<1x24x128xf32>
    %77 = tpu.concatenate %69, %70, %71, %72, %73, %74, %75, %76 in 0 : vector<1x24x128xf32>, vector<1x24x128xf32>, vector<1x24x128xf32>, vector<1x24x128xf32>, vector<1x24x128xf32>, vector<1x24x128xf32>, vector<1x24x128xf32>, vector<1x24x128xf32> -> vector<8x24x128xf32>
    %78 = vector.shape_cast %77 : vector<8x24x128xf32> to vector<192x128xf32>
    %79 = arith.truncf %78 : vector<192x128xf32> to vector<192x128xbf16>
    %c1_70 = arith.constant 1 : index
    %c0_71 = arith.constant 0 : index
    %c0_72 = arith.constant 0 : index
    %80 = vector.load %arg11[%c1_70, %c0_71, %c0_72] : memref<18x24x128xf32, #tpu.memory_space<vmem>>, vector<1x24x128xf32>
    %c3 = arith.constant 3 : index
    %c0_73 = arith.constant 0 : index
    %c0_74 = arith.constant 0 : index
    %81 = vector.load %arg11[%c3, %c0_73, %c0_74] : memref<18x24x128xf32, #tpu.memory_space<vmem>>, vector<1x24x128xf32>
    %c5 = arith.constant 5 : index
    %c0_75 = arith.constant 0 : index
    %c0_76 = arith.constant 0 : index
    %82 = vector.load %arg11[%c5, %c0_75, %c0_76] : memref<18x24x128xf32, #tpu.memory_space<vmem>>, vector<1x24x128xf32>
    %c7 = arith.constant 7 : index
    %c0_77 = arith.constant 0 : index
    %c0_78 = arith.constant 0 : index
    %83 = vector.load %arg11[%c7, %c0_77, %c0_78] : memref<18x24x128xf32, #tpu.memory_space<vmem>>, vector<1x24x128xf32>
    %c9 = arith.constant 9 : index
    %c0_79 = arith.constant 0 : index
    %c0_80 = arith.constant 0 : index
    %84 = vector.load %arg11[%c9, %c0_79, %c0_80] : memref<18x24x128xf32, #tpu.memory_space<vmem>>, vector<1x24x128xf32>
    %c11 = arith.constant 11 : index
    %c0_81 = arith.constant 0 : index
    %c0_82 = arith.constant 0 : index
    %85 = vector.load %arg11[%c11, %c0_81, %c0_82] : memref<18x24x128xf32, #tpu.memory_space<vmem>>, vector<1x24x128xf32>
    %c13 = arith.constant 13 : index
    %c0_83 = arith.constant 0 : index
    %c0_84 = arith.constant 0 : index
    %86 = vector.load %arg11[%c13, %c0_83, %c0_84] : memref<18x24x128xf32, #tpu.memory_space<vmem>>, vector<1x24x128xf32>
    %c15 = arith.constant 15 : index
    %c0_85 = arith.constant 0 : index
    %c0_86 = arith.constant 0 : index
    %87 = vector.load %arg11[%c15, %c0_85, %c0_86] : memref<18x24x128xf32, #tpu.memory_space<vmem>>, vector<1x24x128xf32>
    %88 = tpu.concatenate %80, %81, %82, %83, %84, %85, %86, %87 in 0 : vector<1x24x128xf32>, vector<1x24x128xf32>, vector<1x24x128xf32>, vector<1x24x128xf32>, vector<1x24x128xf32>, vector<1x24x128xf32>, vector<1x24x128xf32>, vector<1x24x128xf32> -> vector<8x24x128xf32>
    %89 = vector.shape_cast %88 : vector<8x24x128xf32> to vector<192x128xf32>
    %90 = arith.truncf %89 : vector<192x128xf32> to vector<192x128xbf16>
    %c2_87 = arith.constant 2 : index
    %c0_88 = arith.constant 0 : index
    %c0_89 = arith.constant 0 : index
    %91 = vector.load %arg11[%c2_87, %c0_88, %c0_89] : memref<18x24x128xf32, #tpu.memory_space<vmem>>, vector<1x24x128xf32>
    %c4_90 = arith.constant 4 : index
    %c0_91 = arith.constant 0 : index
    %c0_92 = arith.constant 0 : index
    %92 = vector.load %arg11[%c4_90, %c0_91, %c0_92] : memref<18x24x128xf32, #tpu.memory_space<vmem>>, vector<1x24x128xf32>
    %c6_93 = arith.constant 6 : index
    %c0_94 = arith.constant 0 : index
    %c0_95 = arith.constant 0 : index
    %93 = vector.load %arg11[%c6_93, %c0_94, %c0_95] : memref<18x24x128xf32, #tpu.memory_space<vmem>>, vector<1x24x128xf32>
    %c8_96 = arith.constant 8 : index
    %c0_97 = arith.constant 0 : index
    %c0_98 = arith.constant 0 : index
    %94 = vector.load %arg11[%c8_96, %c0_97, %c0_98] : memref<18x24x128xf32, #tpu.memory_space<vmem>>, vector<1x24x128xf32>
    %c10_99 = arith.constant 10 : index
    %c0_100 = arith.constant 0 : index
    %c0_101 = arith.constant 0 : index
    %95 = vector.load %arg11[%c10_99, %c0_100, %c0_101] : memref<18x24x128xf32, #tpu.memory_space<vmem>>, vector<1x24x128xf32>
    %c12_102 = arith.constant 12 : index
    %c0_103 = arith.constant 0 : index
    %c0_104 = arith.constant 0 : index
    %96 = vector.load %arg11[%c12_102, %c0_103, %c0_104] : memref<18x24x128xf32, #tpu.memory_space<vmem>>, vector<1x24x128xf32>
    %c14_105 = arith.constant 14 : index
    %c0_106 = arith.constant 0 : index
    %c0_107 = arith.constant 0 : index
    %97 = vector.load %arg11[%c14_105, %c0_106, %c0_107] : memref<18x24x128xf32, #tpu.memory_space<vmem>>, vector<1x24x128xf32>
    %c16 = arith.constant 16 : index
    %c0_108 = arith.constant 0 : index
    %c0_109 = arith.constant 0 : index
    %98 = vector.load %arg11[%c16, %c0_108, %c0_109] : memref<18x24x128xf32, #tpu.memory_space<vmem>>, vector<1x24x128xf32>
    %99 = tpu.concatenate %91, %92, %93, %94, %95, %96, %97, %98 in 0 : vector<1x24x128xf32>, vector<1x24x128xf32>, vector<1x24x128xf32>, vector<1x24x128xf32>, vector<1x24x128xf32>, vector<1x24x128xf32>, vector<1x24x128xf32>, vector<1x24x128xf32> -> vector<8x24x128xf32>
    %100 = vector.shape_cast %99 : vector<8x24x128xf32> to vector<192x128xf32>
    %101 = arith.truncf %100 : vector<192x128xf32> to vector<192x128xbf16>
    %102 = tpu.concatenate %79, %90, %101 in 1 : vector<192x128xbf16>, vector<192x128xbf16>, vector<192x128xbf16> -> vector<192x384xbf16>
    %c0_110 = arith.constant 0 : index
    %c0_111 = arith.constant 0 : index
    %103 = vector.load %arg8[%c0_110, %c0_111] : memref<384x384xbf16, #tpu.memory_space<vmem>>, vector<384x384xbf16>
    %cst_112 = arith.constant dense<0.000000e+00> : vector<192x384xf32>
    %104 = tpu.matmul %102, %103, %cst_112 {dimension_numbers = #tpu.dot_dimension_numbers<[1], [0], [0], [1], [0, 0, 1, 1], [], []>} : vector<192x384xbf16>, vector<384x384xbf16>, vector<192x384xf32> -> vector<192x384xf32>
    %105 = vector.shape_cast %104 : vector<192x384xf32> to vector<8x24x384xf32>
    %106 = vector.extract_strided_slice %105 {offsets = [0, 0, 0], sizes = [8, 16, 128], strides = [1, 1, 1]} : vector<8x24x384xf32> to vector<8x16x128xf32>
    %107 = vector.extract_strided_slice %105 {offsets = [0, 1, 128], sizes = [8, 16, 128], strides = [1, 1, 1]} : vector<8x24x384xf32> to vector<8x16x128xf32>
    %108 = arith.addf %106, %107 : vector<8x16x128xf32>
    %109 = vector.extract_strided_slice %105 {offsets = [0, 2, 256], sizes = [8, 16, 128], strides = [1, 1, 1]} : vector<8x24x384xf32> to vector<8x16x128xf32>
    %110 = arith.addf %108, %109 : vector<8x16x128xf32>
    %c0_113 = arith.constant 0 : index
    %c0_114 = arith.constant 0 : index
    %111 = vector.load %arg9[%c0_113, %c0_114] : memref<1x128xf32, #tpu.memory_space<vmem>>, vector<1x128xf32>
    %112 = vector.shape_cast %111 : vector<1x128xf32> to vector<1x1x128xf32>
    %113 = vector.broadcast %112 : vector<1x1x128xf32> to vector<8x16x128xf32>
    %114 = arith.addf %110, %113 : vector<8x16x128xf32>
    %115 = vector.extract_strided_slice %114 {offsets = [0, 0, 0], sizes = [8, 1, 128], strides = [1, 1, 1]} : vector<8x16x128xf32> to vector<8x1x128xf32>
    %116 = vector.extract_strided_slice %114 {offsets = [0, 2, 0], sizes = [8, 1, 128], strides = [1, 1, 1]} : vector<8x16x128xf32> to vector<8x1x128xf32>
    %117 = vector.extract_strided_slice %114 {offsets = [0, 4, 0], sizes = [8, 1, 128], strides = [1, 1, 1]} : vector<8x16x128xf32> to vector<8x1x128xf32>
    %118 = vector.extract_strided_slice %114 {offsets = [0, 6, 0], sizes = [8, 1, 128], strides = [1, 1, 1]} : vector<8x16x128xf32> to vector<8x1x128xf32>
    %119 = vector.extract_strided_slice %114 {offsets = [0, 8, 0], sizes = [8, 1, 128], strides = [1, 1, 1]} : vector<8x16x128xf32> to vector<8x1x128xf32>
    %120 = vector.extract_strided_slice %114 {offsets = [0, 10, 0], sizes = [8, 1, 128], strides = [1, 1, 1]} : vector<8x16x128xf32> to vector<8x1x128xf32>
    %121 = vector.extract_strided_slice %114 {offsets = [0, 12, 0], sizes = [8, 1, 128], strides = [1, 1, 1]} : vector<8x16x128xf32> to vector<8x1x128xf32>
    %122 = vector.extract_strided_slice %114 {offsets = [0, 14, 0], sizes = [8, 1, 128], strides = [1, 1, 1]} : vector<8x16x128xf32> to vector<8x1x128xf32>
    %123 = tpu.concatenate %115, %116, %117, %118, %119, %120, %121, %122 in 1 : vector<8x1x128xf32>, vector<8x1x128xf32>, vector<8x1x128xf32>, vector<8x1x128xf32>, vector<8x1x128xf32>, vector<8x1x128xf32>, vector<8x1x128xf32>, vector<8x1x128xf32> -> vector<8x8x128xf32>
    %c0_115 = arith.constant 0 : index
    %c0_116 = arith.constant 0 : index
    %c0_117 = arith.constant 0 : index
    %c0_118 = arith.constant 0 : index
    %124 = vector.load %arg10[%c0_115, %c0_116, %c0_117, %c0_118] : memref<1x8x8x128xf32, #tpu.memory_space<vmem>>, vector<1x8x8x128xf32>
    %125 = vector.shape_cast %124 : vector<1x8x8x128xf32> to vector<8x8x128xf32>
    %126 = vector.shape_cast %123 : vector<8x8x128xf32> to vector<1x8x8x128xf32>
    tpu.vector_store %arg10[%c0_115, %c0_116, %c0_117, %c0_118], %126 {strides = array<i32>} : memref<1x8x8x128xf32, #tpu.memory_space<vmem>>, vector<1x8x8x128xf32>,
    return
  }
  func.func @transform_0(%arg0: i32) -> (i32, i32, i32, i32) {
    %c0_i32 = arith.constant 0 : i32
    %c0_i32_0 = arith.constant 0 : i32
    %c0_i32_1 = arith.constant 0 : i32
    %c0_i32_2 = arith.constant 0 : i32
    return %arg0, %c0_i32, %c0_i32_0, %c0_i32_1 : i32, i32, i32, i32
  }
  func.func @transform_1(%arg0: i32) -> (i32, i32) {
    %c0_i32 = arith.constant 0 : i32
    %c0_i32_0 = arith.constant 0 : i32
    %c0_i32_1 = arith.constant 0 : i32
    return %c0_i32, %c0_i32_0 : i32, i32
  }
  func.func @transform_2(%arg0: i32) -> (i32, i32) {
    %c0_i32 = arith.constant 0 : i32
    %c0_i32_0 = arith.constant 0 : i32
    %c0_i32_1 = arith.constant 0 : i32
    return %c0_i32, %c0_i32_0 : i32, i32
  }
  func.func @transform_3(%arg0: i32) -> (i32, i32) {
    %c0_i32 = arith.constant 0 : i32
    %c0_i32_0 = arith.constant 0 : i32
    %c0_i32_1 = arith.constant 0 : i32
    return %c0_i32, %c0_i32_0 : i32, i32
  }
  func.func @transform_4(%arg0: i32) -> (i32, i32) {
    %c0_i32 = arith.constant 0 : i32
    %c0_i32_0 = arith.constant 0 : i32
    %c0_i32_1 = arith.constant 0 : i32
    return %c0_i32, %c0_i32_0 : i32, i32
  }
  func.func @transform_5(%arg0: i32) -> (i32, i32) {
    %c0_i32 = arith.constant 0 : i32
    %c0_i32_0 = arith.constant 0 : i32
    %c0_i32_1 = arith.constant 0 : i32
    return %c0_i32, %c0_i32_0 : i32, i32
  }
  func.func @transform_6(%arg0: i32) -> (i32, i32) {
    %c0_i32 = arith.constant 0 : i32
    %c0_i32_0 = arith.constant 0 : i32
    %c0_i32_1 = arith.constant 0 : i32
    return %c0_i32, %c0_i32_0 : i32, i32
  }
  func.func @transform_7(%arg0: i32) -> (i32, i32) {
    %c0_i32 = arith.constant 0 : i32
    %c0_i32_0 = arith.constant 0 : i32
    %c0_i32_1 = arith.constant 0 : i32
    return %c0_i32, %c0_i32_0 : i32, i32
  }
  func.func @transform_8(%arg0: i32) -> (i32, i32) {
    %c0_i32 = arith.constant 0 : i32
    %c0_i32_0 = arith.constant 0 : i32
    %c0_i32_1 = arith.constant 0 : i32
    return %c0_i32, %c0_i32_0 : i32, i32
  }
  func.func @transform_9(%arg0: i32) -> (i32, i32, i32, i32) {
    %c0_i32 = arith.constant 0 : i32
    %c0_i32_0 = arith.constant 0 : i32
    %c0_i32_1 = arith.constant 0 : i32
    %c0_i32_2 = arith.constant 0 : i32
    return %arg0, %c0_i32, %c0_i32_0, %c0_i32_1 : i32, i32, i32, i32
  }
}

</mosaic_0001>

<llo_original>
// kernel: tpu_custom_call.1
$region0: #{tpu_custom_call.1}
  #allocation0 [shape = 'u32[]', space=smem, size = 0x4, offset = 0x4, fixed_abs, tag = 'smem constant byte address 0x4 - core index']
  #allocation1 [shape = 'u32[144,128]{1,0:T(1,128)}', space=vmem, size = 0x12000, scoped, tag = 'internal scratch']
  #allocation2 [shape = 'f32[18,24,128]{2,1,0:T(8,128)}', space=vmem, size = 0x36000, scoped, tag = 'scratch operand']
  %s0 = inlined_call_operand.hbm [shape: bf16[2,16,16,128], index: 0, kind: input, shape index: {}]
  %s1 = inlined_call_operand.hbm [shape: bf16[384,384], index: 1, kind: input, shape index: {}]
  %s2 = inlined_call_operand.vmem [shape: f32[1,128], index: 2, kind: input, shape index: {}]
  %s3 = inlined_call_operand.hbm [shape: bf16[384,384], index: 3, kind: input, shape index: {}]
  %s4 = inlined_call_operand.vmem [shape: f32[1,128], index: 4, kind: input, shape index: {}]
  %s5 = inlined_call_operand.hbm [shape: bf16[128,128], index: 5, kind: input, shape index: {}]
  %s6 = inlined_call_operand.vmem [shape: f32[1,128], index: 6, kind: input, shape index: {}]
  %s7 = inlined_call_operand.hbm [shape: bf16[384,384], index: 7, kind: input, shape index: {}]
  %s8 = inlined_call_operand.vmem [shape: f32[1,128], index: 8, kind: input, shape index: {}]
  %s9 = inlined_call_operand.hbm [shape: f32[2,8,8,128], index: 9, kind: output, shape index: {}]
  %s10 = sld [smem:[#allocation0]]
  $region89: #{tpu_custom_call.1} parent=0
    _
  %s12 = ssub.s32 1, %s10
  %s13 = scalar_select 0, %s12, %s10
  $region1: #{tpu_custom_call.1} parent=0
    #allocation3 [shape = 'u8[131072]{0}', space=vmem, size = 0x20000, scoped, tag = 'input window, operand 0']
    #allocation4 [shape = 's32[2]{0}', space=sflag, size = 0x8, scoped, tag = 'scoped memory for tpu_custom_call.1']
    #allocation5 [shape = 's32[2]{0}', space=sflag, size = 0x8, scoped, tag = 'scoped memory for tpu_custom_call.1']
    #allocation6 [shape = 'u8[294912]{0}', space=vmem, size = 0x48000, scoped, tag = 'input window, operand 1, single buffered']
    #allocation7 [shape = 's32[1]{0}', space=sflag, size = 0x4, scoped, tag = 'scoped memory for tpu_custom_call.1']
    #allocation8 [shape = 'u8[294912]{0}', space=vmem, size = 0x48000, scoped, tag = 'input window, operand 3, single buffered']
    #allocation9 [shape = 'u8[32768]{0}', space=vmem, size = 0x8000, scoped, tag = 'input window, operand 5, single buffered']
    #allocation10 [shape = 's32[1]{0}', space=sflag, size = 0x4, scoped, tag = 'scoped memory for tpu_custom_call.1']
    #allocation11 [shape = 'u8[294912]{0}', space=vmem, size = 0x48000, scoped, tag = 'input window, operand 7, single buffered']
    #allocation12 [shape = 'u8[65536]{0}', space=vmem, size = 0x10000, scoped, tag = 'output window, operand 0']
    %14 = vsyncpa [#allocation4], 0
    %s15 = scalar_lea.sflag [#allocation4], 1
    %16 = vsyncpa %s15, 0
    %17 = vsyncpa [#allocation7], 0
    %18 = vsyncpa [#allocation10], 0
    %19 = vsyncpa [#allocation5], 0
    %s20 = scalar_lea.sflag [#allocation5], 1
    %21 = vsyncpa %s20, 0
    loop: start=0, step=1, limit=4
    $region2: #{tpu_custom_call.1} parent=1 // loop_pre_header
      _
    $region3: #{tpu_custom_call.1} parent=1 // loop_header
      %s23 = sphi 0, %s27
      %p24 = scmp.ge.s32.totalorder %s23, 4
      %s33 = sphi 0, %s35
      %s36 = sphi 0, %s33
      %s37 = sphi 0, %s36
      %s53 = sphi 0, %s37
      %s57 = sphi 0, %s57
      %s59 = sphi 0, %s57
      %s60 = sphi 0, %s59
      %s74 = sphi 0, %s60
      %s78 = sphi 0, %s78
      %s80 = sphi 0, %s78
      %s81 = sphi 0, %s80
      %s95 = sphi 0, %s81
      %s99 = sphi 0, %s99
      %s101 = sphi 0, %s99
      %s102 = sphi 0, %s101
      %s116 = sphi 0, %s102
      %s120 = sphi 0, %s120
      %s122 = sphi 0, %s120
      %s123 = sphi 0, %s122
      %s137 = sphi 0, %s123
      %s141 = sphi 0, %s141
      %s143 = sphi 0, %s141
      %s144 = sphi 0, %s143
      %s158 = sphi 0, %s144
      %s162 = sphi 0, %s162
      %s164 = sphi 0, %s162
      %s165 = sphi 0, %s164
      %s179 = sphi 0, %s165
      %s183 = sphi 0, %s183
      %s185 = sphi 0, %s183
      %s186 = sphi 0, %s185
      %s200 = sphi 0, %s186
      %s204 = sphi 0, %s204
      %s206 = sphi 0, %s204
      %s207 = sphi 0, %s206
      %s221 = sphi 0, %s207
      %s227 = sphi 0, %s229
      %s230 = sphi 0, %s227
      %s231 = sphi 0, %s230
      %s247 = sphi 0, %s231
    $region4: #{tpu_custom_call.1} parent=1 // loop_header_branch
      %26 = sbr.rel (%p24) target = $region8
    $region5: #{tpu_custom_call.1} parent=1 // loop_body
      %s28 = ssub.s32 %s23, 1
      %s29 = ssub.s32 %s23, 2
      %s30 = sadd.s32 %s23, 1
      %s31 = ssub.s32 %s23, %s30
      %p32 = scmp.eq.s32.totalorder %s31, 0
      %s34 = sadd.s32 %s33, 1
      %s35 = scalar_select %p32, %s33, %s34
      %p38 = pneg %p32
      %p39 = scmp.eq.s32.totalorder %s23, 1
      %p40 = por %p38, %p39
      %p41 = scmp.ne.s32.totalorder %s33, %s36
      %p42 = scmp.eq.s32.totalorder %s23, 0
      %p43 = por %p41, %p42
      %p44 = scmp.ne.s32.totalorder %s33, %s36
      %p45 = scmp.eq.s32.totalorder %s28, 1
      %p46 = por %p44, %p45
      %p47 = scmp.ne.s32.totalorder %s36, %s37
      %p48 = scmp.eq.s32.totalorder %s28, 0
      %p49 = por %p47, %p48
      %p50 = scmp.ne.s32.totalorder %s36, %s37
      %p51 = scmp.eq.s32.totalorder %s29, 1
      %p52 = por %p50, %p51
      %p54 = scmp.ne.s32.totalorder %s37, %s53
      %p55 = scmp.eq.s32.totalorder %s29, 0
      %p56 = por %p54, %p55
      %s58 = sadd.s32 %s57, 1
      %p61 = scmp.eq.s32.totalorder %s23, 1
      %p62 = scmp.ne.s32.totalorder %s57, %s59
      %p63 = scmp.eq.s32.totalorder %s23, 0
      %p64 = por %p62, %p63
      %p65 = scmp.ne.s32.totalorder %s57, %s59
      %p66 = scmp.eq.s32.totalorder %s28, 1
      %p67 = por %p65, %p66
      %p68 = scmp.ne.s32.totalorder %s59, %s60
      %p69 = scmp.eq.s32.totalorder %s28, 0
      %p70 = por %p68, %p69
      %p71 = scmp.ne.s32.totalorder %s59, %s60
      %p72 = scmp.eq.s32.totalorder %s29, 1
      %p73 = por %p71, %p72
      %p75 = scmp.ne.s32.totalorder %s60, %s74
      %p76 = scmp.eq.s32.totalorder %s29, 0
      %p77 = por %p75, %p76
      %s79 = sadd.s32 %s78, 1
      %p82 = scmp.eq.s32.totalorder %s23, 1
      %p83 = scmp.ne.s32.totalorder %s78, %s80
      %p84 = scmp.eq.s32.totalorder %s23, 0
      %p85 = por %p83, %p84
      %p86 = scmp.ne.s32.totalorder %s78, %s80
      %p87 = scmp.eq.s32.totalorder %s28, 1
      %p88 = por %p86, %p87
      %p89 = scmp.ne.s32.totalorder %s80, %s81
      %p90 = scmp.eq.s32.totalorder %s28, 0
      %p91 = por %p89, %p90
      %p92 = scmp.ne.s32.totalorder %s80, %s81
      %p93 = scmp.eq.s32.totalorder %s29, 1
      %p94 = por %p92, %p93
      %p96 = scmp.ne.s32.totalorder %s81, %s95
      %p97 = scmp.eq.s32.totalorder %s29, 0
      %p98 = por %p96, %p97
      %s100 = sadd.s32 %s99, 1
      %p103 = scmp.eq.s32.totalorder %s23, 1
      %p104 = scmp.ne.s32.totalorder %s99, %s101
      %p105 = scmp.eq.s32.totalorder %s23, 0
      %p106 = por %p104, %p105
      %p107 = scmp.ne.s32.totalorder %s99, %s101
      %p108 = scmp.eq.s32.totalorder %s28, 1
      %p109 = por %p107, %p108
      %p110 = scmp.ne.s32.totalorder %s101, %s102
      %p111 = scmp.eq.s32.totalorder %s28, 0
      %p112 = por %p110, %p111
      %p113 = scmp.ne.s32.totalorder %s101, %s102
      %p114 = scmp.eq.s32.totalorder %s29, 1
      %p115 = por %p113, %p114
      %p117 = scmp.ne.s32.totalorder %s102, %s116
      %p118 = scmp.eq.s32.totalorder %s29, 0
      %p119 = por %p117, %p118
      %s121 = sadd.s32 %s120, 1
      %p124 = scmp.eq.s32.totalorder %s23, 1
      %p125 = scmp.ne.s32.totalorder %s120, %s122
      %p126 = scmp.eq.s32.totalorder %s23, 0
      %p127 = por %p125, %p126
      %p128 = scmp.ne.s32.totalorder %s120, %s122
      %p129 = scmp.eq.s32.totalorder %s28, 1
      %p130 = por %p128, %p129
      %p131 = scmp.ne.s32.totalorder %s122, %s123
      %p132 = scmp.eq.s32.totalorder %s28, 0
      %p133 = por %p131, %p132
      %p134 = scmp.ne.s32.totalorder %s122, %s123
      %p135 = scmp.eq.s32.totalorder %s29, 1
      %p136 = por %p134, %p135
      %p138 = scmp.ne.s32.totalorder %s123, %s137
      %p139 = scmp.eq.s32.totalorder %s29, 0
      %p140 = por %p138, %p139
      %s142 = sadd.s32 %s141, 1
      %p145 = scmp.eq.s32.totalorder %s23, 1
      %p146 = scmp.ne.s32.totalorder %s141, %s143
      %p147 = scmp.eq.s32.totalorder %s23, 0
      %p148 = por %p146, %p147
      %p149 = scmp.ne.s32.totalorder %s141, %s143
      %p150 = scmp.eq.s32.totalorder %s28, 1
      %p151 = por %p149, %p150
      %p152 = scmp.ne.s32.totalorder %s143, %s144
      %p153 = scmp.eq.s32.totalorder %s28, 0
      %p154 = por %p152, %p153
      %p155 = scmp.ne.s32.totalorder %s143, %s144
      %p156 = scmp.eq.s32.totalorder %s29, 1
      %p157 = por %p155, %p156
      %p159 = scmp.ne.s32.totalorder %s144, %s158
      %p160 = scmp.eq.s32.totalorder %s29, 0
      %p161 = por %p159, %p160
      %s163 = sadd.s32 %s162, 1
      %p166 = scmp.eq.s32.totalorder %s23, 1
      %p167 = scmp.ne.s32.totalorder %s162, %s164
      %p168 = scmp.eq.s32.totalorder %s23, 0
      %p169 = por %p167, %p168
      %p170 = scmp.ne.s32.totalorder %s162, %s164
      %p171 = scmp.eq.s32.totalorder %s28, 1
      %p172 = por %p170, %p171
      %p173 = scmp.ne.s32.totalorder %s164, %s165
      %p174 = scmp.eq.s32.totalorder %s28, 0
      %p175 = por %p173, %p174
      %p176 = scmp.ne.s32.totalorder %s164, %s165
      %p177 = scmp.eq.s32.totalorder %s29, 1
      %p178 = por %p176, %p177
      %p180 = scmp.ne.s32.totalorder %s165, %s179
      %p181 = scmp.eq.s32.totalorder %s29, 0
      %p182 = por %p180, %p181
      %s184 = sadd.s32 %s183, 1
      %p187 = scmp.eq.s32.totalorder %s23, 1
      %p188 = scmp.ne.s32.totalorder %s183, %s185
      %p189 = scmp.eq.s32.totalorder %s23, 0
      %p190 = por %p188, %p189
      %p191 = scmp.ne.s32.totalorder %s183, %s185
      %p192 = scmp.eq.s32.totalorder %s28, 1
      %p193 = por %p191, %p192
      %p194 = scmp.ne.s32.totalorder %s185, %s186
      %p195 = scmp.eq.s32.totalorder %s28, 0
      %p196 = por %p194, %p195
      %p197 = scmp.ne.s32.totalorder %s185, %s186
      %p198 = scmp.eq.s32.totalorder %s29, 1
      %p199 = por %p197, %p198
      %p201 = scmp.ne.s32.totalorder %s186, %s200
      %p202 = scmp.eq.s32.totalorder %s29, 0
      %p203 = por %p201, %p202
      %s205 = sadd.s32 %s204, 1
      %p208 = scmp.eq.s32.totalorder %s23, 1
      %p209 = scmp.ne.s32.totalorder %s204, %s206
      %p210 = scmp.eq.s32.totalorder %s23, 0
      %p211 = por %p209, %p210
      %p212 = scmp.ne.s32.totalorder %s204, %s206
      %p213 = scmp.eq.s32.totalorder %s28, 1
      %p214 = por %p212, %p213
      %p215 = scmp.ne.s32.totalorder %s206, %s207
      %p216 = scmp.eq.s32.totalorder %s28, 0
      %p217 = por %p215, %p216
      %p218 = scmp.ne.s32.totalorder %s206, %s207
      %p219 = scmp.eq.s32.totalorder %s29, 1
      %p220 = por %p218, %p219
      %p222 = scmp.ne.s32.totalorder %s207, %s221
      %p223 = scmp.eq.s32.totalorder %s29, 0
      %p224 = por %p222, %p223
      %s225 = ssub.s32 %s23, %s30
      %p226 = scmp.eq.s32.totalorder %s225, 0
      %s228 = sadd.s32 %s227, 1
      %s229 = scalar_select %p226, %s227, %s228
      %p232 = pneg %p226
      %p233 = scmp.eq.s32.totalorder %s23, 1
      %p234 = por %p232, %p233
      %p235 = scmp.ne.s32.totalorder %s227, %s230
      %p236 = scmp.eq.s32.totalorder %s23, 0
      %p237 = por %p235, %p236
      %p238 = scmp.ne.s32.totalorder %s227, %s230
      %p239 = scmp.eq.s32.totalorder %s28, 1
      %p240 = por %p238, %p239
      %p241 = scmp.ne.s32.totalorder %s230, %s231
      %p242 = scmp.eq.s32.totalorder %s28, 0
      %p243 = por %p241, %p242
      %p244 = scmp.ne.s32.totalorder %s230, %s231
      %p245 = scmp.eq.s32.totalorder %s29, 1
      %p246 = por %p244, %p245
      %p248 = scmp.ne.s32.totalorder %s231, %s247
      %p249 = scmp.eq.s32.totalorder %s29, 0
      %p250 = por %p248, %p249
      %p251 = scmp.le.s32.totalorder 1, %s23
      %p252 = scmp.lt.s32.totalorder %s23, 3
      %p253 = pnand %p251, %p252
      %p254 = pneg %p253
      // Predicated region
      $region9: #{tpu_custom_call.1} parent=5 // pred_check
        _
      $region10: #{tpu_custom_call.1} parent=5 // pred_check_branch
        %256 = sbr.rel (%p253) target = $region12
      $region11: #{tpu_custom_call.1} parent=5 // pred_region
        %s257 = ssub.s32 %s23, 1
        // Predicated region
        $region13: #{tpu_custom_call.1} parent=11 // pred_check
          %p258 = pneg %p70
        $region14: #{tpu_custom_call.1} parent=11 // pred_check_branch
          %260 = sbr.rel (%p258) target = $region16
        $region15: #{tpu_custom_call.1} parent=11 // pred_region
          %s262 = ssub.s32 9216, 9216
          %263 = vsyncadd [#allocation7], %s262
          %s264 = sshll.u32 [#allocation6], 4
          %s265 = int_to_ptr.vmem [resolvable:$true] %s264
          %270 = dma.hbm_to_vmem [thread:$0]  %s1, 9216, %s265, [#allocation7], 192, 192, 12
        $region16: #{tpu_custom_call.1} parent=11 // pred_fallthru
          _
        // Predicated region
        $region17: #{tpu_custom_call.1} parent=11 // pred_check
          %p271 = pneg %p91
        $region18: #{tpu_custom_call.1} parent=11 // pred_check_branch
          %273 = sbr.rel (%p271) target = $region20
        $region19: #{tpu_custom_call.1} parent=11 // pred_region
          _
        $region20: #{tpu_custom_call.1} parent=11 // pred_fallthru
          _
        // Predicated region
        $region21: #{tpu_custom_call.1} parent=11 // pred_check
          %p274 = pneg %p112
        $region22: #{tpu_custom_call.1} parent=11 // pred_check_branch
          %276 = sbr.rel (%p274) target = $region24
        $region23: #{tpu_custom_call.1} parent=11 // pred_region
          %s278 = ssub.s32 9216, 9216
          %279 = vsyncadd [#allocation7], %s278
          %s280 = sshll.u32 [#allocation8], 4
          %s281 = int_to_ptr.vmem [resolvable:$true] %s280
          %286 = dma.hbm_to_vmem [thread:$0]  %s3, 9216, %s281, [#allocation7], 192, 192, 12
        $region24: #{tpu_custom_call.1} parent=11 // pred_fallthru
          _
        // Predicated region
        $region25: #{tpu_custom_call.1} parent=11 // pred_check
          %p287 = pneg %p133
        $region26: #{tpu_custom_call.1} parent=11 // pred_check_branch
          %289 = sbr.rel (%p287) target = $region28
        $region27: #{tpu_custom_call.1} parent=11 // pred_region
          _
        $region28: #{tpu_custom_call.1} parent=11 // pred_fallthru
          _
        // Predicated region
        $region29: #{tpu_custom_call.1} parent=11 // pred_check
          %p290 = pneg %p154
        $region30: #{tpu_custom_call.1} parent=11 // pred_check_branch
          %292 = sbr.rel (%p290) target = $region32
        $region31: #{tpu_custom_call.1} parent=11 // pred_region
          %s294 = ssub.s32 1024, 1024
          %295 = vsyncadd [#allocation10], %s294
          %s296 = sshll.u32 [#allocation9], 4
          %s297 = int_to_ptr.vmem [resolvable:$true] %s296
          %302 = dma.hbm_to_vmem [thread:$0]  %s5, 1024, %s297, [#allocation10], 64, 64, 4
        $region32: #{tpu_custom_call.1} parent=11 // pred_fallthru
          _
        // Predicated region
        $region33: #{tpu_custom_call.1} parent=11 // pred_check
          %p303 = pneg %p175
        $region34: #{tpu_custom_call.1} parent=11 // pred_check_branch
          %305 = sbr.rel (%p303) target = $region36
        $region35: #{tpu_custom_call.1} parent=11 // pred_region
          _
        $region36: #{tpu_custom_call.1} parent=11 // pred_fallthru
          _
        // Predicated region
        $region37: #{tpu_custom_call.1} parent=11 // pred_check
          %p306 = pneg %p196
        $region38: #{tpu_custom_call.1} parent=11 // pred_check_branch
          %308 = sbr.rel (%p306) target = $region40
        $region39: #{tpu_custom_call.1} parent=11 // pred_region
          %s310 = ssub.s32 9216, 9216
          %311 = vsyncadd [#allocation10], %s310
          %s312 = sshll.u32 [#allocation11], 4
          %s313 = int_to_ptr.vmem [resolvable:$true] %s312
          %318 = dma.hbm_to_vmem [thread:$0]  %s7, 9216, %s313, [#allocation10], 192, 192, 12
        $region40: #{tpu_custom_call.1} parent=11 // pred_fallthru
          _
        // Predicated region
        $region41: #{tpu_custom_call.1} parent=11 // pred_check
          %p319 = pneg %p217
        $region42: #{tpu_custom_call.1} parent=11 // pred_check_branch
          %321 = sbr.rel (%p319) target = $region44
        $region43: #{tpu_custom_call.1} parent=11 // pred_region
          _
        $region44: #{tpu_custom_call.1} parent=11 // pred_fallthru
          _
      $region12: #{tpu_custom_call.1} parent=5 // pred_fallthru
        _
      %p322 = scmp.lt.s32.totalorder %s23, 2
      // Predicated region
      $region45: #{tpu_custom_call.1} parent=5 // pred_check
        %p323 = pneg %p322
      $region46: #{tpu_custom_call.1} parent=5 // pred_check_branch
        %325 = sbr.rel (%p323) target = $region48
      $region47: #{tpu_custom_call.1} parent=5 // pred_region
        // Predicated region
        $region49: #{tpu_custom_call.1} parent=47 // pred_check
          %p326 = pneg %p43
        $region50: #{tpu_custom_call.1} parent=47 // pred_check_branch
          %328 = sbr.rel (%p326) target = $region52
        $region51: #{tpu_custom_call.1} parent=47 // pred_region
          %s329 = sand.u32 %s33, 1
          %s330 = scalar_lea.sflag [#allocation4], %s329
          %s331 = sand.u32 %s33, 1
          %s332 = smul.addr %s331, 128
          %s333 = scalar_lea.vmem [#allocation3], %s332
          %s335 = ssub.s32 2048, 2048
          %336 = vsyncadd %s330, %s335
          %s337 = smul.addr %s23, 32
          %s338 = smul.addr %s337, 64
          %s339 = scalar_lea.hbm %s0, %s338
          %s340 = sshll.u32 %s333, 4
          %s341 = int_to_ptr.vmem [resolvable:$true] %s340
          %346 = dma.hbm_to_vmem [thread:$0]  %s339, 2048, %s341, %s330, 64, 64, 4
        $region52: #{tpu_custom_call.1} parent=47 // pred_fallthru
          _
      $region48: #{tpu_custom_call.1} parent=5 // pred_fallthru
        _
      %p347 = scmp.le.s32.totalorder 1, %s23
      %p348 = scmp.lt.s32.totalorder %s23, 3
      %p349 = pnand %p347, %p348
      %p350 = pneg %p349
      // Predicated region
      $region53: #{tpu_custom_call.1} parent=5 // pred_check
        _
      $region54: #{tpu_custom_call.1} parent=5 // pred_check_branch
        %352 = sbr.rel (%p349) target = $region56
      $region55: #{tpu_custom_call.1} parent=5 // pred_region
        %s353 = ssub.s32 %s23, 1
        %s354 = sand.u32 %s36, 1
        %s355 = scalar_lea.sflag [#allocation4], %s354
        %s356 = sand.u32 %s36, 1
        %s357 = smul.addr %s356, 128
        %s358 = scalar_lea.vmem [#allocation3], %s357
        // Predicated region
        $region57: #{tpu_custom_call.1} parent=55 // pred_check
          %p359 = pneg %p49
        $region58: #{tpu_custom_call.1} parent=55 // pred_check_branch
          %361 = sbr.rel (%p359) target = $region60
        $region59: #{tpu_custom_call.1} parent=55 // pred_region
          %362 = dma.done %s355, 2048
        $region60: #{tpu_custom_call.1} parent=55 // pred_fallthru
          _
        // Predicated region
        $region61: #{tpu_custom_call.1} parent=55 // pred_check
          %p363 = pneg %p70
        $region62: #{tpu_custom_call.1} parent=55 // pred_check_branch
          %365 = sbr.rel (%p363) target = $region64
        $region63: #{tpu_custom_call.1} parent=55 // pred_region
          %366 = dma.done [#allocation7], 9216
        $region64: #{tpu_custom_call.1} parent=55 // pred_fallthru
          _
        // Predicated region
        $region65: #{tpu_custom_call.1} parent=55 // pred_check
          %p367 = pneg %p112
        $region66: #{tpu_custom_call.1} parent=55 // pred_check_branch
          %369 = sbr.rel (%p367) target = $region68
        $region67: #{tpu_custom_call.1} parent=55 // pred_region
          %370 = dma.done [#allocation7], 9216
        $region68: #{tpu_custom_call.1} parent=55 // pred_fallthru
          _
        // Predicated region
        $region69: #{tpu_custom_call.1} parent=55 // pred_check
          %p371 = pneg %p154
        $region70: #{tpu_custom_call.1} parent=55 // pred_check_branch
          %373 = sbr.rel (%p371) target = $region72
        $region71: #{tpu_custom_call.1} parent=55 // pred_region
          %374 = dma.done [#allocation10], 1024
        $region72: #{tpu_custom_call.1} parent=55 // pred_fallthru
          _
        // Predicated region
        $region73: #{tpu_custom_call.1} parent=55 // pred_check
          %p375 = pneg %p196
        $region74: #{tpu_custom_call.1} parent=55 // pred_check_branch
          %377 = sbr.rel (%p375) target = $region76
        $region75: #{tpu_custom_call.1} parent=55 // pred_region
          %378 = dma.done [#allocation10], 9216
        $region76: #{tpu_custom_call.1} parent=55 // pred_fallthru
          _
        %s379 = sand.u32 %s36, 1
        %s380 = scalar_lea.sflag [#allocation4], %s379
        %s381 = sand.u32 %s36, 1
        %s382 = smul.addr %s381, 128
        %s383 = scalar_lea.vmem [#allocation3], %s382
        %p384 = pneg %p49
        %p385 = pneg %p46
        %p386 = pneg %p70
        %p387 = pneg %p67
        %p388 = pneg %p91
        %p389 = pneg %p88
        %p390 = pneg %p112
        %p391 = pneg %p109
        %p392 = pneg %p133
        %p393 = pneg %p130
        %p394 = pneg %p154
        %p395 = pneg %p151
        %p396 = pneg %p175
        %p397 = pneg %p172
        %p398 = pneg %p196
        %p399 = pneg %p193
        %p400 = pneg %p217
        %p401 = pneg %p214
        %p402 = pneg %p243
        %p403 = pneg %p240
        %s404 = sand.u32 %s230, 1
        %s405 = scalar_lea.sflag [#allocation5], %s404
        %s406 = sand.u32 %s230, 1
        %s407 = smul.addr %s406, 64
        %s408 = scalar_lea.vmem [#allocation12], %s407
        %410 = vst [vmem:[#allocation2] sm:$0xff] 0.0
        %411 = vst [vmem:[#allocation2 + $0x8] sm:$0xff] 0.0
        %412 = vst [vmem:[#allocation2 + $0x10] sm:$0xff] 0.0
        %413 = vst [vmem:[#allocation2 + $0x18] sm:$0xff] 0.0
        %414 = vst [vmem:[#allocation2 + $0x20] sm:$0xff] 0.0
        %415 = vst [vmem:[#allocation2 + $0x28] sm:$0xff] 0.0
        %416 = vst [vmem:[#allocation2 + $0x30] sm:$0xff] 0.0
        %417 = vst [vmem:[#allocation2 + $0x38] sm:$0xff] 0.0
        %418 = vst [vmem:[#allocation2 + $0x40] sm:$0xff] 0.0
        %419 = vst [vmem:[#allocation2 + $0x48] sm:$0xff] 0.0
        %420 = vst [vmem:[#allocation2 + $0x50] sm:$0xff] 0.0
        %421 = vst [vmem:[#allocation2 + $0x58] sm:$0xff] 0.0
        %422 = vst [vmem:[#allocation2 + $0x60] sm:$0xff] 0.0
        %423 = vst [vmem:[#allocation2 + $0x68] sm:$0xff] 0.0
        %424 = vst [vmem:[#allocation2 + $0x70] sm:$0xff] 0.0
        %425 = vst [vmem:[#allocation2 + $0x78] sm:$0xff] 0.0
        %426 = vst [vmem:[#allocation2 + $0x80] sm:$0xff] 0.0
        %427 = vst [vmem:[#allocation2 + $0x88] sm:$0xff] 0.0
        %428 = vst [vmem:[#allocation2 + $0x90] sm:$0xff] 0.0
        %429 = vst [vmem:[#allocation2 + $0x98] sm:$0xff] 0.0
        %430 = vst [vmem:[#allocation2 + $0xa0] sm:$0xff] 0.0
        %431 = vst [vmem:[#allocation2 + $0xa8] sm:$0xff] 0.0
        %432 = vst [vmem:[#allocation2 + $0xb0] sm:$0xff] 0.0
        %433 = vst [vmem:[#allocation2 + $0xb8] sm:$0xff] 0.0
        %434 = vst [vmem:[#allocation2 + $0xc0] sm:$0xff] 0.0
        %435 = vst [vmem:[#allocation2 + $0xc8] sm:$0xff] 0.0
        %436 = vst [vmem:[#allocation2 + $0xd0] sm:$0xff] 0.0
        %437 = vst [vmem:[#allocation2 + $0xd8] sm:$0xff] 0.0
        %438 = vst [vmem:[#allocation2 + $0xe0] sm:$0xff] 0.0
        %439 = vst [vmem:[#allocation2 + $0xe8] sm:$0xff] 0.0
        %440 = vst [vmem:[#allocation2 + $0xf0] sm:$0xff] 0.0
        %441 = vst [vmem:[#allocation2 + $0xf8] sm:$0xff] 0.0
        %442 = vst [vmem:[#allocation2 + $0x100] sm:$0xff] 0.0
        %443 = vst [vmem:[#allocation2 + $0x108] sm:$0xff] 0.0
        %444 = vst [vmem:[#allocation2 + $0x110] sm:$0xff] 0.0
        %445 = vst [vmem:[#allocation2 + $0x118] sm:$0xff] 0.0
        %446 = vst [vmem:[#allocation2 + $0x120] sm:$0xff] 0.0
        %447 = vst [vmem:[#allocation2 + $0x128] sm:$0xff] 0.0
        %448 = vst [vmem:[#allocation2 + $0x130] sm:$0xff] 0.0
        %449 = vst [vmem:[#allocation2 + $0x138] sm:$0xff] 0.0
        %450 = vst [vmem:[#allocation2 + $0x140] sm:$0xff] 0.0
        %451 = vst [vmem:[#allocation2 + $0x148] sm:$0xff] 0.0
        %452 = vst [vmem:[#allocation2 + $0x150] sm:$0xff] 0.0
        %453 = vst [vmem:[#allocation2 + $0x158] sm:$0xff] 0.0
        %454 = vst [vmem:[#allocation2 + $0x160] sm:$0xff] 0.0
        %455 = vst [vmem:[#allocation2 + $0x168] sm:$0xff] 0.0
        %456 = vst [vmem:[#allocation2 + $0x170] sm:$0xff] 0.0
        %457 = vst [vmem:[#allocation2 + $0x178] sm:$0xff] 0.0
        %458 = vst [vmem:[#allocation2 + $0x180] sm:$0xff] 0.0
        %459 = vst [vmem:[#allocation2 + $0x188] sm:$0xff] 0.0
        %460 = vst [vmem:[#allocation2 + $0x190] sm:$0xff] 0.0
        %461 = vst [vmem:[#allocation2 + $0x198] sm:$0xff] 0.0
        %462 = vst [vmem:[#allocation2 + $0x1a0] sm:$0xff] 0.0
        %463 = vst [vmem:[#allocation2 + $0x1a8] sm:$0xff] 0.0
        %v464 = vld [vmem:[%s358] sm:$0xf]
        %v465 = vld [vmem:[%s358 + $0x4] sm:$0xf]
        %v466 = vld [vmem:[%s358 + $0x8] sm:$0xf]
        %v467 = vld [vmem:[%s358 + $0xc] sm:$0xf]
        %v468 = vld [vmem:[%s358 + $0x10] sm:$0xf]
        %v469 = vld [vmem:[%s358 + $0x14] sm:$0xf]
        %v470 = vld [vmem:[%s358 + $0x18] sm:$0xf]
        %v471 = vld [vmem:[%s358 + $0x1c] sm:$0xf]
        %v472 = vld [vmem:[%s358 + $0x20] sm:$0xf]
        %v473 = vld [vmem:[%s358 + $0x24] sm:$0xf]
        %v474 = vld [vmem:[%s358 + $0x28] sm:$0xf]
        %v475 = vld [vmem:[%s358 + $0x2c] sm:$0xf]
        %v476 = vld [vmem:[%s358 + $0x30] sm:$0xf]
        %v477 = vld [vmem:[%s358 + $0x34] sm:$0xf]
        %v478 = vld [vmem:[%s358 + $0x38] sm:$0xf]
        %v479 = vld [vmem:[%s358 + $0x3c] sm:$0xf]
        %v480 = vld [vmem:[%s358 + $0x40] sm:$0xf]
        %v481 = vld [vmem:[%s358 + $0x44] sm:$0xf]
        %v482 = vld [vmem:[%s358 + $0x48] sm:$0xf]
        %v483 = vld [vmem:[%s358 + $0x4c] sm:$0xf]
        %v484 = vld [vmem:[%s358 + $0x50] sm:$0xf]
        %v485 = vld [vmem:[%s358 + $0x54] sm:$0xf]
        %v486 = vld [vmem:[%s358 + $0x58] sm:$0xf]
        %v487 = vld [vmem:[%s358 + $0x5c] sm:$0xf]
        %v488 = vld [vmem:[%s358 + $0x60] sm:$0xf]
        %v489 = vld [vmem:[%s358 + $0x64] sm:$0xf]
        %v490 = vld [vmem:[%s358 + $0x68] sm:$0xf]
        %v491 = vld [vmem:[%s358 + $0x6c] sm:$0xf]
        %v492 = vld [vmem:[%s358 + $0x70] sm:$0xf]
        %v493 = vld [vmem:[%s358 + $0x74] sm:$0xf]
        %v494 = vld [vmem:[%s358 + $0x78] sm:$0xf]
        %v495 = vld [vmem:[%s358 + $0x7c] sm:$0xf]
        %v496 = vunpack.c.l.bf16 %v464
        %v497 = vunpack.c.l.bf16 %v465
        %v498 = vunpack.c.l.bf16 %v466
        %v499 = vunpack.c.l.bf16 %v467
        %v500 = vunpack.c.l.bf16 %v468
        %v501 = vunpack.c.l.bf16 %v469
        %v502 = vunpack.c.l.bf16 %v470
        %v503 = vunpack.c.l.bf16 %v471
        %v504 = vunpack.c.l.bf16 %v472
        %v505 = vunpack.c.l.bf16 %v473
        %v506 = vunpack.c.l.bf16 %v474
        %v507 = vunpack.c.l.bf16 %v475
        %v508 = vunpack.c.l.bf16 %v476
        %v509 = vunpack.c.l.bf16 %v477
        %v510 = vunpack.c.l.bf16 %v478
        %v511 = vunpack.c.l.bf16 %v479
        %v512 = vunpack.c.l.bf16 %v480
        %v513 = vunpack.c.l.bf16 %v481
        %v514 = vunpack.c.l.bf16 %v482
        %v515 = vunpack.c.l.bf16 %v483
        %v516 = vunpack.c.l.bf16 %v484
        %v517 = vunpack.c.l.bf16 %v485
        %v518 = vunpack.c.l.bf16 %v486
        %v519 = vunpack.c.l.bf16 %v487
        %v520 = vunpack.c.l.bf16 %v488
        %v521 = vunpack.c.l.bf16 %v489
        %v522 = vunpack.c.l.bf16 %v490
        %v523 = vunpack.c.l.bf16 %v491
        %v524 = vunpack.c.l.bf16 %v492
        %v525 = vunpack.c.l.bf16 %v493
        %v526 = vunpack.c.l.bf16 %v494
        %v527 = vunpack.c.l.bf16 %v495
        %s528 = scalar_lea.vmem [#allocation2], 24
        %529 = vst [vmem:[%s528 + $0x1] sm:$0xff] %v496
        %530 = vst [vmem:[%s528 + $0x9] sm:$0xff] %v497
        %531 = vst [vmem:[%s528 + $0x19] sm:$0xff] %v498
        %532 = vst [vmem:[%s528 + $0x21] sm:$0xff] %v499
        %533 = vst [vmem:[%s528 + $0x31] sm:$0xff] %v500
        %534 = vst [vmem:[%s528 + $0x39] sm:$0xff] %v501
        %535 = vst [vmem:[%s528 + $0x49] sm:$0xff] %v502
        %536 = vst [vmem:[%s528 + $0x51] sm:$0xff] %v503
        %537 = vst [vmem:[%s528 + $0x61] sm:$0xff] %v504
        %538 = vst [vmem:[%s528 + $0x69] sm:$0xff] %v505
        %539 = vst [vmem:[%s528 + $0x79] sm:$0xff] %v506
        %540 = vst [vmem:[%s528 + $0x81] sm:$0xff] %v507
        %541 = vst [vmem:[%s528 + $0x91] sm:$0xff] %v508
        %542 = vst [vmem:[%s528 + $0x99] sm:$0xff] %v509
        %543 = vst [vmem:[%s528 + $0xa9] sm:$0xff] %v510
        %544 = vst [vmem:[%s528 + $0xb1] sm:$0xff] %v511
        %545 = vst [vmem:[%s528 + $0xc1] sm:$0xff] %v512
        %546 = vst [vmem:[%s528 + $0xc9] sm:$0xff] %v513
        %547 = vst [vmem:[%s528 + $0xd9] sm:$0xff] %v514
        %548 = vst [vmem:[%s528 + $0xe1] sm:$0xff] %v515
        %549 = vst [vmem:[%s528 + $0xf1] sm:$0xff] %v516
        %550 = vst [vmem:[%s528 + $0xf9] sm:$0xff] %v517
        %551 = vst [vmem:[%s528 + $0x109] sm:$0xff] %v518
        %552 = vst [vmem:[%s528 + $0x111] sm:$0xff] %v519
        %553 = vst [vmem:[%s528 + $0x121] sm:$0xff] %v520
        %554 = vst [vmem:[%s528 + $0x129] sm:$0xff] %v521
        %555 = vst [vmem:[%s528 + $0x139] sm:$0xff] %v522
        %556 = vst [vmem:[%s528 + $0x141] sm:$0xff] %v523
        %557 = vst [vmem:[%s528 + $0x151] sm:$0xff] %v524
        %558 = vst [vmem:[%s528 + $0x159] sm:$0xff] %v525
        %559 = vst [vmem:[%s528 + $0x169] sm:$0xff] %v526
        %560 = vst [vmem:[%s528 + $0x171] sm:$0xff] %v527
        %v561 = vld [vmem:[#allocation2] sm:$0xff]
        %v562 = vld [vmem:[#allocation2 + $0x8] sm:$0xff]
        %v563 = vld [vmem:[#allocation2 + $0x10] sm:$0xff]
        %v564 = vld [vmem:[#allocation2 + $0x18] sm:$0xff]
        %v565 = vld [vmem:[#allocation2 + $0x20] sm:$0xff]
        %v566 = vld [vmem:[#allocation2 + $0x28] sm:$0xff]
        %v567 = vld [vmem:[#allocation2 + $0x30] sm:$0xff]
        %v568 = vld [vmem:[#allocation2 + $0x38] sm:$0xff]
        %v569 = vld [vmem:[#allocation2 + $0x40] sm:$0xff]
        %v570 = vld [vmem:[#allocation2 + $0x48] sm:$0xff]
        %v571 = vld [vmem:[#allocation2 + $0x50] sm:$0xff]
        %v572 = vld [vmem:[#allocation2 + $0x58] sm:$0xff]
        %v573 = vld [vmem:[#allocation2 + $0x60] sm:$0xff]
        %v574 = vld [vmem:[#allocation2 + $0x68] sm:$0xff]
        %v575 = vld [vmem:[#allocation2 + $0x70] sm:$0xff]
        %v576 = vld [vmem:[#allocation2 + $0x78] sm:$0xff]
        %v577 = vld [vmem:[#allocation2 + $0x80] sm:$0xff]
        %v578 = vld [vmem:[#allocation2 + $0x88] sm:$0xff]
        %v579 = vld [vmem:[#allocation2 + $0x90] sm:$0xff]
        %v580 = vld [vmem:[#allocation2 + $0x98] sm:$0xff]
        %v581 = vld [vmem:[#allocation2 + $0xa0] sm:$0xff]
        %v582 = vld [vmem:[#allocation2 + $0xa8] sm:$0xff]
        %v583 = vld [vmem:[#allocation2 + $0xb0] sm:$0xff]
        %v584 = vld [vmem:[#allocation2 + $0xb8] sm:$0xff]
        %v585 = vld [vmem:[#allocation2 + $0xc0] sm:$0xff]
        %v586 = vld [vmem:[#allocation2 + $0xc8] sm:$0xff]
        %v587 = vld [vmem:[#allocation2 + $0xd0] sm:$0xff]
        %v588 = vld [vmem:[#allocation2 + $0xd8] sm:$0xff]
        %v589 = vld [vmem:[#allocation2 + $0xe0] sm:$0xff]
        %v590 = vld [vmem:[#allocation2 + $0xe8] sm:$0xff]
        %v591 = vld [vmem:[#allocation2 + $0xf0] sm:$0xff]
        %v592 = vld [vmem:[#allocation2 + $0xf8] sm:$0xff]
        %v593 = vld [vmem:[#allocation2 + $0x100] sm:$0xff]
        %v594 = vld [vmem:[#allocation2 + $0x108] sm:$0xff]
        %v595 = vld [vmem:[#allocation2 + $0x110] sm:$0xff]
        %v596 = vld [vmem:[#allocation2 + $0x118] sm:$0xff]
        %v597 = vld [vmem:[#allocation2 + $0x120] sm:$0xff]
        %v598 = vld [vmem:[#allocation2 + $0x128] sm:$0xff]
        %v599 = vld [vmem:[#allocation2 + $0x130] sm:$0xff]
        %v600 = vld [vmem:[#allocation2 + $0x138] sm:$0xff]
        %v601 = vld [vmem:[#allocation2 + $0x140] sm:$0xff]
        %v602 = vld [vmem:[#allocation2 + $0x148] sm:$0xff]
        %v603 = vld [vmem:[#allocation2 + $0x150] sm:$0xff]
        %v604 = vld [vmem:[#allocation2 + $0x158] sm:$0xff]
        %v605 = vld [vmem:[#allocation2 + $0x160] sm:$0xff]
        %v606 = vld [vmem:[#allocation2 + $0x168] sm:$0xff]
        %v607 = vld [vmem:[#allocation2 + $0x170] sm:$0xff]
        %v608 = vld [vmem:[#allocation2 + $0x178] sm:$0xff]
        %v609 = vpack.c.bf16 %v562, %v561
        %v610 = vpack.c.bf16 %v564, %v563
        %v611 = vpack.c.bf16 %v566, %v565
        %v612 = vpack.c.bf16 %v568, %v567
        %v613 = vpack.c.bf16 %v570, %v569
        %v614 = vpack.c.bf16 %v572, %v571
        %v615 = vpack.c.bf16 %v574, %v573
        %v616 = vpack.c.bf16 %v576, %v575
        %v617 = vpack.c.bf16 %v578, %v577
        %v618 = vpack.c.bf16 %v580, %v579
        %v619 = vpack.c.bf16 %v582, %v581
        %v620 = vpack.c.bf16 %v584, %v583
        %v621 = vpack.c.bf16 %v586, %v585
        %v622 = vpack.c.bf16 %v588, %v587
        %v623 = vpack.c.bf16 %v590, %v589
        %v624 = vpack.c.bf16 %v592, %v591
        %v625 = vpack.c.bf16 %v594, %v593
        %v626 = vpack.c.bf16 %v596, %v595
        %v627 = vpack.c.bf16 %v598, %v597
        %v628 = vpack.c.bf16 %v600, %v599
        %v629 = vpack.c.bf16 %v602, %v601
        %v630 = vpack.c.bf16 %v604, %v603
        %v631 = vpack.c.bf16 %v606, %v605
        %v632 = vpack.c.bf16 %v608, %v607
        %v633 = vld [vmem:[%s528] sm:$0xff]
        %v634 = vld [vmem:[%s528 + $0x8] sm:$0xff]
        %v635 = vld [vmem:[%s528 + $0x10] sm:$0xff]
        %v636 = vld [vmem:[%s528 + $0x18] sm:$0xff]
        %v637 = vld [vmem:[%s528 + $0x20] sm:$0xff]
        %v638 = vld [vmem:[%s528 + $0x28] sm:$0xff]
        %v639 = vld [vmem:[%s528 + $0x30] sm:$0xff]
        %v640 = vld [vmem:[%s528 + $0x38] sm:$0xff]
        %v641 = vld [vmem:[%s528 + $0x40] sm:$0xff]
        %v642 = vld [vmem:[%s528 + $0x48] sm:$0xff]
        %v643 = vld [vmem:[%s528 + $0x50] sm:$0xff]
        %v644 = vld [vmem:[%s528 + $0x58] sm:$0xff]
        %v645 = vld [vmem:[%s528 + $0x60] sm:$0xff]
        %v646 = vld [vmem:[%s528 + $0x68] sm:$0xff]
        %v647 = vld [vmem:[%s528 + $0x70] sm:$0xff]
        %v648 = vld [vmem:[%s528 + $0x78] sm:$0xff]
        %v649 = vld [vmem:[%s528 + $0x80] sm:$0xff]
        %v650 = vld [vmem:[%s528 + $0x88] sm:$0xff]
        %v651 = vld [vmem:[%s528 + $0x90] sm:$0xff]
        %v652 = vld [vmem:[%s528 + $0x98] sm:$0xff]
        %v653 = vld [vmem:[%s528 + $0xa0] sm:$0xff]
        %v654 = vld [vmem:[%s528 + $0xa8] sm:$0xff]
        %v655 = vld [vmem:[%s528 + $0xb0] sm:$0xff]
        %v656 = vld [vmem:[%s528 + $0xb8] sm:$0xff]
        %v657 = vld [vmem:[%s528 + $0xc0] sm:$0xff]
        %v658 = vld [vmem:[%s528 + $0xc8] sm:$0xff]
        %v659 = vld [vmem:[%s528 + $0xd0] sm:$0xff]
        %v660 = vld [vmem:[%s528 + $0xd8] sm:$0xff]
        %v661 = vld [vmem:[%s528 + $0xe0] sm:$0xff]
        %v662 = vld [vmem:[%s528 + $0xe8] sm:$0xff]
        %v663 = vld [vmem:[%s528 + $0xf0] sm:$0xff]
        %v664 = vld [vmem:[%s528 + $0xf8] sm:$0xff]
        %v665 = vld [vmem:[%s528 + $0x100] sm:$0xff]
        %v666 = vld [vmem:[%s528 + $0x108] sm:$0xff]
        %v667 = vld [vmem:[%s528 + $0x110] sm:$0xff]
        %v668 = vld [vmem:[%s528 + $0x118] sm:$0xff]
        %v669 = vld [vmem:[%s528 + $0x120] sm:$0xff]
        %v670 = vld [vmem:[%s528 + $0x128] sm:$0xff]
        %v671 = vld [vmem:[%s528 + $0x130] sm:$0xff]
        %v672 = vld [vmem:[%s528 + $0x138] sm:$0xff]
        %v673 = vld [vmem:[%s528 + $0x140] sm:$0xff]
        %v674 = vld [vmem:[%s528 + $0x148] sm:$0xff]
        %v675 = vld [vmem:[%s528 + $0x150] sm:$0xff]
        %v676 = vld [vmem:[%s528 + $0x158] sm:$0xff]
        %v677 = vld [vmem:[%s528 + $0x160] sm:$0xff]
        %v678 = vld [vmem:[%s528 + $0x168] sm:$0xff]
        %v679 = vld [vmem:[%s528 + $0x170] sm:$0xff]
        %v680 = vld [vmem:[%s528 + $0x178] sm:$0xff]
        %v681 = vpack.c.bf16 %v634, %v633
        %v682 = vpack.c.bf16 %v636, %v635
        %v683 = vpack.c.bf16 %v638, %v637
        %v684 = vpack.c.bf16 %v640, %v639
        %v685 = vpack.c.bf16 %v642, %v641
        %v686 = vpack.c.bf16 %v644, %v643
        %v687 = vpack.c.bf16 %v646, %v645
        %v688 = vpack.c.bf16 %v648, %v647
        %v689 = vpack.c.bf16 %v650, %v649
        %v690 = vpack.c.bf16 %v652, %v651
        %v691 = vpack.c.bf16 %v654, %v653
        %v692 = vpack.c.bf16 %v656, %v655
        %v693 = vpack.c.bf16 %v658, %v657
        %v694 = vpack.c.bf16 %v660, %v659
        %v695 = vpack.c.bf16 %v662, %v661
        %v696 = vpack.c.bf16 %v664, %v663
        %v697 = vpack.c.bf16 %v666, %v665
        %v698 = vpack.c.bf16 %v668, %v667
        %v699 = vpack.c.bf16 %v670, %v669
        %v700 = vpack.c.bf16 %v672, %v671
        %v701 = vpack.c.bf16 %v674, %v673
        %v702 = vpack.c.bf16 %v676, %v675
        %v703 = vpack.c.bf16 %v678, %v677
        %v704 = vpack.c.bf16 %v680, %v679
        %s705 = scalar_lea.vmem [#allocation2], 48
        %v706 = vld [vmem:[%s705] sm:$0xff]
        %v707 = vld [vmem:[%s705 + $0x8] sm:$0xff]
        %v708 = vld [vmem:[%s705 + $0x10] sm:$0xff]
        %v709 = vld [vmem:[%s705 + $0x18] sm:$0xff]
        %v710 = vld [vmem:[%s705 + $0x20] sm:$0xff]
        %v711 = vld [vmem:[%s705 + $0x28] sm:$0xff]
        %v712 = vld [vmem:[%s705 + $0x30] sm:$0xff]
        %v713 = vld [vmem:[%s705 + $0x38] sm:$0xff]
        %v714 = vld [vmem:[%s705 + $0x40] sm:$0xff]
        %v715 = vld [vmem:[%s705 + $0x48] sm:$0xff]
        %v716 = vld [vmem:[%s705 + $0x50] sm:$0xff]
        %v717 = vld [vmem:[%s705 + $0x58] sm:$0xff]
        %v718 = vld [vmem:[%s705 + $0x60] sm:$0xff]
        %v719 = vld [vmem:[%s705 + $0x68] sm:$0xff]
        %v720 = vld [vmem:[%s705 + $0x70] sm:$0xff]
        %v721 = vld [vmem:[%s705 + $0x78] sm:$0xff]
        %v722 = vld [vmem:[%s705 + $0x80] sm:$0xff]
        %v723 = vld [vmem:[%s705 + $0x88] sm:$0xff]
        %v724 = vld [vmem:[%s705 + $0x90] sm:$0xff]
        %v725 = vld [vmem:[%s705 + $0x98] sm:$0xff]
        %v726 = vld [vmem:[%s705 + $0xa0] sm:$0xff]
        %v727 = vld [vmem:[%s705 + $0xa8] sm:$0xff]
        %v728 = vld [vmem:[%s705 + $0xb0] sm:$0xff]
        %v729 = vld [vmem:[%s705 + $0xb8] sm:$0xff]
        %v730 = vld [vmem:[%s705 + $0xc0] sm:$0xff]
        %v731 = vld [vmem:[%s705 + $0xc8] sm:$0xff]
        %v732 = vld [vmem:[%s705 + $0xd0] sm:$0xff]
        %v733 = vld [vmem:[%s705 + $0xd8] sm:$0xff]
        %v734 = vld [vmem:[%s705 + $0xe0] sm:$0xff]
        %v735 = vld [vmem:[%s705 + $0xe8] sm:$0xff]
        %v736 = vld [vmem:[%s705 + $0xf0] sm:$0xff]
        %v737 = vld [vmem:[%s705 + $0xf8] sm:$0xff]
        %v738 = vld [vmem:[%s705 + $0x100] sm:$0xff]
        %v739 = vld [vmem:[%s705 + $0x108] sm:$0xff]
        %v740 = vld [vmem:[%s705 + $0x110] sm:$0xff]
        %v741 = vld [vmem:[%s705 + $0x118] sm:$0xff]
        %v742 = vld [vmem:[%s705 + $0x120] sm:$0xff]
        %v743 = vld [vmem:[%s705 + $0x128] sm:$0xff]
        %v744 = vld [vmem:[%s705 + $0x130] sm:$0xff]
        %v745 = vld [vmem:[%s705 + $0x138] sm:$0xff]
        %v746 = vld [vmem:[%s705 + $0x140] sm:$0xff]
        %v747 = vld [vmem:[%s705 + $0x148] sm:$0xff]
        %v748 = vld [vmem:[%s705 + $0x150] sm:$0xff]
        %v749 = vld [vmem:[%s705 + $0x158] sm:$0xff]
        %v750 = vld [vmem:[%s705 + $0x160] sm:$0xff]
        %v751 = vld [vmem:[%s705 + $0x168] sm:$0xff]
        %v752 = vld [vmem:[%s705 + $0x170] sm:$0xff]
        %v753 = vld [vmem:[%s705 + $0x178] sm:$0xff]
        %v754 = vpack.c.bf16 %v707, %v706
        %v755 = vpack.c.bf16 %v709, %v708
        %v756 = vpack.c.bf16 %v711, %v710
        %v757 = vpack.c.bf16 %v713, %v712
        %v758 = vpack.c.bf16 %v715, %v714
        %v759 = vpack.c.bf16 %v717, %v716
        %v760 = vpack.c.bf16 %v719, %v718
        %v761 = vpack.c.bf16 %v721, %v720
        %v762 = vpack.c.bf16 %v723, %v722
        %v763 = vpack.c.bf16 %v725, %v724
        %v764 = vpack.c.bf16 %v727, %v726
        %v765 = vpack.c.bf16 %v729, %v728
        %v766 = vpack.c.bf16 %v731, %v730
        %v767 = vpack.c.bf16 %v733, %v732
        %v768 = vpack.c.bf16 %v735, %v734
        %v769 = vpack.c.bf16 %v737, %v736
        %v770 = vpack.c.bf16 %v739, %v738
        %v771 = vpack.c.bf16 %v741, %v740
        %v772 = vpack.c.bf16 %v743, %v742
        %v773 = vpack.c.bf16 %v745, %v744
        %v774 = vpack.c.bf16 %v747, %v746
        %v775 = vpack.c.bf16 %v749, %v748
        %v776 = vpack.c.bf16 %v751, %v750
        %v777 = vpack.c.bf16 %v753, %v752
        %v778 = vld [vmem:[#allocation6] sm:$0xff]
        %v779 = vld [vmem:[#allocation6 + $0x8] sm:$0xf]
        %v780 = vld [vmem:[#allocation6 + $0xc] sm:$0xff]
        %v781 = vld [vmem:[#allocation6 + $0x14] sm:$0xf]
        %v782 = vld [vmem:[#allocation6 + $0x18] sm:$0xff]
        %v783 = vld [vmem:[#allocation6 + $0x20] sm:$0xf]
        %v784 = vld [vmem:[#allocation6 + $0x24] sm:$0xff]
        %v785 = vld [vmem:[#allocation6 + $0x2c] sm:$0xf]
        %v786 = vld [vmem:[#allocation6 + $0x30] sm:$0xff]
        %v787 = vld [vmem:[#allocation6 + $0x38] sm:$0xf]
        %v788 = vld [vmem:[#allocation6 + $0x3c] sm:$0xff]
        %v789 = vld [vmem:[#allocation6 + $0x44] sm:$0xf]
        %v790 = vld [vmem:[#allocation6 + $0x48] sm:$0xff]
        %v791 = vld [vmem:[#allocation6 + $0x50] sm:$0xf]
        %v792 = vld [vmem:[#allocation6 + $0x54] sm:$0xff]
        %v793 = vld [vmem:[#allocation6 + $0x5c] sm:$0xf]
        %v794 = vld [vmem:[#allocation6 + $0x60] sm:$0xff]
        %v795 = vld [vmem:[#allocation6 + $0x68] sm:$0xf]
        %v796 = vld [vmem:[#allocation6 + $0x6c] sm:$0xff]
        %v797 = vld [vmem:[#allocation6 + $0x74] sm:$0xf]
        %v798 = vld [vmem:[#allocation6 + $0x78] sm:$0xff]
        %v799 = vld [vmem:[#allocation6 + $0x80] sm:$0xf]
        %v800 = vld [vmem:[#allocation6 + $0x84] sm:$0xff]
        %v801 = vld [vmem:[#allocation6 + $0x8c] sm:$0xf]
        %v802 = vld [vmem:[#allocation6 + $0x90] sm:$0xff]
        %v803 = vld [vmem:[#allocation6 + $0x98] sm:$0xf]
        %v804 = vld [vmem:[#allocation6 + $0x9c] sm:$0xff]
        %v805 = vld [vmem:[#allocation6 + $0xa4] sm:$0xf]
        %v806 = vld [vmem:[#allocation6 + $0xa8] sm:$0xff]
        %v807 = vld [vmem:[#allocation6 + $0xb0] sm:$0xf]
        %v808 = vld [vmem:[#allocation6 + $0xb4] sm:$0xff]
        %v809 = vld [vmem:[#allocation6 + $0xbc] sm:$0xf]
        %v810 = vld [vmem:[#allocation6 + $0xc0] sm:$0xff]
        %v811 = vld [vmem:[#allocation6 + $0xc8] sm:$0xf]
        %v812 = vld [vmem:[#allocation6 + $0xcc] sm:$0xff]
        %v813 = vld [vmem:[#allocation6 + $0xd4] sm:$0xf]
        %v814 = vld [vmem:[#allocation6 + $0xd8] sm:$0xff]
        %v815 = vld [vmem:[#allocation6 + $0xe0] sm:$0xf]
        %v816 = vld [vmem:[#allocation6 + $0xe4] sm:$0xff]
        %v817 = vld [vmem:[#allocation6 + $0xec] sm:$0xf]
        %v818 = vld [vmem:[#allocation6 + $0xf0] sm:$0xff]
        %v819 = vld [vmem:[#allocation6 + $0xf8] sm:$0xf]
        %v820 = vld [vmem:[#allocation6 + $0xfc] sm:$0xff]
        %v821 = vld [vmem:[#allocation6 + $0x104] sm:$0xf]
        %v822 = vld [vmem:[#allocation6 + $0x108] sm:$0xff]
        %v823 = vld [vmem:[#allocation6 + $0x110] sm:$0xf]
        %v824 = vld [vmem:[#allocation6 + $0x114] sm:$0xff]
        %v825 = vld [vmem:[#allocation6 + $0x11c] sm:$0xf]
        %v826 = vld [vmem:[#allocation6 + $0x120] sm:$0xff]
        %v827 = vld [vmem:[#allocation6 + $0x128] sm:$0xf]
        %v828 = vld [vmem:[#allocation6 + $0x12c] sm:$0xff]
        %v829 = vld [vmem:[#allocation6 + $0x134] sm:$0xf]
        %v830 = vld [vmem:[#allocation6 + $0x138] sm:$0xff]
        %v831 = vld [vmem:[#allocation6 + $0x140] sm:$0xf]
        %v832 = vld [vmem:[#allocation6 + $0x144] sm:$0xff]
        %v833 = vld [vmem:[#allocation6 + $0x14c] sm:$0xf]
        %v834 = vld [vmem:[#allocation6 + $0x150] sm:$0xff]
        %v835 = vld [vmem:[#allocation6 + $0x158] sm:$0xf]
        %v836 = vld [vmem:[#allocation6 + $0x15c] sm:$0xff]
        %v837 = vld [vmem:[#allocation6 + $0x164] sm:$0xf]
        %v838 = vld [vmem:[#allocation6 + $0x168] sm:$0xff]
        %v839 = vld [vmem:[#allocation6 + $0x170] sm:$0xf]
        %v840 = vld [vmem:[#allocation6 + $0x174] sm:$0xff]
        %v841 = vld [vmem:[#allocation6 + $0x17c] sm:$0xf]
        %v842 = vld [vmem:[#allocation6 + $0x180] sm:$0xff]
        %v843 = vld [vmem:[#allocation6 + $0x188] sm:$0xf]
        %v844 = vld [vmem:[#allocation6 + $0x18c] sm:$0xff]
        %v845 = vld [vmem:[#allocation6 + $0x194] sm:$0xf]
        %v846 = vld [vmem:[#allocation6 + $0x198] sm:$0xff]
        %v847 = vld [vmem:[#allocation6 + $0x1a0] sm:$0xf]
        %v848 = vld [vmem:[#allocation6 + $0x1a4] sm:$0xff]
        %v849 = vld [vmem:[#allocation6 + $0x1ac] sm:$0xf]
        %v850 = vld [vmem:[#allocation6 + $0x1b0] sm:$0xff]
        %v851 = vld [vmem:[#allocation6 + $0x1b8] sm:$0xf]
        %v852 = vld [vmem:[#allocation6 + $0x1bc] sm:$0xff]
        %v853 = vld [vmem:[#allocation6 + $0x1c4] sm:$0xf]
        %v854 = vld [vmem:[#allocation6 + $0x1c8] sm:$0xff]
        %v855 = vld [vmem:[#allocation6 + $0x1d0] sm:$0xf]
        %v856 = vld [vmem:[#allocation6 + $0x1d4] sm:$0xff]
        %v857 = vld [vmem:[#allocation6 + $0x1dc] sm:$0xf]
        %v858 = vld [vmem:[#allocation6 + $0x1e0] sm:$0xff]
        %v859 = vld [vmem:[#allocation6 + $0x1e8] sm:$0xf]
        %v860 = vld [vmem:[#allocation6 + $0x1ec] sm:$0xff]
        %v861 = vld [vmem:[#allocation6 + $0x1f4] sm:$0xf]
        %v862 = vld [vmem:[#allocation6 + $0x1f8] sm:$0xff]
        %v863 = vld [vmem:[#allocation6 + $0x200] sm:$0xf]
        %v864 = vld [vmem:[#allocation6 + $0x204] sm:$0xff]
        %v865 = vld [vmem:[#allocation6 + $0x20c] sm:$0xf]
        %v866 = vld [vmem:[#allocation6 + $0x210] sm:$0xff]
        %v867 = vld [vmem:[#allocation6 + $0x218] sm:$0xf]
        %v868 = vld [vmem:[#allocation6 + $0x21c] sm:$0xff]
        %v869 = vld [vmem:[#allocation6 + $0x224] sm:$0xf]
        %v870 = vld [vmem:[#allocation6 + $0x228] sm:$0xff]
        %v871 = vld [vmem:[#allocation6 + $0x230] sm:$0xf]
        %v872 = vld [vmem:[#allocation6 + $0x234] sm:$0xff]
        %v873 = vld [vmem:[#allocation6 + $0x23c] sm:$0xf]
        %v970 = vunpack.c.l.b16 %v778
        %v971 = vunpack.c.h.b16 %v778
        %v972 = vunpack.c.l.b16 %v779
        %v973 = vunpack.c.l.b16 %v780
        %v974 = vunpack.c.h.b16 %v780
        %v975 = vunpack.c.l.b16 %v781
        %v976 = vunpack.c.l.b16 %v782
        %v977 = vunpack.c.h.b16 %v782
        %v978 = vunpack.c.l.b16 %v783
        %v979 = vunpack.c.l.b16 %v784
        %v980 = vunpack.c.h.b16 %v784
        %v981 = vunpack.c.l.b16 %v785
        %v982 = vunpack.c.l.b16 %v786
        %v983 = vunpack.c.h.b16 %v786
        %v984 = vunpack.c.l.b16 %v787
        %v985 = vunpack.c.l.b16 %v788
        %v986 = vunpack.c.h.b16 %v788
        %v987 = vunpack.c.l.b16 %v789
        %v988 = vunpack.c.l.b16 %v790
        %v989 = vunpack.c.h.b16 %v790
        %v990 = vunpack.c.l.b16 %v791
        %v991 = vunpack.c.l.b16 %v792
        %v992 = vunpack.c.h.b16 %v792
        %v993 = vunpack.c.l.b16 %v793
        %v994 = vunpack.c.l.b16 %v794
        %v995 = vunpack.c.h.b16 %v794
        %v996 = vunpack.c.l.b16 %v795
        %v997 = vunpack.c.l.b16 %v796
        %v998 = vunpack.c.h.b16 %v796
        %v999 = vunpack.c.l.b16 %v797
        %v1000 = vunpack.c.l.b16 %v798
        %v1001 = vunpack.c.h.b16 %v798
        %v1002 = vunpack.c.l.b16 %v799
        %v1003 = vunpack.c.l.b16 %v800
        %v1004 = vunpack.c.h.b16 %v800
        %v1005 = vunpack.c.l.b16 %v801
        %v1006 = vunpack.c.l.b16 %v802
        %v1007 = vunpack.c.h.b16 %v802
        %v1008 = vunpack.c.l.b16 %v803
        %v1009 = vunpack.c.l.b16 %v804
        %v1010 = vunpack.c.h.b16 %v804
        %v1011 = vunpack.c.l.b16 %v805
        %v1012 = vunpack.c.l.b16 %v806
        %v1013 = vunpack.c.h.b16 %v806
        %v1014 = vunpack.c.l.b16 %v807
        %v1015 = vunpack.c.l.b16 %v808
        %v1016 = vunpack.c.h.b16 %v808
        %v1017 = vunpack.c.l.b16 %v809
        %v1018 = vunpack.c.l.b16 %v810
        %v1019 = vunpack.c.h.b16 %v810
        %v1020 = vunpack.c.l.b16 %v811
        %v1021 = vunpack.c.l.b16 %v812
        %v1022 = vunpack.c.h.b16 %v812
        %v1023 = vunpack.c.l.b16 %v813
        %v1024 = vunpack.c.l.b16 %v814
        %v1025 = vunpack.c.h.b16 %v814
        %v1026 = vunpack.c.l.b16 %v815
        %v1027 = vunpack.c.l.b16 %v816
        %v1028 = vunpack.c.h.b16 %v816
        %v1029 = vunpack.c.l.b16 %v817
        %v1030 = vunpack.c.l.b16 %v818
        %v1031 = vunpack.c.h.b16 %v818
        %v1032 = vunpack.c.l.b16 %v819
        %v1033 = vunpack.c.l.b16 %v820
        %v1034 = vunpack.c.h.b16 %v820
        %v1035 = vunpack.c.l.b16 %v821
        %v1036 = vunpack.c.l.b16 %v822
        %v1037 = vunpack.c.h.b16 %v822
        %v1038 = vunpack.c.l.b16 %v823
        %v1039 = vunpack.c.l.b16 %v824
        %v1040 = vunpack.c.h.b16 %v824
        %v1041 = vunpack.c.l.b16 %v825
        %v1042 = vunpack.c.l.b16 %v826
        %v1043 = vunpack.c.h.b16 %v826
        %v1044 = vunpack.c.l.b16 %v827
        %v1045 = vunpack.c.l.b16 %v828
        %v1046 = vunpack.c.h.b16 %v828
        %v1047 = vunpack.c.l.b16 %v829
        %v1048 = vunpack.c.l.b16 %v830
        %v1049 = vunpack.c.h.b16 %v830
        %v1050 = vunpack.c.l.b16 %v831
        %v1051 = vunpack.c.l.b16 %v832
        %v1052 = vunpack.c.h.b16 %v832
        %v1053 = vunpack.c.l.b16 %v833
        %v1054 = vunpack.c.l.b16 %v834
        %v1055 = vunpack.c.h.b16 %v834
        %v1056 = vunpack.c.l.b16 %v835
        %v1057 = vunpack.c.l.b16 %v836
        %v1058 = vunpack.c.h.b16 %v836
        %v1059 = vunpack.c.l.b16 %v837
        %v1060 = vunpack.c.l.b16 %v838
        %v1061 = vunpack.c.h.b16 %v838
        %v1062 = vunpack.c.l.b16 %v839
        %v1063 = vunpack.c.l.b16 %v840
        %v1064 = vunpack.c.h.b16 %v840
        %v1065 = vunpack.c.l.b16 %v841
        %v1066 = vunpack.c.l.b16 %v842
        %v1067 = vunpack.c.h.b16 %v842
        %v1068 = vunpack.c.l.b16 %v843
        %v1069 = vunpack.c.l.b16 %v844
        %v1070 = vunpack.c.h.b16 %v844
        %v1071 = vunpack.c.l.b16 %v845
        %v1072 = vunpack.c.l.b16 %v846
        %v1073 = vunpack.c.h.b16 %v846
        %v1074 = vunpack.c.l.b16 %v847
        %v1075 = vunpack.c.l.b16 %v848
        %v1076 = vunpack.c.h.b16 %v848
        %v1077 = vunpack.c.l.b16 %v849
        %v1078 = vunpack.c.l.b16 %v850
        %v1079 = vunpack.c.h.b16 %v850
        %v1080 = vunpack.c.l.b16 %v851
        %v1081 = vunpack.c.l.b16 %v852
        %v1082 = vunpack.c.h.b16 %v852
        %v1083 = vunpack.c.l.b16 %v853
        %v1084 = vunpack.c.l.b16 %v854
        %v1085 = vunpack.c.h.b16 %v854
        %v1086 = vunpack.c.l.b16 %v855
        %v1087 = vunpack.c.l.b16 %v856
        %v1088 = vunpack.c.h.b16 %v856
        %v1089 = vunpack.c.l.b16 %v857
        %v1090 = vunpack.c.l.b16 %v858
        %v1091 = vunpack.c.h.b16 %v858
        %v1092 = vunpack.c.l.b16 %v859
        %v1093 = vunpack.c.l.b16 %v860
        %v1094 = vunpack.c.h.b16 %v860
        %v1095 = vunpack.c.l.b16 %v861
        %v1096 = vunpack.c.l.b16 %v862
        %v1097 = vunpack.c.h.b16 %v862
        %v1098 = vunpack.c.l.b16 %v863
        %v1099 = vunpack.c.l.b16 %v864
        %v1100 = vunpack.c.h.b16 %v864
        %v1101 = vunpack.c.l.b16 %v865
        %v1102 = vunpack.c.l.b16 %v866
        %v1103 = vunpack.c.h.b16 %v866
        %v1104 = vunpack.c.l.b16 %v867
        %v1105 = vunpack.c.l.b16 %v868
        %v1106 = vunpack.c.h.b16 %v868
        %v1107 = vunpack.c.l.b16 %v869
        %v1108 = vunpack.c.l.b16 %v870
        %v1109 = vunpack.c.h.b16 %v870
        %v1110 = vunpack.c.l.b16 %v871
        %v1111 = vunpack.c.l.b16 %v872
        %v1112 = vunpack.c.h.b16 %v872
        %v1113 = vunpack.c.l.b16 %v873
        %v1114 = vpack.c.b16 %v973, %v970
        %v1115 = vpack.c.b16 %v974, %v971
        %v1116 = vpack.c.b16 %v975, %v972
        %v1117 = vpack.c.b16 %v979, %v976
        %v1118 = vpack.c.b16 %v980, %v977
        %v1119 = vpack.c.b16 %v981, %v978
        %v1120 = vpack.c.b16 %v985, %v982
        %v1121 = vpack.c.b16 %v986, %v983
        %v1122 = vpack.c.b16 %v987, %v984
        %v1123 = vpack.c.b16 %v991, %v988
        %v1124 = vpack.c.b16 %v992, %v989
        %v1125 = vpack.c.b16 %v993, %v990
        %v1126 = vpack.c.b16 %v997, %v994
        %v1127 = vpack.c.b16 %v998, %v995
        %v1128 = vpack.c.b16 %v999, %v996
        %v1129 = vpack.c.b16 %v1003, %v1000
        %v1130 = vpack.c.b16 %v1004, %v1001
        %v1131 = vpack.c.b16 %v1005, %v1002
        %v1132 = vpack.c.b16 %v1009, %v1006
        %v1133 = vpack.c.b16 %v1010, %v1007
        %v1134 = vpack.c.b16 %v1011, %v1008
        %v1135 = vpack.c.b16 %v1015, %v1012
        %v1136 = vpack.c.b16 %v1016, %v1013
        %v1137 = vpack.c.b16 %v1017, %v1014
        %v1138 = vpack.c.b16 %v1021, %v1018
        %v1139 = vpack.c.b16 %v1022, %v1019
        %v1140 = vpack.c.b16 %v1023, %v1020
        %v1141 = vpack.c.b16 %v1027, %v1024
        %v1142 = vpack.c.b16 %v1028, %v1025
        %v1143 = vpack.c.b16 %v1029, %v1026
        %v1144 = vpack.c.b16 %v1033, %v1030
        %v1145 = vpack.c.b16 %v1034, %v1031
        %v1146 = vpack.c.b16 %v1035, %v1032
        %v1147 = vpack.c.b16 %v1039, %v1036
        %v1148 = vpack.c.b16 %v1040, %v1037
        %v1149 = vpack.c.b16 %v1041, %v1038
        %v1150 = vpack.c.b16 %v1045, %v1042
        %v1151 = vpack.c.b16 %v1046, %v1043
        %v1152 = vpack.c.b16 %v1047, %v1044
        %v1153 = vpack.c.b16 %v1051, %v1048
        %v1154 = vpack.c.b16 %v1052, %v1049
        %v1155 = vpack.c.b16 %v1053, %v1050
        %v1156 = vpack.c.b16 %v1057, %v1054
        %v1157 = vpack.c.b16 %v1058, %v1055
        %v1158 = vpack.c.b16 %v1059, %v1056
        %v1159 = vpack.c.b16 %v1063, %v1060
        %v1160 = vpack.c.b16 %v1064, %v1061
        %v1161 = vpack.c.b16 %v1065, %v1062
        %v1162 = vpack.c.b16 %v1069, %v1066
        %v1163 = vpack.c.b16 %v1070, %v1067
        %v1164 = vpack.c.b16 %v1071, %v1068
        %v1165 = vpack.c.b16 %v1075, %v1072
        %v1166 = vpack.c.b16 %v1076, %v1073
        %v1167 = vpack.c.b16 %v1077, %v1074
        %v1168 = vpack.c.b16 %v1081, %v1078
        %v1169 = vpack.c.b16 %v1082, %v1079
        %v1170 = vpack.c.b16 %v1083, %v1080
        %v1171 = vpack.c.b16 %v1087, %v1084
        %v1172 = vpack.c.b16 %v1088, %v1085
        %v1173 = vpack.c.b16 %v1089, %v1086
        %v1174 = vpack.c.b16 %v1093, %v1090
        %v1175 = vpack.c.b16 %v1094, %v1091
        %v1176 = vpack.c.b16 %v1095, %v1092
        %v1177 = vpack.c.b16 %v1099, %v1096
        %v1178 = vpack.c.b16 %v1100, %v1097
        %v1179 = vpack.c.b16 %v1101, %v1098
        %v1180 = vpack.c.b16 %v1105, %v1102
        %v1181 = vpack.c.b16 %v1106, %v1103
        %v1182 = vpack.c.b16 %v1107, %v1104
        %v1183 = vpack.c.b16 %v1111, %v1108
        %v1184 = vpack.c.b16 %v1112, %v1109
        %v1185 = vpack.c.b16 %v1113, %v1110
        %1258 = vmatprep.subr.bf16.mxu0 %v1136
        %1259 = vmatpush1.bf16.msra.mxu0 %v1135
        %1260 = vmatprep.subr.bf16.mxu0 %v1133
        %1261 = vmatpush1.bf16.msra.mxu0 %v1132
        %1262 = vmatprep.subr.bf16.mxu0 %v1130
        %1263 = vmatpush1.bf16.msra.mxu0 %v1129
        %1264 = vmatprep.subr.bf16.mxu0 %v1127
        %1265 = vmatpush1.bf16.msra.mxu0 %v1126
        %1266 = vmatprep.subr.bf16.mxu0 %v1124
        %1267 = vmatpush1.bf16.msra.mxu0 %v1123
        %1268 = vmatprep.subr.bf16.mxu0 %v1121
        %1269 = vmatpush1.bf16.msra.mxu0 %v1120
        %1270 = vmatprep.subr.bf16.mxu0 %v1118
        %1271 = vmatpush1.bf16.msra.mxu0 %v1117
        %1272 = vmatprep.subr.bf16.mxu0 %v1115
        %1273 = vmatpush1.bf16.msra.mxu0 %v1114
        %1274 = vmatprep.subr.bf16.mxu0 %v1160
        %1275 = vmatpush2.bf16.msra.mxu0 %v1159
        %1276 = vmatprep.subr.bf16.mxu0 %v1157
        %1277 = vmatpush2.bf16.msra.mxu0 %v1156
        %1278 = vmatprep.subr.bf16.mxu0 %v1154
        %1279 = vmatpush2.bf16.msra.mxu0 %v1153
        %1280 = vmatprep.subr.bf16.mxu0 %v1151
        %1281 = vmatpush2.bf16.msra.mxu0 %v1150
        %1282 = vmatprep.subr.bf16.mxu0 %v1148
        %1283 = vmatpush2.bf16.msra.mxu0 %v1147
        %1284 = vmatprep.subr.bf16.mxu0 %v1145
        %1285 = vmatpush2.bf16.msra.mxu0 %v1144
        %1286 = vmatprep.subr.bf16.mxu0 %v1142
        %1287 = vmatpush2.bf16.msra.mxu0 %v1141
        %1288 = vmatprep.subr.bf16.mxu0 %v1139
        %1289 = vmatpush2.bf16.msra.mxu0 %v1138
        %1290 = vmatprep.mubr.bf16.mxu0 %v681
        %1291 = vmatmul.mubr.bf16.gmra.mxu0 %v609
        %v1292 = vpop.f32.mrf.mxu0
        %v1293 = vadd.f32 0.0, %v1292
        %v1294 = vpop.f32.mrf.mxu0
        %v1295 = vadd.f32 0.0, %v1294
        %v1296 = vpop.f32.mrf.mxu0
        %v1297 = vadd.f32 0.0, %v1296
        %v1298 = vpop.f32.mrf.mxu0
        %v1299 = vadd.f32 0.0, %v1298
        %1300 = vmatprep.mubr.bf16.mxu0 %v682
        %1301 = vmatmul.mubr.bf16.gmra.mxu0 %v610
        %v1302 = vpop.f32.mrf.mxu0
        %v1303 = vpop.f32.mrf.mxu0
        %v1304 = vadd.f32 0.0, %v1303
        %v1305 = vpop.f32.mrf.mxu0
        %v1306 = vadd.f32 0.0, %v1305
        %v1307 = vpop.f32.mrf.mxu0
        %v1308 = vadd.f32 0.0, %v1307
        %1309 = vmatprep.mubr.bf16.mxu0 %v683
        %1310 = vmatmul.mubr.bf16.gmra.mxu0 %v611
        %v1311 = vpop.f32.mrf.mxu0
        %v1312 = vadd.f32 0.0, %v1311
        %v1313 = vpop.f32.mrf.mxu0
        %v1314 = vadd.f32 0.0, %v1313
        %v1315 = vpop.f32.mrf.mxu0
        %v1316 = vpop.f32.mrf.mxu0
        %v1317 = vadd.f32 0.0, %v1316
        %1318 = vmatprep.mubr.bf16.mxu0 %v684
        %1319 = vmatmul.mubr.bf16.gmra.mxu0 %v612
        %v1320 = vpop.f32.mrf.mxu0
        %v1321 = vadd.f32 0.0, %v1320
        %v1322 = vpop.f32.mrf.mxu0
        %v1323 = vadd.f32 0.0, %v1322
        %v1324 = vpop.f32.mrf.mxu0
        %v1325 = vadd.f32 0.0, %v1324
        %v1326 = vpop.f32.mrf.mxu0
        %v1327 = vadd.f32 0.0, %v1326
        %1328 = vmatprep.mubr.bf16.mxu0 %v685
        %1329 = vmatmul.mubr.bf16.gmra.mxu0 %v613
        %v1330 = vpop.f32.mrf.mxu0
        %v1331 = vpop.f32.mrf.mxu0
        %v1332 = vadd.f32 0.0, %v1331
        %v1333 = vpop.f32.mrf.mxu0
        %v1334 = vadd.f32 0.0, %v1333
        %v1335 = vpop.f32.mrf.mxu0
        %v1336 = vadd.f32 0.0, %v1335
        %1337 = vmatprep.mubr.bf16.mxu0 %v686
        %1338 = vmatmul.mubr.bf16.gmra.mxu0 %v614
        %v1339 = vpop.f32.mrf.mxu0
        %v1340 = vadd.f32 0.0, %v1339
        %v1341 = vpop.f32.mrf.mxu0
        %v1342 = vadd.f32 0.0, %v1341
        %v1343 = vpop.f32.mrf.mxu0
        %v1344 = vpop.f32.mrf.mxu0
        %v1345 = vadd.f32 0.0, %v1344
        %1346 = vmatprep.mubr.bf16.mxu0 %v687
        %1347 = vmatmul.mubr.bf16.gmra.mxu0 %v615
        %v1348 = vpop.f32.mrf.mxu0
        %v1349 = vadd.f32 0.0, %v1348
        %v1350 = vpop.f32.mrf.mxu0
        %v1351 = vadd.f32 0.0, %v1350
        %v1352 = vpop.f32.mrf.mxu0
        %v1353 = vadd.f32 0.0, %v1352
        %v1354 = vpop.f32.mrf.mxu0
        %v1355 = vadd.f32 0.0, %v1354
        %1356 = vmatprep.mubr.bf16.mxu0 %v688
        %1357 = vmatmul.mubr.bf16.gmra.mxu0 %v616
        %v1358 = vpop.f32.mrf.mxu0
        %v1359 = vpop.f32.mrf.mxu0
        %v1360 = vadd.f32 0.0, %v1359
        %v1361 = vpop.f32.mrf.mxu0
        %v1362 = vadd.f32 0.0, %v1361
        %v1363 = vpop.f32.mrf.mxu0
        %v1364 = vadd.f32 0.0, %v1363
        %1365 = vmatprep.mubr.bf16.mxu0 %v689
        %1366 = vmatmul.mubr.bf16.gmra.mxu0 %v617
        %v1367 = vpop.f32.mrf.mxu0
        %v1368 = vadd.f32 0.0, %v1367
        %v1369 = vpop.f32.mrf.mxu0
        %v1370 = vadd.f32 0.0, %v1369
        %v1371 = vpop.f32.mrf.mxu0
        %v1372 = vpop.f32.mrf.mxu0
        %v1373 = vadd.f32 0.0, %v1372
        %1374 = vmatprep.mubr.bf16.mxu0 %v690
        %1375 = vmatmul.mubr.bf16.gmra.mxu0 %v618
        %v1376 = vpop.f32.mrf.mxu0
        %v1377 = vadd.f32 0.0, %v1376
        %v1378 = vpop.f32.mrf.mxu0
        %v1379 = vadd.f32 0.0, %v1378
        %v1380 = vpop.f32.mrf.mxu0
        %v1381 = vadd.f32 0.0, %v1380
        %v1382 = vpop.f32.mrf.mxu0
        %v1383 = vadd.f32 0.0, %v1382
        %1384 = vmatprep.mubr.bf16.mxu0 %v691
        %1385 = vmatmul.mubr.bf16.gmra.mxu0 %v619
        %v1386 = vpop.f32.mrf.mxu0
        %v1387 = vpop.f32.mrf.mxu0
        %v1388 = vadd.f32 0.0, %v1387
        %v1389 = vpop.f32.mrf.mxu0
        %v1390 = vadd.f32 0.0, %v1389
        %v1391 = vpop.f32.mrf.mxu0
        %v1392 = vadd.f32 0.0, %v1391
        %1393 = vmatprep.mubr.bf16.mxu0 %v692
        %1394 = vmatmul.mubr.bf16.gmra.mxu0 %v620
        %v1395 = vpop.f32.mrf.mxu0
        %v1396 = vadd.f32 0.0, %v1395
        %v1397 = vpop.f32.mrf.mxu0
        %v1398 = vadd.f32 0.0, %v1397
        %v1399 = vpop.f32.mrf.mxu0
        %v1400 = vpop.f32.mrf.mxu0
        %v1401 = vadd.f32 0.0, %v1400
        %1402 = vmatprep.mubr.bf16.mxu0 %v693
        %1403 = vmatmul.mubr.bf16.gmra.mxu0 %v621
        %v1404 = vpop.f32.mrf.mxu0
        %v1405 = vadd.f32 0.0, %v1404
        %v1406 = vpop.f32.mrf.mxu0
        %v1407 = vadd.f32 0.0, %v1406
        %v1408 = vpop.f32.mrf.mxu0
        %v1409 = vadd.f32 0.0, %v1408
        %v1410 = vpop.f32.mrf.mxu0
        %v1411 = vadd.f32 0.0, %v1410
        %1412 = vmatprep.mubr.bf16.mxu0 %v694
        %1413 = vmatmul.mubr.bf16.gmra.mxu0 %v622
        %v1414 = vpop.f32.mrf.mxu0
        %v1415 = vpop.f32.mrf.mxu0
        %v1416 = vadd.f32 0.0, %v1415
        %v1417 = vpop.f32.mrf.mxu0
        %v1418 = vadd.f32 0.0, %v1417
        %v1419 = vpop.f32.mrf.mxu0
        %v1420 = vadd.f32 0.0, %v1419
        %1421 = vmatprep.mubr.bf16.mxu0 %v695
        %1422 = vmatmul.mubr.bf16.gmra.mxu0 %v623
        %v1423 = vpop.f32.mrf.mxu0
        %v1424 = vadd.f32 0.0, %v1423
        %v1425 = vpop.f32.mrf.mxu0
        %v1426 = vadd.f32 0.0, %v1425
        %v1427 = vpop.f32.mrf.mxu0
        %v1428 = vpop.f32.mrf.mxu0
        %v1429 = vadd.f32 0.0, %v1428
        %1430 = vmatprep.mubr.bf16.mxu0 %v696
        %1431 = vmatmul.mubr.bf16.gmra.mxu0 %v624
        %v1432 = vpop.f32.mrf.mxu0
        %v1433 = vadd.f32 0.0, %v1432
        %v1434 = vpop.f32.mrf.mxu0
        %v1435 = vadd.f32 0.0, %v1434
        %v1436 = vpop.f32.mrf.mxu0
        %v1437 = vadd.f32 0.0, %v1436
        %v1438 = vpop.f32.mrf.mxu0
        %v1439 = vadd.f32 0.0, %v1438
        %1440 = vmatprep.mubr.bf16.mxu0 %v697
        %1441 = vmatmul.mubr.bf16.gmra.mxu0 %v625
        %v1442 = vpop.f32.mrf.mxu0
        %v1443 = vpop.f32.mrf.mxu0
        %v1444 = vadd.f32 0.0, %v1443
        %v1445 = vpop.f32.mrf.mxu0
        %v1446 = vadd.f32 0.0, %v1445
        %v1447 = vpop.f32.mrf.mxu0
        %v1448 = vadd.f32 0.0, %v1447
        %1449 = vmatprep.mubr.bf16.mxu0 %v698
        %1450 = vmatmul.mubr.bf16.gmra.mxu0 %v626
        %v1451 = vpop.f32.mrf.mxu0
        %v1452 = vadd.f32 0.0, %v1451
        %v1453 = vpop.f32.mrf.mxu0
        %v1454 = vadd.f32 0.0, %v1453
        %v1455 = vpop.f32.mrf.mxu0
        %v1456 = vpop.f32.mrf.mxu0
        %v1457 = vadd.f32 0.0, %v1456
        %1458 = vmatprep.mubr.bf16.mxu0 %v699
        %1459 = vmatmul.mubr.bf16.gmra.mxu0 %v627
        %v1460 = vpop.f32.mrf.mxu0
        %v1461 = vadd.f32 0.0, %v1460
        %v1462 = vpop.f32.mrf.mxu0
        %v1463 = vadd.f32 0.0, %v1462
        %v1464 = vpop.f32.mrf.mxu0
        %v1465 = vadd.f32 0.0, %v1464
        %v1466 = vpop.f32.mrf.mxu0
        %v1467 = vadd.f32 0.0, %v1466
        %1468 = vmatprep.mubr.bf16.mxu0 %v700
        %1469 = vmatmul.mubr.bf16.gmra.mxu0 %v628
        %v1470 = vpop.f32.mrf.mxu0
        %v1471 = vpop.f32.mrf.mxu0
        %v1472 = vadd.f32 0.0, %v1471
        %v1473 = vpop.f32.mrf.mxu0
        %v1474 = vadd.f32 0.0, %v1473
        %v1475 = vpop.f32.mrf.mxu0
        %v1476 = vadd.f32 0.0, %v1475
        %1477 = vmatprep.mubr.bf16.mxu0 %v701
        %1478 = vmatmul.mubr.bf16.gmra.mxu0 %v629
        %v1479 = vpop.f32.mrf.mxu0
        %v1480 = vadd.f32 0.0, %v1479
        %v1481 = vpop.f32.mrf.mxu0
        %v1482 = vadd.f32 0.0, %v1481
        %v1483 = vpop.f32.mrf.mxu0
        %v1484 = vpop.f32.mrf.mxu0
        %v1485 = vadd.f32 0.0, %v1484
        %1486 = vmatprep.mubr.bf16.mxu0 %v702
        %1487 = vmatmul.mubr.bf16.gmra.mxu0 %v630
        %v1488 = vpop.f32.mrf.mxu0
        %v1489 = vadd.f32 0.0, %v1488
        %v1490 = vpop.f32.mrf.mxu0
        %v1491 = vadd.f32 0.0, %v1490
        %v1492 = vpop.f32.mrf.mxu0
        %v1493 = vadd.f32 0.0, %v1492
        %v1494 = vpop.f32.mrf.mxu0
        %v1495 = vadd.f32 0.0, %v1494
        %1496 = vmatprep.mubr.bf16.mxu0 %v703
        %1497 = vmatmul.mubr.bf16.gmra.mxu0 %v631
        %v1498 = vpop.f32.mrf.mxu0
        %v1499 = vpop.f32.mrf.mxu0
        %v1500 = vadd.f32 0.0, %v1499
        %v1501 = vpop.f32.mrf.mxu0
        %v1502 = vadd.f32 0.0, %v1501
        %v1503 = vpop.f32.mrf.mxu0
        %v1504 = vadd.f32 0.0, %v1503
        %1505 = vmatprep.mubr.bf16.mxu0 %v704
        %1506 = vmatmul.mubr.bf16.gmra.mxu0 %v632
        %v1507 = vpop.f32.mrf.mxu0
        %v1508 = vadd.f32 0.0, %v1507
        %v1509 = vpop.f32.mrf.mxu0
        %v1510 = vadd.f32 0.0, %v1509
        %v1511 = vpop.f32.mrf.mxu0
        %v1512 = vpop.f32.mrf.mxu0
        %v1513 = vadd.f32 0.0, %v1512
        %1514 = vdwg.mxu0
        %1515 = vmatprep.subr.bf16.mxu0 %v1184
        %1516 = vmatpush1.bf16.msra.mxu0 %v1183
        %1517 = vmatprep.subr.bf16.mxu0 %v1181
        %1518 = vmatpush1.bf16.msra.mxu0 %v1180
        %1519 = vmatprep.subr.bf16.mxu0 %v1178
        %1520 = vmatpush1.bf16.msra.mxu0 %v1177
        %1521 = vmatprep.subr.bf16.mxu0 %v1175
        %1522 = vmatpush1.bf16.msra.mxu0 %v1174
        %1523 = vmatprep.subr.bf16.mxu0 %v1172
        %1524 = vmatpush1.bf16.msra.mxu0 %v1171
        %1525 = vmatprep.subr.bf16.mxu0 %v1169
        %1526 = vmatpush1.bf16.msra.mxu0 %v1168
        %1527 = vmatprep.subr.bf16.mxu0 %v1166
        %1528 = vmatpush1.bf16.msra.mxu0 %v1165
        %1529 = vmatprep.subr.bf16.mxu0 %v1163
        %1530 = vmatpush1.bf16.msra.mxu0 %v1162
        %1531 = vmatprep.subr.bf16.mxu0 0
        %1532 = vmatpush2.bf16.msra.mxu0 0
        %1533 = vmatprep.subr.bf16.mxu0 0
        %1534 = vmatpush2.bf16.msra.mxu0 0
        %1535 = vmatprep.subr.bf16.mxu0 0
        %1536 = vmatpush2.bf16.msra.mxu0 0
        %1537 = vmatprep.subr.bf16.mxu0 0
        %1538 = vmatpush2.bf16.msra.mxu0 0
        %1539 = vmatprep.subr.bf16.mxu0 0
        %1540 = vmatpush2.bf16.msra.mxu0 0
        %1541 = vmatprep.subr.bf16.mxu0 0
        %1542 = vmatpush2.bf16.msra.mxu0 0
        %1543 = vmatprep.subr.bf16.mxu0 0
        %1544 = vmatpush2.bf16.msra.mxu0 0
        %1545 = vmatprep.subr.bf16.mxu0 0
        %1546 = vmatpush2.bf16.msra.mxu0 0
        %1547 = vmatprep.mubr.bf16.mxu0 0
        %1548 = vmatmul.mubr.bf16.gmra.mxu0 %v754
        %v1549 = vpop.f32.mrf.mxu0
        %v1550 = vadd.f32 %v1293, %v1549
        %v1551 = vpop.f32.mrf.mxu0
        %v1552 = vadd.f32 %v1295, %v1551
        %v1553 = vpop.f32.mrf.mxu0
        %v1554 = vadd.f32 %v1297, %v1553
        %v1555 = vpop.f32.mrf.mxu0
        %v1556 = vadd.f32 %v1299, %v1555
        %1557 = vmatprep.mubr.bf16.mxu0 0
        %1558 = vmatmul.mubr.bf16.gmra.mxu0 %v755
        %v1559 = vpop.f32.mrf.mxu0
        %v1560 = vpop.f32.mrf.mxu0
        %v1561 = vadd.f32 %v1304, %v1560
        %v1562 = vpop.f32.mrf.mxu0
        %v1563 = vadd.f32 %v1306, %v1562
        %v1564 = vpop.f32.mrf.mxu0
        %v1565 = vadd.f32 %v1308, %v1564
        %1566 = vmatprep.mubr.bf16.mxu0 0
        %1567 = vmatmul.mubr.bf16.gmra.mxu0 %v756
        %v1568 = vpop.f32.mrf.mxu0
        %v1569 = vadd.f32 %v1312, %v1568
        %v1570 = vpop.f32.mrf.mxu0
        %v1571 = vadd.f32 %v1314, %v1570
        %v1572 = vpop.f32.mrf.mxu0
        %v1573 = vpop.f32.mrf.mxu0
        %v1574 = vadd.f32 %v1317, %v1573
        %1575 = vmatprep.mubr.bf16.mxu0 0
        %1576 = vmatmul.mubr.bf16.gmra.mxu0 %v757
        %v1577 = vpop.f32.mrf.mxu0
        %v1578 = vadd.f32 %v1321, %v1577
        %v1579 = vpop.f32.mrf.mxu0
        %v1580 = vadd.f32 %v1323, %v1579
        %v1581 = vpop.f32.mrf.mxu0
        %v1582 = vadd.f32 %v1325, %v1581
        %v1583 = vpop.f32.mrf.mxu0
        %v1584 = vadd.f32 %v1327, %v1583
        %1585 = vmatprep.mubr.bf16.mxu0 0
        %1586 = vmatmul.mubr.bf16.gmra.mxu0 %v758
        %v1587 = vpop.f32.mrf.mxu0
        %v1588 = vpop.f32.mrf.mxu0
        %v1589 = vadd.f32 %v1332, %v1588
        %v1590 = vpop.f32.mrf.mxu0
        %v1591 = vadd.f32 %v1334, %v1590
        %v1592 = vpop.f32.mrf.mxu0
        %v1593 = vadd.f32 %v1336, %v1592
        %1594 = vmatprep.mubr.bf16.mxu0 0
        %1595 = vmatmul.mubr.bf16.gmra.mxu0 %v759
        %v1596 = vpop.f32.mrf.mxu0
        %v1597 = vadd.f32 %v1340, %v1596
        %v1598 = vpop.f32.mrf.mxu0
        %v1599 = vadd.f32 %v1342, %v1598
        %v1600 = vpop.f32.mrf.mxu0
        %v1601 = vpop.f32.mrf.mxu0
        %v1602 = vadd.f32 %v1345, %v1601
        %1603 = vmatprep.mubr.bf16.mxu0 0
        %1604 = vmatmul.mubr.bf16.gmra.mxu0 %v760
        %v1605 = vpop.f32.mrf.mxu0
        %v1606 = vadd.f32 %v1349, %v1605
        %v1607 = vpop.f32.mrf.mxu0
        %v1608 = vadd.f32 %v1351, %v1607
        %v1609 = vpop.f32.mrf.mxu0
        %v1610 = vadd.f32 %v1353, %v1609
        %v1611 = vpop.f32.mrf.mxu0
        %v1612 = vadd.f32 %v1355, %v1611
        %1613 = vmatprep.mubr.bf16.mxu0 0
        %1614 = vmatmul.mubr.bf16.gmra.mxu0 %v761
        %v1615 = vpop.f32.mrf.mxu0
        %v1616 = vpop.f32.mrf.mxu0
        %v1617 = vadd.f32 %v1360, %v1616
        %v1618 = vpop.f32.mrf.mxu0
        %v1619 = vadd.f32 %v1362, %v1618
        %v1620 = vpop.f32.mrf.mxu0
        %v1621 = vadd.f32 %v1364, %v1620
        %1622 = vmatprep.mubr.bf16.mxu0 0
        %1623 = vmatmul.mubr.bf16.gmra.mxu0 %v762
        %v1624 = vpop.f32.mrf.mxu0
        %v1625 = vadd.f32 %v1368, %v1624
        %v1626 = vpop.f32.mrf.mxu0
        %v1627 = vadd.f32 %v1370, %v1626
        %v1628 = vpop.f32.mrf.mxu0
        %v1629 = vpop.f32.mrf.mxu0
        %v1630 = vadd.f32 %v1373, %v1629
        %1631 = vmatprep.mubr.bf16.mxu0 0
        %1632 = vmatmul.mubr.bf16.gmra.mxu0 %v763
        %v1633 = vpop.f32.mrf.mxu0
        %v1634 = vadd.f32 %v1377, %v1633
        %v1635 = vpop.f32.mrf.mxu0
        %v1636 = vadd.f32 %v1379, %v1635
        %v1637 = vpop.f32.mrf.mxu0
        %v1638 = vadd.f32 %v1381, %v1637
        %v1639 = vpop.f32.mrf.mxu0
        %v1640 = vadd.f32 %v1383, %v1639
        %1641 = vmatprep.mubr.bf16.mxu0 0
        %1642 = vmatmul.mubr.bf16.gmra.mxu0 %v764
        %v1643 = vpop.f32.mrf.mxu0
        %v1644 = vpop.f32.mrf.mxu0
        %v1645 = vadd.f32 %v1388, %v1644
        %v1646 = vpop.f32.mrf.mxu0
        %v1647 = vadd.f32 %v1390, %v1646
        %v1648 = vpop.f32.mrf.mxu0
        %v1649 = vadd.f32 %v1392, %v1648
        %1650 = vmatprep.mubr.bf16.mxu0 0
        %1651 = vmatmul.mubr.bf16.gmra.mxu0 %v765
        %v1652 = vpop.f32.mrf.mxu0
        %v1653 = vadd.f32 %v1396, %v1652
        %v1654 = vpop.f32.mrf.mxu0
        %v1655 = vadd.f32 %v1398, %v1654
        %v1656 = vpop.f32.mrf.mxu0
        %v1657 = vpop.f32.mrf.mxu0
        %v1658 = vadd.f32 %v1401, %v1657
        %1659 = vmatprep.mubr.bf16.mxu0 0
        %1660 = vmatmul.mubr.bf16.gmra.mxu0 %v766
        %v1661 = vpop.f32.mrf.mxu0
        %v1662 = vadd.f32 %v1405, %v1661
        %v1663 = vpop.f32.mrf.mxu0
        %v1664 = vadd.f32 %v1407, %v1663
        %v1665 = vpop.f32.mrf.mxu0
        %v1666 = vadd.f32 %v1409, %v1665
        %v1667 = vpop.f32.mrf.mxu0
        %v1668 = vadd.f32 %v1411, %v1667
        %1669 = vmatprep.mubr.bf16.mxu0 0
        %1670 = vmatmul.mubr.bf16.gmra.mxu0 %v767
        %v1671 = vpop.f32.mrf.mxu0
        %v1672 = vpop.f32.mrf.mxu0
        %v1673 = vadd.f32 %v1416, %v1672
        %v1674 = vpop.f32.mrf.mxu0
        %v1675 = vadd.f32 %v1418, %v1674
        %v1676 = vpop.f32.mrf.mxu0
        %v1677 = vadd.f32 %v1420, %v1676
        %1678 = vmatprep.mubr.bf16.mxu0 0
        %1679 = vmatmul.mubr.bf16.gmra.mxu0 %v768
        %v1680 = vpop.f32.mrf.mxu0
        %v1681 = vadd.f32 %v1424, %v1680
        %v1682 = vpop.f32.mrf.mxu0
        %v1683 = vadd.f32 %v1426, %v1682
        %v1684 = vpop.f32.mrf.mxu0
        %v1685 = vpop.f32.mrf.mxu0
        %v1686 = vadd.f32 %v1429, %v1685
        %1687 = vmatprep.mubr.bf16.mxu0 0
        %1688 = vmatmul.mubr.bf16.gmra.mxu0 %v769
        %v1689 = vpop.f32.mrf.mxu0
        %v1690 = vadd.f32 %v1433, %v1689
        %v1691 = vpop.f32.mrf.mxu0
        %v1692 = vadd.f32 %v1435, %v1691
        %v1693 = vpop.f32.mrf.mxu0
        %v1694 = vadd.f32 %v1437, %v1693
        %v1695 = vpop.f32.mrf.mxu0
        %v1696 = vadd.f32 %v1439, %v1695
        %1697 = vmatprep.mubr.bf16.mxu0 0
        %1698 = vmatmul.mubr.bf16.gmra.mxu0 %v770
        %v1699 = vpop.f32.mrf.mxu0
        %v1700 = vpop.f32.mrf.mxu0
        %v1701 = vadd.f32 %v1444, %v1700
        %v1702 = vpop.f32.mrf.mxu0
        %v1703 = vadd.f32 %v1446, %v1702
        %v1704 = vpop.f32.mrf.mxu0
        %v1705 = vadd.f32 %v1448, %v1704
        %1706 = vmatprep.mubr.bf16.mxu0 0
        %1707 = vmatmul.mubr.bf16.gmra.mxu0 %v771
        %v1708 = vpop.f32.mrf.mxu0
        %v1709 = vadd.f32 %v1452, %v1708
        %v1710 = vpop.f32.mrf.mxu0
        %v1711 = vadd.f32 %v1454, %v1710
        %v1712 = vpop.f32.mrf.mxu0
        %v1713 = vpop.f32.mrf.mxu0
        %v1714 = vadd.f32 %v1457, %v1713
        %1715 = vmatprep.mubr.bf16.mxu0 0
        %1716 = vmatmul.mubr.bf16.gmra.mxu0 %v772
        %v1717 = vpop.f32.mrf.mxu0
        %v1718 = vadd.f32 %v1461, %v1717
        %v1719 = vpop.f32.mrf.mxu0
        %v1720 = vadd.f32 %v1463, %v1719
        %v1721 = vpop.f32.mrf.mxu0
        %v1722 = vadd.f32 %v1465, %v1721
        %v1723 = vpop.f32.mrf.mxu0
        %v1724 = vadd.f32 %v1467, %v1723
        %1725 = vmatprep.mubr.bf16.mxu0 0
        %1726 = vmatmul.mubr.bf16.gmra.mxu0 %v773
        %v1727 = vpop.f32.mrf.mxu0
        %v1728 = vpop.f32.mrf.mxu0
        %v1729 = vadd.f32 %v1472, %v1728
        %v1730 = vpop.f32.mrf.mxu0
        %v1731 = vadd.f32 %v1474, %v1730
        %v1732 = vpop.f32.mrf.mxu0
        %v1733 = vadd.f32 %v1476, %v1732
        %1734 = vmatprep.mubr.bf16.mxu0 0
        %1735 = vmatmul.mubr.bf16.gmra.mxu0 %v774
        %v1736 = vpop.f32.mrf.mxu0
        %v1737 = vadd.f32 %v1480, %v1736
        %v1738 = vpop.f32.mrf.mxu0
        %v1739 = vadd.f32 %v1482, %v1738
        %v1740 = vpop.f32.mrf.mxu0
        %v1741 = vpop.f32.mrf.mxu0
        %v1742 = vadd.f32 %v1485, %v1741
        %1743 = vmatprep.mubr.bf16.mxu0 0
        %1744 = vmatmul.mubr.bf16.gmra.mxu0 %v775
        %v1745 = vpop.f32.mrf.mxu0
        %v1746 = vadd.f32 %v1489, %v1745
        %v1747 = vpop.f32.mrf.mxu0
        %v1748 = vadd.f32 %v1491, %v1747
        %v1749 = vpop.f32.mrf.mxu0
        %v1750 = vadd.f32 %v1493, %v1749
        %v1751 = vpop.f32.mrf.mxu0
        %v1752 = vadd.f32 %v1495, %v1751
        %1753 = vmatprep.mubr.bf16.mxu0 0
        %1754 = vmatmul.mubr.bf16.gmra.mxu0 %v776
        %v1755 = vpop.f32.mrf.mxu0
        %v1756 = vpop.f32.mrf.mxu0
        %v1757 = vadd.f32 %v1500, %v1756
        %v1758 = vpop.f32.mrf.mxu0
        %v1759 = vadd.f32 %v1502, %v1758
        %v1760 = vpop.f32.mrf.mxu0
        %v1761 = vadd.f32 %v1504, %v1760
        %1762 = vmatprep.mubr.bf16.mxu0 0
        %1763 = vmatmul.mubr.bf16.gmra.mxu0 %v777
        %v1764 = vpop.f32.mrf.mxu0
        %v1765 = vadd.f32 %v1508, %v1764
        %v1766 = vpop.f32.mrf.mxu0
        %v1767 = vadd.f32 %v1510, %v1766
        %v1768 = vpop.f32.mrf.mxu0
        %v1769 = vpop.f32.mrf.mxu0
        %v1770 = vadd.f32 %v1513, %v1769
        %1771 = vdwg.mxu0
        %1772 = vmatprep.subr.bf16.mxu0 0
        %1773 = vmatpush1.bf16.msra.mxu0 %v1137
        %1774 = vmatprep.subr.bf16.mxu0 0
        %1775 = vmatpush1.bf16.msra.mxu0 %v1134
        %1776 = vmatprep.subr.bf16.mxu0 0
        %1777 = vmatpush1.bf16.msra.mxu0 %v1131
        %1778 = vmatprep.subr.bf16.mxu0 0
        %1779 = vmatpush1.bf16.msra.mxu0 %v1128
        %1780 = vmatprep.subr.bf16.mxu0 0
        %1781 = vmatpush1.bf16.msra.mxu0 %v1125
        %1782 = vmatprep.subr.bf16.mxu0 0
        %1783 = vmatpush1.bf16.msra.mxu0 %v1122
        %1784 = vmatprep.subr.bf16.mxu0 0
        %1785 = vmatpush1.bf16.msra.mxu0 %v1119
        %1786 = vmatprep.subr.bf16.mxu0 0
        %1787 = vmatpush1.bf16.msra.mxu0 %v1116
        %1788 = vmatprep.subr.bf16.mxu0 0
        %1789 = vmatpush2.bf16.msra.mxu0 %v1161
        %1790 = vmatprep.subr.bf16.mxu0 0
        %1791 = vmatpush2.bf16.msra.mxu0 %v1158
        %1792 = vmatprep.subr.bf16.mxu0 0
        %1793 = vmatpush2.bf16.msra.mxu0 %v1155
        %1794 = vmatprep.subr.bf16.mxu0 0
        %1795 = vmatpush2.bf16.msra.mxu0 %v1152
        %1796 = vmatprep.subr.bf16.mxu0 0
        %1797 = vmatpush2.bf16.msra.mxu0 %v1149
        %1798 = vmatprep.subr.bf16.mxu0 0
        %1799 = vmatpush2.bf16.msra.mxu0 %v1146
        %1800 = vmatprep.subr.bf16.mxu0 0
        %1801 = vmatpush2.bf16.msra.mxu0 %v1143
        %1802 = vmatprep.subr.bf16.mxu0 0
        %1803 = vmatpush2.bf16.msra.mxu0 %v1140
        %1804 = vmatprep.mubr.bf16.mxu0 %v681
        %1805 = vmatmul.mubr.bf16.gmra.mxu0 %v609
        %v1806 = vpop.f32.mrf.mxu0
        %v1807 = vadd.f32 0.0, %v1806
        %v1808 = vpop.f32.mrf.mxu0
        %v1809 = vpop.f32.mrf.mxu0
        %v1810 = vadd.f32 0.0, %v1809
        %v1811 = vpop.f32.mrf.mxu0
        %1812 = vmatprep.mubr.bf16.mxu0 %v682
        %1813 = vmatmul.mubr.bf16.gmra.mxu0 %v610
        %v1814 = vpop.f32.mrf.mxu0
        %v1815 = vadd.f32 0.0, %v1814
        %v1816 = vpop.f32.mrf.mxu0
        %v1817 = vpop.f32.mrf.mxu0
        %v1818 = vadd.f32 0.0, %v1817
        %v1819 = vpop.f32.mrf.mxu0
        %1820 = vmatprep.mubr.bf16.mxu0 %v683
        %1821 = vmatmul.mubr.bf16.gmra.mxu0 %v611
        %v1822 = vpop.f32.mrf.mxu0
        %v1823 = vadd.f32 0.0, %v1822
        %v1824 = vpop.f32.mrf.mxu0
        %v1825 = vpop.f32.mrf.mxu0
        %v1826 = vadd.f32 0.0, %v1825
        %v1827 = vpop.f32.mrf.mxu0
        %1828 = vmatprep.mubr.bf16.mxu0 %v684
        %1829 = vmatmul.mubr.bf16.gmra.mxu0 %v612
        %v1830 = vpop.f32.mrf.mxu0
        %v1831 = vadd.f32 0.0, %v1830
        %v1832 = vpop.f32.mrf.mxu0
        %v1833 = vpop.f32.mrf.mxu0
        %v1834 = vadd.f32 0.0, %v1833
        %v1835 = vpop.f32.mrf.mxu0
        %1836 = vmatprep.mubr.bf16.mxu0 %v685
        %1837 = vmatmul.mubr.bf16.gmra.mxu0 %v613
        %v1838 = vpop.f32.mrf.mxu0
        %v1839 = vadd.f32 0.0, %v1838
        %v1840 = vpop.f32.mrf.mxu0
        %v1841 = vpop.f32.mrf.mxu0
        %v1842 = vadd.f32 0.0, %v1841
        %v1843 = vpop.f32.mrf.mxu0
        %1844 = vmatprep.mubr.bf16.mxu0 %v686
        %1845 = vmatmul.mubr.bf16.gmra.mxu0 %v614
        %v1846 = vpop.f32.mrf.mxu0
        %v1847 = vadd.f32 0.0, %v1846
        %v1848 = vpop.f32.mrf.mxu0
        %v1849 = vpop.f32.mrf.mxu0
        %v1850 = vadd.f32 0.0, %v1849
        %v1851 = vpop.f32.mrf.mxu0
        %1852 = vmatprep.mubr.bf16.mxu0 %v687
        %1853 = vmatmul.mubr.bf16.gmra.mxu0 %v615
        %v1854 = vpop.f32.mrf.mxu0
        %v1855 = vadd.f32 0.0, %v1854
        %v1856 = vpop.f32.mrf.mxu0
        %v1857 = vpop.f32.mrf.mxu0
        %v1858 = vadd.f32 0.0, %v1857
        %v1859 = vpop.f32.mrf.mxu0
        %1860 = vmatprep.mubr.bf16.mxu0 %v688
        %1861 = vmatmul.mubr.bf16.gmra.mxu0 %v616
        %v1862 = vpop.f32.mrf.mxu0
        %v1863 = vadd.f32 0.0, %v1862
        %v1864 = vpop.f32.mrf.mxu0
        %v1865 = vpop.f32.mrf.mxu0
        %v1866 = vadd.f32 0.0, %v1865
        %v1867 = vpop.f32.mrf.mxu0
        %1868 = vmatprep.mubr.bf16.mxu0 %v689
        %1869 = vmatmul.mubr.bf16.gmra.mxu0 %v617
        %v1870 = vpop.f32.mrf.mxu0
        %v1871 = vadd.f32 0.0, %v1870
        %v1872 = vpop.f32.mrf.mxu0
        %v1873 = vpop.f32.mrf.mxu0
        %v1874 = vadd.f32 0.0, %v1873
        %v1875 = vpop.f32.mrf.mxu0
        %1876 = vmatprep.mubr.bf16.mxu0 %v690
        %1877 = vmatmul.mubr.bf16.gmra.mxu0 %v618
        %v1878 = vpop.f32.mrf.mxu0
        %v1879 = vadd.f32 0.0, %v1878
        %v1880 = vpop.f32.mrf.mxu0
        %v1881 = vpop.f32.mrf.mxu0
        %v1882 = vadd.f32 0.0, %v1881
        %v1883 = vpop.f32.mrf.mxu0
        %1884 = vmatprep.mubr.bf16.mxu0 %v691
        %1885 = vmatmul.mubr.bf16.gmra.mxu0 %v619
        %v1886 = vpop.f32.mrf.mxu0
        %v1887 = vadd.f32 0.0, %v1886
        %v1888 = vpop.f32.mrf.mxu0
        %v1889 = vpop.f32.mrf.mxu0
        %v1890 = vadd.f32 0.0, %v1889
        %v1891 = vpop.f32.mrf.mxu0
        %1892 = vmatprep.mubr.bf16.mxu0 %v692
        %1893 = vmatmul.mubr.bf16.gmra.mxu0 %v620
        %v1894 = vpop.f32.mrf.mxu0
        %v1895 = vadd.f32 0.0, %v1894
        %v1896 = vpop.f32.mrf.mxu0
        %v1897 = vpop.f32.mrf.mxu0
        %v1898 = vadd.f32 0.0, %v1897
        %v1899 = vpop.f32.mrf.mxu0
        %1900 = vmatprep.mubr.bf16.mxu0 %v693
        %1901 = vmatmul.mubr.bf16.gmra.mxu0 %v621
        %v1902 = vpop.f32.mrf.mxu0
        %v1903 = vadd.f32 0.0, %v1902
        %v1904 = vpop.f32.mrf.mxu0
        %v1905 = vpop.f32.mrf.mxu0
        %v1906 = vadd.f32 0.0, %v1905
        %v1907 = vpop.f32.mrf.mxu0
        %1908 = vmatprep.mubr.bf16.mxu0 %v694
        %1909 = vmatmul.mubr.bf16.gmra.mxu0 %v622
        %v1910 = vpop.f32.mrf.mxu0
        %v1911 = vadd.f32 0.0, %v1910
        %v1912 = vpop.f32.mrf.mxu0
        %v1913 = vpop.f32.mrf.mxu0
        %v1914 = vadd.f32 0.0, %v1913
        %v1915 = vpop.f32.mrf.mxu0
        %1916 = vmatprep.mubr.bf16.mxu0 %v695
        %1917 = vmatmul.mubr.bf16.gmra.mxu0 %v623
        %v1918 = vpop.f32.mrf.mxu0
        %v1919 = vadd.f32 0.0, %v1918
        %v1920 = vpop.f32.mrf.mxu0
        %v1921 = vpop.f32.mrf.mxu0
        %v1922 = vadd.f32 0.0, %v1921
        %v1923 = vpop.f32.mrf.mxu0
        %1924 = vmatprep.mubr.bf16.mxu0 %v696
        %1925 = vmatmul.mubr.bf16.gmra.mxu0 %v624
        %v1926 = vpop.f32.mrf.mxu0
        %v1927 = vadd.f32 0.0, %v1926
        %v1928 = vpop.f32.mrf.mxu0
        %v1929 = vpop.f32.mrf.mxu0
        %v1930 = vadd.f32 0.0, %v1929
        %v1931 = vpop.f32.mrf.mxu0
        %1932 = vmatprep.mubr.bf16.mxu0 %v697
        %1933 = vmatmul.mubr.bf16.gmra.mxu0 %v625
        %v1934 = vpop.f32.mrf.mxu0
        %v1935 = vadd.f32 0.0, %v1934
        %v1936 = vpop.f32.mrf.mxu0
        %v1937 = vpop.f32.mrf.mxu0
        %v1938 = vadd.f32 0.0, %v1937
        %v1939 = vpop.f32.mrf.mxu0
        %1940 = vmatprep.mubr.bf16.mxu0 %v698
        %1941 = vmatmul.mubr.bf16.gmra.mxu0 %v626
        %v1942 = vpop.f32.mrf.mxu0
        %v1943 = vadd.f32 0.0, %v1942
        %v1944 = vpop.f32.mrf.mxu0
        %v1945 = vpop.f32.mrf.mxu0
        %v1946 = vadd.f32 0.0, %v1945
        %v1947 = vpop.f32.mrf.mxu0
        %1948 = vmatprep.mubr.bf16.mxu0 %v699
        %1949 = vmatmul.mubr.bf16.gmra.mxu0 %v627
        %v1950 = vpop.f32.mrf.mxu0
        %v1951 = vadd.f32 0.0, %v1950
        %v1952 = vpop.f32.mrf.mxu0
        %v1953 = vpop.f32.mrf.mxu0
        %v1954 = vadd.f32 0.0, %v1953
        %v1955 = vpop.f32.mrf.mxu0
        %1956 = vmatprep.mubr.bf16.mxu0 %v700
        %1957 = vmatmul.mubr.bf16.gmra.mxu0 %v628
        %v1958 = vpop.f32.mrf.mxu0
        %v1959 = vadd.f32 0.0, %v1958
        %v1960 = vpop.f32.mrf.mxu0
        %v1961 = vpop.f32.mrf.mxu0
        %v1962 = vadd.f32 0.0, %v1961
        %v1963 = vpop.f32.mrf.mxu0
        %1964 = vmatprep.mubr.bf16.mxu0 %v701
        %1965 = vmatmul.mubr.bf16.gmra.mxu0 %v629
        %v1966 = vpop.f32.mrf.mxu0
        %v1967 = vadd.f32 0.0, %v1966
        %v1968 = vpop.f32.mrf.mxu0
        %v1969 = vpop.f32.mrf.mxu0
        %v1970 = vadd.f32 0.0, %v1969
        %v1971 = vpop.f32.mrf.mxu0
        %1972 = vmatprep.mubr.bf16.mxu0 %v702
        %1973 = vmatmul.mubr.bf16.gmra.mxu0 %v630
        %v1974 = vpop.f32.mrf.mxu0
        %v1975 = vadd.f32 0.0, %v1974
        %v1976 = vpop.f32.mrf.mxu0
        %v1977 = vpop.f32.mrf.mxu0
        %v1978 = vadd.f32 0.0, %v1977
        %v1979 = vpop.f32.mrf.mxu0
        %1980 = vmatprep.mubr.bf16.mxu0 %v703
        %1981 = vmatmul.mubr.bf16.gmra.mxu0 %v631
        %v1982 = vpop.f32.mrf.mxu0
        %v1983 = vadd.f32 0.0, %v1982
        %v1984 = vpop.f32.mrf.mxu0
        %v1985 = vpop.f32.mrf.mxu0
        %v1986 = vadd.f32 0.0, %v1985
        %v1987 = vpop.f32.mrf.mxu0
        %1988 = vmatprep.mubr.bf16.mxu0 %v704
        %1989 = vmatmul.mubr.bf16.gmra.mxu0 %v632
        %v1990 = vpop.f32.mrf.mxu0
        %v1991 = vadd.f32 0.0, %v1990
        %v1992 = vpop.f32.mrf.mxu0
        %v1993 = vpop.f32.mrf.mxu0
        %v1994 = vadd.f32 0.0, %v1993
        %v1995 = vpop.f32.mrf.mxu0
        %1996 = vdwg.mxu0
        %1997 = vmatprep.subr.bf16.mxu0 0
        %1998 = vmatpush1.bf16.msra.mxu0 %v1185
        %1999 = vmatprep.subr.bf16.mxu0 0
        %2000 = vmatpush1.bf16.msra.mxu0 %v1182
        %2001 = vmatprep.subr.bf16.mxu0 0
        %2002 = vmatpush1.bf16.msra.mxu0 %v1179
        %2003 = vmatprep.subr.bf16.mxu0 0
        %2004 = vmatpush1.bf16.msra.mxu0 %v1176
        %2005 = vmatprep.subr.bf16.mxu0 0
        %2006 = vmatpush1.bf16.msra.mxu0 %v1173
        %2007 = vmatprep.subr.bf16.mxu0 0
        %2008 = vmatpush1.bf16.msra.mxu0 %v1170
        %2009 = vmatprep.subr.bf16.mxu0 0
        %2010 = vmatpush1.bf16.msra.mxu0 %v1167
        %2011 = vmatprep.subr.bf16.mxu0 0
        %2012 = vmatpush1.bf16.msra.mxu0 %v1164
        %2013 = vmatprep.subr.bf16.mxu0 0
        %2014 = vmatpush2.bf16.msra.mxu0 0
        %2015 = vmatprep.subr.bf16.mxu0 0
        %2016 = vmatpush2.bf16.msra.mxu0 0
        %2017 = vmatprep.subr.bf16.mxu0 0
        %2018 = vmatpush2.bf16.msra.mxu0 0
        %2019 = vmatprep.subr.bf16.mxu0 0
        %2020 = vmatpush2.bf16.msra.mxu0 0
        %2021 = vmatprep.subr.bf16.mxu0 0
        %2022 = vmatpush2.bf16.msra.mxu0 0
        %2023 = vmatprep.subr.bf16.mxu0 0
        %2024 = vmatpush2.bf16.msra.mxu0 0
        %2025 = vmatprep.subr.bf16.mxu0 0
        %2026 = vmatpush2.bf16.msra.mxu0 0
        %2027 = vmatprep.subr.bf16.mxu0 0
        %2028 = vmatpush2.bf16.msra.mxu0 0
        %2029 = vmatprep.mubr.bf16.mxu0 0
        %2030 = vmatmul.mubr.bf16.gmra.mxu0 %v754
        %v2031 = vpop.f32.mrf.mxu0
        %v2032 = vadd.f32 %v1807, %v2031
        %v2033 = vpop.f32.mrf.mxu0
        %v2034 = vpop.f32.mrf.mxu0
        %v2035 = vadd.f32 %v1810, %v2034
        %v2036 = vpop.f32.mrf.mxu0
        %2037 = vmatprep.mubr.bf16.mxu0 0
        %2038 = vmatmul.mubr.bf16.gmra.mxu0 %v755
        %v2039 = vpop.f32.mrf.mxu0
        %v2040 = vadd.f32 %v1815, %v2039
        %v2041 = vpop.f32.mrf.mxu0
        %v2042 = vpop.f32.mrf.mxu0
        %v2043 = vadd.f32 %v1818, %v2042
        %v2044 = vpop.f32.mrf.mxu0
        %2045 = vmatprep.mubr.bf16.mxu0 0
        %2046 = vmatmul.mubr.bf16.gmra.mxu0 %v756
        %v2047 = vpop.f32.mrf.mxu0
        %v2048 = vadd.f32 %v1823, %v2047
        %v2049 = vpop.f32.mrf.mxu0
        %v2050 = vpop.f32.mrf.mxu0
        %v2051 = vadd.f32 %v1826, %v2050
        %v2052 = vpop.f32.mrf.mxu0
        %2053 = vmatprep.mubr.bf16.mxu0 0
        %2054 = vmatmul.mubr.bf16.gmra.mxu0 %v757
        %v2055 = vpop.f32.mrf.mxu0
        %v2056 = vadd.f32 %v1831, %v2055
        %v2057 = vpop.f32.mrf.mxu0
        %v2058 = vpop.f32.mrf.mxu0
        %v2059 = vadd.f32 %v1834, %v2058
        %v2060 = vpop.f32.mrf.mxu0
        %2061 = vmatprep.mubr.bf16.mxu0 0
        %2062 = vmatmul.mubr.bf16.gmra.mxu0 %v758
        %v2063 = vpop.f32.mrf.mxu0
        %v2064 = vadd.f32 %v1839, %v2063
        %v2065 = vpop.f32.mrf.mxu0
        %v2066 = vpop.f32.mrf.mxu0
        %v2067 = vadd.f32 %v1842, %v2066
        %v2068 = vpop.f32.mrf.mxu0
        %2069 = vmatprep.mubr.bf16.mxu0 0
        %2070 = vmatmul.mubr.bf16.gmra.mxu0 %v759
        %v2071 = vpop.f32.mrf.mxu0
        %v2072 = vadd.f32 %v1847, %v2071
        %v2073 = vpop.f32.mrf.mxu0
        %v2074 = vpop.f32.mrf.mxu0
        %v2075 = vadd.f32 %v1850, %v2074
        %v2076 = vpop.f32.mrf.mxu0
        %2077 = vmatprep.mubr.bf16.mxu0 0
        %2078 = vmatmul.mubr.bf16.gmra.mxu0 %v760
        %v2079 = vpop.f32.mrf.mxu0
        %v2080 = vadd.f32 %v1855, %v2079
        %v2081 = vpop.f32.mrf.mxu0
        %v2082 = vpop.f32.mrf.mxu0
        %v2083 = vadd.f32 %v1858, %v2082
        %v2084 = vpop.f32.mrf.mxu0
        %2085 = vmatprep.mubr.bf16.mxu0 0
        %2086 = vmatmul.mubr.bf16.gmra.mxu0 %v761
        %v2087 = vpop.f32.mrf.mxu0
        %v2088 = vadd.f32 %v1863, %v2087
        %v2089 = vpop.f32.mrf.mxu0
        %v2090 = vpop.f32.mrf.mxu0
        %v2091 = vadd.f32 %v1866, %v2090
        %v2092 = vpop.f32.mrf.mxu0
        %2093 = vmatprep.mubr.bf16.mxu0 0
        %2094 = vmatmul.mubr.bf16.gmra.mxu0 %v762
        %v2095 = vpop.f32.mrf.mxu0
        %v2096 = vadd.f32 %v1871, %v2095
        %v2097 = vpop.f32.mrf.mxu0
        %v2098 = vpop.f32.mrf.mxu0
        %v2099 = vadd.f32 %v1874, %v2098
        %v2100 = vpop.f32.mrf.mxu0
        %2101 = vmatprep.mubr.bf16.mxu0 0
        %2102 = vmatmul.mubr.bf16.gmra.mxu0 %v763
        %v2103 = vpop.f32.mrf.mxu0
        %v2104 = vadd.f32 %v1879, %v2103
        %v2105 = vpop.f32.mrf.mxu0
        %v2106 = vpop.f32.mrf.mxu0
        %v2107 = vadd.f32 %v1882, %v2106
        %v2108 = vpop.f32.mrf.mxu0
        %2109 = vmatprep.mubr.bf16.mxu0 0
        %2110 = vmatmul.mubr.bf16.gmra.mxu0 %v764
        %v2111 = vpop.f32.mrf.mxu0
        %v2112 = vadd.f32 %v1887, %v2111
        %v2113 = vpop.f32.mrf.mxu0
        %v2114 = vpop.f32.mrf.mxu0
        %v2115 = vadd.f32 %v1890, %v2114
        %v2116 = vpop.f32.mrf.mxu0
        %2117 = vmatprep.mubr.bf16.mxu0 0
        %2118 = vmatmul.mubr.bf16.gmra.mxu0 %v765
        %v2119 = vpop.f32.mrf.mxu0
        %v2120 = vadd.f32 %v1895, %v2119
        %v2121 = vpop.f32.mrf.mxu0
        %v2122 = vpop.f32.mrf.mxu0
        %v2123 = vadd.f32 %v1898, %v2122
        %v2124 = vpop.f32.mrf.mxu0
        %2125 = vmatprep.mubr.bf16.mxu0 0
        %2126 = vmatmul.mubr.bf16.gmra.mxu0 %v766
        %v2127 = vpop.f32.mrf.mxu0
        %v2128 = vadd.f32 %v1903, %v2127
        %v2129 = vpop.f32.mrf.mxu0
        %v2130 = vpop.f32.mrf.mxu0
        %v2131 = vadd.f32 %v1906, %v2130
        %v2132 = vpop.f32.mrf.mxu0
        %2133 = vmatprep.mubr.bf16.mxu0 0
        %2134 = vmatmul.mubr.bf16.gmra.mxu0 %v767
        %v2135 = vpop.f32.mrf.mxu0
        %v2136 = vadd.f32 %v1911, %v2135
        %v2137 = vpop.f32.mrf.mxu0
        %v2138 = vpop.f32.mrf.mxu0
        %v2139 = vadd.f32 %v1914, %v2138
        %v2140 = vpop.f32.mrf.mxu0
        %2141 = vmatprep.mubr.bf16.mxu0 0
        %2142 = vmatmul.mubr.bf16.gmra.mxu0 %v768
        %v2143 = vpop.f32.mrf.mxu0
        %v2144 = vadd.f32 %v1919, %v2143
        %v2145 = vpop.f32.mrf.mxu0
        %v2146 = vpop.f32.mrf.mxu0
        %v2147 = vadd.f32 %v1922, %v2146
        %v2148 = vpop.f32.mrf.mxu0
        %2149 = vmatprep.mubr.bf16.mxu0 0
        %2150 = vmatmul.mubr.bf16.gmra.mxu0 %v769
        %v2151 = vpop.f32.mrf.mxu0
        %v2152 = vadd.f32 %v1927, %v2151
        %v2153 = vpop.f32.mrf.mxu0
        %v2154 = vpop.f32.mrf.mxu0
        %v2155 = vadd.f32 %v1930, %v2154
        %v2156 = vpop.f32.mrf.mxu0
        %2157 = vmatprep.mubr.bf16.mxu0 0
        %2158 = vmatmul.mubr.bf16.gmra.mxu0 %v770
        %v2159 = vpop.f32.mrf.mxu0
        %v2160 = vadd.f32 %v1935, %v2159
        %v2161 = vpop.f32.mrf.mxu0
        %v2162 = vpop.f32.mrf.mxu0
        %v2163 = vadd.f32 %v1938, %v2162
        %v2164 = vpop.f32.mrf.mxu0
        %2165 = vmatprep.mubr.bf16.mxu0 0
        %2166 = vmatmul.mubr.bf16.gmra.mxu0 %v771
        %v2167 = vpop.f32.mrf.mxu0
        %v2168 = vadd.f32 %v1943, %v2167
        %v2169 = vpop.f32.mrf.mxu0
        %v2170 = vpop.f32.mrf.mxu0
        %v2171 = vadd.f32 %v1946, %v2170
        %v2172 = vpop.f32.mrf.mxu0
        %2173 = vmatprep.mubr.bf16.mxu0 0
        %2174 = vmatmul.mubr.bf16.gmra.mxu0 %v772
        %v2175 = vpop.f32.mrf.mxu0
        %v2176 = vadd.f32 %v1951, %v2175
        %v2177 = vpop.f32.mrf.mxu0
        %v2178 = vpop.f32.mrf.mxu0
        %v2179 = vadd.f32 %v1954, %v2178
        %v2180 = vpop.f32.mrf.mxu0
        %2181 = vmatprep.mubr.bf16.mxu0 0
        %2182 = vmatmul.mubr.bf16.gmra.mxu0 %v773
        %v2183 = vpop.f32.mrf.mxu0
        %v2184 = vadd.f32 %v1959, %v2183
        %v2185 = vpop.f32.mrf.mxu0
        %v2186 = vpop.f32.mrf.mxu0
        %v2187 = vadd.f32 %v1962, %v2186
        %v2188 = vpop.f32.mrf.mxu0
        %2189 = vmatprep.mubr.bf16.mxu0 0
        %2190 = vmatmul.mubr.bf16.gmra.mxu0 %v774
        %v2191 = vpop.f32.mrf.mxu0
        %v2192 = vadd.f32 %v1967, %v2191
        %v2193 = vpop.f32.mrf.mxu0
        %v2194 = vpop.f32.mrf.mxu0
        %v2195 = vadd.f32 %v1970, %v2194
        %v2196 = vpop.f32.mrf.mxu0
        %2197 = vmatprep.mubr.bf16.mxu0 0
        %2198 = vmatmul.mubr.bf16.gmra.mxu0 %v775
        %v2199 = vpop.f32.mrf.mxu0
        %v2200 = vadd.f32 %v1975, %v2199
        %v2201 = vpop.f32.mrf.mxu0
        %v2202 = vpop.f32.mrf.mxu0
        %v2203 = vadd.f32 %v1978, %v2202
        %v2204 = vpop.f32.mrf.mxu0
        %2205 = vmatprep.mubr.bf16.mxu0 0
        %2206 = vmatmul.mubr.bf16.gmra.mxu0 %v776
        %v2207 = vpop.f32.mrf.mxu0
        %v2208 = vadd.f32 %v1983, %v2207
        %v2209 = vpop.f32.mrf.mxu0
        %v2210 = vpop.f32.mrf.mxu0
        %v2211 = vadd.f32 %v1986, %v2210
        %v2212 = vpop.f32.mrf.mxu0
        %2213 = vmatprep.mubr.bf16.mxu0 0
        %2214 = vmatmul.mubr.bf16.gmra.mxu0 %v777
        %v2215 = vpop.f32.mrf.mxu0
        %v2216 = vadd.f32 %v1991, %v2215
        %v2217 = vpop.f32.mrf.mxu0
        %v2218 = vpop.f32.mrf.mxu0
        %v2219 = vadd.f32 %v1994, %v2218
        %v2220 = vpop.f32.mrf.mxu0
        %2221 = vdwg.mxu0
        %vm2270 = vcmask 1046528
        %v2271 = vrot.slane %v1552, 1
        %v2272 = vrot.slane %v1556, 1
        %v2273 = vsel %vm2270, %v2271, %v2272
        %v2274 = vrot.slane %v1561, 1
        %v2275 = vsel %vm2270, %v2272, %v2274
        %v2276 = vrot.slane %v1565, 1
        %v2277 = vrot.slane %v1571, 1
        %v2278 = vsel %vm2270, %v2276, %v2277
        %v2279 = vrot.slane %v1574, 1
        %v2280 = vsel %vm2270, %v2277, %v2279
        %v2281 = vrot.slane %v1580, 1
        %v2282 = vrot.slane %v1584, 1
        %v2283 = vsel %vm2270, %v2281, %v2282
        %v2284 = vrot.slane %v1589, 1
        %v2285 = vsel %vm2270, %v2282, %v2284
        %v2286 = vrot.slane %v1593, 1
        %v2287 = vrot.slane %v1599, 1
        %v2288 = vsel %vm2270, %v2286, %v2287
        %v2289 = vrot.slane %v1602, 1
        %v2290 = vsel %vm2270, %v2287, %v2289
        %v2291 = vrot.slane %v1608, 1
        %v2292 = vrot.slane %v1612, 1
        %v2293 = vsel %vm2270, %v2291, %v2292
        %v2294 = vrot.slane %v1617, 1
        %v2295 = vsel %vm2270, %v2292, %v2294
        %v2296 = vrot.slane %v1621, 1
        %v2297 = vrot.slane %v1627, 1
        %v2298 = vsel %vm2270, %v2296, %v2297
        %v2299 = vrot.slane %v1630, 1
        %v2300 = vsel %vm2270, %v2297, %v2299
        %v2301 = vrot.slane %v1636, 1
        %v2302 = vrot.slane %v1640, 1
        %v2303 = vsel %vm2270, %v2301, %v2302
        %v2304 = vrot.slane %v1645, 1
        %v2305 = vsel %vm2270, %v2302, %v2304
        %v2306 = vrot.slane %v1649, 1
        %v2307 = vrot.slane %v1655, 1
        %v2308 = vsel %vm2270, %v2306, %v2307
        %v2309 = vrot.slane %v1658, 1
        %v2310 = vsel %vm2270, %v2307, %v2309
        %v2311 = vrot.slane %v1664, 1
        %v2312 = vrot.slane %v1668, 1
        %v2313 = vsel %vm2270, %v2311, %v2312
        %v2314 = vrot.slane %v1673, 1
        %v2315 = vsel %vm2270, %v2312, %v2314
        %v2316 = vrot.slane %v1677, 1
        %v2317 = vrot.slane %v1683, 1
        %v2318 = vsel %vm2270, %v2316, %v2317
        %v2319 = vrot.slane %v1686, 1
        %v2320 = vsel %vm2270, %v2317, %v2319
        %v2321 = vrot.slane %v1692, 1
        %v2322 = vrot.slane %v1696, 1
        %v2323 = vsel %vm2270, %v2321, %v2322
        %v2324 = vrot.slane %v1701, 1
        %v2325 = vsel %vm2270, %v2322, %v2324
        %v2326 = vrot.slane %v1705, 1
        %v2327 = vrot.slane %v1711, 1
        %v2328 = vsel %vm2270, %v2326, %v2327
        %v2329 = vrot.slane %v1714, 1
        %v2330 = vsel %vm2270, %v2327, %v2329
        %v2331 = vrot.slane %v1720, 1
        %v2332 = vrot.slane %v1724, 1
        %v2333 = vsel %vm2270, %v2331, %v2332
        %v2334 = vrot.slane %v1729, 1
        %v2335 = vsel %vm2270, %v2332, %v2334
        %v2336 = vrot.slane %v1733, 1
        %v2337 = vrot.slane %v1739, 1
        %v2338 = vsel %vm2270, %v2336, %v2337
        %v2339 = vrot.slane %v1742, 1
        %v2340 = vsel %vm2270, %v2337, %v2339
        %v2341 = vrot.slane %v1748, 1
        %v2342 = vrot.slane %v1752, 1
        %v2343 = vsel %vm2270, %v2341, %v2342
        %v2344 = vrot.slane %v1757, 1
        %v2345 = vsel %vm2270, %v2342, %v2344
        %v2346 = vrot.slane %v1761, 1
        %v2347 = vrot.slane %v1767, 1
        %v2348 = vsel %vm2270, %v2346, %v2347
        %v2349 = vrot.slane %v1770, 1
        %v2350 = vsel %vm2270, %v2347, %v2349
        %v2383 = vadd.f32 %v1550, %v2273
        %v2384 = vadd.f32 %v1554, %v2275
        %v2385 = vadd.f32 %v1563, %v2278
        %v2386 = vadd.f32 %v1569, %v2280
        %v2387 = vadd.f32 %v1578, %v2283
        %v2388 = vadd.f32 %v1582, %v2285
        %v2389 = vadd.f32 %v1591, %v2288
        %v2390 = vadd.f32 %v1597, %v2290
        %v2391 = vadd.f32 %v1606, %v2293
        %v2392 = vadd.f32 %v1610, %v2295
        %v2393 = vadd.f32 %v1619, %v2298
        %v2394 = vadd.f32 %v1625, %v2300
        %v2395 = vadd.f32 %v1634, %v2303
        %v2396 = vadd.f32 %v1638, %v2305
        %v2397 = vadd.f32 %v1647, %v2308
        %v2398 = vadd.f32 %v1653, %v2310
        %v2399 = vadd.f32 %v1662, %v2313
        %v2400 = vadd.f32 %v1666, %v2315
        %v2401 = vadd.f32 %v1675, %v2318
        %v2402 = vadd.f32 %v1681, %v2320
        %v2403 = vadd.f32 %v1690, %v2323
        %v2404 = vadd.f32 %v1694, %v2325
        %v2405 = vadd.f32 %v1703, %v2328
        %v2406 = vadd.f32 %v1709, %v2330
        %v2407 = vadd.f32 %v1718, %v2333
        %v2408 = vadd.f32 %v1722, %v2335
        %v2409 = vadd.f32 %v1731, %v2338
        %v2410 = vadd.f32 %v1737, %v2340
        %v2411 = vadd.f32 %v1746, %v2343
        %v2412 = vadd.f32 %v1750, %v2345
        %v2413 = vadd.f32 %v1759, %v2348
        %v2414 = vadd.f32 %v1765, %v2350
        %vm2463 = vcmask 1045504
        %v2464 = vrot.slane %v2032, 2
        %v2465 = vrot.slane %v2035, 2
        %v2466 = vsel %vm2463, %v2464, %v2465
        %v2467 = vrot.slane %v2040, 2
        %v2468 = vsel %vm2463, %v2465, %v2467
        %v2469 = vrot.slane %v2043, 2
        %v2470 = vrot.slane %v2048, 2
        %v2471 = vsel %vm2463, %v2469, %v2470
        %v2472 = vrot.slane %v2051, 2
        %v2473 = vsel %vm2463, %v2470, %v2472
        %v2474 = vrot.slane %v2056, 2
        %v2475 = vrot.slane %v2059, 2
        %v2476 = vsel %vm2463, %v2474, %v2475
        %v2477 = vrot.slane %v2064, 2
        %v2478 = vsel %vm2463, %v2475, %v2477
        %v2479 = vrot.slane %v2067, 2
        %v2480 = vrot.slane %v2072, 2
        %v2481 = vsel %vm2463, %v2479, %v2480
        %v2482 = vrot.slane %v2075, 2
        %v2483 = vsel %vm2463, %v2480, %v2482
        %v2484 = vrot.slane %v2080, 2
        %v2485 = vrot.slane %v2083, 2
        %v2486 = vsel %vm2463, %v2484, %v2485
        %v2487 = vrot.slane %v2088, 2
        %v2488 = vsel %vm2463, %v2485, %v2487
        %v2489 = vrot.slane %v2091, 2
        %v2490 = vrot.slane %v2096, 2
        %v2491 = vsel %vm2463, %v2489, %v2490
        %v2492 = vrot.slane %v2099, 2
        %v2493 = vsel %vm2463, %v2490, %v2492
        %v2494 = vrot.slane %v2104, 2
        %v2495 = vrot.slane %v2107, 2
        %v2496 = vsel %vm2463, %v2494, %v2495
        %v2497 = vrot.slane %v2112, 2
        %v2498 = vsel %vm2463, %v2495, %v2497
        %v2499 = vrot.slane %v2115, 2
        %v2500 = vrot.slane %v2120, 2
        %v2501 = vsel %vm2463, %v2499, %v2500
        %v2502 = vrot.slane %v2123, 2
        %v2503 = vsel %vm2463, %v2500, %v2502
        %v2504 = vrot.slane %v2128, 2
        %v2505 = vrot.slane %v2131, 2
        %v2506 = vsel %vm2463, %v2504, %v2505
        %v2507 = vrot.slane %v2136, 2
        %v2508 = vsel %vm2463, %v2505, %v2507
        %v2509 = vrot.slane %v2139, 2
        %v2510 = vrot.slane %v2144, 2
        %v2511 = vsel %vm2463, %v2509, %v2510
        %v2512 = vrot.slane %v2147, 2
        %v2513 = vsel %vm2463, %v2510, %v2512
        %v2514 = vrot.slane %v2152, 2
        %v2515 = vrot.slane %v2155, 2
        %v2516 = vsel %vm2463, %v2514, %v2515
        %v2517 = vrot.slane %v2160, 2
        %v2518 = vsel %vm2463, %v2515, %v2517
        %v2519 = vrot.slane %v2163, 2
        %v2520 = vrot.slane %v2168, 2
        %v2521 = vsel %vm2463, %v2519, %v2520
        %v2522 = vrot.slane %v2171, 2
        %v2523 = vsel %vm2463, %v2520, %v2522
        %v2524 = vrot.slane %v2176, 2
        %v2525 = vrot.slane %v2179, 2
        %v2526 = vsel %vm2463, %v2524, %v2525
        %v2527 = vrot.slane %v2184, 2
        %v2528 = vsel %vm2463, %v2525, %v2527
        %v2529 = vrot.slane %v2187, 2
        %v2530 = vrot.slane %v2192, 2
        %v2531 = vsel %vm2463, %v2529, %v2530
        %v2532 = vrot.slane %v2195, 2
        %v2533 = vsel %vm2463, %v2530, %v2532
        %v2534 = vrot.slane %v2200, 2
        %v2535 = vrot.slane %v2203, 2
        %v2536 = vsel %vm2463, %v2534, %v2535
        %v2537 = vrot.slane %v2208, 2
        %v2538 = vsel %vm2463, %v2535, %v2537
        %v2539 = vrot.slane %v2211, 2
        %v2540 = vrot.slane %v2216, 2
        %v2541 = vsel %vm2463, %v2539, %v2540
        %v2542 = vrot.slane %v2219, 2
        %v2543 = vsel %vm2463, %v2540, %v2542
        %v2576 = vadd.f32 %v2383, %v2466
        %v2577 = vadd.f32 %v2384, %v2468
        %v2578 = vadd.f32 %v2385, %v2471
        %v2579 = vadd.f32 %v2386, %v2473
        %v2580 = vadd.f32 %v2387, %v2476
        %v2581 = vadd.f32 %v2388, %v2478
        %v2582 = vadd.f32 %v2389, %v2481
        %v2583 = vadd.f32 %v2390, %v2483
        %v2584 = vadd.f32 %v2391, %v2486
        %v2585 = vadd.f32 %v2392, %v2488
        %v2586 = vadd.f32 %v2393, %v2491
        %v2587 = vadd.f32 %v2394, %v2493
        %v2588 = vadd.f32 %v2395, %v2496
        %v2589 = vadd.f32 %v2396, %v2498
        %v2590 = vadd.f32 %v2397, %v2501
        %v2591 = vadd.f32 %v2398, %v2503
        %v2592 = vadd.f32 %v2399, %v2506
        %v2593 = vadd.f32 %v2400, %v2508
        %v2594 = vadd.f32 %v2401, %v2511
        %v2595 = vadd.f32 %v2402, %v2513
        %v2596 = vadd.f32 %v2403, %v2516
        %v2597 = vadd.f32 %v2404, %v2518
        %v2598 = vadd.f32 %v2405, %v2521
        %v2599 = vadd.f32 %v2406, %v2523
        %v2600 = vadd.f32 %v2407, %v2526
        %v2601 = vadd.f32 %v2408, %v2528
        %v2602 = vadd.f32 %v2409, %v2531
        %v2603 = vadd.f32 %v2410, %v2533
        %v2604 = vadd.f32 %v2411, %v2536
        %v2605 = vadd.f32 %v2412, %v2538
        %v2606 = vadd.f32 %v2413, %v2541
        %v2607 = vadd.f32 %v2414, %v2543
        %v2608 = vld [vmem:[%s2] sm:$0x1]
        %v2610 = vlaneseq
        %v2611 = vshrl.u32 %v2610, 7
        %v2612 = vsub.s32 0, %v2611
        %v2613 = vrot.slane %v2608, %v2612
        %v2615 = vadd.f32 %v2576, %v2613
        %v2616 = vadd.f32 %v2577, %v2613
        %v2617 = vadd.f32 %v2578, %v2613
        %v2618 = vadd.f32 %v2579, %v2613
        %v2619 = vadd.f32 %v2580, %v2613
        %v2620 = vadd.f32 %v2581, %v2613
        %v2621 = vadd.f32 %v2582, %v2613
        %v2622 = vadd.f32 %v2583, %v2613
        %v2623 = vadd.f32 %v2584, %v2613
        %v2624 = vadd.f32 %v2585, %v2613
        %v2625 = vadd.f32 %v2586, %v2613
        %v2626 = vadd.f32 %v2587, %v2613
        %v2627 = vadd.f32 %v2588, %v2613
        %v2628 = vadd.f32 %v2589, %v2613
        %v2629 = vadd.f32 %v2590, %v2613
        %v2630 = vadd.f32 %v2591, %v2613
        %v2631 = vadd.f32 %v2592, %v2613
        %v2632 = vadd.f32 %v2593, %v2613
        %v2633 = vadd.f32 %v2594, %v2613
        %v2634 = vadd.f32 %v2595, %v2613
        %v2635 = vadd.f32 %v2596, %v2613
        %v2636 = vadd.f32 %v2597, %v2613
        %v2637 = vadd.f32 %v2598, %v2613
        %v2638 = vadd.f32 %v2599, %v2613
        %v2639 = vadd.f32 %v2600, %v2613
        %v2640 = vadd.f32 %v2601, %v2613
        %v2641 = vadd.f32 %v2602, %v2613
        %v2642 = vadd.f32 %v2603, %v2613
        %v2643 = vadd.f32 %v2604, %v2613
        %v2644 = vadd.f32 %v2605, %v2613
        %v2645 = vadd.f32 %v2606, %v2613
        %v2646 = vadd.f32 %v2607, %v2613
        %v2647 = vmul.f32 %v2615, 0.2
        %v2648 = vmul.f32 %v2616, 0.2
        %v2649 = vmul.f32 %v2617, 0.2
        %v2650 = vmul.f32 %v2618, 0.2
        %v2651 = vmul.f32 %v2619, 0.2
        %v2652 = vmul.f32 %v2620, 0.2
        %v2653 = vmul.f32 %v2621, 0.2
        %v2654 = vmul.f32 %v2622, 0.2
        %v2655 = vmul.f32 %v2623, 0.2
        %v2656 = vmul.f32 %v2624, 0.2
        %v2657 = vmul.f32 %v2625, 0.2
        %v2658 = vmul.f32 %v2626, 0.2
        %v2659 = vmul.f32 %v2627, 0.2
        %v2660 = vmul.f32 %v2628, 0.2
        %v2661 = vmul.f32 %v2629, 0.2
        %v2662 = vmul.f32 %v2630, 0.2
        %v2663 = vmul.f32 %v2631, 0.2
        %v2664 = vmul.f32 %v2632, 0.2
        %v2665 = vmul.f32 %v2633, 0.2
        %v2666 = vmul.f32 %v2634, 0.2
        %v2667 = vmul.f32 %v2635, 0.2
        %v2668 = vmul.f32 %v2636, 0.2
        %v2669 = vmul.f32 %v2637, 0.2
        %v2670 = vmul.f32 %v2638, 0.2
        %v2671 = vmul.f32 %v2639, 0.2
        %v2672 = vmul.f32 %v2640, 0.2
        %v2673 = vmul.f32 %v2641, 0.2
        %v2674 = vmul.f32 %v2642, 0.2
        %v2675 = vmul.f32 %v2643, 0.2
        %v2676 = vmul.f32 %v2644, 0.2
        %v2677 = vmul.f32 %v2645, 0.2
        %v2678 = vmul.f32 %v2646, 0.2
        %v2679 = vmax.f32 %v2615, %v2647
        %v2680 = vmax.f32 %v2616, %v2648
        %v2681 = vmax.f32 %v2617, %v2649
        %v2682 = vmax.f32 %v2618, %v2650
        %v2683 = vmax.f32 %v2619, %v2651
        %v2684 = vmax.f32 %v2620, %v2652
        %v2685 = vmax.f32 %v2621, %v2653
        %v2686 = vmax.f32 %v2622, %v2654
        %v2687 = vmax.f32 %v2623, %v2655
        %v2688 = vmax.f32 %v2624, %v2656
        %v2689 = vmax.f32 %v2625, %v2657
        %v2690 = vmax.f32 %v2626, %v2658
        %v2691 = vmax.f32 %v2627, %v2659
        %v2692 = vmax.f32 %v2628, %v2660
        %v2693 = vmax.f32 %v2629, %v2661
        %v2694 = vmax.f32 %v2630, %v2662
        %v2695 = vmax.f32 %v2631, %v2663
        %v2696 = vmax.f32 %v2632, %v2664
        %v2697 = vmax.f32 %v2633, %v2665
        %v2698 = vmax.f32 %v2634, %v2666
        %v2699 = vmax.f32 %v2635, %v2667
        %v2700 = vmax.f32 %v2636, %v2668
        %v2701 = vmax.f32 %v2637, %v2669
        %v2702 = vmax.f32 %v2638, %v2670
        %v2703 = vmax.f32 %v2639, %v2671
        %v2704 = vmax.f32 %v2640, %v2672
        %v2705 = vmax.f32 %v2641, %v2673
        %v2706 = vmax.f32 %v2642, %v2674
        %v2707 = vmax.f32 %v2643, %v2675
        %v2708 = vmax.f32 %v2644, %v2676
        %v2709 = vmax.f32 %v2645, %v2677
        %v2710 = vmax.f32 %v2646, %v2678
        %2711 = vst [vmem:[%s528 + $0x1] sm:$0xff] %v2679
        %2712 = vst [vmem:[%s528 + $0x9] sm:$0xff] %v2680
        %2713 = vst [vmem:[%s528 + $0x19] sm:$0xff] %v2681
        %2714 = vst [vmem:[%s528 + $0x21] sm:$0xff] %v2682
        %2715 = vst [vmem:[%s528 + $0x31] sm:$0xff] %v2683
        %2716 = vst [vmem:[%s528 + $0x39] sm:$0xff] %v2684
        %2717 = vst [vmem:[%s528 + $0x49] sm:$0xff] %v2685
        %2718 = vst [vmem:[%s528 + $0x51] sm:$0xff] %v2686
        %2719 = vst [vmem:[%s528 + $0x61] sm:$0xff] %v2687
        %2720 = vst [vmem:[%s528 + $0x69] sm:$0xff] %v2688
        %2721 = vst [vmem:[%s528 + $0x79] sm:$0xff] %v2689
        %2722 = vst [vmem:[%s528 + $0x81] sm:$0xff] %v2690
        %2723 = vst [vmem:[%s528 + $0x91] sm:$0xff] %v2691
        %2724 = vst [vmem:[%s528 + $0x99] sm:$0xff] %v2692
        %2725 = vst [vmem:[%s528 + $0xa9] sm:$0xff] %v2693
        %2726 = vst [vmem:[%s528 + $0xb1] sm:$0xff] %v2694
        %2727 = vst [vmem:[%s528 + $0xc1] sm:$0xff] %v2695
        %2728 = vst [vmem:[%s528 + $0xc9] sm:$0xff] %v2696
        %2729 = vst [vmem:[%s528 + $0xd9] sm:$0xff] %v2697
        %2730 = vst [vmem:[%s528 + $0xe1] sm:$0xff] %v2698
        %2731 = vst [vmem:[%s528 + $0xf1] sm:$0xff] %v2699
        %2732 = vst [vmem:[%s528 + $0xf9] sm:$0xff] %v2700
        %2733 = vst [vmem:[%s528 + $0x109] sm:$0xff] %v2701
        %2734 = vst [vmem:[%s528 + $0x111] sm:$0xff] %v2702
        %2735 = vst [vmem:[%s528 + $0x121] sm:$0xff] %v2703
        %2736 = vst [vmem:[%s528 + $0x129] sm:$0xff] %v2704
        %2737 = vst [vmem:[%s528 + $0x139] sm:$0xff] %v2705
        %2738 = vst [vmem:[%s528 + $0x141] sm:$0xff] %v2706
        %2739 = vst [vmem:[%s528 + $0x151] sm:$0xff] %v2707
        %2740 = vst [vmem:[%s528 + $0x159] sm:$0xff] %v2708
        %2741 = vst [vmem:[%s528 + $0x169] sm:$0xff] %v2709
        %2742 = vst [vmem:[%s528 + $0x171] sm:$0xff] %v2710
        %v2743 = vld [vmem:[#allocation2] sm:$0xff]
        %v2744 = vld [vmem:[#allocation2 + $0x8] sm:$0xff]
        %v2745 = vld [vmem:[#allocation2 + $0x10] sm:$0xff]
        %v2746 = vld [vmem:[#allocation2 + $0x18] sm:$0xff]
        %v2747 = vld [vmem:[#allocation2 + $0x20] sm:$0xff]
        %v2748 = vld [vmem:[#allocation2 + $0x28] sm:$0xff]
        %v2749 = vld [vmem:[#allocation2 + $0x30] sm:$0xff]
        %v2750 = vld [vmem:[#allocation2 + $0x38] sm:$0xff]
        %v2751 = vld [vmem:[#allocation2 + $0x40] sm:$0xff]
        %v2752 = vld [vmem:[#allocation2 + $0x48] sm:$0xff]
        %v2753 = vld [vmem:[#allocation2 + $0x50] sm:$0xff]
        %v2754 = vld [vmem:[#allocation2 + $0x58] sm:$0xff]
        %v2755 = vld [vmem:[#allocation2 + $0x60] sm:$0xff]
        %v2756 = vld [vmem:[#allocation2 + $0x68] sm:$0xff]
        %v2757 = vld [vmem:[#allocation2 + $0x70] sm:$0xff]
        %v2758 = vld [vmem:[#allocation2 + $0x78] sm:$0xff]
        %v2759 = vld [vmem:[#allocation2 + $0x80] sm:$0xff]
        %v2760 = vld [vmem:[#allocation2 + $0x88] sm:$0xff]
        %v2761 = vld [vmem:[#allocation2 + $0x90] sm:$0xff]
        %v2762 = vld [vmem:[#allocation2 + $0x98] sm:$0xff]
        %v2763 = vld [vmem:[#allocation2 + $0xa0] sm:$0xff]
        %v2764 = vld [vmem:[#allocation2 + $0xa8] sm:$0xff]
        %v2765 = vld [vmem:[#allocation2 + $0xb0] sm:$0xff]
        %v2766 = vld [vmem:[#allocation2 + $0xb8] sm:$0xff]
        %v2767 = vld [vmem:[#allocation2 + $0xc0] sm:$0xff]
        %v2768 = vld [vmem:[#allocation2 + $0xc8] sm:$0xff]
        %v2769 = vld [vmem:[#allocation2 + $0xd0] sm:$0xff]
        %v2770 = vld [vmem:[#allocation2 + $0xd8] sm:$0xff]
        %v2771 = vld [vmem:[#allocation2 + $0xe0] sm:$0xff]
        %v2772 = vld [vmem:[#allocation2 + $0xe8] sm:$0xff]
        %v2773 = vld [vmem:[#allocation2 + $0xf0] sm:$0xff]
        %v2774 = vld [vmem:[#allocation2 + $0xf8] sm:$0xff]
        %v2775 = vld [vmem:[#allocation2 + $0x100] sm:$0xff]
        %v2776 = vld [vmem:[#allocation2 + $0x108] sm:$0xff]
        %v2777 = vld [vmem:[#allocation2 + $0x110] sm:$0xff]
        %v2778 = vld [vmem:[#allocation2 + $0x118] sm:$0xff]
        %v2779 = vld [vmem:[#allocation2 + $0x120] sm:$0xff]
        %v2780 = vld [vmem:[#allocation2 + $0x128] sm:$0xff]
        %v2781 = vld [vmem:[#allocation2 + $0x130] sm:$0xff]
        %v2782 = vld [vmem:[#allocation2 + $0x138] sm:$0xff]
        %v2783 = vld [vmem:[#allocation2 + $0x140] sm:$0xff]
        %v2784 = vld [vmem:[#allocation2 + $0x148] sm:$0xff]
        %v2785 = vld [vmem:[#allocation2 + $0x150] sm:$0xff]
        %v2786 = vld [vmem:[#allocation2 + $0x158] sm:$0xff]
        %v2787 = vld [vmem:[#allocation2 + $0x160] sm:$0xff]
        %v2788 = vld [vmem:[#allocation2 + $0x168] sm:$0xff]
        %v2789 = vld [vmem:[#allocation2 + $0x170] sm:$0xff]
        %v2790 = vld [vmem:[#allocation2 + $0x178] sm:$0xff]
        %v2791 = vpack.c.bf16 %v2744, %v2743
        %v2792 = vpack.c.bf16 %v2746, %v2745
        %v2793 = vpack.c.bf16 %v2748, %v2747
        %v2794 = vpack.c.bf16 %v2750, %v2749
        %v2795 = vpack.c.bf16 %v2752, %v2751
        %v2796 = vpack.c.bf16 %v2754, %v2753
        %v2797 = vpack.c.bf16 %v2756, %v2755
        %v2798 = vpack.c.bf16 %v2758, %v2757
        %v2799 = vpack.c.bf16 %v2760, %v2759
        %v2800 = vpack.c.bf16 %v2762, %v2761
        %v2801 = vpack.c.bf16 %v2764, %v2763
        %v2802 = vpack.c.bf16 %v2766, %v2765
        %v2803 = vpack.c.bf16 %v2768, %v2767
        %v2804 = vpack.c.bf16 %v2770, %v2769
        %v2805 = vpack.c.bf16 %v2772, %v2771
        %v2806 = vpack.c.bf16 %v2774, %v2773
        %v2807 = vpack.c.bf16 %v2776, %v2775
        %v2808 = vpack.c.bf16 %v2778, %v2777
        %v2809 = vpack.c.bf16 %v2780, %v2779
        %v2810 = vpack.c.bf16 %v2782, %v2781
        %v2811 = vpack.c.bf16 %v2784, %v2783
        %v2812 = vpack.c.bf16 %v2786, %v2785
        %v2813 = vpack.c.bf16 %v2788, %v2787
        %v2814 = vpack.c.bf16 %v2790, %v2789
        %v2815 = vld [vmem:[%s528] sm:$0xff]
        %v2816 = vld [vmem:[%s528 + $0x8] sm:$0xff]
        %v2817 = vld [vmem:[%s528 + $0x10] sm:$0xff]
        %v2818 = vld [vmem:[%s528 + $0x18] sm:$0xff]
        %v2819 = vld [vmem:[%s528 + $0x20] sm:$0xff]
        %v2820 = vld [vmem:[%s528 + $0x28] sm:$0xff]
        %v2821 = vld [vmem:[%s528 + $0x30] sm:$0xff]
        %v2822 = vld [vmem:[%s528 + $0x38] sm:$0xff]
        %v2823 = vld [vmem:[%s528 + $0x40] sm:$0xff]
        %v2824 = vld [vmem:[%s528 + $0x48] sm:$0xff]
        %v2825 = vld [vmem:[%s528 + $0x50] sm:$0xff]
        %v2826 = vld [vmem:[%s528 + $0x58] sm:$0xff]
        %v2827 = vld [vmem:[%s528 + $0x60] sm:$0xff]
        %v2828 = vld [vmem:[%s528 + $0x68] sm:$0xff]
        %v2829 = vld [vmem:[%s528 + $0x70] sm:$0xff]
        %v2830 = vld [vmem:[%s528 + $0x78] sm:$0xff]
        %v2831 = vld [vmem:[%s528 + $0x80] sm:$0xff]
        %v2832 = vld [vmem:[%s528 + $0x88] sm:$0xff]
        %v2833 = vld [vmem:[%s528 + $0x90] sm:$0xff]
        %v2834 = vld [vmem:[%s528 + $0x98] sm:$0xff]
        %v2835 = vld [vmem:[%s528 + $0xa0] sm:$0xff]
        %v2836 = vld [vmem:[%s528 + $0xa8] sm:$0xff]
        %v2837 = vld [vmem:[%s528 + $0xb0] sm:$0xff]
        %v2838 = vld [vmem:[%s528 + $0xb8] sm:$0xff]
        %v2839 = vld [vmem:[%s528 + $0xc0] sm:$0xff]
        %v2840 = vld [vmem:[%s528 + $0xc8] sm:$0xff]
        %v2841 = vld [vmem:[%s528 + $0xd0] sm:$0xff]
        %v2842 = vld [vmem:[%s528 + $0xd8] sm:$0xff]
        %v2843 = vld [vmem:[%s528 + $0xe0] sm:$0xff]
        %v2844 = vld [vmem:[%s528 + $0xe8] sm:$0xff]
        %v2845 = vld [vmem:[%s528 + $0xf0] sm:$0xff]
        %v2846 = vld [vmem:[%s528 + $0xf8] sm:$0xff]
        %v2847 = vld [vmem:[%s528 + $0x100] sm:$0xff]
        %v2848 = vld [vmem:[%s528 + $0x108] sm:$0xff]
        %v2849 = vld [vmem:[%s528 + $0x110] sm:$0xff]
        %v2850 = vld [vmem:[%s528 + $0x118] sm:$0xff]
        %v2851 = vld [vmem:[%s528 + $0x120] sm:$0xff]
        %v2852 = vld [vmem:[%s528 + $0x128] sm:$0xff]
        %v2853 = vld [vmem:[%s528 + $0x130] sm:$0xff]
        %v2854 = vld [vmem:[%s528 + $0x138] sm:$0xff]
        %v2855 = vld [vmem:[%s528 + $0x140] sm:$0xff]
        %v2856 = vld [vmem:[%s528 + $0x148] sm:$0xff]
        %v2857 = vld [vmem:[%s528 + $0x150] sm:$0xff]
        %v2858 = vld [vmem:[%s528 + $0x158] sm:$0xff]
        %v2859 = vld [vmem:[%s528 + $0x160] sm:$0xff]
        %v2860 = vld [vmem:[%s528 + $0x168] sm:$0xff]
        %v2861 = vld [vmem:[%s528 + $0x170] sm:$0xff]
        %v2862 = vld [vmem:[%s528 + $0x178] sm:$0xff]
        %v2863 = vpack.c.bf16 %v2816, %v2815
        %v2864 = vpack.c.bf16 %v2818, %v2817
        %v2865 = vpack.c.bf16 %v2820, %v2819
        %v2866 = vpack.c.bf16 %v2822, %v2821
        %v2867 = vpack.c.bf16 %v2824, %v2823
        %v2868 = vpack.c.bf16 %v2826, %v2825
        %v2869 = vpack.c.bf16 %v2828, %v2827
        %v2870 = vpack.c.bf16 %v2830, %v2829
        %v2871 = vpack.c.bf16 %v2832, %v2831
        %v2872 = vpack.c.bf16 %v2834, %v2833
        %v2873 = vpack.c.bf16 %v2836, %v2835
        %v2874 = vpack.c.bf16 %v2838, %v2837
        %v2875 = vpack.c.bf16 %v2840, %v2839
        %v2876 = vpack.c.bf16 %v2842, %v2841
        %v2877 = vpack.c.bf16 %v2844, %v2843
        %v2878 = vpack.c.bf16 %v2846, %v2845
        %v2879 = vpack.c.bf16 %v2848, %v2847
        %v2880 = vpack.c.bf16 %v2850, %v2849
        %v2881 = vpack.c.bf16 %v2852, %v2851
        %v2882 = vpack.c.bf16 %v2854, %v2853
        %v2883 = vpack.c.bf16 %v2856, %v2855
        %v2884 = vpack.c.bf16 %v2858, %v2857
        %v2885 = vpack.c.bf16 %v2860, %v2859
        %v2886 = vpack.c.bf16 %v2862, %v2861
        %v2887 = vld [vmem:[%s705] sm:$0xff]
        %v2888 = vld [vmem:[%s705 + $0x8] sm:$0xff]
        %v2889 = vld [vmem:[%s705 + $0x10] sm:$0xff]
        %v2890 = vld [vmem:[%s705 + $0x18] sm:$0xff]
        %v2891 = vld [vmem:[%s705 + $0x20] sm:$0xff]
        %v2892 = vld [vmem:[%s705 + $0x28] sm:$0xff]
        %v2893 = vld [vmem:[%s705 + $0x30] sm:$0xff]
        %v2894 = vld [vmem:[%s705 + $0x38] sm:$0xff]
        %v2895 = vld [vmem:[%s705 + $0x40] sm:$0xff]
        %v2896 = vld [vmem:[%s705 + $0x48] sm:$0xff]
        %v2897 = vld [vmem:[%s705 + $0x50] sm:$0xff]
        %v2898 = vld [vmem:[%s705 + $0x58] sm:$0xff]
        %v2899 = vld [vmem:[%s705 + $0x60] sm:$0xff]
        %v2900 = vld [vmem:[%s705 + $0x68] sm:$0xff]
        %v2901 = vld [vmem:[%s705 + $0x70] sm:$0xff]
        %v2902 = vld [vmem:[%s705 + $0x78] sm:$0xff]
        %v2903 = vld [vmem:[%s705 + $0x80] sm:$0xff]
        %v2904 = vld [vmem:[%s705 + $0x88] sm:$0xff]
        %v2905 = vld [vmem:[%s705 + $0x90] sm:$0xff]
        %v2906 = vld [vmem:[%s705 + $0x98] sm:$0xff]
        %v2907 = vld [vmem:[%s705 + $0xa0] sm:$0xff]
        %v2908 = vld [vmem:[%s705 + $0xa8] sm:$0xff]
        %v2909 = vld [vmem:[%s705 + $0xb0] sm:$0xff]
        %v2910 = vld [vmem:[%s705 + $0xb8] sm:$0xff]
        %v2911 = vld [vmem:[%s705 + $0xc0] sm:$0xff]
        %v2912 = vld [vmem:[%s705 + $0xc8] sm:$0xff]
        %v2913 = vld [vmem:[%s705 + $0xd0] sm:$0xff]
        %v2914 = vld [vmem:[%s705 + $0xd8] sm:$0xff]
        %v2915 = vld [vmem:[%s705 + $0xe0] sm:$0xff]
        %v2916 = vld [vmem:[%s705 + $0xe8] sm:$0xff]
        %v2917 = vld [vmem:[%s705 + $0xf0] sm:$0xff]
        %v2918 = vld [vmem:[%s705 + $0xf8] sm:$0xff]
        %v2919 = vld [vmem:[%s705 + $0x100] sm:$0xff]
        %v2920 = vld [vmem:[%s705 + $0x108] sm:$0xff]
        %v2921 = vld [vmem:[%s705 + $0x110] sm:$0xff]
        %v2922 = vld [vmem:[%s705 + $0x118] sm:$0xff]
        %v2923 = vld [vmem:[%s705 + $0x120] sm:$0xff]
        %v2924 = vld [vmem:[%s705 + $0x128] sm:$0xff]
        %v2925 = vld [vmem:[%s705 + $0x130] sm:$0xff]
        %v2926 = vld [vmem:[%s705 + $0x138] sm:$0xff]
        %v2927 = vld [vmem:[%s705 + $0x140] sm:$0xff]
        %v2928 = vld [vmem:[%s705 + $0x148] sm:$0xff]
        %v2929 = vld [vmem:[%s705 + $0x150] sm:$0xff]
        %v2930 = vld [vmem:[%s705 + $0x158] sm:$0xff]
        %v2931 = vld [vmem:[%s705 + $0x160] sm:$0xff]
        %v2932 = vld [vmem:[%s705 + $0x168] sm:$0xff]
        %v2933 = vld [vmem:[%s705 + $0x170] sm:$0xff]
        %v2934 = vld [vmem:[%s705 + $0x178] sm:$0xff]
        %v2935 = vpack.c.bf16 %v2888, %v2887
        %v2936 = vpack.c.bf16 %v2890, %v2889
        %v2937 = vpack.c.bf16 %v2892, %v2891
        %v2938 = vpack.c.bf16 %v2894, %v2893
        %v2939 = vpack.c.bf16 %v2896, %v2895
        %v2940 = vpack.c.bf16 %v2898, %v2897
        %v2941 = vpack.c.bf16 %v2900, %v2899
        %v2942 = vpack.c.bf16 %v2902, %v2901
        %v2943 = vpack.c.bf16 %v2904, %v2903
        %v2944 = vpack.c.bf16 %v2906, %v2905
        %v2945 = vpack.c.bf16 %v2908, %v2907
        %v2946 = vpack.c.bf16 %v2910, %v2909
        %v2947 = vpack.c.bf16 %v2912, %v2911
        %v2948 = vpack.c.bf16 %v2914, %v2913
        %v2949 = vpack.c.bf16 %v2916, %v2915
        %v2950 = vpack.c.bf16 %v2918, %v2917
        %v2951 = vpack.c.bf16 %v2920, %v2919
        %v2952 = vpack.c.bf16 %v2922, %v2921
        %v2953 = vpack.c.bf16 %v2924, %v2923
        %v2954 = vpack.c.bf16 %v2926, %v2925
        %v2955 = vpack.c.bf16 %v2928, %v2927
        %v2956 = vpack.c.bf16 %v2930, %v2929
        %v2957 = vpack.c.bf16 %v2932, %v2931
        %v2958 = vpack.c.bf16 %v2934, %v2933
        %v2959 = vld [vmem:[#allocation8] sm:$0xff]
        %v2960 = vld [vmem:[#allocation8 + $0x8] sm:$0xf]
        %v2961 = vld [vmem:[#allocation8 + $0xc] sm:$0xff]
        %v2962 = vld [vmem:[#allocation8 + $0x14] sm:$0xf]
        %v2963 = vld [vmem:[#allocation8 + $0x18] sm:$0xff]
        %v2964 = vld [vmem:[#allocation8 + $0x20] sm:$0xf]
        %v2965 = vld [vmem:[#allocation8 + $0x24] sm:$0xff]
        %v2966 = vld [vmem:[#allocation8 + $0x2c] sm:$0xf]
        %v2967 = vld [vmem:[#allocation8 + $0x30] sm:$0xff]
        %v2968 = vld [vmem:[#allocation8 + $0x38] sm:$0xf]
        %v2969 = vld [vmem:[#allocation8 + $0x3c] sm:$0xff]
        %v2970 = vld [vmem:[#allocation8 + $0x44] sm:$0xf]
        %v2971 = vld [vmem:[#allocation8 + $0x48] sm:$0xff]
        %v2972 = vld [vmem:[#allocation8 + $0x50] sm:$0xf]
        %v2973 = vld [vmem:[#allocation8 + $0x54] sm:$0xff]
        %v2974 = vld [vmem:[#allocation8 + $0x5c] sm:$0xf]
        %v2975 = vld [vmem:[#allocation8 + $0x60] sm:$0xff]
        %v2976 = vld [vmem:[#allocation8 + $0x68] sm:$0xf]
        %v2977 = vld [vmem:[#allocation8 + $0x6c] sm:$0xff]
        %v2978 = vld [vmem:[#allocation8 + $0x74] sm:$0xf]
        %v2979 = vld [vmem:[#allocation8 + $0x78] sm:$0xff]
        %v2980 = vld [vmem:[#allocation8 + $0x80] sm:$0xf]
        %v2981 = vld [vmem:[#allocation8 + $0x84] sm:$0xff]
        %v2982 = vld [vmem:[#allocation8 + $0x8c] sm:$0xf]
        %v2983 = vld [vmem:[#allocation8 + $0x90] sm:$0xff]
        %v2984 = vld [vmem:[#allocation8 + $0x98] sm:$0xf]
        %v2985 = vld [vmem:[#allocation8 + $0x9c] sm:$0xff]
        %v2986 = vld [vmem:[#allocation8 + $0xa4] sm:$0xf]
        %v2987 = vld [vmem:[#allocation8 + $0xa8] sm:$0xff]
        %v2988 = vld [vmem:[#allocation8 + $0xb0] sm:$0xf]
        %v2989 = vld [vmem:[#allocation8 + $0xb4] sm:$0xff]
        %v2990 = vld [vmem:[#allocation8 + $0xbc] sm:$0xf]
        %v2991 = vld [vmem:[#allocation8 + $0xc0] sm:$0xff]
        %v2992 = vld [vmem:[#allocation8 + $0xc8] sm:$0xf]
        %v2993 = vld [vmem:[#allocation8 + $0xcc] sm:$0xff]
        %v2994 = vld [vmem:[#allocation8 + $0xd4] sm:$0xf]
        %v2995 = vld [vmem:[#allocation8 + $0xd8] sm:$0xff]
        %v2996 = vld [vmem:[#allocation8 + $0xe0] sm:$0xf]
        %v2997 = vld [vmem:[#allocation8 + $0xe4] sm:$0xff]
        %v2998 = vld [vmem:[#allocation8 + $0xec] sm:$0xf]
        %v2999 = vld [vmem:[#allocation8 + $0xf0] sm:$0xff]
        %v3000 = vld [vmem:[#allocation8 + $0xf8] sm:$0xf]
        %v3001 = vld [vmem:[#allocation8 + $0xfc] sm:$0xff]
        %v3002 = vld [vmem:[#allocation8 + $0x104] sm:$0xf]
        %v3003 = vld [vmem:[#allocation8 + $0x108] sm:$0xff]
        %v3004 = vld [vmem:[#allocation8 + $0x110] sm:$0xf]
        %v3005 = vld [vmem:[#allocation8 + $0x114] sm:$0xff]
        %v3006 = vld [vmem:[#allocation8 + $0x11c] sm:$0xf]
        %v3007 = vld [vmem:[#allocation8 + $0x120] sm:$0xff]
        %v3008 = vld [vmem:[#allocation8 + $0x128] sm:$0xf]
        %v3009 = vld [vmem:[#allocation8 + $0x12c] sm:$0xff]
        %v3010 = vld [vmem:[#allocation8 + $0x134] sm:$0xf]
        %v3011 = vld [vmem:[#allocation8 + $0x138] sm:$0xff]
        %v3012 = vld [vmem:[#allocation8 + $0x140] sm:$0xf]
        %v3013 = vld [vmem:[#allocation8 + $0x144] sm:$0xff]
        %v3014 = vld [vmem:[#allocation8 + $0x14c] sm:$0xf]
        %v3015 = vld [vmem:[#allocation8 + $0x150] sm:$0xff]
        %v3016 = vld [vmem:[#allocation8 + $0x158] sm:$0xf]
        %v3017 = vld [vmem:[#allocation8 + $0x15c] sm:$0xff]
        %v3018 = vld [vmem:[#allocation8 + $0x164] sm:$0xf]
        %v3019 = vld [vmem:[#allocation8 + $0x168] sm:$0xff]
        %v3020 = vld [vmem:[#allocation8 + $0x170] sm:$0xf]
        %v3021 = vld [vmem:[#allocation8 + $0x174] sm:$0xff]
        %v3022 = vld [vmem:[#allocation8 + $0x17c] sm:$0xf]
        %v3023 = vld [vmem:[#allocation8 + $0x180] sm:$0xff]
        %v3024 = vld [vmem:[#allocation8 + $0x188] sm:$0xf]
        %v3025 = vld [vmem:[#allocation8 + $0x18c] sm:$0xff]
        %v3026 = vld [vmem:[#allocation8 + $0x194] sm:$0xf]
        %v3027 = vld [vmem:[#allocation8 + $0x198] sm:$0xff]
        %v3028 = vld [vmem:[#allocation8 + $0x1a0] sm:$0xf]
        %v3029 = vld [vmem:[#allocation8 + $0x1a4] sm:$0xff]
        %v3030 = vld [vmem:[#allocation8 + $0x1ac] sm:$0xf]
        %v3031 = vld [vmem:[#allocation8 + $0x1b0] sm:$0xff]
        %v3032 = vld [vmem:[#allocation8 + $0x1b8] sm:$0xf]
        %v3033 = vld [vmem:[#allocation8 + $0x1bc] sm:$0xff]
        %v3034 = vld [vmem:[#allocation8 + $0x1c4] sm:$0xf]
        %v3035 = vld [vmem:[#allocation8 + $0x1c8] sm:$0xff]
        %v3036 = vld [vmem:[#allocation8 + $0x1d0] sm:$0xf]
        %v3037 = vld [vmem:[#allocation8 + $0x1d4] sm:$0xff]
        %v3038 = vld [vmem:[#allocation8 + $0x1dc] sm:$0xf]
        %v3039 = vld [vmem:[#allocation8 + $0x1e0] sm:$0xff]
        %v3040 = vld [vmem:[#allocation8 + $0x1e8] sm:$0xf]
        %v3041 = vld [vmem:[#allocation8 + $0x1ec] sm:$0xff]
        %v3042 = vld [vmem:[#allocation8 + $0x1f4] sm:$0xf]
        %v3043 = vld [vmem:[#allocation8 + $0x1f8] sm:$0xff]
        %v3044 = vld [vmem:[#allocation8 + $0x200] sm:$0xf]
        %v3045 = vld [vmem:[#allocation8 + $0x204] sm:$0xff]
        %v3046 = vld [vmem:[#allocation8 + $0x20c] sm:$0xf]
        %v3047 = vld [vmem:[#allocation8 + $0x210] sm:$0xff]
        %v3048 = vld [vmem:[#allocation8 + $0x218] sm:$0xf]
        %v3049 = vld [vmem:[#allocation8 + $0x21c] sm:$0xff]
        %v3050 = vld [vmem:[#allocation8 + $0x224] sm:$0xf]
        %v3051 = vld [vmem:[#allocation8 + $0x228] sm:$0xff]
        %v3052 = vld [vmem:[#allocation8 + $0x230] sm:$0xf]
        %v3053 = vld [vmem:[#allocation8 + $0x234] sm:$0xff]
        %v3054 = vld [vmem:[#allocation8 + $0x23c] sm:$0xf]
        %v3151 = vunpack.c.l.b16 %v2959
        %v3152 = vunpack.c.h.b16 %v2959
        %v3153 = vunpack.c.l.b16 %v2960
        %v3154 = vunpack.c.l.b16 %v2961
        %v3155 = vunpack.c.h.b16 %v2961
        %v3156 = vunpack.c.l.b16 %v2962
        %v3157 = vunpack.c.l.b16 %v2963
        %v3158 = vunpack.c.h.b16 %v2963
        %v3159 = vunpack.c.l.b16 %v2964
        %v3160 = vunpack.c.l.b16 %v2965
        %v3161 = vunpack.c.h.b16 %v2965
        %v3162 = vunpack.c.l.b16 %v2966
        %v3163 = vunpack.c.l.b16 %v2967
        %v3164 = vunpack.c.h.b16 %v2967
        %v3165 = vunpack.c.l.b16 %v2968
        %v3166 = vunpack.c.l.b16 %v2969
        %v3167 = vunpack.c.h.b16 %v2969
        %v3168 = vunpack.c.l.b16 %v2970
        %v3169 = vunpack.c.l.b16 %v2971
        %v3170 = vunpack.c.h.b16 %v2971
        %v3171 = vunpack.c.l.b16 %v2972
        %v3172 = vunpack.c.l.b16 %v2973
        %v3173 = vunpack.c.h.b16 %v2973
        %v3174 = vunpack.c.l.b16 %v2974
        %v3175 = vunpack.c.l.b16 %v2975
        %v3176 = vunpack.c.h.b16 %v2975
        %v3177 = vunpack.c.l.b16 %v2976
        %v3178 = vunpack.c.l.b16 %v2977
        %v3179 = vunpack.c.h.b16 %v2977
        %v3180 = vunpack.c.l.b16 %v2978
        %v3181 = vunpack.c.l.b16 %v2979
        %v3182 = vunpack.c.h.b16 %v2979
        %v3183 = vunpack.c.l.b16 %v2980
        %v3184 = vunpack.c.l.b16 %v2981
        %v3185 = vunpack.c.h.b16 %v2981
        %v3186 = vunpack.c.l.b16 %v2982
        %v3187 = vunpack.c.l.b16 %v2983
        %v3188 = vunpack.c.h.b16 %v2983
        %v3189 = vunpack.c.l.b16 %v2984
        %v3190 = vunpack.c.l.b16 %v2985
        %v3191 = vunpack.c.h.b16 %v2985
        %v3192 = vunpack.c.l.b16 %v2986
        %v3193 = vunpack.c.l.b16 %v2987
        %v3194 = vunpack.c.h.b16 %v2987
        %v3195 = vunpack.c.l.b16 %v2988
        %v3196 = vunpack.c.l.b16 %v2989
        %v3197 = vunpack.c.h.b16 %v2989
        %v3198 = vunpack.c.l.b16 %v2990
        %v3199 = vunpack.c.l.b16 %v2991
        %v3200 = vunpack.c.h.b16 %v2991
        %v3201 = vunpack.c.l.b16 %v2992
        %v3202 = vunpack.c.l.b16 %v2993
        %v3203 = vunpack.c.h.b16 %v2993
        %v3204 = vunpack.c.l.b16 %v2994
        %v3205 = vunpack.c.l.b16 %v2995
        %v3206 = vunpack.c.h.b16 %v2995
        %v3207 = vunpack.c.l.b16 %v2996
        %v3208 = vunpack.c.l.b16 %v2997
        %v3209 = vunpack.c.h.b16 %v2997
        %v3210 = vunpack.c.l.b16 %v2998
        %v3211 = vunpack.c.l.b16 %v2999
        %v3212 = vunpack.c.h.b16 %v2999
        %v3213 = vunpack.c.l.b16 %v3000
        %v3214 = vunpack.c.l.b16 %v3001
        %v3215 = vunpack.c.h.b16 %v3001
        %v3216 = vunpack.c.l.b16 %v3002
        %v3217 = vunpack.c.l.b16 %v3003
        %v3218 = vunpack.c.h.b16 %v3003
        %v3219 = vunpack.c.l.b16 %v3004
        %v3220 = vunpack.c.l.b16 %v3005
        %v3221 = vunpack.c.h.b16 %v3005
        %v3222 = vunpack.c.l.b16 %v3006
        %v3223 = vunpack.c.l.b16 %v3007
        %v3224 = vunpack.c.h.b16 %v3007
        %v3225 = vunpack.c.l.b16 %v3008
        %v3226 = vunpack.c.l.b16 %v3009
        %v3227 = vunpack.c.h.b16 %v3009
        %v3228 = vunpack.c.l.b16 %v3010
        %v3229 = vunpack.c.l.b16 %v3011
        %v3230 = vunpack.c.h.b16 %v3011
        %v3231 = vunpack.c.l.b16 %v3012
        %v3232 = vunpack.c.l.b16 %v3013
        %v3233 = vunpack.c.h.b16 %v3013
        %v3234 = vunpack.c.l.b16 %v3014
        %v3235 = vunpack.c.l.b16 %v3015
        %v3236 = vunpack.c.h.b16 %v3015
        %v3237 = vunpack.c.l.b16 %v3016
        %v3238 = vunpack.c.l.b16 %v3017
        %v3239 = vunpack.c.h.b16 %v3017
        %v3240 = vunpack.c.l.b16 %v3018
        %v3241 = vunpack.c.l.b16 %v3019
        %v3242 = vunpack.c.h.b16 %v3019
        %v3243 = vunpack.c.l.b16 %v3020
        %v3244 = vunpack.c.l.b16 %v3021
        %v3245 = vunpack.c.h.b16 %v3021
        %v3246 = vunpack.c.l.b16 %v3022
        %v3247 = vunpack.c.l.b16 %v3023
        %v3248 = vunpack.c.h.b16 %v3023
        %v3249 = vunpack.c.l.b16 %v3024
        %v3250 = vunpack.c.l.b16 %v3025
        %v3251 = vunpack.c.h.b16 %v3025
        %v3252 = vunpack.c.l.b16 %v3026
        %v3253 = vunpack.c.l.b16 %v3027
        %v3254 = vunpack.c.h.b16 %v3027
        %v3255 = vunpack.c.l.b16 %v3028
        %v3256 = vunpack.c.l.b16 %v3029
        %v3257 = vunpack.c.h.b16 %v3029
        %v3258 = vunpack.c.l.b16 %v3030
        %v3259 = vunpack.c.l.b16 %v3031
        %v3260 = vunpack.c.h.b16 %v3031
        %v3261 = vunpack.c.l.b16 %v3032
        %v3262 = vunpack.c.l.b16 %v3033
        %v3263 = vunpack.c.h.b16 %v3033
        %v3264 = vunpack.c.l.b16 %v3034
        %v3265 = vunpack.c.l.b16 %v3035
        %v3266 = vunpack.c.h.b16 %v3035
        %v3267 = vunpack.c.l.b16 %v3036
        %v3268 = vunpack.c.l.b16 %v3037
        %v3269 = vunpack.c.h.b16 %v3037
        %v3270 = vunpack.c.l.b16 %v3038
        %v3271 = vunpack.c.l.b16 %v3039
        %v3272 = vunpack.c.h.b16 %v3039
        %v3273 = vunpack.c.l.b16 %v3040
        %v3274 = vunpack.c.l.b16 %v3041
        %v3275 = vunpack.c.h.b16 %v3041
        %v3276 = vunpack.c.l.b16 %v3042
        %v3277 = vunpack.c.l.b16 %v3043
        %v3278 = vunpack.c.h.b16 %v3043
        %v3279 = vunpack.c.l.b16 %v3044
        %v3280 = vunpack.c.l.b16 %v3045
        %v3281 = vunpack.c.h.b16 %v3045
        %v3282 = vunpack.c.l.b16 %v3046
        %v3283 = vunpack.c.l.b16 %v3047
        %v3284 = vunpack.c.h.b16 %v3047
        %v3285 = vunpack.c.l.b16 %v3048
        %v3286 = vunpack.c.l.b16 %v3049
        %v3287 = vunpack.c.h.b16 %v3049
        %v3288 = vunpack.c.l.b16 %v3050
        %v3289 = vunpack.c.l.b16 %v3051
        %v3290 = vunpack.c.h.b16 %v3051
        %v3291 = vunpack.c.l.b16 %v3052
        %v3292 = vunpack.c.l.b16 %v3053
        %v3293 = vunpack.c.h.b16 %v3053
        %v3294 = vunpack.c.l.b16 %v3054
        %v3295 = vpack.c.b16 %v3154, %v3151
        %v3296 = vpack.c.b16 %v3155, %v3152
        %v3297 = vpack.c.b16 %v3156, %v3153
        %v3298 = vpack.c.b16 %v3160, %v3157
        %v3299 = vpack.c.b16 %v3161, %v3158
        %v3300 = vpack.c.b16 %v3162, %v3159
        %v3301 = vpack.c.b16 %v3166, %v3163
        %v3302 = vpack.c.b16 %v3167, %v3164
        %v3303 = vpack.c.b16 %v3168, %v3165
        %v3304 = vpack.c.b16 %v3172, %v3169
        %v3305 = vpack.c.b16 %v3173, %v3170
        %v3306 = vpack.c.b16 %v3174, %v3171
        %v3307 = vpack.c.b16 %v3178, %v3175
        %v3308 = vpack.c.b16 %v3179, %v3176
        %v3309 = vpack.c.b16 %v3180, %v3177
        %v3310 = vpack.c.b16 %v3184, %v3181
        %v3311 = vpack.c.b16 %v3185, %v3182
        %v3312 = vpack.c.b16 %v3186, %v3183
        %v3313 = vpack.c.b16 %v3190, %v3187
        %v3314 = vpack.c.b16 %v3191, %v3188
        %v3315 = vpack.c.b16 %v3192, %v3189
        %v3316 = vpack.c.b16 %v3196, %v3193
        %v3317 = vpack.c.b16 %v3197, %v3194
        %v3318 = vpack.c.b16 %v3198, %v3195
        %v3319 = vpack.c.b16 %v3202, %v3199
        %v3320 = vpack.c.b16 %v3203, %v3200
        %v3321 = vpack.c.b16 %v3204, %v3201
        %v3322 = vpack.c.b16 %v3208, %v3205
        %v3323 = vpack.c.b16 %v3209, %v3206
        %v3324 = vpack.c.b16 %v3210, %v3207
        %v3325 = vpack.c.b16 %v3214, %v3211
        %v3326 = vpack.c.b16 %v3215, %v3212
        %v3327 = vpack.c.b16 %v3216, %v3213
        %v3328 = vpack.c.b16 %v3220, %v3217
        %v3329 = vpack.c.b16 %v3221, %v3218
        %v3330 = vpack.c.b16 %v3222, %v3219
        %v3331 = vpack.c.b16 %v3226, %v3223
        %v3332 = vpack.c.b16 %v3227, %v3224
        %v3333 = vpack.c.b16 %v3228, %v3225
        %v3334 = vpack.c.b16 %v3232, %v3229
        %v3335 = vpack.c.b16 %v3233, %v3230
        %v3336 = vpack.c.b16 %v3234, %v3231
        %v3337 = vpack.c.b16 %v3238, %v3235
        %v3338 = vpack.c.b16 %v3239, %v3236
        %v3339 = vpack.c.b16 %v3240, %v3237
        %v3340 = vpack.c.b16 %v3244, %v3241
        %v3341 = vpack.c.b16 %v3245, %v3242
        %v3342 = vpack.c.b16 %v3246, %v3243
        %v3343 = vpack.c.b16 %v3250, %v3247
        %v3344 = vpack.c.b16 %v3251, %v3248
        %v3345 = vpack.c.b16 %v3252, %v3249
        %v3346 = vpack.c.b16 %v3256, %v3253
        %v3347 = vpack.c.b16 %v3257, %v3254
        %v3348 = vpack.c.b16 %v3258, %v3255
        %v3349 = vpack.c.b16 %v3262, %v3259
        %v3350 = vpack.c.b16 %v3263, %v3260
        %v3351 = vpack.c.b16 %v3264, %v3261
        %v3352 = vpack.c.b16 %v3268, %v3265
        %v3353 = vpack.c.b16 %v3269, %v3266
        %v3354 = vpack.c.b16 %v3270, %v3267
        %v3355 = vpack.c.b16 %v3274, %v3271
        %v3356 = vpack.c.b16 %v3275, %v3272
        %v3357 = vpack.c.b16 %v3276, %v3273
        %v3358 = vpack.c.b16 %v3280, %v3277
        %v3359 = vpack.c.b16 %v3281, %v3278
        %v3360 = vpack.c.b16 %v3282, %v3279
        %v3361 = vpack.c.b16 %v3286, %v3283
        %v3362 = vpack.c.b16 %v3287, %v3284
        %v3363 = vpack.c.b16 %v3288, %v3285
        %v3364 = vpack.c.b16 %v3292, %v3289
        %v3365 = vpack.c.b16 %v3293, %v3290
        %v3366 = vpack.c.b16 %v3294, %v3291
        %3439 = vmatprep.subr.bf16.mxu0 %v3317
        %3440 = vmatpush1.bf16.msra.mxu0 %v3316
        %3441 = vmatprep.subr.bf16.mxu0 %v3314
        %3442 = vmatpush1.bf16.msra.mxu0 %v3313
        %3443 = vmatprep.subr.bf16.mxu0 %v3311
        %3444 = vmatpush1.bf16.msra.mxu0 %v3310
        %3445 = vmatprep.subr.bf16.mxu0 %v3308
        %3446 = vmatpush1.bf16.msra.mxu0 %v3307
        %3447 = vmatprep.subr.bf16.mxu0 %v3305
        %3448 = vmatpush1.bf16.msra.mxu0 %v3304
        %3449 = vmatprep.subr.bf16.mxu0 %v3302
        %3450 = vmatpush1.bf16.msra.mxu0 %v3301
        %3451 = vmatprep.subr.bf16.mxu0 %v3299
        %3452 = vmatpush1.bf16.msra.mxu0 %v3298
        %3453 = vmatprep.subr.bf16.mxu0 %v3296
        %3454 = vmatpush1.bf16.msra.mxu0 %v3295
        %3455 = vmatprep.subr.bf16.mxu0 %v3341
        %3456 = vmatpush2.bf16.msra.mxu0 %v3340
        %3457 = vmatprep.subr.bf16.mxu0 %v3338
        %3458 = vmatpush2.bf16.msra.mxu0 %v3337
        %3459 = vmatprep.subr.bf16.mxu0 %v3335
        %3460 = vmatpush2.bf16.msra.mxu0 %v3334
        %3461 = vmatprep.subr.bf16.mxu0 %v3332
        %3462 = vmatpush2.bf16.msra.mxu0 %v3331
        %3463 = vmatprep.subr.bf16.mxu0 %v3329
        %3464 = vmatpush2.bf16.msra.mxu0 %v3328
        %3465 = vmatprep.subr.bf16.mxu0 %v3326
        %3466 = vmatpush2.bf16.msra.mxu0 %v3325
        %3467 = vmatprep.subr.bf16.mxu0 %v3323
        %3468 = vmatpush2.bf16.msra.mxu0 %v3322
        %3469 = vmatprep.subr.bf16.mxu0 %v3320
        %3470 = vmatpush2.bf16.msra.mxu0 %v3319
        %3471 = vmatprep.mubr.bf16.mxu0 %v2863
        %3472 = vmatmul.mubr.bf16.gmra.mxu0 %v2791
        %v3473 = vpop.f32.mrf.mxu0
        %v3474 = vadd.f32 0.0, %v3473
        %v3475 = vpop.f32.mrf.mxu0
        %v3476 = vadd.f32 0.0, %v3475
        %v3477 = vpop.f32.mrf.mxu0
        %v3478 = vadd.f32 0.0, %v3477
        %v3479 = vpop.f32.mrf.mxu0
        %v3480 = vadd.f32 0.0, %v3479
        %3481 = vmatprep.mubr.bf16.mxu0 %v2864
        %3482 = vmatmul.mubr.bf16.gmra.mxu0 %v2792
        %v3483 = vpop.f32.mrf.mxu0
        %v3484 = vpop.f32.mrf.mxu0
        %v3485 = vadd.f32 0.0, %v3484
        %v3486 = vpop.f32.mrf.mxu0
        %v3487 = vadd.f32 0.0, %v3486
        %v3488 = vpop.f32.mrf.mxu0
        %v3489 = vadd.f32 0.0, %v3488
        %3490 = vmatprep.mubr.bf16.mxu0 %v2865
        %3491 = vmatmul.mubr.bf16.gmra.mxu0 %v2793
        %v3492 = vpop.f32.mrf.mxu0
        %v3493 = vadd.f32 0.0, %v3492
        %v3494 = vpop.f32.mrf.mxu0
        %v3495 = vadd.f32 0.0, %v3494
        %v3496 = vpop.f32.mrf.mxu0
        %v3497 = vpop.f32.mrf.mxu0
        %v3498 = vadd.f32 0.0, %v3497
        %3499 = vmatprep.mubr.bf16.mxu0 %v2866
        %3500 = vmatmul.mubr.bf16.gmra.mxu0 %v2794
        %v3501 = vpop.f32.mrf.mxu0
        %v3502 = vadd.f32 0.0, %v3501
        %v3503 = vpop.f32.mrf.mxu0
        %v3504 = vadd.f32 0.0, %v3503
        %v3505 = vpop.f32.mrf.mxu0
        %v3506 = vadd.f32 0.0, %v3505
        %v3507 = vpop.f32.mrf.mxu0
        %v3508 = vadd.f32 0.0, %v3507
        %3509 = vmatprep.mubr.bf16.mxu0 %v2867
        %3510 = vmatmul.mubr.bf16.gmra.mxu0 %v2795
        %v3511 = vpop.f32.mrf.mxu0
        %v3512 = vpop.f32.mrf.mxu0
        %v3513 = vadd.f32 0.0, %v3512
        %v3514 = vpop.f32.mrf.mxu0
        %v3515 = vadd.f32 0.0, %v3514
        %v3516 = vpop.f32.mrf.mxu0
        %v3517 = vadd.f32 0.0, %v3516
        %3518 = vmatprep.mubr.bf16.mxu0 %v2868
        %3519 = vmatmul.mubr.bf16.gmra.mxu0 %v2796
        %v3520 = vpop.f32.mrf.mxu0
        %v3521 = vadd.f32 0.0, %v3520
        %v3522 = vpop.f32.mrf.mxu0
        %v3523 = vadd.f32 0.0, %v3522
        %v3524 = vpop.f32.mrf.mxu0
        %v3525 = vpop.f32.mrf.mxu0
        %v3526 = vadd.f32 0.0, %v3525
        %3527 = vmatprep.mubr.bf16.mxu0 %v2869
        %3528 = vmatmul.mubr.bf16.gmra.mxu0 %v2797
        %v3529 = vpop.f32.mrf.mxu0
        %v3530 = vadd.f32 0.0, %v3529
        %v3531 = vpop.f32.mrf.mxu0
        %v3532 = vadd.f32 0.0, %v3531
        %v3533 = vpop.f32.mrf.mxu0
        %v3534 = vadd.f32 0.0, %v3533
        %v3535 = vpop.f32.mrf.mxu0
        %v3536 = vadd.f32 0.0, %v3535
        %3537 = vmatprep.mubr.bf16.mxu0 %v2870
        %3538 = vmatmul.mubr.bf16.gmra.mxu0 %v2798
        %v3539 = vpop.f32.mrf.mxu0
        %v3540 = vpop.f32.mrf.mxu0
        %v3541 = vadd.f32 0.0, %v3540
        %v3542 = vpop.f32.mrf.mxu0
        %v3543 = vadd.f32 0.0, %v3542
        %v3544 = vpop.f32.mrf.mxu0
        %v3545 = vadd.f32 0.0, %v3544
        %3546 = vmatprep.mubr.bf16.mxu0 %v2871
        %3547 = vmatmul.mubr.bf16.gmra.mxu0 %v2799
        %v3548 = vpop.f32.mrf.mxu0
        %v3549 = vadd.f32 0.0, %v3548
        %v3550 = vpop.f32.mrf.mxu0
        %v3551 = vadd.f32 0.0, %v3550
        %v3552 = vpop.f32.mrf.mxu0
        %v3553 = vpop.f32.mrf.mxu0
        %v3554 = vadd.f32 0.0, %v3553
        %3555 = vmatprep.mubr.bf16.mxu0 %v2872
        %3556 = vmatmul.mubr.bf16.gmra.mxu0 %v2800
        %v3557 = vpop.f32.mrf.mxu0
        %v3558 = vadd.f32 0.0, %v3557
        %v3559 = vpop.f32.mrf.mxu0
        %v3560 = vadd.f32 0.0, %v3559
        %v3561 = vpop.f32.mrf.mxu0
        %v3562 = vadd.f32 0.0, %v3561
        %v3563 = vpop.f32.mrf.mxu0
        %v3564 = vadd.f32 0.0, %v3563
        %3565 = vmatprep.mubr.bf16.mxu0 %v2873
        %3566 = vmatmul.mubr.bf16.gmra.mxu0 %v2801
        %v3567 = vpop.f32.mrf.mxu0
        %v3568 = vpop.f32.mrf.mxu0
        %v3569 = vadd.f32 0.0, %v3568
        %v3570 = vpop.f32.mrf.mxu0
        %v3571 = vadd.f32 0.0, %v3570
        %v3572 = vpop.f32.mrf.mxu0
        %v3573 = vadd.f32 0.0, %v3572
        %3574 = vmatprep.mubr.bf16.mxu0 %v2874
        %3575 = vmatmul.mubr.bf16.gmra.mxu0 %v2802
        %v3576 = vpop.f32.mrf.mxu0
        %v3577 = vadd.f32 0.0, %v3576
        %v3578 = vpop.f32.mrf.mxu0
        %v3579 = vadd.f32 0.0, %v3578
        %v3580 = vpop.f32.mrf.mxu0
        %v3581 = vpop.f32.mrf.mxu0
        %v3582 = vadd.f32 0.0, %v3581
        %3583 = vmatprep.mubr.bf16.mxu0 %v2875
        %3584 = vmatmul.mubr.bf16.gmra.mxu0 %v2803
        %v3585 = vpop.f32.mrf.mxu0
        %v3586 = vadd.f32 0.0, %v3585
        %v3587 = vpop.f32.mrf.mxu0
        %v3588 = vadd.f32 0.0, %v3587
        %v3589 = vpop.f32.mrf.mxu0
        %v3590 = vadd.f32 0.0, %v3589
        %v3591 = vpop.f32.mrf.mxu0
        %v3592 = vadd.f32 0.0, %v3591
        %3593 = vmatprep.mubr.bf16.mxu0 %v2876
        %3594 = vmatmul.mubr.bf16.gmra.mxu0 %v2804
        %v3595 = vpop.f32.mrf.mxu0
        %v3596 = vpop.f32.mrf.mxu0
        %v3597 = vadd.f32 0.0, %v3596
        %v3598 = vpop.f32.mrf.mxu0
        %v3599 = vadd.f32 0.0, %v3598
        %v3600 = vpop.f32.mrf.mxu0
        %v3601 = vadd.f32 0.0, %v3600
        %3602 = vmatprep.mubr.bf16.mxu0 %v2877
        %3603 = vmatmul.mubr.bf16.gmra.mxu0 %v2805
        %v3604 = vpop.f32.mrf.mxu0
        %v3605 = vadd.f32 0.0, %v3604
        %v3606 = vpop.f32.mrf.mxu0
        %v3607 = vadd.f32 0.0, %v3606
        %v3608 = vpop.f32.mrf.mxu0
        %v3609 = vpop.f32.mrf.mxu0
        %v3610 = vadd.f32 0.0, %v3609
        %3611 = vmatprep.mubr.bf16.mxu0 %v2878
        %3612 = vmatmul.mubr.bf16.gmra.mxu0 %v2806
        %v3613 = vpop.f32.mrf.mxu0
        %v3614 = vadd.f32 0.0, %v3613
        %v3615 = vpop.f32.mrf.mxu0
        %v3616 = vadd.f32 0.0, %v3615
        %v3617 = vpop.f32.mrf.mxu0
        %v3618 = vadd.f32 0.0, %v3617
        %v3619 = vpop.f32.mrf.mxu0
        %v3620 = vadd.f32 0.0, %v3619
        %3621 = vmatprep.mubr.bf16.mxu0 %v2879
        %3622 = vmatmul.mubr.bf16.gmra.mxu0 %v2807
        %v3623 = vpop.f32.mrf.mxu0
        %v3624 = vpop.f32.mrf.mxu0
        %v3625 = vadd.f32 0.0, %v3624
        %v3626 = vpop.f32.mrf.mxu0
        %v3627 = vadd.f32 0.0, %v3626
        %v3628 = vpop.f32.mrf.mxu0
        %v3629 = vadd.f32 0.0, %v3628
        %3630 = vmatprep.mubr.bf16.mxu0 %v2880
        %3631 = vmatmul.mubr.bf16.gmra.mxu0 %v2808
        %v3632 = vpop.f32.mrf.mxu0
        %v3633 = vadd.f32 0.0, %v3632
        %v3634 = vpop.f32.mrf.mxu0
        %v3635 = vadd.f32 0.0, %v3634
        %v3636 = vpop.f32.mrf.mxu0
        %v3637 = vpop.f32.mrf.mxu0
        %v3638 = vadd.f32 0.0, %v3637
        %3639 = vmatprep.mubr.bf16.mxu0 %v2881
        %3640 = vmatmul.mubr.bf16.gmra.mxu0 %v2809
        %v3641 = vpop.f32.mrf.mxu0
        %v3642 = vadd.f32 0.0, %v3641
        %v3643 = vpop.f32.mrf.mxu0
        %v3644 = vadd.f32 0.0, %v3643
        %v3645 = vpop.f32.mrf.mxu0
        %v3646 = vadd.f32 0.0, %v3645
        %v3647 = vpop.f32.mrf.mxu0
        %v3648 = vadd.f32 0.0, %v3647
        %3649 = vmatprep.mubr.bf16.mxu0 %v2882
        %3650 = vmatmul.mubr.bf16.gmra.mxu0 %v2810
        %v3651 = vpop.f32.mrf.mxu0
        %v3652 = vpop.f32.mrf.mxu0
        %v3653 = vadd.f32 0.0, %v3652
        %v3654 = vpop.f32.mrf.mxu0
        %v3655 = vadd.f32 0.0, %v3654
        %v3656 = vpop.f32.mrf.mxu0
        %v3657 = vadd.f32 0.0, %v3656
        %3658 = vmatprep.mubr.bf16.mxu0 %v2883
        %3659 = vmatmul.mubr.bf16.gmra.mxu0 %v2811
        %v3660 = vpop.f32.mrf.mxu0
        %v3661 = vadd.f32 0.0, %v3660
        %v3662 = vpop.f32.mrf.mxu0
        %v3663 = vadd.f32 0.0, %v3662
        %v3664 = vpop.f32.mrf.mxu0
        %v3665 = vpop.f32.mrf.mxu0
        %v3666 = vadd.f32 0.0, %v3665
        %3667 = vmatprep.mubr.bf16.mxu0 %v2884
        %3668 = vmatmul.mubr.bf16.gmra.mxu0 %v2812
        %v3669 = vpop.f32.mrf.mxu0
        %v3670 = vadd.f32 0.0, %v3669
        %v3671 = vpop.f32.mrf.mxu0
        %v3672 = vadd.f32 0.0, %v3671
        %v3673 = vpop.f32.mrf.mxu0
        %v3674 = vadd.f32 0.0, %v3673
        %v3675 = vpop.f32.mrf.mxu0
        %v3676 = vadd.f32 0.0, %v3675
        %3677 = vmatprep.mubr.bf16.mxu0 %v2885
        %3678 = vmatmul.mubr.bf16.gmra.mxu0 %v2813
        %v3679 = vpop.f32.mrf.mxu0
        %v3680 = vpop.f32.mrf.mxu0
        %v3681 = vadd.f32 0.0, %v3680
        %v3682 = vpop.f32.mrf.mxu0
        %v3683 = vadd.f32 0.0, %v3682
        %v3684 = vpop.f32.mrf.mxu0
        %v3685 = vadd.f32 0.0, %v3684
        %3686 = vmatprep.mubr.bf16.mxu0 %v2886
        %3687 = vmatmul.mubr.bf16.gmra.mxu0 %v2814
        %v3688 = vpop.f32.mrf.mxu0
        %v3689 = vadd.f32 0.0, %v3688
        %v3690 = vpop.f32.mrf.mxu0
        %v3691 = vadd.f32 0.0, %v3690
        %v3692 = vpop.f32.mrf.mxu0
        %v3693 = vpop.f32.mrf.mxu0
        %v3694 = vadd.f32 0.0, %v3693
        %3695 = vdwg.mxu0
        %3696 = vmatprep.subr.bf16.mxu0 %v3365
        %3697 = vmatpush1.bf16.msra.mxu0 %v3364
        %3698 = vmatprep.subr.bf16.mxu0 %v3362
        %3699 = vmatpush1.bf16.msra.mxu0 %v3361
        %3700 = vmatprep.subr.bf16.mxu0 %v3359
        %3701 = vmatpush1.bf16.msra.mxu0 %v3358
        %3702 = vmatprep.subr.bf16.mxu0 %v3356
        %3703 = vmatpush1.bf16.msra.mxu0 %v3355
        %3704 = vmatprep.subr.bf16.mxu0 %v3353
        %3705 = vmatpush1.bf16.msra.mxu0 %v3352
        %3706 = vmatprep.subr.bf16.mxu0 %v3350
        %3707 = vmatpush1.bf16.msra.mxu0 %v3349
        %3708 = vmatprep.subr.bf16.mxu0 %v3347
        %3709 = vmatpush1.bf16.msra.mxu0 %v3346
        %3710 = vmatprep.subr.bf16.mxu0 %v3344
        %3711 = vmatpush1.bf16.msra.mxu0 %v3343
        %3712 = vmatprep.subr.bf16.mxu0 0
        %3713 = vmatpush2.bf16.msra.mxu0 0
        %3714 = vmatprep.subr.bf16.mxu0 0
        %3715 = vmatpush2.bf16.msra.mxu0 0
        %3716 = vmatprep.subr.bf16.mxu0 0
        %3717 = vmatpush2.bf16.msra.mxu0 0
        %3718 = vmatprep.subr.bf16.mxu0 0
        %3719 = vmatpush2.bf16.msra.mxu0 0
        %3720 = vmatprep.subr.bf16.mxu0 0
        %3721 = vmatpush2.bf16.msra.mxu0 0
        %3722 = vmatprep.subr.bf16.mxu0 0
        %3723 = vmatpush2.bf16.msra.mxu0 0
        %3724 = vmatprep.subr.bf16.mxu0 0
        %3725 = vmatpush2.bf16.msra.mxu0 0
        %3726 = vmatprep.subr.bf16.mxu0 0
        %3727 = vmatpush2.bf16.msra.mxu0 0
        %3728 = vmatprep.mubr.bf16.mxu0 0
        %3729 = vmatmul.mubr.bf16.gmra.mxu0 %v2935
        %v3730 = vpop.f32.mrf.mxu0
        %v3731 = vadd.f32 %v3474, %v3730
        %v3732 = vpop.f32.mrf.mxu0
        %v3733 = vadd.f32 %v3476, %v3732
        %v3734 = vpop.f32.mrf.mxu0
        %v3735 = vadd.f32 %v3478, %v3734
        %v3736 = vpop.f32.mrf.mxu0
        %v3737 = vadd.f32 %v3480, %v3736
        %3738 = vmatprep.mubr.bf16.mxu0 0
        %3739 = vmatmul.mubr.bf16.gmra.mxu0 %v2936
        %v3740 = vpop.f32.mrf.mxu0
        %v3741 = vpop.f32.mrf.mxu0
        %v3742 = vadd.f32 %v3485, %v3741
        %v3743 = vpop.f32.mrf.mxu0
        %v3744 = vadd.f32 %v3487, %v3743
        %v3745 = vpop.f32.mrf.mxu0
        %v3746 = vadd.f32 %v3489, %v3745
        %3747 = vmatprep.mubr.bf16.mxu0 0
        %3748 = vmatmul.mubr.bf16.gmra.mxu0 %v2937
        %v3749 = vpop.f32.mrf.mxu0
        %v3750 = vadd.f32 %v3493, %v3749
        %v3751 = vpop.f32.mrf.mxu0
        %v3752 = vadd.f32 %v3495, %v3751
        %v3753 = vpop.f32.mrf.mxu0
        %v3754 = vpop.f32.mrf.mxu0
        %v3755 = vadd.f32 %v3498, %v3754
        %3756 = vmatprep.mubr.bf16.mxu0 0
        %3757 = vmatmul.mubr.bf16.gmra.mxu0 %v2938
        %v3758 = vpop.f32.mrf.mxu0
        %v3759 = vadd.f32 %v3502, %v3758
        %v3760 = vpop.f32.mrf.mxu0
        %v3761 = vadd.f32 %v3504, %v3760
        %v3762 = vpop.f32.mrf.mxu0
        %v3763 = vadd.f32 %v3506, %v3762
        %v3764 = vpop.f32.mrf.mxu0
        %v3765 = vadd.f32 %v3508, %v3764
        %3766 = vmatprep.mubr.bf16.mxu0 0
        %3767 = vmatmul.mubr.bf16.gmra.mxu0 %v2939
        %v3768 = vpop.f32.mrf.mxu0
        %v3769 = vpop.f32.mrf.mxu0
        %v3770 = vadd.f32 %v3513, %v3769
        %v3771 = vpop.f32.mrf.mxu0
        %v3772 = vadd.f32 %v3515, %v3771
        %v3773 = vpop.f32.mrf.mxu0
        %v3774 = vadd.f32 %v3517, %v3773
        %3775 = vmatprep.mubr.bf16.mxu0 0
        %3776 = vmatmul.mubr.bf16.gmra.mxu0 %v2940
        %v3777 = vpop.f32.mrf.mxu0
        %v3778 = vadd.f32 %v3521, %v3777
        %v3779 = vpop.f32.mrf.mxu0
        %v3780 = vadd.f32 %v3523, %v3779
        %v3781 = vpop.f32.mrf.mxu0
        %v3782 = vpop.f32.mrf.mxu0
        %v3783 = vadd.f32 %v3526, %v3782
        %3784 = vmatprep.mubr.bf16.mxu0 0
        %3785 = vmatmul.mubr.bf16.gmra.mxu0 %v2941
        %v3786 = vpop.f32.mrf.mxu0
        %v3787 = vadd.f32 %v3530, %v3786
        %v3788 = vpop.f32.mrf.mxu0
        %v3789 = vadd.f32 %v3532, %v3788
        %v3790 = vpop.f32.mrf.mxu0
        %v3791 = vadd.f32 %v3534, %v3790
        %v3792 = vpop.f32.mrf.mxu0
        %v3793 = vadd.f32 %v3536, %v3792
        %3794 = vmatprep.mubr.bf16.mxu0 0
        %3795 = vmatmul.mubr.bf16.gmra.mxu0 %v2942
        %v3796 = vpop.f32.mrf.mxu0
        %v3797 = vpop.f32.mrf.mxu0
        %v3798 = vadd.f32 %v3541, %v3797
        %v3799 = vpop.f32.mrf.mxu0
        %v3800 = vadd.f32 %v3543, %v3799
        %v3801 = vpop.f32.mrf.mxu0
        %v3802 = vadd.f32 %v3545, %v3801
        %3803 = vmatprep.mubr.bf16.mxu0 0
        %3804 = vmatmul.mubr.bf16.gmra.mxu0 %v2943
        %v3805 = vpop.f32.mrf.mxu0
        %v3806 = vadd.f32 %v3549, %v3805
        %v3807 = vpop.f32.mrf.mxu0
        %v3808 = vadd.f32 %v3551, %v3807
        %v3809 = vpop.f32.mrf.mxu0
        %v3810 = vpop.f32.mrf.mxu0
        %v3811 = vadd.f32 %v3554, %v3810
        %3812 = vmatprep.mubr.bf16.mxu0 0
        %3813 = vmatmul.mubr.bf16.gmra.mxu0 %v2944
        %v3814 = vpop.f32.mrf.mxu0
        %v3815 = vadd.f32 %v3558, %v3814
        %v3816 = vpop.f32.mrf.mxu0
        %v3817 = vadd.f32 %v3560, %v3816
        %v3818 = vpop.f32.mrf.mxu0
        %v3819 = vadd.f32 %v3562, %v3818
        %v3820 = vpop.f32.mrf.mxu0
        %v3821 = vadd.f32 %v3564, %v3820
        %3822 = vmatprep.mubr.bf16.mxu0 0
        %3823 = vmatmul.mubr.bf16.gmra.mxu0 %v2945
        %v3824 = vpop.f32.mrf.mxu0
        %v3825 = vpop.f32.mrf.mxu0
        %v3826 = vadd.f32 %v3569, %v3825
        %v3827 = vpop.f32.mrf.mxu0
        %v3828 = vadd.f32 %v3571, %v3827
        %v3829 = vpop.f32.mrf.mxu0
        %v3830 = vadd.f32 %v3573, %v3829
        %3831 = vmatprep.mubr.bf16.mxu0 0
        %3832 = vmatmul.mubr.bf16.gmra.mxu0 %v2946
        %v3833 = vpop.f32.mrf.mxu0
        %v3834 = vadd.f32 %v3577, %v3833
        %v3835 = vpop.f32.mrf.mxu0
        %v3836 = vadd.f32 %v3579, %v3835
        %v3837 = vpop.f32.mrf.mxu0
        %v3838 = vpop.f32.mrf.mxu0
        %v3839 = vadd.f32 %v3582, %v3838
        %3840 = vmatprep.mubr.bf16.mxu0 0
        %3841 = vmatmul.mubr.bf16.gmra.mxu0 %v2947
        %v3842 = vpop.f32.mrf.mxu0
        %v3843 = vadd.f32 %v3586, %v3842
        %v3844 = vpop.f32.mrf.mxu0
        %v3845 = vadd.f32 %v3588, %v3844
        %v3846 = vpop.f32.mrf.mxu0
        %v3847 = vadd.f32 %v3590, %v3846
        %v3848 = vpop.f32.mrf.mxu0
        %v3849 = vadd.f32 %v3592, %v3848
        %3850 = vmatprep.mubr.bf16.mxu0 0
        %3851 = vmatmul.mubr.bf16.gmra.mxu0 %v2948
        %v3852 = vpop.f32.mrf.mxu0
        %v3853 = vpop.f32.mrf.mxu0
        %v3854 = vadd.f32 %v3597, %v3853
        %v3855 = vpop.f32.mrf.mxu0
        %v3856 = vadd.f32 %v3599, %v3855
        %v3857 = vpop.f32.mrf.mxu0
        %v3858 = vadd.f32 %v3601, %v3857
        %3859 = vmatprep.mubr.bf16.mxu0 0
        %3860 = vmatmul.mubr.bf16.gmra.mxu0 %v2949
        %v3861 = vpop.f32.mrf.mxu0
        %v3862 = vadd.f32 %v3605, %v3861
        %v3863 = vpop.f32.mrf.mxu0
        %v3864 = vadd.f32 %v3607, %v3863
        %v3865 = vpop.f32.mrf.mxu0
        %v3866 = vpop.f32.mrf.mxu0
        %v3867 = vadd.f32 %v3610, %v3866
        %3868 = vmatprep.mubr.bf16.mxu0 0
        %3869 = vmatmul.mubr.bf16.gmra.mxu0 %v2950
        %v3870 = vpop.f32.mrf.mxu0
        %v3871 = vadd.f32 %v3614, %v3870
        %v3872 = vpop.f32.mrf.mxu0
        %v3873 = vadd.f32 %v3616, %v3872
        %v3874 = vpop.f32.mrf.mxu0
        %v3875 = vadd.f32 %v3618, %v3874
        %v3876 = vpop.f32.mrf.mxu0
        %v3877 = vadd.f32 %v3620, %v3876
        %3878 = vmatprep.mubr.bf16.mxu0 0
        %3879 = vmatmul.mubr.bf16.gmra.mxu0 %v2951
        %v3880 = vpop.f32.mrf.mxu0
        %v3881 = vpop.f32.mrf.mxu0
        %v3882 = vadd.f32 %v3625, %v3881
        %v3883 = vpop.f32.mrf.mxu0
        %v3884 = vadd.f32 %v3627, %v3883
        %v3885 = vpop.f32.mrf.mxu0
        %v3886 = vadd.f32 %v3629, %v3885
        %3887 = vmatprep.mubr.bf16.mxu0 0
        %3888 = vmatmul.mubr.bf16.gmra.mxu0 %v2952
        %v3889 = vpop.f32.mrf.mxu0
        %v3890 = vadd.f32 %v3633, %v3889
        %v3891 = vpop.f32.mrf.mxu0
        %v3892 = vadd.f32 %v3635, %v3891
        %v3893 = vpop.f32.mrf.mxu0
        %v3894 = vpop.f32.mrf.mxu0
        %v3895 = vadd.f32 %v3638, %v3894
        %3896 = vmatprep.mubr.bf16.mxu0 0
        %3897 = vmatmul.mubr.bf16.gmra.mxu0 %v2953
        %v3898 = vpop.f32.mrf.mxu0
        %v3899 = vadd.f32 %v3642, %v3898
        %v3900 = vpop.f32.mrf.mxu0
        %v3901 = vadd.f32 %v3644, %v3900
        %v3902 = vpop.f32.mrf.mxu0
        %v3903 = vadd.f32 %v3646, %v3902
        %v3904 = vpop.f32.mrf.mxu0
        %v3905 = vadd.f32 %v3648, %v3904
        %3906 = vmatprep.mubr.bf16.mxu0 0
        %3907 = vmatmul.mubr.bf16.gmra.mxu0 %v2954
        %v3908 = vpop.f32.mrf.mxu0
        %v3909 = vpop.f32.mrf.mxu0
        %v3910 = vadd.f32 %v3653, %v3909
        %v3911 = vpop.f32.mrf.mxu0
        %v3912 = vadd.f32 %v3655, %v3911
        %v3913 = vpop.f32.mrf.mxu0
        %v3914 = vadd.f32 %v3657, %v3913
        %3915 = vmatprep.mubr.bf16.mxu0 0
        %3916 = vmatmul.mubr.bf16.gmra.mxu0 %v2955
        %v3917 = vpop.f32.mrf.mxu0
        %v3918 = vadd.f32 %v3661, %v3917
        %v3919 = vpop.f32.mrf.mxu0
        %v3920 = vadd.f32 %v3663, %v3919
        %v3921 = vpop.f32.mrf.mxu0
        %v3922 = vpop.f32.mrf.mxu0
        %v3923 = vadd.f32 %v3666, %v3922
        %3924 = vmatprep.mubr.bf16.mxu0 0
        %3925 = vmatmul.mubr.bf16.gmra.mxu0 %v2956
        %v3926 = vpop.f32.mrf.mxu0
        %v3927 = vadd.f32 %v3670, %v3926
        %v3928 = vpop.f32.mrf.mxu0
        %v3929 = vadd.f32 %v3672, %v3928
        %v3930 = vpop.f32.mrf.mxu0
        %v3931 = vadd.f32 %v3674, %v3930
        %v3932 = vpop.f32.mrf.mxu0
        %v3933 = vadd.f32 %v3676, %v3932
        %3934 = vmatprep.mubr.bf16.mxu0 0
        %3935 = vmatmul.mubr.bf16.gmra.mxu0 %v2957
        %v3936 = vpop.f32.mrf.mxu0
        %v3937 = vpop.f32.mrf.mxu0
        %v3938 = vadd.f32 %v3681, %v3937
        %v3939 = vpop.f32.mrf.mxu0
        %v3940 = vadd.f32 %v3683, %v3939
        %v3941 = vpop.f32.mrf.mxu0
        %v3942 = vadd.f32 %v3685, %v3941
        %3943 = vmatprep.mubr.bf16.mxu0 0
        %3944 = vmatmul.mubr.bf16.gmra.mxu0 %v2958
        %v3945 = vpop.f32.mrf.mxu0
        %v3946 = vadd.f32 %v3689, %v3945
        %v3947 = vpop.f32.mrf.mxu0
        %v3948 = vadd.f32 %v3691, %v3947
        %v3949 = vpop.f32.mrf.mxu0
        %v3950 = vpop.f32.mrf.mxu0
        %v3951 = vadd.f32 %v3694, %v3950
        %3952 = vdwg.mxu0
        %3953 = vmatprep.subr.bf16.mxu0 0
        %3954 = vmatpush1.bf16.msra.mxu0 %v3318
        %3955 = vmatprep.subr.bf16.mxu0 0
        %3956 = vmatpush1.bf16.msra.mxu0 %v3315
        %3957 = vmatprep.subr.bf16.mxu0 0
        %3958 = vmatpush1.bf16.msra.mxu0 %v3312
        %3959 = vmatprep.subr.bf16.mxu0 0
        %3960 = vmatpush1.bf16.msra.mxu0 %v3309
        %3961 = vmatprep.subr.bf16.mxu0 0
        %3962 = vmatpush1.bf16.msra.mxu0 %v3306
        %3963 = vmatprep.subr.bf16.mxu0 0
        %3964 = vmatpush1.bf16.msra.mxu0 %v3303
        %3965 = vmatprep.subr.bf16.mxu0 0
        %3966 = vmatpush1.bf16.msra.mxu0 %v3300
        %3967 = vmatprep.subr.bf16.mxu0 0
        %3968 = vmatpush1.bf16.msra.mxu0 %v3297
        %3969 = vmatprep.subr.bf16.mxu0 0
        %3970 = vmatpush2.bf16.msra.mxu0 %v3342
        %3971 = vmatprep.subr.bf16.mxu0 0
        %3972 = vmatpush2.bf16.msra.mxu0 %v3339
        %3973 = vmatprep.subr.bf16.mxu0 0
        %3974 = vmatpush2.bf16.msra.mxu0 %v3336
        %3975 = vmatprep.subr.bf16.mxu0 0
        %3976 = vmatpush2.bf16.msra.mxu0 %v3333
        %3977 = vmatprep.subr.bf16.mxu0 0
        %3978 = vmatpush2.bf16.msra.mxu0 %v3330
        %3979 = vmatprep.subr.bf16.mxu0 0
        %3980 = vmatpush2.bf16.msra.mxu0 %v3327
        %3981 = vmatprep.subr.bf16.mxu0 0
        %3982 = vmatpush2.bf16.msra.mxu0 %v3324
        %3983 = vmatprep.subr.bf16.mxu0 0
        %3984 = vmatpush2.bf16.msra.mxu0 %v3321
        %3985 = vmatprep.mubr.bf16.mxu0 %v2863
        %3986 = vmatmul.mubr.bf16.gmra.mxu0 %v2791
        %v3987 = vpop.f32.mrf.mxu0
        %v3988 = vadd.f32 0.0, %v3987
        %v3989 = vpop.f32.mrf.mxu0
        %v3990 = vpop.f32.mrf.mxu0
        %v3991 = vadd.f32 0.0, %v3990
        %v3992 = vpop.f32.mrf.mxu0
        %3993 = vmatprep.mubr.bf16.mxu0 %v2864
        %3994 = vmatmul.mubr.bf16.gmra.mxu0 %v2792
        %v3995 = vpop.f32.mrf.mxu0
        %v3996 = vadd.f32 0.0, %v3995
        %v3997 = vpop.f32.mrf.mxu0
        %v3998 = vpop.f32.mrf.mxu0
        %v3999 = vadd.f32 0.0, %v3998
        %v4000 = vpop.f32.mrf.mxu0
        %4001 = vmatprep.mubr.bf16.mxu0 %v2865
        %4002 = vmatmul.mubr.bf16.gmra.mxu0 %v2793
        %v4003 = vpop.f32.mrf.mxu0
        %v4004 = vadd.f32 0.0, %v4003
        %v4005 = vpop.f32.mrf.mxu0
        %v4006 = vpop.f32.mrf.mxu0
        %v4007 = vadd.f32 0.0, %v4006
        %v4008 = vpop.f32.mrf.mxu0
        %4009 = vmatprep.mubr.bf16.mxu0 %v2866
        %4010 = vmatmul.mubr.bf16.gmra.mxu0 %v2794
        %v4011 = vpop.f32.mrf.mxu0
        %v4012 = vadd.f32 0.0, %v4011
        %v4013 = vpop.f32.mrf.mxu0
        %v4014 = vpop.f32.mrf.mxu0
        %v4015 = vadd.f32 0.0, %v4014
        %v4016 = vpop.f32.mrf.mxu0
        %4017 = vmatprep.mubr.bf16.mxu0 %v2867
        %4018 = vmatmul.mubr.bf16.gmra.mxu0 %v2795
        %v4019 = vpop.f32.mrf.mxu0
        %v4020 = vadd.f32 0.0, %v4019
        %v4021 = vpop.f32.mrf.mxu0
        %v4022 = vpop.f32.mrf.mxu0
        %v4023 = vadd.f32 0.0, %v4022
        %v4024 = vpop.f32.mrf.mxu0
        %4025 = vmatprep.mubr.bf16.mxu0 %v2868
        %4026 = vmatmul.mubr.bf16.gmra.mxu0 %v2796
        %v4027 = vpop.f32.mrf.mxu0
        %v4028 = vadd.f32 0.0, %v4027
        %v4029 = vpop.f32.mrf.mxu0
        %v4030 = vpop.f32.mrf.mxu0
        %v4031 = vadd.f32 0.0, %v4030
        %v4032 = vpop.f32.mrf.mxu0
        %4033 = vmatprep.mubr.bf16.mxu0 %v2869
        %4034 = vmatmul.mubr.bf16.gmra.mxu0 %v2797
        %v4035 = vpop.f32.mrf.mxu0
        %v4036 = vadd.f32 0.0, %v4035
        %v4037 = vpop.f32.mrf.mxu0
        %v4038 = vpop.f32.mrf.mxu0
        %v4039 = vadd.f32 0.0, %v4038
        %v4040 = vpop.f32.mrf.mxu0
        %4041 = vmatprep.mubr.bf16.mxu0 %v2870
        %4042 = vmatmul.mubr.bf16.gmra.mxu0 %v2798
        %v4043 = vpop.f32.mrf.mxu0
        %v4044 = vadd.f32 0.0, %v4043
        %v4045 = vpop.f32.mrf.mxu0
        %v4046 = vpop.f32.mrf.mxu0
        %v4047 = vadd.f32 0.0, %v4046
        %v4048 = vpop.f32.mrf.mxu0
        %4049 = vmatprep.mubr.bf16.mxu0 %v2871
        %4050 = vmatmul.mubr.bf16.gmra.mxu0 %v2799
        %v4051 = vpop.f32.mrf.mxu0
        %v4052 = vadd.f32 0.0, %v4051
        %v4053 = vpop.f32.mrf.mxu0
        %v4054 = vpop.f32.mrf.mxu0
        %v4055 = vadd.f32 0.0, %v4054
        %v4056 = vpop.f32.mrf.mxu0
        %4057 = vmatprep.mubr.bf16.mxu0 %v2872
        %4058 = vmatmul.mubr.bf16.gmra.mxu0 %v2800
        %v4059 = vpop.f32.mrf.mxu0
        %v4060 = vadd.f32 0.0, %v4059
        %v4061 = vpop.f32.mrf.mxu0
        %v4062 = vpop.f32.mrf.mxu0
        %v4063 = vadd.f32 0.0, %v4062
        %v4064 = vpop.f32.mrf.mxu0
        %4065 = vmatprep.mubr.bf16.mxu0 %v2873
        %4066 = vmatmul.mubr.bf16.gmra.mxu0 %v2801
        %v4067 = vpop.f32.mrf.mxu0
        %v4068 = vadd.f32 0.0, %v4067
        %v4069 = vpop.f32.mrf.mxu0
        %v4070 = vpop.f32.mrf.mxu0
        %v4071 = vadd.f32 0.0, %v4070
        %v4072 = vpop.f32.mrf.mxu0
        %4073 = vmatprep.mubr.bf16.mxu0 %v2874
        %4074 = vmatmul.mubr.bf16.gmra.mxu0 %v2802
        %v4075 = vpop.f32.mrf.mxu0
        %v4076 = vadd.f32 0.0, %v4075
        %v4077 = vpop.f32.mrf.mxu0
        %v4078 = vpop.f32.mrf.mxu0
        %v4079 = vadd.f32 0.0, %v4078
        %v4080 = vpop.f32.mrf.mxu0
        %4081 = vmatprep.mubr.bf16.mxu0 %v2875
        %4082 = vmatmul.mubr.bf16.gmra.mxu0 %v2803
        %v4083 = vpop.f32.mrf.mxu0
        %v4084 = vadd.f32 0.0, %v4083
        %v4085 = vpop.f32.mrf.mxu0
        %v4086 = vpop.f32.mrf.mxu0
        %v4087 = vadd.f32 0.0, %v4086
        %v4088 = vpop.f32.mrf.mxu0
        %4089 = vmatprep.mubr.bf16.mxu0 %v2876
        %4090 = vmatmul.mubr.bf16.gmra.mxu0 %v2804
        %v4091 = vpop.f32.mrf.mxu0
        %v4092 = vadd.f32 0.0, %v4091
        %v4093 = vpop.f32.mrf.mxu0
        %v4094 = vpop.f32.mrf.mxu0
        %v4095 = vadd.f32 0.0, %v4094
        %v4096 = vpop.f32.mrf.mxu0
        %4097 = vmatprep.mubr.bf16.mxu0 %v2877
        %4098 = vmatmul.mubr.bf16.gmra.mxu0 %v2805
        %v4099 = vpop.f32.mrf.mxu0
        %v4100 = vadd.f32 0.0, %v4099
        %v4101 = vpop.f32.mrf.mxu0
        %v4102 = vpop.f32.mrf.mxu0
        %v4103 = vadd.f32 0.0, %v4102
        %v4104 = vpop.f32.mrf.mxu0
        %4105 = vmatprep.mubr.bf16.mxu0 %v2878
        %4106 = vmatmul.mubr.bf16.gmra.mxu0 %v2806
        %v4107 = vpop.f32.mrf.mxu0
        %v4108 = vadd.f32 0.0, %v4107
        %v4109 = vpop.f32.mrf.mxu0
        %v4110 = vpop.f32.mrf.mxu0
        %v4111 = vadd.f32 0.0, %v4110
        %v4112 = vpop.f32.mrf.mxu0
        %4113 = vmatprep.mubr.bf16.mxu0 %v2879
        %4114 = vmatmul.mubr.bf16.gmra.mxu0 %v2807
        %v4115 = vpop.f32.mrf.mxu0
        %v4116 = vadd.f32 0.0, %v4115
        %v4117 = vpop.f32.mrf.mxu0
        %v4118 = vpop.f32.mrf.mxu0
        %v4119 = vadd.f32 0.0, %v4118
        %v4120 = vpop.f32.mrf.mxu0
        %4121 = vmatprep.mubr.bf16.mxu0 %v2880
        %4122 = vmatmul.mubr.bf16.gmra.mxu0 %v2808
        %v4123 = vpop.f32.mrf.mxu0
        %v4124 = vadd.f32 0.0, %v4123
        %v4125 = vpop.f32.mrf.mxu0
        %v4126 = vpop.f32.mrf.mxu0
        %v4127 = vadd.f32 0.0, %v4126
        %v4128 = vpop.f32.mrf.mxu0
        %4129 = vmatprep.mubr.bf16.mxu0 %v2881
        %4130 = vmatmul.mubr.bf16.gmra.mxu0 %v2809
        %v4131 = vpop.f32.mrf.mxu0
        %v4132 = vadd.f32 0.0, %v4131
        %v4133 = vpop.f32.mrf.mxu0
        %v4134 = vpop.f32.mrf.mxu0
        %v4135 = vadd.f32 0.0, %v4134
        %v4136 = vpop.f32.mrf.mxu0
        %4137 = vmatprep.mubr.bf16.mxu0 %v2882
        %4138 = vmatmul.mubr.bf16.gmra.mxu0 %v2810
        %v4139 = vpop.f32.mrf.mxu0
        %v4140 = vadd.f32 0.0, %v4139
        %v4141 = vpop.f32.mrf.mxu0
        %v4142 = vpop.f32.mrf.mxu0
        %v4143 = vadd.f32 0.0, %v4142
        %v4144 = vpop.f32.mrf.mxu0
        %4145 = vmatprep.mubr.bf16.mxu0 %v2883
        %4146 = vmatmul.mubr.bf16.gmra.mxu0 %v2811
        %v4147 = vpop.f32.mrf.mxu0
        %v4148 = vadd.f32 0.0, %v4147
        %v4149 = vpop.f32.mrf.mxu0
        %v4150 = vpop.f32.mrf.mxu0
        %v4151 = vadd.f32 0.0, %v4150
        %v4152 = vpop.f32.mrf.mxu0
        %4153 = vmatprep.mubr.bf16.mxu0 %v2884
        %4154 = vmatmul.mubr.bf16.gmra.mxu0 %v2812
        %v4155 = vpop.f32.mrf.mxu0
        %v4156 = vadd.f32 0.0, %v4155
        %v4157 = vpop.f32.mrf.mxu0
        %v4158 = vpop.f32.mrf.mxu0
        %v4159 = vadd.f32 0.0, %v4158
        %v4160 = vpop.f32.mrf.mxu0
        %4161 = vmatprep.mubr.bf16.mxu0 %v2885
        %4162 = vmatmul.mubr.bf16.gmra.mxu0 %v2813
        %v4163 = vpop.f32.mrf.mxu0
        %v4164 = vadd.f32 0.0, %v4163
        %v4165 = vpop.f32.mrf.mxu0
        %v4166 = vpop.f32.mrf.mxu0
        %v4167 = vadd.f32 0.0, %v4166
        %v4168 = vpop.f32.mrf.mxu0
        %4169 = vmatprep.mubr.bf16.mxu0 %v2886
        %4170 = vmatmul.mubr.bf16.gmra.mxu0 %v2814
        %v4171 = vpop.f32.mrf.mxu0
        %v4172 = vadd.f32 0.0, %v4171
        %v4173 = vpop.f32.mrf.mxu0
        %v4174 = vpop.f32.mrf.mxu0
        %v4175 = vadd.f32 0.0, %v4174
        %v4176 = vpop.f32.mrf.mxu0
        %4177 = vdwg.mxu0
        %4178 = vmatprep.subr.bf16.mxu0 0
        %4179 = vmatpush1.bf16.msra.mxu0 %v3366
        %4180 = vmatprep.subr.bf16.mxu0 0
        %4181 = vmatpush1.bf16.msra.mxu0 %v3363
        %4182 = vmatprep.subr.bf16.mxu0 0
        %4183 = vmatpush1.bf16.msra.mxu0 %v3360
        %4184 = vmatprep.subr.bf16.mxu0 0
        %4185 = vmatpush1.bf16.msra.mxu0 %v3357
        %4186 = vmatprep.subr.bf16.mxu0 0
        %4187 = vmatpush1.bf16.msra.mxu0 %v3354
        %4188 = vmatprep.subr.bf16.mxu0 0
        %4189 = vmatpush1.bf16.msra.mxu0 %v3351
        %4190 = vmatprep.subr.bf16.mxu0 0
        %4191 = vmatpush1.bf16.msra.mxu0 %v3348
        %4192 = vmatprep.subr.bf16.mxu0 0
        %4193 = vmatpush1.bf16.msra.mxu0 %v3345
        %4194 = vmatprep.subr.bf16.mxu0 0
        %4195 = vmatpush2.bf16.msra.mxu0 0
        %4196 = vmatprep.subr.bf16.mxu0 0
        %4197 = vmatpush2.bf16.msra.mxu0 0
        %4198 = vmatprep.subr.bf16.mxu0 0
        %4199 = vmatpush2.bf16.msra.mxu0 0
        %4200 = vmatprep.subr.bf16.mxu0 0
        %4201 = vmatpush2.bf16.msra.mxu0 0
        %4202 = vmatprep.subr.bf16.mxu0 0
        %4203 = vmatpush2.bf16.msra.mxu0 0
        %4204 = vmatprep.subr.bf16.mxu0 0
        %4205 = vmatpush2.bf16.msra.mxu0 0
        %4206 = vmatprep.subr.bf16.mxu0 0
        %4207 = vmatpush2.bf16.msra.mxu0 0
        %4208 = vmatprep.subr.bf16.mxu0 0
        %4209 = vmatpush2.bf16.msra.mxu0 0
        %4210 = vmatprep.mubr.bf16.mxu0 0
        %4211 = vmatmul.mubr.bf16.gmra.mxu0 %v2935
        %v4212 = vpop.f32.mrf.mxu0
        %v4213 = vadd.f32 %v3988, %v4212
        %v4214 = vpop.f32.mrf.mxu0
        %v4215 = vpop.f32.mrf.mxu0
        %v4216 = vadd.f32 %v3991, %v4215
        %v4217 = vpop.f32.mrf.mxu0
        %4218 = vmatprep.mubr.bf16.mxu0 0
        %4219 = vmatmul.mubr.bf16.gmra.mxu0 %v2936
        %v4220 = vpop.f32.mrf.mxu0
        %v4221 = vadd.f32 %v3996, %v4220
        %v4222 = vpop.f32.mrf.mxu0
        %v4223 = vpop.f32.mrf.mxu0
        %v4224 = vadd.f32 %v3999, %v4223
        %v4225 = vpop.f32.mrf.mxu0
        %4226 = vmatprep.mubr.bf16.mxu0 0
        %4227 = vmatmul.mubr.bf16.gmra.mxu0 %v2937
        %v4228 = vpop.f32.mrf.mxu0
        %v4229 = vadd.f32 %v4004, %v4228
        %v4230 = vpop.f32.mrf.mxu0
        %v4231 = vpop.f32.mrf.mxu0
        %v4232 = vadd.f32 %v4007, %v4231
        %v4233 = vpop.f32.mrf.mxu0
        %4234 = vmatprep.mubr.bf16.mxu0 0
        %4235 = vmatmul.mubr.bf16.gmra.mxu0 %v2938
        %v4236 = vpop.f32.mrf.mxu0
        %v4237 = vadd.f32 %v4012, %v4236
        %v4238 = vpop.f32.mrf.mxu0
        %v4239 = vpop.f32.mrf.mxu0
        %v4240 = vadd.f32 %v4015, %v4239
        %v4241 = vpop.f32.mrf.mxu0
        %4242 = vmatprep.mubr.bf16.mxu0 0
        %4243 = vmatmul.mubr.bf16.gmra.mxu0 %v2939
        %v4244 = vpop.f32.mrf.mxu0
        %v4245 = vadd.f32 %v4020, %v4244
        %v4246 = vpop.f32.mrf.mxu0
        %v4247 = vpop.f32.mrf.mxu0
        %v4248 = vadd.f32 %v4023, %v4247
        %v4249 = vpop.f32.mrf.mxu0
        %4250 = vmatprep.mubr.bf16.mxu0 0
        %4251 = vmatmul.mubr.bf16.gmra.mxu0 %v2940
        %v4252 = vpop.f32.mrf.mxu0
        %v4253 = vadd.f32 %v4028, %v4252
        %v4254 = vpop.f32.mrf.mxu0
        %v4255 = vpop.f32.mrf.mxu0
        %v4256 = vadd.f32 %v4031, %v4255
        %v4257 = vpop.f32.mrf.mxu0
        %4258 = vmatprep.mubr.bf16.mxu0 0
        %4259 = vmatmul.mubr.bf16.gmra.mxu0 %v2941
        %v4260 = vpop.f32.mrf.mxu0
        %v4261 = vadd.f32 %v4036, %v4260
        %v4262 = vpop.f32.mrf.mxu0
        %v4263 = vpop.f32.mrf.mxu0
        %v4264 = vadd.f32 %v4039, %v4263
        %v4265 = vpop.f32.mrf.mxu0
        %4266 = vmatprep.mubr.bf16.mxu0 0
        %4267 = vmatmul.mubr.bf16.gmra.mxu0 %v2942
        %v4268 = vpop.f32.mrf.mxu0
        %v4269 = vadd.f32 %v4044, %v4268
        %v4270 = vpop.f32.mrf.mxu0
        %v4271 = vpop.f32.mrf.mxu0
        %v4272 = vadd.f32 %v4047, %v4271
        %v4273 = vpop.f32.mrf.mxu0
        %4274 = vmatprep.mubr.bf16.mxu0 0
        %4275 = vmatmul.mubr.bf16.gmra.mxu0 %v2943
        %v4276 = vpop.f32.mrf.mxu0
        %v4277 = vadd.f32 %v4052, %v4276
        %v4278 = vpop.f32.mrf.mxu0
        %v4279 = vpop.f32.mrf.mxu0
        %v4280 = vadd.f32 %v4055, %v4279
        %v4281 = vpop.f32.mrf.mxu0
        %4282 = vmatprep.mubr.bf16.mxu0 0
        %4283 = vmatmul.mubr.bf16.gmra.mxu0 %v2944
        %v4284 = vpop.f32.mrf.mxu0
        %v4285 = vadd.f32 %v4060, %v4284
        %v4286 = vpop.f32.mrf.mxu0
        %v4287 = vpop.f32.mrf.mxu0
        %v4288 = vadd.f32 %v4063, %v4287
        %v4289 = vpop.f32.mrf.mxu0
        %4290 = vmatprep.mubr.bf16.mxu0 0
        %4291 = vmatmul.mubr.bf16.gmra.mxu0 %v2945
        %v4292 = vpop.f32.mrf.mxu0
        %v4293 = vadd.f32 %v4068, %v4292
        %v4294 = vpop.f32.mrf.mxu0
        %v4295 = vpop.f32.mrf.mxu0
        %v4296 = vadd.f32 %v4071, %v4295
        %v4297 = vpop.f32.mrf.mxu0
        %4298 = vmatprep.mubr.bf16.mxu0 0
        %4299 = vmatmul.mubr.bf16.gmra.mxu0 %v2946
        %v4300 = vpop.f32.mrf.mxu0
        %v4301 = vadd.f32 %v4076, %v4300
        %v4302 = vpop.f32.mrf.mxu0
        %v4303 = vpop.f32.mrf.mxu0
        %v4304 = vadd.f32 %v4079, %v4303
        %v4305 = vpop.f32.mrf.mxu0
        %4306 = vmatprep.mubr.bf16.mxu0 0
        %4307 = vmatmul.mubr.bf16.gmra.mxu0 %v2947
        %v4308 = vpop.f32.mrf.mxu0
        %v4309 = vadd.f32 %v4084, %v4308
        %v4310 = vpop.f32.mrf.mxu0
        %v4311 = vpop.f32.mrf.mxu0
        %v4312 = vadd.f32 %v4087, %v4311
        %v4313 = vpop.f32.mrf.mxu0
        %4314 = vmatprep.mubr.bf16.mxu0 0
        %4315 = vmatmul.mubr.bf16.gmra.mxu0 %v2948
        %v4316 = vpop.f32.mrf.mxu0
        %v4317 = vadd.f32 %v4092, %v4316
        %v4318 = vpop.f32.mrf.mxu0
        %v4319 = vpop.f32.mrf.mxu0
        %v4320 = vadd.f32 %v4095, %v4319
        %v4321 = vpop.f32.mrf.mxu0
        %4322 = vmatprep.mubr.bf16.mxu0 0
        %4323 = vmatmul.mubr.bf16.gmra.mxu0 %v2949
        %v4324 = vpop.f32.mrf.mxu0
        %v4325 = vadd.f32 %v4100, %v4324
        %v4326 = vpop.f32.mrf.mxu0
        %v4327 = vpop.f32.mrf.mxu0
        %v4328 = vadd.f32 %v4103, %v4327
        %v4329 = vpop.f32.mrf.mxu0
        %4330 = vmatprep.mubr.bf16.mxu0 0
        %4331 = vmatmul.mubr.bf16.gmra.mxu0 %v2950
        %v4332 = vpop.f32.mrf.mxu0
        %v4333 = vadd.f32 %v4108, %v4332
        %v4334 = vpop.f32.mrf.mxu0
        %v4335 = vpop.f32.mrf.mxu0
        %v4336 = vadd.f32 %v4111, %v4335
        %v4337 = vpop.f32.mrf.mxu0
        %4338 = vmatprep.mubr.bf16.mxu0 0
        %4339 = vmatmul.mubr.bf16.gmra.mxu0 %v2951
        %v4340 = vpop.f32.mrf.mxu0
        %v4341 = vadd.f32 %v4116, %v4340
        %v4342 = vpop.f32.mrf.mxu0
        %v4343 = vpop.f32.mrf.mxu0
        %v4344 = vadd.f32 %v4119, %v4343
        %v4345 = vpop.f32.mrf.mxu0
        %4346 = vmatprep.mubr.bf16.mxu0 0
        %4347 = vmatmul.mubr.bf16.gmra.mxu0 %v2952
        %v4348 = vpop.f32.mrf.mxu0
        %v4349 = vadd.f32 %v4124, %v4348
        %v4350 = vpop.f32.mrf.mxu0
        %v4351 = vpop.f32.mrf.mxu0
        %v4352 = vadd.f32 %v4127, %v4351
        %v4353 = vpop.f32.mrf.mxu0
        %4354 = vmatprep.mubr.bf16.mxu0 0
        %4355 = vmatmul.mubr.bf16.gmra.mxu0 %v2953
        %v4356 = vpop.f32.mrf.mxu0
        %v4357 = vadd.f32 %v4132, %v4356
        %v4358 = vpop.f32.mrf.mxu0
        %v4359 = vpop.f32.mrf.mxu0
        %v4360 = vadd.f32 %v4135, %v4359
        %v4361 = vpop.f32.mrf.mxu0
        %4362 = vmatprep.mubr.bf16.mxu0 0
        %4363 = vmatmul.mubr.bf16.gmra.mxu0 %v2954
        %v4364 = vpop.f32.mrf.mxu0
        %v4365 = vadd.f32 %v4140, %v4364
        %v4366 = vpop.f32.mrf.mxu0
        %v4367 = vpop.f32.mrf.mxu0
        %v4368 = vadd.f32 %v4143, %v4367
        %v4369 = vpop.f32.mrf.mxu0
        %4370 = vmatprep.mubr.bf16.mxu0 0
        %4371 = vmatmul.mubr.bf16.gmra.mxu0 %v2955
        %v4372 = vpop.f32.mrf.mxu0
        %v4373 = vadd.f32 %v4148, %v4372
        %v4374 = vpop.f32.mrf.mxu0
        %v4375 = vpop.f32.mrf.mxu0
        %v4376 = vadd.f32 %v4151, %v4375
        %v4377 = vpop.f32.mrf.mxu0
        %4378 = vmatprep.mubr.bf16.mxu0 0
        %4379 = vmatmul.mubr.bf16.gmra.mxu0 %v2956
        %v4380 = vpop.f32.mrf.mxu0
        %v4381 = vadd.f32 %v4156, %v4380
        %v4382 = vpop.f32.mrf.mxu0
        %v4383 = vpop.f32.mrf.mxu0
        %v4384 = vadd.f32 %v4159, %v4383
        %v4385 = vpop.f32.mrf.mxu0
        %4386 = vmatprep.mubr.bf16.mxu0 0
        %4387 = vmatmul.mubr.bf16.gmra.mxu0 %v2957
        %v4388 = vpop.f32.mrf.mxu0
        %v4389 = vadd.f32 %v4164, %v4388
        %v4390 = vpop.f32.mrf.mxu0
        %v4391 = vpop.f32.mrf.mxu0
        %v4392 = vadd.f32 %v4167, %v4391
        %v4393 = vpop.f32.mrf.mxu0
        %4394 = vmatprep.mubr.bf16.mxu0 0
        %4395 = vmatmul.mubr.bf16.gmra.mxu0 %v2958
        %v4396 = vpop.f32.mrf.mxu0
        %v4397 = vadd.f32 %v4172, %v4396
        %v4398 = vpop.f32.mrf.mxu0
        %v4399 = vpop.f32.mrf.mxu0
        %v4400 = vadd.f32 %v4175, %v4399
        %v4401 = vpop.f32.mrf.mxu0
        %4402 = vdwg.mxu0
        %v4451 = vrot.slane %v3733, 1
        %v4452 = vrot.slane %v3737, 1
        %v4453 = vsel %vm2270, %v4451, %v4452
        %v4454 = vrot.slane %v3742, 1
        %v4455 = vsel %vm2270, %v4452, %v4454
        %v4456 = vrot.slane %v3746, 1
        %v4457 = vrot.slane %v3752, 1
        %v4458 = vsel %vm2270, %v4456, %v4457
        %v4459 = vrot.slane %v3755, 1
        %v4460 = vsel %vm2270, %v4457, %v4459
        %v4461 = vrot.slane %v3761, 1
        %v4462 = vrot.slane %v3765, 1
        %v4463 = vsel %vm2270, %v4461, %v4462
        %v4464 = vrot.slane %v3770, 1
        %v4465 = vsel %vm2270, %v4462, %v4464
        %v4466 = vrot.slane %v3774, 1
        %v4467 = vrot.slane %v3780, 1
        %v4468 = vsel %vm2270, %v4466, %v4467
        %v4469 = vrot.slane %v3783, 1
        %v4470 = vsel %vm2270, %v4467, %v4469
        %v4471 = vrot.slane %v3789, 1
        %v4472 = vrot.slane %v3793, 1
        %v4473 = vsel %vm2270, %v4471, %v4472
        %v4474 = vrot.slane %v3798, 1
        %v4475 = vsel %vm2270, %v4472, %v4474
        %v4476 = vrot.slane %v3802, 1
        %v4477 = vrot.slane %v3808, 1
        %v4478 = vsel %vm2270, %v4476, %v4477
        %v4479 = vrot.slane %v3811, 1
        %v4480 = vsel %vm2270, %v4477, %v4479
        %v4481 = vrot.slane %v3817, 1
        %v4482 = vrot.slane %v3821, 1
        %v4483 = vsel %vm2270, %v4481, %v4482
        %v4484 = vrot.slane %v3826, 1
        %v4485 = vsel %vm2270, %v4482, %v4484
        %v4486 = vrot.slane %v3830, 1
        %v4487 = vrot.slane %v3836, 1
        %v4488 = vsel %vm2270, %v4486, %v4487
        %v4489 = vrot.slane %v3839, 1
        %v4490 = vsel %vm2270, %v4487, %v4489
        %v4491 = vrot.slane %v3845, 1
        %v4492 = vrot.slane %v3849, 1
        %v4493 = vsel %vm2270, %v4491, %v4492
        %v4494 = vrot.slane %v3854, 1
        %v4495 = vsel %vm2270, %v4492, %v4494
        %v4496 = vrot.slane %v3858, 1
        %v4497 = vrot.slane %v3864, 1
        %v4498 = vsel %vm2270, %v4496, %v4497
        %v4499 = vrot.slane %v3867, 1
        %v4500 = vsel %vm2270, %v4497, %v4499
        %v4501 = vrot.slane %v3873, 1
        %v4502 = vrot.slane %v3877, 1
        %v4503 = vsel %vm2270, %v4501, %v4502
        %v4504 = vrot.slane %v3882, 1
        %v4505 = vsel %vm2270, %v4502, %v4504
        %v4506 = vrot.slane %v3886, 1
        %v4507 = vrot.slane %v3892, 1
        %v4508 = vsel %vm2270, %v4506, %v4507
        %v4509 = vrot.slane %v3895, 1
        %v4510 = vsel %vm2270, %v4507, %v4509
        %v4511 = vrot.slane %v3901, 1
        %v4512 = vrot.slane %v3905, 1
        %v4513 = vsel %vm2270, %v4511, %v4512
        %v4514 = vrot.slane %v3910, 1
        %v4515 = vsel %vm2270, %v4512, %v4514
        %v4516 = vrot.slane %v3914, 1
        %v4517 = vrot.slane %v3920, 1
        %v4518 = vsel %vm2270, %v4516, %v4517
        %v4519 = vrot.slane %v3923, 1
        %v4520 = vsel %vm2270, %v4517, %v4519
        %v4521 = vrot.slane %v3929, 1
        %v4522 = vrot.slane %v3933, 1
        %v4523 = vsel %vm2270, %v4521, %v4522
        %v4524 = vrot.slane %v3938, 1
        %v4525 = vsel %vm2270, %v4522, %v4524
        %v4526 = vrot.slane %v3942, 1
        %v4527 = vrot.slane %v3948, 1
        %v4528 = vsel %vm2270, %v4526, %v4527
        %v4529 = vrot.slane %v3951, 1
        %v4530 = vsel %vm2270, %v4527, %v4529
        %v4563 = vadd.f32 %v3731, %v4453
        %v4564 = vadd.f32 %v3735, %v4455
        %v4565 = vadd.f32 %v3744, %v4458
        %v4566 = vadd.f32 %v3750, %v4460
        %v4567 = vadd.f32 %v3759, %v4463
        %v4568 = vadd.f32 %v3763, %v4465
        %v4569 = vadd.f32 %v3772, %v4468
        %v4570 = vadd.f32 %v3778, %v4470
        %v4571 = vadd.f32 %v3787, %v4473
        %v4572 = vadd.f32 %v3791, %v4475
        %v4573 = vadd.f32 %v3800, %v4478
        %v4574 = vadd.f32 %v3806, %v4480
        %v4575 = vadd.f32 %v3815, %v4483
        %v4576 = vadd.f32 %v3819, %v4485
        %v4577 = vadd.f32 %v3828, %v4488
        %v4578 = vadd.f32 %v3834, %v4490
        %v4579 = vadd.f32 %v3843, %v4493
        %v4580 = vadd.f32 %v3847, %v4495
        %v4581 = vadd.f32 %v3856, %v4498
        %v4582 = vadd.f32 %v3862, %v4500
        %v4583 = vadd.f32 %v3871, %v4503
        %v4584 = vadd.f32 %v3875, %v4505
        %v4585 = vadd.f32 %v3884, %v4508
        %v4586 = vadd.f32 %v3890, %v4510
        %v4587 = vadd.f32 %v3899, %v4513
        %v4588 = vadd.f32 %v3903, %v4515
        %v4589 = vadd.f32 %v3912, %v4518
        %v4590 = vadd.f32 %v3918, %v4520
        %v4591 = vadd.f32 %v3927, %v4523
        %v4592 = vadd.f32 %v3931, %v4525
        %v4593 = vadd.f32 %v3940, %v4528
        %v4594 = vadd.f32 %v3946, %v4530
        %v4643 = vrot.slane %v4213, 2
        %v4644 = vrot.slane %v4216, 2
        %v4645 = vsel %vm2463, %v4643, %v4644
        %v4646 = vrot.slane %v4221, 2
        %v4647 = vsel %vm2463, %v4644, %v4646
        %v4648 = vrot.slane %v4224, 2
        %v4649 = vrot.slane %v4229, 2
        %v4650 = vsel %vm2463, %v4648, %v4649
        %v4651 = vrot.slane %v4232, 2
        %v4652 = vsel %vm2463, %v4649, %v4651
        %v4653 = vrot.slane %v4237, 2
        %v4654 = vrot.slane %v4240, 2
        %v4655 = vsel %vm2463, %v4653, %v4654
        %v4656 = vrot.slane %v4245, 2
        %v4657 = vsel %vm2463, %v4654, %v4656
        %v4658 = vrot.slane %v4248, 2
        %v4659 = vrot.slane %v4253, 2
        %v4660 = vsel %vm2463, %v4658, %v4659
        %v4661 = vrot.slane %v4256, 2
        %v4662 = vsel %vm2463, %v4659, %v4661
        %v4663 = vrot.slane %v4261, 2
        %v4664 = vrot.slane %v4264, 2
        %v4665 = vsel %vm2463, %v4663, %v4664
        %v4666 = vrot.slane %v4269, 2
        %v4667 = vsel %vm2463, %v4664, %v4666
        %v4668 = vrot.slane %v4272, 2
        %v4669 = vrot.slane %v4277, 2
        %v4670 = vsel %vm2463, %v4668, %v4669
        %v4671 = vrot.slane %v4280, 2
        %v4672 = vsel %vm2463, %v4669, %v4671
        %v4673 = vrot.slane %v4285, 2
        %v4674 = vrot.slane %v4288, 2
        %v4675 = vsel %vm2463, %v4673, %v4674
        %v4676 = vrot.slane %v4293, 2
        %v4677 = vsel %vm2463, %v4674, %v4676
        %v4678 = vrot.slane %v4296, 2
        %v4679 = vrot.slane %v4301, 2
        %v4680 = vsel %vm2463, %v4678, %v4679
        %v4681 = vrot.slane %v4304, 2
        %v4682 = vsel %vm2463, %v4679, %v4681
        %v4683 = vrot.slane %v4309, 2
        %v4684 = vrot.slane %v4312, 2
        %v4685 = vsel %vm2463, %v4683, %v4684
        %v4686 = vrot.slane %v4317, 2
        %v4687 = vsel %vm2463, %v4684, %v4686
        %v4688 = vrot.slane %v4320, 2
        %v4689 = vrot.slane %v4325, 2
        %v4690 = vsel %vm2463, %v4688, %v4689
        %v4691 = vrot.slane %v4328, 2
        %v4692 = vsel %vm2463, %v4689, %v4691
        %v4693 = vrot.slane %v4333, 2
        %v4694 = vrot.slane %v4336, 2
        %v4695 = vsel %vm2463, %v4693, %v4694
        %v4696 = vrot.slane %v4341, 2
        %v4697 = vsel %vm2463, %v4694, %v4696
        %v4698 = vrot.slane %v4344, 2
        %v4699 = vrot.slane %v4349, 2
        %v4700 = vsel %vm2463, %v4698, %v4699
        %v4701 = vrot.slane %v4352, 2
        %v4702 = vsel %vm2463, %v4699, %v4701
        %v4703 = vrot.slane %v4357, 2
        %v4704 = vrot.slane %v4360, 2
        %v4705 = vsel %vm2463, %v4703, %v4704
        %v4706 = vrot.slane %v4365, 2
        %v4707 = vsel %vm2463, %v4704, %v4706
        %v4708 = vrot.slane %v4368, 2
        %v4709 = vrot.slane %v4373, 2
        %v4710 = vsel %vm2463, %v4708, %v4709
        %v4711 = vrot.slane %v4376, 2
        %v4712 = vsel %vm2463, %v4709, %v4711
        %v4713 = vrot.slane %v4381, 2
        %v4714 = vrot.slane %v4384, 2
        %v4715 = vsel %vm2463, %v4713, %v4714
        %v4716 = vrot.slane %v4389, 2
        %v4717 = vsel %vm2463, %v4714, %v4716
        %v4718 = vrot.slane %v4392, 2
        %v4719 = vrot.slane %v4397, 2
        %v4720 = vsel %vm2463, %v4718, %v4719
        %v4721 = vrot.slane %v4400, 2
        %v4722 = vsel %vm2463, %v4719, %v4721
        %v4755 = vadd.f32 %v4563, %v4645
        %v4756 = vadd.f32 %v4564, %v4647
        %v4757 = vadd.f32 %v4565, %v4650
        %v4758 = vadd.f32 %v4566, %v4652
        %v4759 = vadd.f32 %v4567, %v4655
        %v4760 = vadd.f32 %v4568, %v4657
        %v4761 = vadd.f32 %v4569, %v4660
        %v4762 = vadd.f32 %v4570, %v4662
        %v4763 = vadd.f32 %v4571, %v4665
        %v4764 = vadd.f32 %v4572, %v4667
        %v4765 = vadd.f32 %v4573, %v4670
        %v4766 = vadd.f32 %v4574, %v4672
        %v4767 = vadd.f32 %v4575, %v4675
        %v4768 = vadd.f32 %v4576, %v4677
        %v4769 = vadd.f32 %v4577, %v4680
        %v4770 = vadd.f32 %v4578, %v4682
        %v4771 = vadd.f32 %v4579, %v4685
        %v4772 = vadd.f32 %v4580, %v4687
        %v4773 = vadd.f32 %v4581, %v4690
        %v4774 = vadd.f32 %v4582, %v4692
        %v4775 = vadd.f32 %v4583, %v4695
        %v4776 = vadd.f32 %v4584, %v4697
        %v4777 = vadd.f32 %v4585, %v4700
        %v4778 = vadd.f32 %v4586, %v4702
        %v4779 = vadd.f32 %v4587, %v4705
        %v4780 = vadd.f32 %v4588, %v4707
        %v4781 = vadd.f32 %v4589, %v4710
        %v4782 = vadd.f32 %v4590, %v4712
        %v4783 = vadd.f32 %v4591, %v4715
        %v4784 = vadd.f32 %v4592, %v4717
        %v4785 = vadd.f32 %v4593, %v4720
        %v4786 = vadd.f32 %v4594, %v4722
        %v4787 = vld [vmem:[%s4] sm:$0x1]
        %v4789 = vlaneseq
        %v4790 = vshrl.u32 %v4789, 7
        %v4791 = vsub.s32 0, %v4790
        %v4792 = vrot.slane %v4787, %v4791
        %v4794 = vadd.f32 %v4755, %v4792
        %v4795 = vadd.f32 %v4756, %v4792
        %v4796 = vadd.f32 %v4757, %v4792
        %v4797 = vadd.f32 %v4758, %v4792
        %v4798 = vadd.f32 %v4759, %v4792
        %v4799 = vadd.f32 %v4760, %v4792
        %v4800 = vadd.f32 %v4761, %v4792
        %v4801 = vadd.f32 %v4762, %v4792
        %v4802 = vadd.f32 %v4763, %v4792
        %v4803 = vadd.f32 %v4764, %v4792
        %v4804 = vadd.f32 %v4765, %v4792
        %v4805 = vadd.f32 %v4766, %v4792
        %v4806 = vadd.f32 %v4767, %v4792
        %v4807 = vadd.f32 %v4768, %v4792
        %v4808 = vadd.f32 %v4769, %v4792
        %v4809 = vadd.f32 %v4770, %v4792
        %v4810 = vadd.f32 %v4771, %v4792
        %v4811 = vadd.f32 %v4772, %v4792
        %v4812 = vadd.f32 %v4773, %v4792
        %v4813 = vadd.f32 %v4774, %v4792
        %v4814 = vadd.f32 %v4775, %v4792
        %v4815 = vadd.f32 %v4776, %v4792
        %v4816 = vadd.f32 %v4777, %v4792
        %v4817 = vadd.f32 %v4778, %v4792
        %v4818 = vadd.f32 %v4779, %v4792
        %v4819 = vadd.f32 %v4780, %v4792
        %v4820 = vadd.f32 %v4781, %v4792
        %v4821 = vadd.f32 %v4782, %v4792
        %v4822 = vadd.f32 %v4783, %v4792
        %v4823 = vadd.f32 %v4784, %v4792
        %v4824 = vadd.f32 %v4785, %v4792
        %v4825 = vadd.f32 %v4786, %v4792
        %v4826 = vmul.f32 %v4794, 0.2
        %v4827 = vmul.f32 %v4795, 0.2
        %v4828 = vmul.f32 %v4796, 0.2
        %v4829 = vmul.f32 %v4797, 0.2
        %v4830 = vmul.f32 %v4798, 0.2
        %v4831 = vmul.f32 %v4799, 0.2
        %v4832 = vmul.f32 %v4800, 0.2
        %v4833 = vmul.f32 %v4801, 0.2
        %v4834 = vmul.f32 %v4802, 0.2
        %v4835 = vmul.f32 %v4803, 0.2
        %v4836 = vmul.f32 %v4804, 0.2
        %v4837 = vmul.f32 %v4805, 0.2
        %v4838 = vmul.f32 %v4806, 0.2
        %v4839 = vmul.f32 %v4807, 0.2
        %v4840 = vmul.f32 %v4808, 0.2
        %v4841 = vmul.f32 %v4809, 0.2
        %v4842 = vmul.f32 %v4810, 0.2
        %v4843 = vmul.f32 %v4811, 0.2
        %v4844 = vmul.f32 %v4812, 0.2
        %v4845 = vmul.f32 %v4813, 0.2
        %v4846 = vmul.f32 %v4814, 0.2
        %v4847 = vmul.f32 %v4815, 0.2
        %v4848 = vmul.f32 %v4816, 0.2
        %v4849 = vmul.f32 %v4817, 0.2
        %v4850 = vmul.f32 %v4818, 0.2
        %v4851 = vmul.f32 %v4819, 0.2
        %v4852 = vmul.f32 %v4820, 0.2
        %v4853 = vmul.f32 %v4821, 0.2
        %v4854 = vmul.f32 %v4822, 0.2
        %v4855 = vmul.f32 %v4823, 0.2
        %v4856 = vmul.f32 %v4824, 0.2
        %v4857 = vmul.f32 %v4825, 0.2
        %v4858 = vmax.f32 %v4794, %v4826
        %v4859 = vmax.f32 %v4795, %v4827
        %v4860 = vmax.f32 %v4796, %v4828
        %v4861 = vmax.f32 %v4797, %v4829
        %v4862 = vmax.f32 %v4798, %v4830
        %v4863 = vmax.f32 %v4799, %v4831
        %v4864 = vmax.f32 %v4800, %v4832
        %v4865 = vmax.f32 %v4801, %v4833
        %v4866 = vmax.f32 %v4802, %v4834
        %v4867 = vmax.f32 %v4803, %v4835
        %v4868 = vmax.f32 %v4804, %v4836
        %v4869 = vmax.f32 %v4805, %v4837
        %v4870 = vmax.f32 %v4806, %v4838
        %v4871 = vmax.f32 %v4807, %v4839
        %v4872 = vmax.f32 %v4808, %v4840
        %v4873 = vmax.f32 %v4809, %v4841
        %v4874 = vmax.f32 %v4810, %v4842
        %v4875 = vmax.f32 %v4811, %v4843
        %v4876 = vmax.f32 %v4812, %v4844
        %v4877 = vmax.f32 %v4813, %v4845
        %v4878 = vmax.f32 %v4814, %v4846
        %v4879 = vmax.f32 %v4815, %v4847
        %v4880 = vmax.f32 %v4816, %v4848
        %v4881 = vmax.f32 %v4817, %v4849
        %v4882 = vmax.f32 %v4818, %v4850
        %v4883 = vmax.f32 %v4819, %v4851
        %v4884 = vmax.f32 %v4820, %v4852
        %v4885 = vmax.f32 %v4821, %v4853
        %v4886 = vmax.f32 %v4822, %v4854
        %v4887 = vmax.f32 %v4823, %v4855
        %v4888 = vmax.f32 %v4824, %v4856
        %v4889 = vmax.f32 %v4825, %v4857
        %v4890 = vld [vmem:[%s358] sm:$0xf]
        %v4891 = vld [vmem:[%s358 + $0x4] sm:$0xf]
        %v4892 = vld [vmem:[%s358 + $0x8] sm:$0xf]
        %v4893 = vld [vmem:[%s358 + $0xc] sm:$0xf]
        %v4894 = vld [vmem:[%s358 + $0x10] sm:$0xf]
        %v4895 = vld [vmem:[%s358 + $0x14] sm:$0xf]
        %v4896 = vld [vmem:[%s358 + $0x18] sm:$0xf]
        %v4897 = vld [vmem:[%s358 + $0x1c] sm:$0xf]
        %v4898 = vld [vmem:[%s358 + $0x20] sm:$0xf]
        %v4899 = vld [vmem:[%s358 + $0x24] sm:$0xf]
        %v4900 = vld [vmem:[%s358 + $0x28] sm:$0xf]
        %v4901 = vld [vmem:[%s358 + $0x2c] sm:$0xf]
        %v4902 = vld [vmem:[%s358 + $0x30] sm:$0xf]
        %v4903 = vld [vmem:[%s358 + $0x34] sm:$0xf]
        %v4904 = vld [vmem:[%s358 + $0x38] sm:$0xf]
        %v4905 = vld [vmem:[%s358 + $0x3c] sm:$0xf]
        %v4906 = vld [vmem:[%s358 + $0x40] sm:$0xf]
        %v4907 = vld [vmem:[%s358 + $0x44] sm:$0xf]
        %v4908 = vld [vmem:[%s358 + $0x48] sm:$0xf]
        %v4909 = vld [vmem:[%s358 + $0x4c] sm:$0xf]
        %v4910 = vld [vmem:[%s358 + $0x50] sm:$0xf]
        %v4911 = vld [vmem:[%s358 + $0x54] sm:$0xf]
        %v4912 = vld [vmem:[%s358 + $0x58] sm:$0xf]
        %v4913 = vld [vmem:[%s358 + $0x5c] sm:$0xf]
        %v4914 = vld [vmem:[%s358 + $0x60] sm:$0xf]
        %v4915 = vld [vmem:[%s358 + $0x64] sm:$0xf]
        %v4916 = vld [vmem:[%s358 + $0x68] sm:$0xf]
        %v4917 = vld [vmem:[%s358 + $0x6c] sm:$0xf]
        %v4918 = vld [vmem:[%s358 + $0x70] sm:$0xf]
        %v4919 = vld [vmem:[%s358 + $0x74] sm:$0xf]
        %v4920 = vld [vmem:[%s358 + $0x78] sm:$0xf]
        %v4921 = vld [vmem:[%s358 + $0x7c] sm:$0xf]
        %v4922 = vld [vmem:[#allocation9] sm:$0xf]
        %v4923 = vld [vmem:[#allocation9 + $0x4] sm:$0xf]
        %v4924 = vld [vmem:[#allocation9 + $0x8] sm:$0xf]
        %v4925 = vld [vmem:[#allocation9 + $0xc] sm:$0xf]
        %v4926 = vld [vmem:[#allocation9 + $0x10] sm:$0xf]
        %v4927 = vld [vmem:[#allocation9 + $0x14] sm:$0xf]
        %v4928 = vld [vmem:[#allocation9 + $0x18] sm:$0xf]
        %v4929 = vld [vmem:[#allocation9 + $0x1c] sm:$0xf]
        %v4930 = vld [vmem:[#allocation9 + $0x20] sm:$0xf]
        %v4931 = vld [vmem:[#allocation9 + $0x24] sm:$0xf]
        %v4932 = vld [vmem:[#allocation9 + $0x28] sm:$0xf]
        %v4933 = vld [vmem:[#allocation9 + $0x2c] sm:$0xf]
        %v4934 = vld [vmem:[#allocation9 + $0x30] sm:$0xf]
        %v4935 = vld [vmem:[#allocation9 + $0x34] sm:$0xf]
        %v4936 = vld [vmem:[#allocation9 + $0x38] sm:$0xf]
        %v4937 = vld [vmem:[#allocation9 + $0x3c] sm:$0xf]
        %v4970 = vunpack.c.l.b16 %v4890
        %v4971 = vunpack.c.l.b16 %v4891
        %v4972 = vunpack.c.l.b16 %v4892
        %v4973 = vunpack.c.l.b16 %v4893
        %v4974 = vunpack.c.l.b16 %v4894
        %v4975 = vunpack.c.l.b16 %v4895
        %v4976 = vunpack.c.l.b16 %v4896
        %v4977 = vunpack.c.l.b16 %v4897
        %v4978 = vunpack.c.l.b16 %v4898
        %v4979 = vunpack.c.l.b16 %v4899
        %v4980 = vunpack.c.l.b16 %v4900
        %v4981 = vunpack.c.l.b16 %v4901
        %v4982 = vunpack.c.l.b16 %v4902
        %v4983 = vunpack.c.l.b16 %v4903
        %v4984 = vunpack.c.l.b16 %v4904
        %v4985 = vunpack.c.l.b16 %v4905
        %v4986 = vunpack.c.l.b16 %v4906
        %v4987 = vunpack.c.l.b16 %v4907
        %v4988 = vunpack.c.l.b16 %v4908
        %v4989 = vunpack.c.l.b16 %v4909
        %v4990 = vunpack.c.l.b16 %v4910
        %v4991 = vunpack.c.l.b16 %v4911
        %v4992 = vunpack.c.l.b16 %v4912
        %v4993 = vunpack.c.l.b16 %v4913
        %v4994 = vunpack.c.l.b16 %v4914
        %v4995 = vunpack.c.l.b16 %v4915
        %v4996 = vunpack.c.l.b16 %v4916
        %v4997 = vunpack.c.l.b16 %v4917
        %v4998 = vunpack.c.l.b16 %v4918
        %v4999 = vunpack.c.l.b16 %v4919
        %v5000 = vunpack.c.l.b16 %v4920
        %v5001 = vunpack.c.l.b16 %v4921
        %v5002 = vpack.c.b16 %v4971, %v4970
        %v5003 = vpack.c.b16 %v4973, %v4972
        %v5004 = vpack.c.b16 %v4975, %v4974
        %v5005 = vpack.c.b16 %v4977, %v4976
        %v5006 = vpack.c.b16 %v4979, %v4978
        %v5007 = vpack.c.b16 %v4981, %v4980
        %v5008 = vpack.c.b16 %v4983, %v4982
        %v5009 = vpack.c.b16 %v4985, %v4984
        %v5010 = vpack.c.b16 %v4987, %v4986
        %v5011 = vpack.c.b16 %v4989, %v4988
        %v5012 = vpack.c.b16 %v4991, %v4990
        %v5013 = vpack.c.b16 %v4993, %v4992
        %v5014 = vpack.c.b16 %v4995, %v4994
        %v5015 = vpack.c.b16 %v4997, %v4996
        %v5016 = vpack.c.b16 %v4999, %v4998
        %v5017 = vpack.c.b16 %v5001, %v5000
        %v5050 = vunpack.c.l.b16 %v4922
        %v5051 = vunpack.c.l.b16 %v4923
        %v5052 = vunpack.c.l.b16 %v4924
        %v5053 = vunpack.c.l.b16 %v4925
        %v5054 = vunpack.c.l.b16 %v4926
        %v5055 = vunpack.c.l.b16 %v4927
        %v5056 = vunpack.c.l.b16 %v4928
        %v5057 = vunpack.c.l.b16 %v4929
        %v5058 = vunpack.c.l.b16 %v4930
        %v5059 = vunpack.c.l.b16 %v4931
        %v5060 = vunpack.c.l.b16 %v4932
        %v5061 = vunpack.c.l.b16 %v4933
        %v5062 = vunpack.c.l.b16 %v4934
        %v5063 = vunpack.c.l.b16 %v4935
        %v5064 = vunpack.c.l.b16 %v4936
        %v5065 = vunpack.c.l.b16 %v4937
        %v5066 = vpack.c.b16 %v5051, %v5050
        %v5067 = vpack.c.b16 %v5053, %v5052
        %v5068 = vpack.c.b16 %v5055, %v5054
        %v5069 = vpack.c.b16 %v5057, %v5056
        %v5070 = vpack.c.b16 %v5059, %v5058
        %v5071 = vpack.c.b16 %v5061, %v5060
        %v5072 = vpack.c.b16 %v5063, %v5062
        %v5073 = vpack.c.b16 %v5065, %v5064
        %5082 = vmatprep.subr.bf16.mxu0 0
        %5083 = vmatpush1.bf16.msra.mxu0 %v5073
        %5084 = vmatprep.subr.bf16.mxu0 0
        %5085 = vmatpush1.bf16.msra.mxu0 %v5072
        %5086 = vmatprep.subr.bf16.mxu0 0
        %5087 = vmatpush1.bf16.msra.mxu0 %v5071
        %5088 = vmatprep.subr.bf16.mxu0 0
        %5089 = vmatpush1.bf16.msra.mxu0 %v5070
        %5090 = vmatprep.subr.bf16.mxu0 0
        %5091 = vmatpush1.bf16.msra.mxu0 %v5069
        %5092 = vmatprep.subr.bf16.mxu0 0
        %5093 = vmatpush1.bf16.msra.mxu0 %v5068
        %5094 = vmatprep.subr.bf16.mxu0 0
        %5095 = vmatpush1.bf16.msra.mxu0 %v5067
        %5096 = vmatprep.subr.bf16.mxu0 0
        %5097 = vmatpush1.bf16.msra.mxu0 %v5066
        %5098 = vmatprep.subr.bf16.mxu0 0
        %5099 = vmatpush2.bf16.msra.mxu0 0
        %5100 = vmatprep.subr.bf16.mxu0 0
        %5101 = vmatpush2.bf16.msra.mxu0 0
        %5102 = vmatprep.subr.bf16.mxu0 0
        %5103 = vmatpush2.bf16.msra.mxu0 0
        %5104 = vmatprep.subr.bf16.mxu0 0
        %5105 = vmatpush2.bf16.msra.mxu0 0
        %5106 = vmatprep.subr.bf16.mxu0 0
        %5107 = vmatpush2.bf16.msra.mxu0 0
        %5108 = vmatprep.subr.bf16.mxu0 0
        %5109 = vmatpush2.bf16.msra.mxu0 0
        %5110 = vmatprep.subr.bf16.mxu0 0
        %5111 = vmatpush2.bf16.msra.mxu0 0
        %5112 = vmatprep.subr.bf16.mxu0 0
        %5113 = vmatpush2.bf16.msra.mxu0 0
        %5114 = vmatprep.mubr.bf16.mxu0 0
        %5115 = vmatmul.mubr.bf16.gmra.mxu0 %v5002
        %v5116 = vpop.f32.mrf.mxu0
        %v5117 = vadd.f32 0.0, %v5116
        %v5118 = vpop.f32.mrf.mxu0
        %v5119 = vpop.f32.mrf.mxu0
        %v5120 = vadd.f32 0.0, %v5119
        %v5121 = vpop.f32.mrf.mxu0
        %5122 = vmatprep.mubr.bf16.mxu0 0
        %5123 = vmatmul.mubr.bf16.gmra.mxu0 %v5003
        %v5124 = vpop.f32.mrf.mxu0
        %v5125 = vadd.f32 0.0, %v5124
        %v5126 = vpop.f32.mrf.mxu0
        %v5127 = vpop.f32.mrf.mxu0
        %v5128 = vadd.f32 0.0, %v5127
        %v5129 = vpop.f32.mrf.mxu0
        %5130 = vmatprep.mubr.bf16.mxu0 0
        %5131 = vmatmul.mubr.bf16.gmra.mxu0 %v5004
        %v5132 = vpop.f32.mrf.mxu0
        %v5133 = vadd.f32 0.0, %v5132
        %v5134 = vpop.f32.mrf.mxu0
        %v5135 = vpop.f32.mrf.mxu0
        %v5136 = vadd.f32 0.0, %v5135
        %v5137 = vpop.f32.mrf.mxu0
        %5138 = vmatprep.mubr.bf16.mxu0 0
        %5139 = vmatmul.mubr.bf16.gmra.mxu0 %v5005
        %v5140 = vpop.f32.mrf.mxu0
        %v5141 = vadd.f32 0.0, %v5140
        %v5142 = vpop.f32.mrf.mxu0
        %v5143 = vpop.f32.mrf.mxu0
        %v5144 = vadd.f32 0.0, %v5143
        %v5145 = vpop.f32.mrf.mxu0
        %5146 = vmatprep.mubr.bf16.mxu0 0
        %5147 = vmatmul.mubr.bf16.gmra.mxu0 %v5006
        %v5148 = vpop.f32.mrf.mxu0
        %v5149 = vadd.f32 0.0, %v5148
        %v5150 = vpop.f32.mrf.mxu0
        %v5151 = vpop.f32.mrf.mxu0
        %v5152 = vadd.f32 0.0, %v5151
        %v5153 = vpop.f32.mrf.mxu0
        %5154 = vmatprep.mubr.bf16.mxu0 0
        %5155 = vmatmul.mubr.bf16.gmra.mxu0 %v5007
        %v5156 = vpop.f32.mrf.mxu0
        %v5157 = vadd.f32 0.0, %v5156
        %v5158 = vpop.f32.mrf.mxu0
        %v5159 = vpop.f32.mrf.mxu0
        %v5160 = vadd.f32 0.0, %v5159
        %v5161 = vpop.f32.mrf.mxu0
        %5162 = vmatprep.mubr.bf16.mxu0 0
        %5163 = vmatmul.mubr.bf16.gmra.mxu0 %v5008
        %v5164 = vpop.f32.mrf.mxu0
        %v5165 = vadd.f32 0.0, %v5164
        %v5166 = vpop.f32.mrf.mxu0
        %v5167 = vpop.f32.mrf.mxu0
        %v5168 = vadd.f32 0.0, %v5167
        %v5169 = vpop.f32.mrf.mxu0
        %5170 = vmatprep.mubr.bf16.mxu0 0
        %5171 = vmatmul.mubr.bf16.gmra.mxu0 %v5009
        %v5172 = vpop.f32.mrf.mxu0
        %v5173 = vadd.f32 0.0, %v5172
        %v5174 = vpop.f32.mrf.mxu0
        %v5175 = vpop.f32.mrf.mxu0
        %v5176 = vadd.f32 0.0, %v5175
        %v5177 = vpop.f32.mrf.mxu0
        %5178 = vmatprep.mubr.bf16.mxu0 0
        %5179 = vmatmul.mubr.bf16.gmra.mxu0 %v5010
        %v5180 = vpop.f32.mrf.mxu0
        %v5181 = vadd.f32 0.0, %v5180
        %v5182 = vpop.f32.mrf.mxu0
        %v5183 = vpop.f32.mrf.mxu0
        %v5184 = vadd.f32 0.0, %v5183
        %v5185 = vpop.f32.mrf.mxu0
        %5186 = vmatprep.mubr.bf16.mxu0 0
        %5187 = vmatmul.mubr.bf16.gmra.mxu0 %v5011
        %v5188 = vpop.f32.mrf.mxu0
        %v5189 = vadd.f32 0.0, %v5188
        %v5190 = vpop.f32.mrf.mxu0
        %v5191 = vpop.f32.mrf.mxu0
        %v5192 = vadd.f32 0.0, %v5191
        %v5193 = vpop.f32.mrf.mxu0
        %5194 = vmatprep.mubr.bf16.mxu0 0
        %5195 = vmatmul.mubr.bf16.gmra.mxu0 %v5012
        %v5196 = vpop.f32.mrf.mxu0
        %v5197 = vadd.f32 0.0, %v5196
        %v5198 = vpop.f32.mrf.mxu0
        %v5199 = vpop.f32.mrf.mxu0
        %v5200 = vadd.f32 0.0, %v5199
        %v5201 = vpop.f32.mrf.mxu0
        %5202 = vmatprep.mubr.bf16.mxu0 0
        %5203 = vmatmul.mubr.bf16.gmra.mxu0 %v5013
        %v5204 = vpop.f32.mrf.mxu0
        %v5205 = vadd.f32 0.0, %v5204
        %v5206 = vpop.f32.mrf.mxu0
        %v5207 = vpop.f32.mrf.mxu0
        %v5208 = vadd.f32 0.0, %v5207
        %v5209 = vpop.f32.mrf.mxu0
        %5210 = vmatprep.mubr.bf16.mxu0 0
        %5211 = vmatmul.mubr.bf16.gmra.mxu0 %v5014
        %v5212 = vpop.f32.mrf.mxu0
        %v5213 = vadd.f32 0.0, %v5212
        %v5214 = vpop.f32.mrf.mxu0
        %v5215 = vpop.f32.mrf.mxu0
        %v5216 = vadd.f32 0.0, %v5215
        %v5217 = vpop.f32.mrf.mxu0
        %5218 = vmatprep.mubr.bf16.mxu0 0
        %5219 = vmatmul.mubr.bf16.gmra.mxu0 %v5015
        %v5220 = vpop.f32.mrf.mxu0
        %v5221 = vadd.f32 0.0, %v5220
        %v5222 = vpop.f32.mrf.mxu0
        %v5223 = vpop.f32.mrf.mxu0
        %v5224 = vadd.f32 0.0, %v5223
        %v5225 = vpop.f32.mrf.mxu0
        %5226 = vmatprep.mubr.bf16.mxu0 0
        %5227 = vmatmul.mubr.bf16.gmra.mxu0 %v5016
        %v5228 = vpop.f32.mrf.mxu0
        %v5229 = vadd.f32 0.0, %v5228
        %v5230 = vpop.f32.mrf.mxu0
        %v5231 = vpop.f32.mrf.mxu0
        %v5232 = vadd.f32 0.0, %v5231
        %v5233 = vpop.f32.mrf.mxu0
        %5234 = vmatprep.mubr.bf16.mxu0 0
        %5235 = vmatmul.mubr.bf16.gmra.mxu0 %v5017
        %v5236 = vpop.f32.mrf.mxu0
        %v5237 = vadd.f32 0.0, %v5236
        %v5238 = vpop.f32.mrf.mxu0
        %v5239 = vpop.f32.mrf.mxu0
        %v5240 = vadd.f32 0.0, %v5239
        %v5241 = vpop.f32.mrf.mxu0
        %5242 = vdwg.mxu0
        %v5243 = vadd.f32 %v4858, %v5117
        %v5244 = vadd.f32 %v4859, %v5120
        %v5245 = vadd.f32 %v4860, %v5125
        %v5246 = vadd.f32 %v4861, %v5128
        %v5247 = vadd.f32 %v4862, %v5133
        %v5248 = vadd.f32 %v4863, %v5136
        %v5249 = vadd.f32 %v4864, %v5141
        %v5250 = vadd.f32 %v4865, %v5144
        %v5251 = vadd.f32 %v4866, %v5149
        %v5252 = vadd.f32 %v4867, %v5152
        %v5253 = vadd.f32 %v4868, %v5157
        %v5254 = vadd.f32 %v4869, %v5160
        %v5255 = vadd.f32 %v4870, %v5165
        %v5256 = vadd.f32 %v4871, %v5168
        %v5257 = vadd.f32 %v4872, %v5173
        %v5258 = vadd.f32 %v4873, %v5176
        %v5259 = vadd.f32 %v4874, %v5181
        %v5260 = vadd.f32 %v4875, %v5184
        %v5261 = vadd.f32 %v4876, %v5189
        %v5262 = vadd.f32 %v4877, %v5192
        %v5263 = vadd.f32 %v4878, %v5197
        %v5264 = vadd.f32 %v4879, %v5200
        %v5265 = vadd.f32 %v4880, %v5205
        %v5266 = vadd.f32 %v4881, %v5208
        %v5267 = vadd.f32 %v4882, %v5213
        %v5268 = vadd.f32 %v4883, %v5216
        %v5269 = vadd.f32 %v4884, %v5221
        %v5270 = vadd.f32 %v4885, %v5224
        %v5271 = vadd.f32 %v4886, %v5229
        %v5272 = vadd.f32 %v4887, %v5232
        %v5273 = vadd.f32 %v4888, %v5237
        %v5274 = vadd.f32 %v4889, %v5240
        %v5275 = vld [vmem:[%s6] sm:$0x1]
        %v5277 = vlaneseq
        %v5278 = vshrl.u32 %v5277, 7
        %v5279 = vsub.s32 0, %v5278
        %v5280 = vrot.slane %v5275, %v5279
        %v5282 = vadd.f32 %v5243, %v5280
        %v5283 = vadd.f32 %v5244, %v5280
        %v5284 = vadd.f32 %v5245, %v5280
        %v5285 = vadd.f32 %v5246, %v5280
        %v5286 = vadd.f32 %v5247, %v5280
        %v5287 = vadd.f32 %v5248, %v5280
        %v5288 = vadd.f32 %v5249, %v5280
        %v5289 = vadd.f32 %v5250, %v5280
        %v5290 = vadd.f32 %v5251, %v5280
        %v5291 = vadd.f32 %v5252, %v5280
        %v5292 = vadd.f32 %v5253, %v5280
        %v5293 = vadd.f32 %v5254, %v5280
        %v5294 = vadd.f32 %v5255, %v5280
        %v5295 = vadd.f32 %v5256, %v5280
        %v5296 = vadd.f32 %v5257, %v5280
        %v5297 = vadd.f32 %v5258, %v5280
        %v5298 = vadd.f32 %v5259, %v5280
        %v5299 = vadd.f32 %v5260, %v5280
        %v5300 = vadd.f32 %v5261, %v5280
        %v5301 = vadd.f32 %v5262, %v5280
        %v5302 = vadd.f32 %v5263, %v5280
        %v5303 = vadd.f32 %v5264, %v5280
        %v5304 = vadd.f32 %v5265, %v5280
        %v5305 = vadd.f32 %v5266, %v5280
        %v5306 = vadd.f32 %v5267, %v5280
        %v5307 = vadd.f32 %v5268, %v5280
        %v5308 = vadd.f32 %v5269, %v5280
        %v5309 = vadd.f32 %v5270, %v5280
        %v5310 = vadd.f32 %v5271, %v5280
        %v5311 = vadd.f32 %v5272, %v5280
        %v5312 = vadd.f32 %v5273, %v5280
        %v5313 = vadd.f32 %v5274, %v5280
        %5314 = vst [vmem:[%s528 + $0x1] sm:$0xff] %v5282
        %5315 = vst [vmem:[%s528 + $0x9] sm:$0xff] %v5283
        %5316 = vst [vmem:[%s528 + $0x19] sm:$0xff] %v5284
        %5317 = vst [vmem:[%s528 + $0x21] sm:$0xff] %v5285
        %5318 = vst [vmem:[%s528 + $0x31] sm:$0xff] %v5286
        %5319 = vst [vmem:[%s528 + $0x39] sm:$0xff] %v5287
        %5320 = vst [vmem:[%s528 + $0x49] sm:$0xff] %v5288
        %5321 = vst [vmem:[%s528 + $0x51] sm:$0xff] %v5289
        %5322 = vst [vmem:[%s528 + $0x61] sm:$0xff] %v5290
        %5323 = vst [vmem:[%s528 + $0x69] sm:$0xff] %v5291
        %5324 = vst [vmem:[%s528 + $0x79] sm:$0xff] %v5292
        %5325 = vst [vmem:[%s528 + $0x81] sm:$0xff] %v5293
        %5326 = vst [vmem:[%s528 + $0x91] sm:$0xff] %v5294
        %5327 = vst [vmem:[%s528 + $0x99] sm:$0xff] %v5295
        %5328 = vst [vmem:[%s528 + $0xa9] sm:$0xff] %v5296
        %5329 = vst [vmem:[%s528 + $0xb1] sm:$0xff] %v5297
        %5330 = vst [vmem:[%s528 + $0xc1] sm:$0xff] %v5298
        %5331 = vst [vmem:[%s528 + $0xc9] sm:$0xff] %v5299
        %5332 = vst [vmem:[%s528 + $0xd9] sm:$0xff] %v5300
        %5333 = vst [vmem:[%s528 + $0xe1] sm:$0xff] %v5301
        %5334 = vst [vmem:[%s528 + $0xf1] sm:$0xff] %v5302
        %5335 = vst [vmem:[%s528 + $0xf9] sm:$0xff] %v5303
        %5336 = vst [vmem:[%s528 + $0x109] sm:$0xff] %v5304
        %5337 = vst [vmem:[%s528 + $0x111] sm:$0xff] %v5305
        %5338 = vst [vmem:[%s528 + $0x121] sm:$0xff] %v5306
        %5339 = vst [vmem:[%s528 + $0x129] sm:$0xff] %v5307
        %5340 = vst [vmem:[%s528 + $0x139] sm:$0xff] %v5308
        %5341 = vst [vmem:[%s528 + $0x141] sm:$0xff] %v5309
        %5342 = vst [vmem:[%s528 + $0x151] sm:$0xff] %v5310
        %5343 = vst [vmem:[%s528 + $0x159] sm:$0xff] %v5311
        %5344 = vst [vmem:[%s528 + $0x169] sm:$0xff] %v5312
        %5345 = vst [vmem:[%s528 + $0x171] sm:$0xff] %v5313
        %v5346 = vld [vmem:[#allocation2] sm:$0xff]
        %v5347 = vld [vmem:[#allocation2 + $0x8] sm:$0xff]
        %v5348 = vld [vmem:[#allocation2 + $0x10] sm:$0xff]
        %v5349 = vld [vmem:[%s705] sm:$0xff]
        %v5350 = vld [vmem:[%s705 + $0x8] sm:$0xff]
        %v5351 = vld [vmem:[%s705 + $0x10] sm:$0xff]
        %s5352 = scalar_lea.vmem [#allocation2], 96
        %v5353 = vld [vmem:[%s5352] sm:$0xff]
        %v5354 = vld [vmem:[%s5352 + $0x8] sm:$0xff]
        %v5355 = vld [vmem:[%s5352 + $0x10] sm:$0xff]
        %s5356 = scalar_lea.vmem [#allocation2], 144
        %v5357 = vld [vmem:[%s5356] sm:$0xff]
        %v5358 = vld [vmem:[%s5356 + $0x8] sm:$0xff]
        %v5359 = vld [vmem:[%s5356 + $0x10] sm:$0xff]
        %s5360 = scalar_lea.vmem [#allocation2], 192
        %v5361 = vld [vmem:[%s5360] sm:$0xff]
        %v5362 = vld [vmem:[%s5360 + $0x8] sm:$0xff]
        %v5363 = vld [vmem:[%s5360 + $0x10] sm:$0xff]
        %s5364 = scalar_lea.vmem [#allocation2], 240
        %v5365 = vld [vmem:[%s5364] sm:$0xff]
        %v5366 = vld [vmem:[%s5364 + $0x8] sm:$0xff]
        %v5367 = vld [vmem:[%s5364 + $0x10] sm:$0xff]
        %s5368 = scalar_lea.vmem [#allocation2], 288
        %v5369 = vld [vmem:[%s5368] sm:$0xff]
        %v5370 = vld [vmem:[%s5368 + $0x8] sm:$0xff]
        %v5371 = vld [vmem:[%s5368 + $0x10] sm:$0xff]
        %s5372 = scalar_lea.vmem [#allocation2], 336
        %v5373 = vld [vmem:[%s5372] sm:$0xff]
        %v5374 = vld [vmem:[%s5372 + $0x8] sm:$0xff]
        %v5375 = vld [vmem:[%s5372 + $0x10] sm:$0xff]
        %v5376 = vpack.c.bf16 %v5347, %v5346
        %v5377 = vpack.c.bf16 %v5349, %v5348
        %v5378 = vpack.c.bf16 %v5351, %v5350
        %v5379 = vpack.c.bf16 %v5354, %v5353
        %v5380 = vpack.c.bf16 %v5357, %v5355
        %v5381 = vpack.c.bf16 %v5359, %v5358
        %v5382 = vpack.c.bf16 %v5362, %v5361
        %v5383 = vpack.c.bf16 %v5365, %v5363
        %v5384 = vpack.c.bf16 %v5367, %v5366
        %v5385 = vpack.c.bf16 %v5370, %v5369
        %v5386 = vpack.c.bf16 %v5373, %v5371
        %v5387 = vpack.c.bf16 %v5375, %v5374
        %v5388 = vld [vmem:[%s528] sm:$0xff]
        %v5389 = vld [vmem:[%s528 + $0x8] sm:$0xff]
        %v5390 = vld [vmem:[%s528 + $0x10] sm:$0xff]
        %s5391 = scalar_lea.vmem [#allocation2], 72
        %v5392 = vld [vmem:[%s5391] sm:$0xff]
        %v5393 = vld [vmem:[%s5391 + $0x8] sm:$0xff]
        %v5394 = vld [vmem:[%s5391 + $0x10] sm:$0xff]
        %s5395 = scalar_lea.vmem [#allocation2], 120
        %v5396 = vld [vmem:[%s5395] sm:$0xff]
        %v5397 = vld [vmem:[%s5395 + $0x8] sm:$0xff]
        %v5398 = vld [vmem:[%s5395 + $0x10] sm:$0xff]
        %s5399 = scalar_lea.vmem [#allocation2], 168
        %v5400 = vld [vmem:[%s5399] sm:$0xff]
        %v5401 = vld [vmem:[%s5399 + $0x8] sm:$0xff]
        %v5402 = vld [vmem:[%s5399 + $0x10] sm:$0xff]
        %s5403 = scalar_lea.vmem [#allocation2], 216
        %v5404 = vld [vmem:[%s5403] sm:$0xff]
        %v5405 = vld [vmem:[%s5403 + $0x8] sm:$0xff]
        %v5406 = vld [vmem:[%s5403 + $0x10] sm:$0xff]
        %s5407 = scalar_lea.vmem [#allocation2], 264
        %v5408 = vld [vmem:[%s5407] sm:$0xff]
        %v5409 = vld [vmem:[%s5407 + $0x8] sm:$0xff]
        %v5410 = vld [vmem:[%s5407 + $0x10] sm:$0xff]
        %s5411 = scalar_lea.vmem [#allocation2], 312
        %v5412 = vld [vmem:[%s5411] sm:$0xff]
        %v5413 = vld [vmem:[%s5411 + $0x8] sm:$0xff]
        %v5414 = vld [vmem:[%s5411 + $0x10] sm:$0xff]
        %s5415 = scalar_lea.vmem [#allocation2], 360
        %v5416 = vld [vmem:[%s5415] sm:$0xff]
        %v5417 = vld [vmem:[%s5415 + $0x8] sm:$0xff]
        %v5418 = vld [vmem:[%s5415 + $0x10] sm:$0xff]
        %v5419 = vpack.c.bf16 %v5389, %v5388
        %v5420 = vpack.c.bf16 %v5392, %v5390
        %v5421 = vpack.c.bf16 %v5394, %v5393
        %v5422 = vpack.c.bf16 %v5397, %v5396
        %v5423 = vpack.c.bf16 %v5400, %v5398
        %v5424 = vpack.c.bf16 %v5402, %v5401
        %v5425 = vpack.c.bf16 %v5405, %v5404
        %v5426 = vpack.c.bf16 %v5408, %v5406
        %v5427 = vpack.c.bf16 %v5410, %v5409
        %v5428 = vpack.c.bf16 %v5413, %v5412
        %v5429 = vpack.c.bf16 %v5416, %v5414
        %v5430 = vpack.c.bf16 %v5418, %v5417
        %s5431 = scalar_lea.vmem [#allocation2], 384
        %v5432 = vld [vmem:[%s5431] sm:$0xff]
        %v5433 = vld [vmem:[%s5431 + $0x8] sm:$0xff]
        %v5434 = vld [vmem:[%s5431 + $0x10] sm:$0xff]
        %v5435 = vpack.c.bf16 %v5350, %v5349
        %v5436 = vpack.c.bf16 %v5353, %v5351
        %v5437 = vpack.c.bf16 %v5355, %v5354
        %v5438 = vpack.c.bf16 %v5358, %v5357
        %v5439 = vpack.c.bf16 %v5361, %v5359
        %v5440 = vpack.c.bf16 %v5363, %v5362
        %v5441 = vpack.c.bf16 %v5366, %v5365
        %v5442 = vpack.c.bf16 %v5369, %v5367
        %v5443 = vpack.c.bf16 %v5371, %v5370
        %v5444 = vpack.c.bf16 %v5374, %v5373
        %v5445 = vpack.c.bf16 %v5432, %v5375
        %v5446 = vpack.c.bf16 %v5434, %v5433
        %v5447 = vld [vmem:[#allocation11] sm:$0xff]
        %v5448 = vld [vmem:[#allocation11 + $0x8] sm:$0xf]
        %v5449 = vld [vmem:[#allocation11 + $0xc] sm:$0xff]
        %v5450 = vld [vmem:[#allocation11 + $0x14] sm:$0xf]
        %v5451 = vld [vmem:[#allocation11 + $0x18] sm:$0xff]
        %v5452 = vld [vmem:[#allocation11 + $0x20] sm:$0xf]
        %v5453 = vld [vmem:[#allocation11 + $0x24] sm:$0xff]
        %v5454 = vld [vmem:[#allocation11 + $0x2c] sm:$0xf]
        %v5455 = vld [vmem:[#allocation11 + $0x30] sm:$0xff]
        %v5456 = vld [vmem:[#allocation11 + $0x38] sm:$0xf]
        %v5457 = vld [vmem:[#allocation11 + $0x3c] sm:$0xff]
        %v5458 = vld [vmem:[#allocation11 + $0x44] sm:$0xf]
        %v5459 = vld [vmem:[#allocation11 + $0x48] sm:$0xff]
        %v5460 = vld [vmem:[#allocation11 + $0x50] sm:$0xf]
        %v5461 = vld [vmem:[#allocation11 + $0x54] sm:$0xff]
        %v5462 = vld [vmem:[#allocation11 + $0x5c] sm:$0xf]
        %v5463 = vld [vmem:[#allocation11 + $0x60] sm:$0xff]
        %v5464 = vld [vmem:[#allocation11 + $0x68] sm:$0xf]
        %v5465 = vld [vmem:[#allocation11 + $0x6c] sm:$0xff]
        %v5466 = vld [vmem:[#allocation11 + $0x74] sm:$0xf]
        %v5467 = vld [vmem:[#allocation11 + $0x78] sm:$0xff]
        %v5468 = vld [vmem:[#allocation11 + $0x80] sm:$0xf]
        %v5469 = vld [vmem:[#allocation11 + $0x84] sm:$0xff]
        %v5470 = vld [vmem:[#allocation11 + $0x8c] sm:$0xf]
        %v5471 = vld [vmem:[#allocation11 + $0x90] sm:$0xff]
        %v5472 = vld [vmem:[#allocation11 + $0x98] sm:$0xf]
        %v5473 = vld [vmem:[#allocation11 + $0x9c] sm:$0xff]
        %v5474 = vld [vmem:[#allocation11 + $0xa4] sm:$0xf]
        %v5475 = vld [vmem:[#allocation11 + $0xa8] sm:$0xff]
        %v5476 = vld [vmem:[#allocation11 + $0xb0] sm:$0xf]
        %v5477 = vld [vmem:[#allocation11 + $0xb4] sm:$0xff]
        %v5478 = vld [vmem:[#allocation11 + $0xbc] sm:$0xf]
        %v5479 = vld [vmem:[#allocation11 + $0xc0] sm:$0xff]
        %v5480 = vld [vmem:[#allocation11 + $0xc8] sm:$0xf]
        %v5481 = vld [vmem:[#allocation11 + $0xcc] sm:$0xff]
        %v5482 = vld [vmem:[#allocation11 + $0xd4] sm:$0xf]
        %v5483 = vld [vmem:[#allocation11 + $0xd8] sm:$0xff]
        %v5484 = vld [vmem:[#allocation11 + $0xe0] sm:$0xf]
        %v5485 = vld [vmem:[#allocation11 + $0xe4] sm:$0xff]
        %v5486 = vld [vmem:[#allocation11 + $0xec] sm:$0xf]
        %v5487 = vld [vmem:[#allocation11 + $0xf0] sm:$0xff]
        %v5488 = vld [vmem:[#allocation11 + $0xf8] sm:$0xf]
        %v5489 = vld [vmem:[#allocation11 + $0xfc] sm:$0xff]
        %v5490 = vld [vmem:[#allocation11 + $0x104] sm:$0xf]
        %v5491 = vld [vmem:[#allocation11 + $0x108] sm:$0xff]
        %v5492 = vld [vmem:[#allocation11 + $0x110] sm:$0xf]
        %v5493 = vld [vmem:[#allocation11 + $0x114] sm:$0xff]
        %v5494 = vld [vmem:[#allocation11 + $0x11c] sm:$0xf]
        %v5495 = vld [vmem:[#allocation11 + $0x120] sm:$0xff]
        %v5496 = vld [vmem:[#allocation11 + $0x128] sm:$0xf]
        %v5497 = vld [vmem:[#allocation11 + $0x12c] sm:$0xff]
        %v5498 = vld [vmem:[#allocation11 + $0x134] sm:$0xf]
        %v5499 = vld [vmem:[#allocation11 + $0x138] sm:$0xff]
        %v5500 = vld [vmem:[#allocation11 + $0x140] sm:$0xf]
        %v5501 = vld [vmem:[#allocation11 + $0x144] sm:$0xff]
        %v5502 = vld [vmem:[#allocation11 + $0x14c] sm:$0xf]
        %v5503 = vld [vmem:[#allocation11 + $0x150] sm:$0xff]
        %v5504 = vld [vmem:[#allocation11 + $0x158] sm:$0xf]
        %v5505 = vld [vmem:[#allocation11 + $0x15c] sm:$0xff]
        %v5506 = vld [vmem:[#allocation11 + $0x164] sm:$0xf]
        %v5507 = vld [vmem:[#allocation11 + $0x168] sm:$0xff]
        %v5508 = vld [vmem:[#allocation11 + $0x170] sm:$0xf]
        %v5509 = vld [vmem:[#allocation11 + $0x174] sm:$0xff]
        %v5510 = vld [vmem:[#allocation11 + $0x17c] sm:$0xf]
        %v5511 = vld [vmem:[#allocation11 + $0x180] sm:$0xff]
        %v5512 = vld [vmem:[#allocation11 + $0x188] sm:$0xf]
        %v5513 = vld [vmem:[#allocation11 + $0x18c] sm:$0xff]
        %v5514 = vld [vmem:[#allocation11 + $0x194] sm:$0xf]
        %v5515 = vld [vmem:[#allocation11 + $0x198] sm:$0xff]
        %v5516 = vld [vmem:[#allocation11 + $0x1a0] sm:$0xf]
        %v5517 = vld [vmem:[#allocation11 + $0x1a4] sm:$0xff]
        %v5518 = vld [vmem:[#allocation11 + $0x1ac] sm:$0xf]
        %v5519 = vld [vmem:[#allocation11 + $0x1b0] sm:$0xff]
        %v5520 = vld [vmem:[#allocation11 + $0x1b8] sm:$0xf]
        %v5521 = vld [vmem:[#allocation11 + $0x1bc] sm:$0xff]
        %v5522 = vld [vmem:[#allocation11 + $0x1c4] sm:$0xf]
        %v5523 = vld [vmem:[#allocation11 + $0x1c8] sm:$0xff]
        %v5524 = vld [vmem:[#allocation11 + $0x1d0] sm:$0xf]
        %v5525 = vld [vmem:[#allocation11 + $0x1d4] sm:$0xff]
        %v5526 = vld [vmem:[#allocation11 + $0x1dc] sm:$0xf]
        %v5527 = vld [vmem:[#allocation11 + $0x1e0] sm:$0xff]
        %v5528 = vld [vmem:[#allocation11 + $0x1e8] sm:$0xf]
        %v5529 = vld [vmem:[#allocation11 + $0x1ec] sm:$0xff]
        %v5530 = vld [vmem:[#allocation11 + $0x1f4] sm:$0xf]
        %v5531 = vld [vmem:[#allocation11 + $0x1f8] sm:$0xff]
        %v5532 = vld [vmem:[#allocation11 + $0x200] sm:$0xf]
        %v5533 = vld [vmem:[#allocation11 + $0x204] sm:$0xff]
        %v5534 = vld [vmem:[#allocation11 + $0x20c] sm:$0xf]
        %v5535 = vld [vmem:[#allocation11 + $0x210] sm:$0xff]
        %v5536 = vld [vmem:[#allocation11 + $0x218] sm:$0xf]
        %v5537 = vld [vmem:[#allocation11 + $0x21c] sm:$0xff]
        %v5538 = vld [vmem:[#allocation11 + $0x224] sm:$0xf]
        %v5539 = vld [vmem:[#allocation11 + $0x228] sm:$0xff]
        %v5540 = vld [vmem:[#allocation11 + $0x230] sm:$0xf]
        %v5541 = vld [vmem:[#allocation11 + $0x234] sm:$0xff]
        %v5542 = vld [vmem:[#allocation11 + $0x23c] sm:$0xf]
        %v5639 = vunpack.c.l.b16 %v5447
        %v5640 = vunpack.c.h.b16 %v5447
        %v5641 = vunpack.c.l.b16 %v5448
        %v5642 = vunpack.c.l.b16 %v5449
        %v5643 = vunpack.c.h.b16 %v5449
        %v5644 = vunpack.c.l.b16 %v5450
        %v5645 = vunpack.c.l.b16 %v5451
        %v5646 = vunpack.c.h.b16 %v5451
        %v5647 = vunpack.c.l.b16 %v5452
        %v5648 = vunpack.c.l.b16 %v5453
        %v5649 = vunpack.c.h.b16 %v5453
        %v5650 = vunpack.c.l.b16 %v5454
        %v5651 = vunpack.c.l.b16 %v5455
        %v5652 = vunpack.c.h.b16 %v5455
        %v5653 = vunpack.c.l.b16 %v5456
        %v5654 = vunpack.c.l.b16 %v5457
        %v5655 = vunpack.c.h.b16 %v5457
        %v5656 = vunpack.c.l.b16 %v5458
        %v5657 = vunpack.c.l.b16 %v5459
        %v5658 = vunpack.c.h.b16 %v5459
        %v5659 = vunpack.c.l.b16 %v5460
        %v5660 = vunpack.c.l.b16 %v5461
        %v5661 = vunpack.c.h.b16 %v5461
        %v5662 = vunpack.c.l.b16 %v5462
        %v5663 = vunpack.c.l.b16 %v5463
        %v5664 = vunpack.c.h.b16 %v5463
        %v5665 = vunpack.c.l.b16 %v5464
        %v5666 = vunpack.c.l.b16 %v5465
        %v5667 = vunpack.c.h.b16 %v5465
        %v5668 = vunpack.c.l.b16 %v5466
        %v5669 = vunpack.c.l.b16 %v5467
        %v5670 = vunpack.c.h.b16 %v5467
        %v5671 = vunpack.c.l.b16 %v5468
        %v5672 = vunpack.c.l.b16 %v5469
        %v5673 = vunpack.c.h.b16 %v5469
        %v5674 = vunpack.c.l.b16 %v5470
        %v5675 = vunpack.c.l.b16 %v5471
        %v5676 = vunpack.c.h.b16 %v5471
        %v5677 = vunpack.c.l.b16 %v5472
        %v5678 = vunpack.c.l.b16 %v5473
        %v5679 = vunpack.c.h.b16 %v5473
        %v5680 = vunpack.c.l.b16 %v5474
        %v5681 = vunpack.c.l.b16 %v5475
        %v5682 = vunpack.c.h.b16 %v5475
        %v5683 = vunpack.c.l.b16 %v5476
        %v5684 = vunpack.c.l.b16 %v5477
        %v5685 = vunpack.c.h.b16 %v5477
        %v5686 = vunpack.c.l.b16 %v5478
        %v5687 = vunpack.c.l.b16 %v5479
        %v5688 = vunpack.c.h.b16 %v5479
        %v5689 = vunpack.c.l.b16 %v5480
        %v5690 = vunpack.c.l.b16 %v5481
        %v5691 = vunpack.c.h.b16 %v5481
        %v5692 = vunpack.c.l.b16 %v5482
        %v5693 = vunpack.c.l.b16 %v5483
        %v5694 = vunpack.c.h.b16 %v5483
        %v5695 = vunpack.c.l.b16 %v5484
        %v5696 = vunpack.c.l.b16 %v5485
        %v5697 = vunpack.c.h.b16 %v5485
        %v5698 = vunpack.c.l.b16 %v5486
        %v5699 = vunpack.c.l.b16 %v5487
        %v5700 = vunpack.c.h.b16 %v5487
        %v5701 = vunpack.c.l.b16 %v5488
        %v5702 = vunpack.c.l.b16 %v5489
        %v5703 = vunpack.c.h.b16 %v5489
        %v5704 = vunpack.c.l.b16 %v5490
        %v5705 = vunpack.c.l.b16 %v5491
        %v5706 = vunpack.c.h.b16 %v5491
        %v5707 = vunpack.c.l.b16 %v5492
        %v5708 = vunpack.c.l.b16 %v5493
        %v5709 = vunpack.c.h.b16 %v5493
        %v5710 = vunpack.c.l.b16 %v5494
        %v5711 = vunpack.c.l.b16 %v5495
        %v5712 = vunpack.c.h.b16 %v5495
        %v5713 = vunpack.c.l.b16 %v5496
        %v5714 = vunpack.c.l.b16 %v5497
        %v5715 = vunpack.c.h.b16 %v5497
        %v5716 = vunpack.c.l.b16 %v5498
        %v5717 = vunpack.c.l.b16 %v5499
        %v5718 = vunpack.c.h.b16 %v5499
        %v5719 = vunpack.c.l.b16 %v5500
        %v5720 = vunpack.c.l.b16 %v5501
        %v5721 = vunpack.c.h.b16 %v5501
        %v5722 = vunpack.c.l.b16 %v5502
        %v5723 = vunpack.c.l.b16 %v5503
        %v5724 = vunpack.c.h.b16 %v5503
        %v5725 = vunpack.c.l.b16 %v5504
        %v5726 = vunpack.c.l.b16 %v5505
        %v5727 = vunpack.c.h.b16 %v5505
        %v5728 = vunpack.c.l.b16 %v5506
        %v5729 = vunpack.c.l.b16 %v5507
        %v5730 = vunpack.c.h.b16 %v5507
        %v5731 = vunpack.c.l.b16 %v5508
        %v5732 = vunpack.c.l.b16 %v5509
        %v5733 = vunpack.c.h.b16 %v5509
        %v5734 = vunpack.c.l.b16 %v5510
        %v5735 = vunpack.c.l.b16 %v5511
        %v5736 = vunpack.c.h.b16 %v5511
        %v5737 = vunpack.c.l.b16 %v5512
        %v5738 = vunpack.c.l.b16 %v5513
        %v5739 = vunpack.c.h.b16 %v5513
        %v5740 = vunpack.c.l.b16 %v5514
        %v5741 = vunpack.c.l.b16 %v5515
        %v5742 = vunpack.c.h.b16 %v5515
        %v5743 = vunpack.c.l.b16 %v5516
        %v5744 = vunpack.c.l.b16 %v5517
        %v5745 = vunpack.c.h.b16 %v5517
        %v5746 = vunpack.c.l.b16 %v5518
        %v5747 = vunpack.c.l.b16 %v5519
        %v5748 = vunpack.c.h.b16 %v5519
        %v5749 = vunpack.c.l.b16 %v5520
        %v5750 = vunpack.c.l.b16 %v5521
        %v5751 = vunpack.c.h.b16 %v5521
        %v5752 = vunpack.c.l.b16 %v5522
        %v5753 = vunpack.c.l.b16 %v5523
        %v5754 = vunpack.c.h.b16 %v5523
        %v5755 = vunpack.c.l.b16 %v5524
        %v5756 = vunpack.c.l.b16 %v5525
        %v5757 = vunpack.c.h.b16 %v5525
        %v5758 = vunpack.c.l.b16 %v5526
        %v5759 = vunpack.c.l.b16 %v5527
        %v5760 = vunpack.c.h.b16 %v5527
        %v5761 = vunpack.c.l.b16 %v5528
        %v5762 = vunpack.c.l.b16 %v5529
        %v5763 = vunpack.c.h.b16 %v5529
        %v5764 = vunpack.c.l.b16 %v5530
        %v5765 = vunpack.c.l.b16 %v5531
        %v5766 = vunpack.c.h.b16 %v5531
        %v5767 = vunpack.c.l.b16 %v5532
        %v5768 = vunpack.c.l.b16 %v5533
        %v5769 = vunpack.c.h.b16 %v5533
        %v5770 = vunpack.c.l.b16 %v5534
        %v5771 = vunpack.c.l.b16 %v5535
        %v5772 = vunpack.c.h.b16 %v5535
        %v5773 = vunpack.c.l.b16 %v5536
        %v5774 = vunpack.c.l.b16 %v5537
        %v5775 = vunpack.c.h.b16 %v5537
        %v5776 = vunpack.c.l.b16 %v5538
        %v5777 = vunpack.c.l.b16 %v5539
        %v5778 = vunpack.c.h.b16 %v5539
        %v5779 = vunpack.c.l.b16 %v5540
        %v5780 = vunpack.c.l.b16 %v5541
        %v5781 = vunpack.c.h.b16 %v5541
        %v5782 = vunpack.c.l.b16 %v5542
        %v5783 = vpack.c.b16 %v5642, %v5639
        %v5784 = vpack.c.b16 %v5643, %v5640
        %v5785 = vpack.c.b16 %v5644, %v5641
        %v5786 = vpack.c.b16 %v5648, %v5645
        %v5787 = vpack.c.b16 %v5649, %v5646
        %v5788 = vpack.c.b16 %v5650, %v5647
        %v5789 = vpack.c.b16 %v5654, %v5651
        %v5790 = vpack.c.b16 %v5655, %v5652
        %v5791 = vpack.c.b16 %v5656, %v5653
        %v5792 = vpack.c.b16 %v5660, %v5657
        %v5793 = vpack.c.b16 %v5661, %v5658
        %v5794 = vpack.c.b16 %v5662, %v5659
        %v5795 = vpack.c.b16 %v5666, %v5663
        %v5796 = vpack.c.b16 %v5667, %v5664
        %v5797 = vpack.c.b16 %v5668, %v5665
        %v5798 = vpack.c.b16 %v5672, %v5669
        %v5799 = vpack.c.b16 %v5673, %v5670
        %v5800 = vpack.c.b16 %v5674, %v5671
        %v5801 = vpack.c.b16 %v5678, %v5675
        %v5802 = vpack.c.b16 %v5679, %v5676
        %v5803 = vpack.c.b16 %v5680, %v5677
        %v5804 = vpack.c.b16 %v5684, %v5681
        %v5805 = vpack.c.b16 %v5685, %v5682
        %v5806 = vpack.c.b16 %v5686, %v5683
        %v5807 = vpack.c.b16 %v5690, %v5687
        %v5808 = vpack.c.b16 %v5691, %v5688
        %v5809 = vpack.c.b16 %v5692, %v5689
        %v5810 = vpack.c.b16 %v5696, %v5693
        %v5811 = vpack.c.b16 %v5697, %v5694
        %v5812 = vpack.c.b16 %v5698, %v5695
        %v5813 = vpack.c.b16 %v5702, %v5699
        %v5814 = vpack.c.b16 %v5703, %v5700
        %v5815 = vpack.c.b16 %v5704, %v5701
        %v5816 = vpack.c.b16 %v5708, %v5705
        %v5817 = vpack.c.b16 %v5709, %v5706
        %v5818 = vpack.c.b16 %v5710, %v5707
        %v5819 = vpack.c.b16 %v5714, %v5711
        %v5820 = vpack.c.b16 %v5715, %v5712
        %v5821 = vpack.c.b16 %v5716, %v5713
        %v5822 = vpack.c.b16 %v5720, %v5717
        %v5823 = vpack.c.b16 %v5721, %v5718
        %v5824 = vpack.c.b16 %v5722, %v5719
        %v5825 = vpack.c.b16 %v5726, %v5723
        %v5826 = vpack.c.b16 %v5727, %v5724
        %v5827 = vpack.c.b16 %v5728, %v5725
        %v5828 = vpack.c.b16 %v5732, %v5729
        %v5829 = vpack.c.b16 %v5733, %v5730
        %v5830 = vpack.c.b16 %v5734, %v5731
        %v5831 = vpack.c.b16 %v5738, %v5735
        %v5832 = vpack.c.b16 %v5739, %v5736
        %v5833 = vpack.c.b16 %v5740, %v5737
        %v5834 = vpack.c.b16 %v5744, %v5741
        %v5835 = vpack.c.b16 %v5745, %v5742
        %v5836 = vpack.c.b16 %v5746, %v5743
        %v5837 = vpack.c.b16 %v5750, %v5747
        %v5838 = vpack.c.b16 %v5751, %v5748
        %v5839 = vpack.c.b16 %v5752, %v5749
        %v5840 = vpack.c.b16 %v5756, %v5753
        %v5841 = vpack.c.b16 %v5757, %v5754
        %v5842 = vpack.c.b16 %v5758, %v5755
        %v5843 = vpack.c.b16 %v5762, %v5759
        %v5844 = vpack.c.b16 %v5763, %v5760
        %v5845 = vpack.c.b16 %v5764, %v5761
        %v5846 = vpack.c.b16 %v5768, %v5765
        %v5847 = vpack.c.b16 %v5769, %v5766
        %v5848 = vpack.c.b16 %v5770, %v5767
        %v5849 = vpack.c.b16 %v5774, %v5771
        %v5850 = vpack.c.b16 %v5775, %v5772
        %v5851 = vpack.c.b16 %v5776, %v5773
        %v5852 = vpack.c.b16 %v5780, %v5777
        %v5853 = vpack.c.b16 %v5781, %v5778
        %v5854 = vpack.c.b16 %v5782, %v5779
        %5927 = vmatprep.subr.bf16.mxu0 %v5805
        %5928 = vmatpush1.bf16.msra.mxu0 %v5804
        %5929 = vmatprep.subr.bf16.mxu0 %v5802
        %5930 = vmatpush1.bf16.msra.mxu0 %v5801
        %5931 = vmatprep.subr.bf16.mxu0 %v5799
        %5932 = vmatpush1.bf16.msra.mxu0 %v5798
        %5933 = vmatprep.subr.bf16.mxu0 %v5796
        %5934 = vmatpush1.bf16.msra.mxu0 %v5795
        %5935 = vmatprep.subr.bf16.mxu0 %v5793
        %5936 = vmatpush1.bf16.msra.mxu0 %v5792
        %5937 = vmatprep.subr.bf16.mxu0 %v5790
        %5938 = vmatpush1.bf16.msra.mxu0 %v5789
        %5939 = vmatprep.subr.bf16.mxu0 %v5787
        %5940 = vmatpush1.bf16.msra.mxu0 %v5786
        %5941 = vmatprep.subr.bf16.mxu0 %v5784
        %5942 = vmatpush1.bf16.msra.mxu0 %v5783
        %5943 = vmatprep.subr.bf16.mxu0 %v5829
        %5944 = vmatpush2.bf16.msra.mxu0 %v5828
        %5945 = vmatprep.subr.bf16.mxu0 %v5826
        %5946 = vmatpush2.bf16.msra.mxu0 %v5825
        %5947 = vmatprep.subr.bf16.mxu0 %v5823
        %5948 = vmatpush2.bf16.msra.mxu0 %v5822
        %5949 = vmatprep.subr.bf16.mxu0 %v5820
        %5950 = vmatpush2.bf16.msra.mxu0 %v5819
        %5951 = vmatprep.subr.bf16.mxu0 %v5817
        %5952 = vmatpush2.bf16.msra.mxu0 %v5816
        %5953 = vmatprep.subr.bf16.mxu0 %v5814
        %5954 = vmatpush2.bf16.msra.mxu0 %v5813
        %5955 = vmatprep.subr.bf16.mxu0 %v5811
        %5956 = vmatpush2.bf16.msra.mxu0 %v5810
        %5957 = vmatprep.subr.bf16.mxu0 %v5808
        %5958 = vmatpush2.bf16.msra.mxu0 %v5807
        %5959 = vmatprep.mubr.bf16.mxu0 %v5419
        %5960 = vmatmul.mubr.bf16.gmra.mxu0 %v5376
        %v5961 = vpop.f32.mrf.mxu0
        %v5962 = vadd.f32 0.0, %v5961
        %v5963 = vpop.f32.mrf.mxu0
        %v5964 = vadd.f32 0.0, %v5963
        %v5965 = vpop.f32.mrf.mxu0
        %v5966 = vadd.f32 0.0, %v5965
        %v5967 = vpop.f32.mrf.mxu0
        %v5968 = vadd.f32 0.0, %v5967
        %5969 = vmatprep.mubr.bf16.mxu0 %v5420
        %5970 = vmatmul.mubr.bf16.gmra.mxu0 %v5377
        %v5971 = vpop.f32.mrf.mxu0
        %v5972 = vpop.f32.mrf.mxu0
        %v5973 = vadd.f32 0.0, %v5972
        %v5974 = vpop.f32.mrf.mxu0
        %v5975 = vadd.f32 0.0, %v5974
        %v5976 = vpop.f32.mrf.mxu0
        %v5977 = vadd.f32 0.0, %v5976
        %5978 = vmatprep.mubr.bf16.mxu0 %v5421
        %5979 = vmatmul.mubr.bf16.gmra.mxu0 %v5378
        %v5980 = vpop.f32.mrf.mxu0
        %v5981 = vadd.f32 0.0, %v5980
        %v5982 = vpop.f32.mrf.mxu0
        %v5983 = vadd.f32 0.0, %v5982
        %v5984 = vpop.f32.mrf.mxu0
        %v5985 = vpop.f32.mrf.mxu0
        %v5986 = vadd.f32 0.0, %v5985
        %5987 = vmatprep.mubr.bf16.mxu0 %v5422
        %5988 = vmatmul.mubr.bf16.gmra.mxu0 %v5379
        %v5989 = vpop.f32.mrf.mxu0
        %v5990 = vadd.f32 0.0, %v5989
        %v5991 = vpop.f32.mrf.mxu0
        %v5992 = vadd.f32 0.0, %v5991
        %v5993 = vpop.f32.mrf.mxu0
        %v5994 = vadd.f32 0.0, %v5993
        %v5995 = vpop.f32.mrf.mxu0
        %v5996 = vadd.f32 0.0, %v5995
        %5997 = vmatprep.mubr.bf16.mxu0 %v5423
        %5998 = vmatmul.mubr.bf16.gmra.mxu0 %v5380
        %v5999 = vpop.f32.mrf.mxu0
        %v6000 = vpop.f32.mrf.mxu0
        %v6001 = vadd.f32 0.0, %v6000
        %v6002 = vpop.f32.mrf.mxu0
        %v6003 = vadd.f32 0.0, %v6002
        %v6004 = vpop.f32.mrf.mxu0
        %v6005 = vadd.f32 0.0, %v6004
        %6006 = vmatprep.mubr.bf16.mxu0 %v5424
        %6007 = vmatmul.mubr.bf16.gmra.mxu0 %v5381
        %v6008 = vpop.f32.mrf.mxu0
        %v6009 = vadd.f32 0.0, %v6008
        %v6010 = vpop.f32.mrf.mxu0
        %v6011 = vadd.f32 0.0, %v6010
        %v6012 = vpop.f32.mrf.mxu0
        %v6013 = vpop.f32.mrf.mxu0
        %v6014 = vadd.f32 0.0, %v6013
        %6015 = vmatprep.mubr.bf16.mxu0 %v5425
        %6016 = vmatmul.mubr.bf16.gmra.mxu0 %v5382
        %v6017 = vpop.f32.mrf.mxu0
        %v6018 = vadd.f32 0.0, %v6017
        %v6019 = vpop.f32.mrf.mxu0
        %v6020 = vadd.f32 0.0, %v6019
        %v6021 = vpop.f32.mrf.mxu0
        %v6022 = vadd.f32 0.0, %v6021
        %v6023 = vpop.f32.mrf.mxu0
        %v6024 = vadd.f32 0.0, %v6023
        %6025 = vmatprep.mubr.bf16.mxu0 %v5426
        %6026 = vmatmul.mubr.bf16.gmra.mxu0 %v5383
        %v6027 = vpop.f32.mrf.mxu0
        %v6028 = vpop.f32.mrf.mxu0
        %v6029 = vadd.f32 0.0, %v6028
        %v6030 = vpop.f32.mrf.mxu0
        %v6031 = vadd.f32 0.0, %v6030
        %v6032 = vpop.f32.mrf.mxu0
        %v6033 = vadd.f32 0.0, %v6032
        %6034 = vmatprep.mubr.bf16.mxu0 %v5427
        %6035 = vmatmul.mubr.bf16.gmra.mxu0 %v5384
        %v6036 = vpop.f32.mrf.mxu0
        %v6037 = vadd.f32 0.0, %v6036
        %v6038 = vpop.f32.mrf.mxu0
        %v6039 = vadd.f32 0.0, %v6038
        %v6040 = vpop.f32.mrf.mxu0
        %v6041 = vpop.f32.mrf.mxu0
        %v6042 = vadd.f32 0.0, %v6041
        %6043 = vmatprep.mubr.bf16.mxu0 %v5428
        %6044 = vmatmul.mubr.bf16.gmra.mxu0 %v5385
        %v6045 = vpop.f32.mrf.mxu0
        %v6046 = vadd.f32 0.0, %v6045
        %v6047 = vpop.f32.mrf.mxu0
        %v6048 = vadd.f32 0.0, %v6047
        %v6049 = vpop.f32.mrf.mxu0
        %v6050 = vadd.f32 0.0, %v6049
        %v6051 = vpop.f32.mrf.mxu0
        %v6052 = vadd.f32 0.0, %v6051
        %6053 = vmatprep.mubr.bf16.mxu0 %v5429
        %6054 = vmatmul.mubr.bf16.gmra.mxu0 %v5386
        %v6055 = vpop.f32.mrf.mxu0
        %v6056 = vpop.f32.mrf.mxu0
        %v6057 = vadd.f32 0.0, %v6056
        %v6058 = vpop.f32.mrf.mxu0
        %v6059 = vadd.f32 0.0, %v6058
        %v6060 = vpop.f32.mrf.mxu0
        %v6061 = vadd.f32 0.0, %v6060
        %6062 = vmatprep.mubr.bf16.mxu0 %v5430
        %6063 = vmatmul.mubr.bf16.gmra.mxu0 %v5387
        %v6064 = vpop.f32.mrf.mxu0
        %v6065 = vadd.f32 0.0, %v6064
        %v6066 = vpop.f32.mrf.mxu0
        %v6067 = vadd.f32 0.0, %v6066
        %v6068 = vpop.f32.mrf.mxu0
        %v6069 = vpop.f32.mrf.mxu0
        %v6070 = vadd.f32 0.0, %v6069
        %6071 = vdwg.mxu0
        %6072 = vmatprep.subr.bf16.mxu0 %v5853
        %6073 = vmatpush1.bf16.msra.mxu0 %v5852
        %6074 = vmatprep.subr.bf16.mxu0 %v5850
        %6075 = vmatpush1.bf16.msra.mxu0 %v5849
        %6076 = vmatprep.subr.bf16.mxu0 %v5847
        %6077 = vmatpush1.bf16.msra.mxu0 %v5846
        %6078 = vmatprep.subr.bf16.mxu0 %v5844
        %6079 = vmatpush1.bf16.msra.mxu0 %v5843
        %6080 = vmatprep.subr.bf16.mxu0 %v5841
        %6081 = vmatpush1.bf16.msra.mxu0 %v5840
        %6082 = vmatprep.subr.bf16.mxu0 %v5838
        %6083 = vmatpush1.bf16.msra.mxu0 %v5837
        %6084 = vmatprep.subr.bf16.mxu0 %v5835
        %6085 = vmatpush1.bf16.msra.mxu0 %v5834
        %6086 = vmatprep.subr.bf16.mxu0 %v5832
        %6087 = vmatpush1.bf16.msra.mxu0 %v5831
        %6088 = vmatprep.subr.bf16.mxu0 0
        %6089 = vmatpush2.bf16.msra.mxu0 0
        %6090 = vmatprep.subr.bf16.mxu0 0
        %6091 = vmatpush2.bf16.msra.mxu0 0
        %6092 = vmatprep.subr.bf16.mxu0 0
        %6093 = vmatpush2.bf16.msra.mxu0 0
        %6094 = vmatprep.subr.bf16.mxu0 0
        %6095 = vmatpush2.bf16.msra.mxu0 0
        %6096 = vmatprep.subr.bf16.mxu0 0
        %6097 = vmatpush2.bf16.msra.mxu0 0
        %6098 = vmatprep.subr.bf16.mxu0 0
        %6099 = vmatpush2.bf16.msra.mxu0 0
        %6100 = vmatprep.subr.bf16.mxu0 0
        %6101 = vmatpush2.bf16.msra.mxu0 0
        %6102 = vmatprep.subr.bf16.mxu0 0
        %6103 = vmatpush2.bf16.msra.mxu0 0
        %6104 = vmatprep.mubr.bf16.mxu0 0
        %6105 = vmatmul.mubr.bf16.gmra.mxu0 %v5435
        %v6106 = vpop.f32.mrf.mxu0
        %v6107 = vadd.f32 %v5962, %v6106
        %v6108 = vpop.f32.mrf.mxu0
        %v6109 = vadd.f32 %v5964, %v6108
        %v6110 = vpop.f32.mrf.mxu0
        %v6111 = vadd.f32 %v5966, %v6110
        %v6112 = vpop.f32.mrf.mxu0
        %v6113 = vadd.f32 %v5968, %v6112
        %6114 = vmatprep.mubr.bf16.mxu0 0
        %6115 = vmatmul.mubr.bf16.gmra.mxu0 %v5436
        %v6116 = vpop.f32.mrf.mxu0
        %v6117 = vpop.f32.mrf.mxu0
        %v6118 = vadd.f32 %v5973, %v6117
        %v6119 = vpop.f32.mrf.mxu0
        %v6120 = vadd.f32 %v5975, %v6119
        %v6121 = vpop.f32.mrf.mxu0
        %v6122 = vadd.f32 %v5977, %v6121
        %6123 = vmatprep.mubr.bf16.mxu0 0
        %6124 = vmatmul.mubr.bf16.gmra.mxu0 %v5437
        %v6125 = vpop.f32.mrf.mxu0
        %v6126 = vadd.f32 %v5981, %v6125
        %v6127 = vpop.f32.mrf.mxu0
        %v6128 = vadd.f32 %v5983, %v6127
        %v6129 = vpop.f32.mrf.mxu0
        %v6130 = vpop.f32.mrf.mxu0
        %v6131 = vadd.f32 %v5986, %v6130
        %6132 = vmatprep.mubr.bf16.mxu0 0
        %6133 = vmatmul.mubr.bf16.gmra.mxu0 %v5438
        %v6134 = vpop.f32.mrf.mxu0
        %v6135 = vadd.f32 %v5990, %v6134
        %v6136 = vpop.f32.mrf.mxu0
        %v6137 = vadd.f32 %v5992, %v6136
        %v6138 = vpop.f32.mrf.mxu0
        %v6139 = vadd.f32 %v5994, %v6138
        %v6140 = vpop.f32.mrf.mxu0
        %v6141 = vadd.f32 %v5996, %v6140
        %6142 = vmatprep.mubr.bf16.mxu0 0
        %6143 = vmatmul.mubr.bf16.gmra.mxu0 %v5439
        %v6144 = vpop.f32.mrf.mxu0
        %v6145 = vpop.f32.mrf.mxu0
        %v6146 = vadd.f32 %v6001, %v6145
        %v6147 = vpop.f32.mrf.mxu0
        %v6148 = vadd.f32 %v6003, %v6147
        %v6149 = vpop.f32.mrf.mxu0
        %v6150 = vadd.f32 %v6005, %v6149
        %6151 = vmatprep.mubr.bf16.mxu0 0
        %6152 = vmatmul.mubr.bf16.gmra.mxu0 %v5440
        %v6153 = vpop.f32.mrf.mxu0
        %v6154 = vadd.f32 %v6009, %v6153
        %v6155 = vpop.f32.mrf.mxu0
        %v6156 = vadd.f32 %v6011, %v6155
        %v6157 = vpop.f32.mrf.mxu0
        %v6158 = vpop.f32.mrf.mxu0
        %v6159 = vadd.f32 %v6014, %v6158
        %6160 = vmatprep.mubr.bf16.mxu0 0
        %6161 = vmatmul.mubr.bf16.gmra.mxu0 %v5441
        %v6162 = vpop.f32.mrf.mxu0
        %v6163 = vadd.f32 %v6018, %v6162
        %v6164 = vpop.f32.mrf.mxu0
        %v6165 = vadd.f32 %v6020, %v6164
        %v6166 = vpop.f32.mrf.mxu0
        %v6167 = vadd.f32 %v6022, %v6166
        %v6168 = vpop.f32.mrf.mxu0
        %v6169 = vadd.f32 %v6024, %v6168
        %6170 = vmatprep.mubr.bf16.mxu0 0
        %6171 = vmatmul.mubr.bf16.gmra.mxu0 %v5442
        %v6172 = vpop.f32.mrf.mxu0
        %v6173 = vpop.f32.mrf.mxu0
        %v6174 = vadd.f32 %v6029, %v6173
        %v6175 = vpop.f32.mrf.mxu0
        %v6176 = vadd.f32 %v6031, %v6175
        %v6177 = vpop.f32.mrf.mxu0
        %v6178 = vadd.f32 %v6033, %v6177
        %6179 = vmatprep.mubr.bf16.mxu0 0
        %6180 = vmatmul.mubr.bf16.gmra.mxu0 %v5443
        %v6181 = vpop.f32.mrf.mxu0
        %v6182 = vadd.f32 %v6037, %v6181
        %v6183 = vpop.f32.mrf.mxu0
        %v6184 = vadd.f32 %v6039, %v6183
        %v6185 = vpop.f32.mrf.mxu0
        %v6186 = vpop.f32.mrf.mxu0
        %v6187 = vadd.f32 %v6042, %v6186
        %6188 = vmatprep.mubr.bf16.mxu0 0
        %6189 = vmatmul.mubr.bf16.gmra.mxu0 %v5444
        %v6190 = vpop.f32.mrf.mxu0
        %v6191 = vadd.f32 %v6046, %v6190
        %v6192 = vpop.f32.mrf.mxu0
        %v6193 = vadd.f32 %v6048, %v6192
        %v6194 = vpop.f32.mrf.mxu0
        %v6195 = vadd.f32 %v6050, %v6194
        %v6196 = vpop.f32.mrf.mxu0
        %v6197 = vadd.f32 %v6052, %v6196
        %6198 = vmatprep.mubr.bf16.mxu0 0
        %6199 = vmatmul.mubr.bf16.gmra.mxu0 %v5445
        %v6200 = vpop.f32.mrf.mxu0
        %v6201 = vpop.f32.mrf.mxu0
        %v6202 = vadd.f32 %v6057, %v6201
        %v6203 = vpop.f32.mrf.mxu0
        %v6204 = vadd.f32 %v6059, %v6203
        %v6205 = vpop.f32.mrf.mxu0
        %v6206 = vadd.f32 %v6061, %v6205
        %6207 = vmatprep.mubr.bf16.mxu0 0
        %6208 = vmatmul.mubr.bf16.gmra.mxu0 %v5446
        %v6209 = vpop.f32.mrf.mxu0
        %v6210 = vadd.f32 %v6065, %v6209
        %v6211 = vpop.f32.mrf.mxu0
        %v6212 = vadd.f32 %v6067, %v6211
        %v6213 = vpop.f32.mrf.mxu0
        %v6214 = vpop.f32.mrf.mxu0
        %v6215 = vadd.f32 %v6070, %v6214
        %6216 = vdwg.mxu0
        %6217 = vmatprep.subr.bf16.mxu0 0
        %6218 = vmatpush1.bf16.msra.mxu0 %v5806
        %6219 = vmatprep.subr.bf16.mxu0 0
        %6220 = vmatpush1.bf16.msra.mxu0 %v5803
        %6221 = vmatprep.subr.bf16.mxu0 0
        %6222 = vmatpush1.bf16.msra.mxu0 %v5800
        %6223 = vmatprep.subr.bf16.mxu0 0
        %6224 = vmatpush1.bf16.msra.mxu0 %v5797
        %6225 = vmatprep.subr.bf16.mxu0 0
        %6226 = vmatpush1.bf16.msra.mxu0 %v5794
        %6227 = vmatprep.subr.bf16.mxu0 0
        %6228 = vmatpush1.bf16.msra.mxu0 %v5791
        %6229 = vmatprep.subr.bf16.mxu0 0
        %6230 = vmatpush1.bf16.msra.mxu0 %v5788
        %6231 = vmatprep.subr.bf16.mxu0 0
        %6232 = vmatpush1.bf16.msra.mxu0 %v5785
        %6233 = vmatprep.subr.bf16.mxu0 0
        %6234 = vmatpush2.bf16.msra.mxu0 %v5830
        %6235 = vmatprep.subr.bf16.mxu0 0
        %6236 = vmatpush2.bf16.msra.mxu0 %v5827
        %6237 = vmatprep.subr.bf16.mxu0 0
        %6238 = vmatpush2.bf16.msra.mxu0 %v5824
        %6239 = vmatprep.subr.bf16.mxu0 0
        %6240 = vmatpush2.bf16.msra.mxu0 %v5821
        %6241 = vmatprep.subr.bf16.mxu0 0
        %6242 = vmatpush2.bf16.msra.mxu0 %v5818
        %6243 = vmatprep.subr.bf16.mxu0 0
        %6244 = vmatpush2.bf16.msra.mxu0 %v5815
        %6245 = vmatprep.subr.bf16.mxu0 0
        %6246 = vmatpush2.bf16.msra.mxu0 %v5812
        %6247 = vmatprep.subr.bf16.mxu0 0
        %6248 = vmatpush2.bf16.msra.mxu0 %v5809
        %6249 = vmatprep.mubr.bf16.mxu0 %v5419
        %6250 = vmatmul.mubr.bf16.gmra.mxu0 %v5376
        %v6251 = vpop.f32.mrf.mxu0
        %v6252 = vadd.f32 0.0, %v6251
        %v6253 = vpop.f32.mrf.mxu0
        %v6254 = vpop.f32.mrf.mxu0
        %v6255 = vadd.f32 0.0, %v6254
        %v6256 = vpop.f32.mrf.mxu0
        %6257 = vmatprep.mubr.bf16.mxu0 %v5420
        %6258 = vmatmul.mubr.bf16.gmra.mxu0 %v5377
        %v6259 = vpop.f32.mrf.mxu0
        %v6260 = vadd.f32 0.0, %v6259
        %v6261 = vpop.f32.mrf.mxu0
        %v6262 = vpop.f32.mrf.mxu0
        %v6263 = vadd.f32 0.0, %v6262
        %v6264 = vpop.f32.mrf.mxu0
        %6265 = vmatprep.mubr.bf16.mxu0 %v5421
        %6266 = vmatmul.mubr.bf16.gmra.mxu0 %v5378
        %v6267 = vpop.f32.mrf.mxu0
        %v6268 = vadd.f32 0.0, %v6267
        %v6269 = vpop.f32.mrf.mxu0
        %v6270 = vpop.f32.mrf.mxu0
        %v6271 = vadd.f32 0.0, %v6270
        %v6272 = vpop.f32.mrf.mxu0
        %6273 = vmatprep.mubr.bf16.mxu0 %v5422
        %6274 = vmatmul.mubr.bf16.gmra.mxu0 %v5379
        %v6275 = vpop.f32.mrf.mxu0
        %v6276 = vadd.f32 0.0, %v6275
        %v6277 = vpop.f32.mrf.mxu0
        %v6278 = vpop.f32.mrf.mxu0
        %v6279 = vadd.f32 0.0, %v6278
        %v6280 = vpop.f32.mrf.mxu0
        %6281 = vmatprep.mubr.bf16.mxu0 %v5423
        %6282 = vmatmul.mubr.bf16.gmra.mxu0 %v5380
        %v6283 = vpop.f32.mrf.mxu0
        %v6284 = vadd.f32 0.0, %v6283
        %v6285 = vpop.f32.mrf.mxu0
        %v6286 = vpop.f32.mrf.mxu0
        %v6287 = vadd.f32 0.0, %v6286
        %v6288 = vpop.f32.mrf.mxu0
        %6289 = vmatprep.mubr.bf16.mxu0 %v5424
        %6290 = vmatmul.mubr.bf16.gmra.mxu0 %v5381
        %v6291 = vpop.f32.mrf.mxu0
        %v6292 = vadd.f32 0.0, %v6291
        %v6293 = vpop.f32.mrf.mxu0
        %v6294 = vpop.f32.mrf.mxu0
        %v6295 = vadd.f32 0.0, %v6294
        %v6296 = vpop.f32.mrf.mxu0
        %6297 = vmatprep.mubr.bf16.mxu0 %v5425
        %6298 = vmatmul.mubr.bf16.gmra.mxu0 %v5382
        %v6299 = vpop.f32.mrf.mxu0
        %v6300 = vadd.f32 0.0, %v6299
        %v6301 = vpop.f32.mrf.mxu0
        %v6302 = vpop.f32.mrf.mxu0
        %v6303 = vadd.f32 0.0, %v6302
        %v6304 = vpop.f32.mrf.mxu0
        %6305 = vmatprep.mubr.bf16.mxu0 %v5426
        %6306 = vmatmul.mubr.bf16.gmra.mxu0 %v5383
        %v6307 = vpop.f32.mrf.mxu0
        %v6308 = vadd.f32 0.0, %v6307
        %v6309 = vpop.f32.mrf.mxu0
        %v6310 = vpop.f32.mrf.mxu0
        %v6311 = vadd.f32 0.0, %v6310
        %v6312 = vpop.f32.mrf.mxu0
        %6313 = vmatprep.mubr.bf16.mxu0 %v5427
        %6314 = vmatmul.mubr.bf16.gmra.mxu0 %v5384
        %v6315 = vpop.f32.mrf.mxu0
        %v6316 = vadd.f32 0.0, %v6315
        %v6317 = vpop.f32.mrf.mxu0
        %v6318 = vpop.f32.mrf.mxu0
        %v6319 = vadd.f32 0.0, %v6318
        %v6320 = vpop.f32.mrf.mxu0
        %6321 = vmatprep.mubr.bf16.mxu0 %v5428
        %6322 = vmatmul.mubr.bf16.gmra.mxu0 %v5385
        %v6323 = vpop.f32.mrf.mxu0
        %v6324 = vadd.f32 0.0, %v6323
        %v6325 = vpop.f32.mrf.mxu0
        %v6326 = vpop.f32.mrf.mxu0
        %v6327 = vadd.f32 0.0, %v6326
        %v6328 = vpop.f32.mrf.mxu0
        %6329 = vmatprep.mubr.bf16.mxu0 %v5429
        %6330 = vmatmul.mubr.bf16.gmra.mxu0 %v5386
        %v6331 = vpop.f32.mrf.mxu0
        %v6332 = vadd.f32 0.0, %v6331
        %v6333 = vpop.f32.mrf.mxu0
        %v6334 = vpop.f32.mrf.mxu0
        %v6335 = vadd.f32 0.0, %v6334
        %v6336 = vpop.f32.mrf.mxu0
        %6337 = vmatprep.mubr.bf16.mxu0 %v5430
        %6338 = vmatmul.mubr.bf16.gmra.mxu0 %v5387
        %v6339 = vpop.f32.mrf.mxu0
        %v6340 = vadd.f32 0.0, %v6339
        %v6341 = vpop.f32.mrf.mxu0
        %v6342 = vpop.f32.mrf.mxu0
        %v6343 = vadd.f32 0.0, %v6342
        %v6344 = vpop.f32.mrf.mxu0
        %6345 = vdwg.mxu0
        %6346 = vmatprep.subr.bf16.mxu0 0
        %6347 = vmatpush1.bf16.msra.mxu0 %v5854
        %6348 = vmatprep.subr.bf16.mxu0 0
        %6349 = vmatpush1.bf16.msra.mxu0 %v5851
        %6350 = vmatprep.subr.bf16.mxu0 0
        %6351 = vmatpush1.bf16.msra.mxu0 %v5848
        %6352 = vmatprep.subr.bf16.mxu0 0
        %6353 = vmatpush1.bf16.msra.mxu0 %v5845
        %6354 = vmatprep.subr.bf16.mxu0 0
        %6355 = vmatpush1.bf16.msra.mxu0 %v5842
        %6356 = vmatprep.subr.bf16.mxu0 0
        %6357 = vmatpush1.bf16.msra.mxu0 %v5839
        %6358 = vmatprep.subr.bf16.mxu0 0
        %6359 = vmatpush1.bf16.msra.mxu0 %v5836
        %6360 = vmatprep.subr.bf16.mxu0 0
        %6361 = vmatpush1.bf16.msra.mxu0 %v5833
        %6362 = vmatprep.subr.bf16.mxu0 0
        %6363 = vmatpush2.bf16.msra.mxu0 0
        %6364 = vmatprep.subr.bf16.mxu0 0
        %6365 = vmatpush2.bf16.msra.mxu0 0
        %6366 = vmatprep.subr.bf16.mxu0 0
        %6367 = vmatpush2.bf16.msra.mxu0 0
        %6368 = vmatprep.subr.bf16.mxu0 0
        %6369 = vmatpush2.bf16.msra.mxu0 0
        %6370 = vmatprep.subr.bf16.mxu0 0
        %6371 = vmatpush2.bf16.msra.mxu0 0
        %6372 = vmatprep.subr.bf16.mxu0 0
        %6373 = vmatpush2.bf16.msra.mxu0 0
        %6374 = vmatprep.subr.bf16.mxu0 0
        %6375 = vmatpush2.bf16.msra.mxu0 0
        %6376 = vmatprep.subr.bf16.mxu0 0
        %6377 = vmatpush2.bf16.msra.mxu0 0
        %6378 = vmatprep.mubr.bf16.mxu0 0
        %6379 = vmatmul.mubr.bf16.gmra.mxu0 %v5435
        %v6380 = vpop.f32.mrf.mxu0
        %v6381 = vadd.f32 %v6252, %v6380
        %v6382 = vpop.f32.mrf.mxu0
        %v6383 = vpop.f32.mrf.mxu0
        %v6384 = vadd.f32 %v6255, %v6383
        %v6385 = vpop.f32.mrf.mxu0
        %6386 = vmatprep.mubr.bf16.mxu0 0
        %6387 = vmatmul.mubr.bf16.gmra.mxu0 %v5436
        %v6388 = vpop.f32.mrf.mxu0
        %v6389 = vadd.f32 %v6260, %v6388
        %v6390 = vpop.f32.mrf.mxu0
        %v6391 = vpop.f32.mrf.mxu0
        %v6392 = vadd.f32 %v6263, %v6391
        %v6393 = vpop.f32.mrf.mxu0
        %6394 = vmatprep.mubr.bf16.mxu0 0
        %6395 = vmatmul.mubr.bf16.gmra.mxu0 %v5437
        %v6396 = vpop.f32.mrf.mxu0
        %v6397 = vadd.f32 %v6268, %v6396
        %v6398 = vpop.f32.mrf.mxu0
        %v6399 = vpop.f32.mrf.mxu0
        %v6400 = vadd.f32 %v6271, %v6399
        %v6401 = vpop.f32.mrf.mxu0
        %6402 = vmatprep.mubr.bf16.mxu0 0
        %6403 = vmatmul.mubr.bf16.gmra.mxu0 %v5438
        %v6404 = vpop.f32.mrf.mxu0
        %v6405 = vadd.f32 %v6276, %v6404
        %v6406 = vpop.f32.mrf.mxu0
        %v6407 = vpop.f32.mrf.mxu0
        %v6408 = vadd.f32 %v6279, %v6407
        %v6409 = vpop.f32.mrf.mxu0
        %6410 = vmatprep.mubr.bf16.mxu0 0
        %6411 = vmatmul.mubr.bf16.gmra.mxu0 %v5439
        %v6412 = vpop.f32.mrf.mxu0
        %v6413 = vadd.f32 %v6284, %v6412
        %v6414 = vpop.f32.mrf.mxu0
        %v6415 = vpop.f32.mrf.mxu0
        %v6416 = vadd.f32 %v6287, %v6415
        %v6417 = vpop.f32.mrf.mxu0
        %6418 = vmatprep.mubr.bf16.mxu0 0
        %6419 = vmatmul.mubr.bf16.gmra.mxu0 %v5440
        %v6420 = vpop.f32.mrf.mxu0
        %v6421 = vadd.f32 %v6292, %v6420
        %v6422 = vpop.f32.mrf.mxu0
        %v6423 = vpop.f32.mrf.mxu0
        %v6424 = vadd.f32 %v6295, %v6423
        %v6425 = vpop.f32.mrf.mxu0
        %6426 = vmatprep.mubr.bf16.mxu0 0
        %6427 = vmatmul.mubr.bf16.gmra.mxu0 %v5441
        %v6428 = vpop.f32.mrf.mxu0
        %v6429 = vadd.f32 %v6300, %v6428
        %v6430 = vpop.f32.mrf.mxu0
        %v6431 = vpop.f32.mrf.mxu0
        %v6432 = vadd.f32 %v6303, %v6431
        %v6433 = vpop.f32.mrf.mxu0
        %6434 = vmatprep.mubr.bf16.mxu0 0
        %6435 = vmatmul.mubr.bf16.gmra.mxu0 %v5442
        %v6436 = vpop.f32.mrf.mxu0
        %v6437 = vadd.f32 %v6308, %v6436
        %v6438 = vpop.f32.mrf.mxu0
        %v6439 = vpop.f32.mrf.mxu0
        %v6440 = vadd.f32 %v6311, %v6439
        %v6441 = vpop.f32.mrf.mxu0
        %6442 = vmatprep.mubr.bf16.mxu0 0
        %6443 = vmatmul.mubr.bf16.gmra.mxu0 %v5443
        %v6444 = vpop.f32.mrf.mxu0
        %v6445 = vadd.f32 %v6316, %v6444
        %v6446 = vpop.f32.mrf.mxu0
        %v6447 = vpop.f32.mrf.mxu0
        %v6448 = vadd.f32 %v6319, %v6447
        %v6449 = vpop.f32.mrf.mxu0
        %6450 = vmatprep.mubr.bf16.mxu0 0
        %6451 = vmatmul.mubr.bf16.gmra.mxu0 %v5444
        %v6452 = vpop.f32.mrf.mxu0
        %v6453 = vadd.f32 %v6324, %v6452
        %v6454 = vpop.f32.mrf.mxu0
        %v6455 = vpop.f32.mrf.mxu0
        %v6456 = vadd.f32 %v6327, %v6455
        %v6457 = vpop.f32.mrf.mxu0
        %6458 = vmatprep.mubr.bf16.mxu0 0
        %6459 = vmatmul.mubr.bf16.gmra.mxu0 %v5445
        %v6460 = vpop.f32.mrf.mxu0
        %v6461 = vadd.f32 %v6332, %v6460
        %v6462 = vpop.f32.mrf.mxu0
        %v6463 = vpop.f32.mrf.mxu0
        %v6464 = vadd.f32 %v6335, %v6463
        %v6465 = vpop.f32.mrf.mxu0
        %6466 = vmatprep.mubr.bf16.mxu0 0
        %6467 = vmatmul.mubr.bf16.gmra.mxu0 %v5446
        %v6468 = vpop.f32.mrf.mxu0
        %v6469 = vadd.f32 %v6340, %v6468
        %v6470 = vpop.f32.mrf.mxu0
        %v6471 = vpop.f32.mrf.mxu0
        %v6472 = vadd.f32 %v6343, %v6471
        %v6473 = vpop.f32.mrf.mxu0
        %6474 = vdwg.mxu0
        %v6499 = vrot.slane %v6109, 1
        %v6500 = vrot.slane %v6113, 1
        %v6501 = vsel %vm2270, %v6499, %v6500
        %v6502 = vrot.slane %v6118, 1
        %v6503 = vsel %vm2270, %v6500, %v6502
        %v6504 = vrot.slane %v6122, 1
        %v6505 = vrot.slane %v6128, 1
        %v6506 = vsel %vm2270, %v6504, %v6505
        %v6507 = vrot.slane %v6131, 1
        %v6508 = vsel %vm2270, %v6505, %v6507
        %v6509 = vrot.slane %v6137, 1
        %v6510 = vrot.slane %v6141, 1
        %v6511 = vsel %vm2270, %v6509, %v6510
        %v6512 = vrot.slane %v6146, 1
        %v6513 = vsel %vm2270, %v6510, %v6512
        %v6514 = vrot.slane %v6150, 1
        %v6515 = vrot.slane %v6156, 1
        %v6516 = vsel %vm2270, %v6514, %v6515
        %v6517 = vrot.slane %v6159, 1
        %v6518 = vsel %vm2270, %v6515, %v6517
        %v6519 = vrot.slane %v6165, 1
        %v6520 = vrot.slane %v6169, 1
        %v6521 = vsel %vm2270, %v6519, %v6520
        %v6522 = vrot.slane %v6174, 1
        %v6523 = vsel %vm2270, %v6520, %v6522
        %v6524 = vrot.slane %v6178, 1
        %v6525 = vrot.slane %v6184, 1
        %v6526 = vsel %vm2270, %v6524, %v6525
        %v6527 = vrot.slane %v6187, 1
        %v6528 = vsel %vm2270, %v6525, %v6527
        %v6529 = vrot.slane %v6193, 1
        %v6530 = vrot.slane %v6197, 1
        %v6531 = vsel %vm2270, %v6529, %v6530
        %v6532 = vrot.slane %v6202, 1
        %v6533 = vsel %vm2270, %v6530, %v6532
        %v6534 = vrot.slane %v6206, 1
        %v6535 = vrot.slane %v6212, 1
        %v6536 = vsel %vm2270, %v6534, %v6535
        %v6537 = vrot.slane %v6215, 1
        %v6538 = vsel %vm2270, %v6535, %v6537
        %v6555 = vadd.f32 %v6107, %v6501
        %v6556 = vadd.f32 %v6111, %v6503
        %v6557 = vadd.f32 %v6120, %v6506
        %v6558 = vadd.f32 %v6126, %v6508
        %v6559 = vadd.f32 %v6135, %v6511
        %v6560 = vadd.f32 %v6139, %v6513
        %v6561 = vadd.f32 %v6148, %v6516
        %v6562 = vadd.f32 %v6154, %v6518
        %v6563 = vadd.f32 %v6163, %v6521
        %v6564 = vadd.f32 %v6167, %v6523
        %v6565 = vadd.f32 %v6176, %v6526
        %v6566 = vadd.f32 %v6182, %v6528
        %v6567 = vadd.f32 %v6191, %v6531
        %v6568 = vadd.f32 %v6195, %v6533
        %v6569 = vadd.f32 %v6204, %v6536
        %v6570 = vadd.f32 %v6210, %v6538
        %v6595 = vrot.slane %v6381, 2
        %v6596 = vrot.slane %v6384, 2
        %v6597 = vsel %vm2463, %v6595, %v6596
        %v6598 = vrot.slane %v6389, 2
        %v6599 = vsel %vm2463, %v6596, %v6598
        %v6600 = vrot.slane %v6392, 2
        %v6601 = vrot.slane %v6397, 2
        %v6602 = vsel %vm2463, %v6600, %v6601
        %v6603 = vrot.slane %v6400, 2
        %v6604 = vsel %vm2463, %v6601, %v6603
        %v6605 = vrot.slane %v6405, 2
        %v6606 = vrot.slane %v6408, 2
        %v6607 = vsel %vm2463, %v6605, %v6606
        %v6608 = vrot.slane %v6413, 2
        %v6609 = vsel %vm2463, %v6606, %v6608
        %v6610 = vrot.slane %v6416, 2
        %v6611 = vrot.slane %v6421, 2
        %v6612 = vsel %vm2463, %v6610, %v6611
        %v6613 = vrot.slane %v6424, 2
        %v6614 = vsel %vm2463, %v6611, %v6613
        %v6615 = vrot.slane %v6429, 2
        %v6616 = vrot.slane %v6432, 2
        %v6617 = vsel %vm2463, %v6615, %v6616
        %v6618 = vrot.slane %v6437, 2
        %v6619 = vsel %vm2463, %v6616, %v6618
        %v6620 = vrot.slane %v6440, 2
        %v6621 = vrot.slane %v6445, 2
        %v6622 = vsel %vm2463, %v6620, %v6621
        %v6623 = vrot.slane %v6448, 2
        %v6624 = vsel %vm2463, %v6621, %v6623
        %v6625 = vrot.slane %v6453, 2
        %v6626 = vrot.slane %v6456, 2
        %v6627 = vsel %vm2463, %v6625, %v6626
        %v6628 = vrot.slane %v6461, 2
        %v6629 = vsel %vm2463, %v6626, %v6628
        %v6630 = vrot.slane %v6464, 2
        %v6631 = vrot.slane %v6469, 2
        %v6632 = vsel %vm2463, %v6630, %v6631
        %v6633 = vrot.slane %v6472, 2
        %v6634 = vsel %vm2463, %v6631, %v6633
        %v6651 = vadd.f32 %v6555, %v6597
        %v6652 = vadd.f32 %v6556, %v6599
        %v6653 = vadd.f32 %v6557, %v6602
        %v6654 = vadd.f32 %v6558, %v6604
        %v6655 = vadd.f32 %v6559, %v6607
        %v6656 = vadd.f32 %v6560, %v6609
        %v6657 = vadd.f32 %v6561, %v6612
        %v6658 = vadd.f32 %v6562, %v6614
        %v6659 = vadd.f32 %v6563, %v6617
        %v6660 = vadd.f32 %v6564, %v6619
        %v6661 = vadd.f32 %v6565, %v6622
        %v6662 = vadd.f32 %v6566, %v6624
        %v6663 = vadd.f32 %v6567, %v6627
        %v6664 = vadd.f32 %v6568, %v6629
        %v6665 = vadd.f32 %v6569, %v6632
        %v6666 = vadd.f32 %v6570, %v6634
        %v6667 = vld [vmem:[%s8] sm:$0x1]
        %v6669 = vlaneseq
        %v6670 = vshrl.u32 %v6669, 7
        %v6671 = vsub.s32 0, %v6670
        %v6672 = vrot.slane %v6667, %v6671
        %v6674 = vadd.f32 %v6651, %v6672
        %v6675 = vadd.f32 %v6652, %v6672
        %v6676 = vadd.f32 %v6653, %v6672
        %v6677 = vadd.f32 %v6654, %v6672
        %v6678 = vadd.f32 %v6655, %v6672
        %v6679 = vadd.f32 %v6656, %v6672
        %v6680 = vadd.f32 %v6657, %v6672
        %v6681 = vadd.f32 %v6658, %v6672
        %v6682 = vadd.f32 %v6659, %v6672
        %v6683 = vadd.f32 %v6660, %v6672
        %v6684 = vadd.f32 %v6661, %v6672
        %v6685 = vadd.f32 %v6662, %v6672
        %v6686 = vadd.f32 %v6663, %v6672
        %v6687 = vadd.f32 %v6664, %v6672
        %v6688 = vadd.f32 %v6665, %v6672
        %v6689 = vadd.f32 %v6666, %v6672
        %v6698 = vrot.slane %v6674, 1
        %v6699 = vrot.slane %v6676, 1
        %v6700 = vrot.slane %v6678, 1
        %v6701 = vrot.slane %v6680, 1
        %v6702 = vrot.slane %v6682, 1
        %v6703 = vrot.slane %v6684, 1
        %v6704 = vrot.slane %v6686, 1
        %v6705 = vrot.slane %v6688, 1
        %v6714 = vrot.slane %v6674, 2
        %v6715 = vrot.slane %v6676, 2
        %v6716 = vrot.slane %v6678, 2
        %v6717 = vrot.slane %v6680, 2
        %v6718 = vrot.slane %v6682, 2
        %v6719 = vrot.slane %v6684, 2
        %v6720 = vrot.slane %v6686, 2
        %v6721 = vrot.slane %v6688, 2
        %v6730 = vrot.slane %v6674, 3
        %v6731 = vrot.slane %v6676, 3
        %v6732 = vrot.slane %v6678, 3
        %v6733 = vrot.slane %v6680, 3
        %v6734 = vrot.slane %v6682, 3
        %v6735 = vrot.slane %v6684, 3
        %v6736 = vrot.slane %v6686, 3
        %v6737 = vrot.slane %v6688, 3
        %v6754 = vrot.slane %v6675, 4
        %v6755 = vrot.slane %v6677, 4
        %v6756 = vrot.slane %v6679, 4
        %v6757 = vrot.slane %v6681, 4
        %v6758 = vrot.slane %v6683, 4
        %v6759 = vrot.slane %v6685, 4
        %v6760 = vrot.slane %v6687, 4
        %v6761 = vrot.slane %v6689, 4
        %v6770 = vrot.slane %v6675, 5
        %v6771 = vrot.slane %v6677, 5
        %v6772 = vrot.slane %v6679, 5
        %v6773 = vrot.slane %v6681, 5
        %v6774 = vrot.slane %v6683, 5
        %v6775 = vrot.slane %v6685, 5
        %v6776 = vrot.slane %v6687, 5
        %v6777 = vrot.slane %v6689, 5
        %v6786 = vrot.slane %v6675, 6
        %v6787 = vrot.slane %v6677, 6
        %v6788 = vrot.slane %v6679, 6
        %v6789 = vrot.slane %v6681, 6
        %v6790 = vrot.slane %v6683, 6
        %v6791 = vrot.slane %v6685, 6
        %v6792 = vrot.slane %v6687, 6
        %v6793 = vrot.slane %v6689, 6
        %v6802 = vrot.slane %v6675, 7
        %v6803 = vrot.slane %v6677, 7
        %v6804 = vrot.slane %v6679, 7
        %v6805 = vrot.slane %v6681, 7
        %v6806 = vrot.slane %v6683, 7
        %v6807 = vrot.slane %v6685, 7
        %v6808 = vrot.slane %v6687, 7
        %v6809 = vrot.slane %v6689, 7
        %vm6818 = vcmask 1040384
        %v6819 = vsel %vm6818, %v6674, %v6698
        %v6820 = vsel %vm6818, %v6676, %v6699
        %v6821 = vsel %vm6818, %v6678, %v6700
        %v6822 = vsel %vm6818, %v6680, %v6701
        %v6823 = vsel %vm6818, %v6682, %v6702
        %v6824 = vsel %vm6818, %v6684, %v6703
        %v6825 = vsel %vm6818, %v6686, %v6704
        %v6826 = vsel %vm6818, %v6688, %v6705
        %vm6827 = vcmask 1041408
        %v6828 = vsel %vm6827, %v6819, %v6714
        %v6829 = vsel %vm6827, %v6820, %v6715
        %v6830 = vsel %vm6827, %v6821, %v6716
        %v6831 = vsel %vm6827, %v6822, %v6717
        %v6832 = vsel %vm6827, %v6823, %v6718
        %v6833 = vsel %vm6827, %v6824, %v6719
        %v6834 = vsel %vm6827, %v6825, %v6720
        %v6835 = vsel %vm6827, %v6826, %v6721
        %vm6836 = vcmask 1042432
        %v6837 = vsel %vm6836, %v6828, %v6730
        %v6838 = vsel %vm6836, %v6829, %v6731
        %v6839 = vsel %vm6836, %v6830, %v6732
        %v6840 = vsel %vm6836, %v6831, %v6733
        %v6841 = vsel %vm6836, %v6832, %v6734
        %v6842 = vsel %vm6836, %v6833, %v6735
        %v6843 = vsel %vm6836, %v6834, %v6736
        %v6844 = vsel %vm6836, %v6835, %v6737
        %vm6845 = vcmask 1043456
        %v6846 = vsel %vm6845, %v6837, %v6754
        %v6847 = vsel %vm6845, %v6838, %v6755
        %v6848 = vsel %vm6845, %v6839, %v6756
        %v6849 = vsel %vm6845, %v6840, %v6757
        %v6850 = vsel %vm6845, %v6841, %v6758
        %v6851 = vsel %vm6845, %v6842, %v6759
        %v6852 = vsel %vm6845, %v6843, %v6760
        %v6853 = vsel %vm6845, %v6844, %v6761
        %vm6854 = vcmask 1044480
        %v6855 = vsel %vm6854, %v6846, %v6770
        %v6856 = vsel %vm6854, %v6847, %v6771
        %v6857 = vsel %vm6854, %v6848, %v6772
        %v6858 = vsel %vm6854, %v6849, %v6773
        %v6859 = vsel %vm6854, %v6850, %v6774
        %v6860 = vsel %vm6854, %v6851, %v6775
        %v6861 = vsel %vm6854, %v6852, %v6776
        %v6862 = vsel %vm6854, %v6853, %v6777
        %v6863 = vsel %vm2463, %v6855, %v6786
        %v6864 = vsel %vm2463, %v6856, %v6787
        %v6865 = vsel %vm2463, %v6857, %v6788
        %v6866 = vsel %vm2463, %v6858, %v6789
        %v6867 = vsel %vm2463, %v6859, %v6790
        %v6868 = vsel %vm2463, %v6860, %v6791
        %v6869 = vsel %vm2463, %v6861, %v6792
        %v6870 = vsel %vm2463, %v6862, %v6793
        %v6871 = vsel %vm2270, %v6863, %v6802
        %v6872 = vsel %vm2270, %v6864, %v6803
        %v6873 = vsel %vm2270, %v6865, %v6804
        %v6874 = vsel %vm2270, %v6866, %v6805
        %v6875 = vsel %vm2270, %v6867, %v6806
        %v6876 = vsel %vm2270, %v6868, %v6807
        %v6877 = vsel %vm2270, %v6869, %v6808
        %v6878 = vsel %vm2270, %v6870, %v6809
        %6879 = vst [vmem:[%s408] sm:$0xff] %v6871
        %6880 = vst [vmem:[%s408 + $0x8] sm:$0xff] %v6872
        %6881 = vst [vmem:[%s408 + $0x10] sm:$0xff] %v6873
        %6882 = vst [vmem:[%s408 + $0x18] sm:$0xff] %v6874
        %6883 = vst [vmem:[%s408 + $0x20] sm:$0xff] %v6875
        %6884 = vst [vmem:[%s408 + $0x28] sm:$0xff] %v6876
        %6885 = vst [vmem:[%s408 + $0x30] sm:$0xff] %v6877
        %6886 = vst [vmem:[%s408 + $0x38] sm:$0xff] %v6878
        %s6887 = sand.u32 %s230, 1
        %s6888 = scalar_lea.sflag [#allocation5], %s6887
        %s6889 = sand.u32 %s230, 1
        %s6890 = smul.addr %s6889, 64
        %s6891 = scalar_lea.vmem [#allocation12], %s6890
        // Predicated region
        $region77: #{tpu_custom_call.1} parent=55 // pred_check
          %p6892 = pneg %p240
        $region78: #{tpu_custom_call.1} parent=55 // pred_check_branch
          %6894 = sbr.rel (%p6892) target = $region80
        $region79: #{tpu_custom_call.1} parent=55 // pred_region
          %s6896 = ssub.s32 1024, 1024
          %6897 = vsyncadd %s6888, %s6896
          %s6898 = smul.addr %s28, 8
          %s6899 = smul.addr %s6898, 128
          %s6900 = scalar_lea.hbm %s9, %s6899
          %s6901 = sshll.u32 %s6891, 4
          %s6902 = int_to_ptr.vmem [resolvable:$true] %s6901
          %6907 = dma.vmem_to_hbm [thread:$0]  %s6902, 1024, %s6900, %s6888, 128, 128, 8
        $region80: #{tpu_custom_call.1} parent=55 // pred_fallthru
          _
      $region56: #{tpu_custom_call.1} parent=5 // pred_fallthru
        _
      %p6908 = scmp.le.s32.totalorder 2, %s23
      // Predicated region
      $region81: #{tpu_custom_call.1} parent=5 // pred_check
        %p6909 = pneg %p6908
      $region82: #{tpu_custom_call.1} parent=5 // pred_check_branch
        %6911 = sbr.rel (%p6909) target = $region84
      $region83: #{tpu_custom_call.1} parent=5 // pred_region
        %s6912 = ssub.s32 %s23, 2
        // Predicated region
        $region85: #{tpu_custom_call.1} parent=83 // pred_check
          %p6913 = pneg %p246
        $region86: #{tpu_custom_call.1} parent=83 // pred_check_branch
          %6915 = sbr.rel (%p6913) target = $region88
        $region87: #{tpu_custom_call.1} parent=83 // pred_region
          %s6916 = sand.u32 %s231, 1
          %s6917 = scalar_lea.sflag [#allocation5], %s6916
          %s6918 = sand.u32 %s231, 1
          %s6919 = smul.addr %s6918, 64
          %s6920 = scalar_lea.vmem [#allocation12], %s6919
          %6921 = dma.done %s6917, 1024
        $region88: #{tpu_custom_call.1} parent=83 // pred_fallthru
          _
      $region84: #{tpu_custom_call.1} parent=5 // pred_fallthru
        _
    $region6: #{tpu_custom_call.1} parent=1 // loop_footer
      %s27 = sadd.s32 1, %s23
    $region7: #{tpu_custom_call.1} parent=1 // loop_footer_branch
      %22 = sbr.rel target = $region3
    $region8: #{tpu_custom_call.1} parent=1 // loop_exit
      _
    %6922 = vsyncpa [#allocation4], 1
    %s6923 = scalar_lea.sflag [#allocation4], 1
    %6924 = vsyncpa %s6923, 1
    %6925 = vsyncpa [#allocation7], 1
    %6926 = vsyncpa [#allocation10], 1
    %6927 = vsyncpa [#allocation5], 1
    %s6928 = scalar_lea.sflag [#allocation5], 1
    %6929 = vsyncpa %s6928, 1

</llo_original>
